<compile_context>
chip_gen: v7x
topology: tpu7x:2x2x1
jax: 0.10.0
libtpu: 0.0.40
codegen_flags: <defaults>
</compile_context>

<pallas_src>
import functools
import math

import jax
import jax.numpy as jnp
from jax import lax
from jax.experimental import pallas as pl
from jax.experimental.pallas import tpu as pltpu

EPS = 1e-5   # nn.LayerNorm default eps
LANE = 128   # TPU lane width


# ----------------------------- in-kernel helpers -----------------------------

def _layernorm(x, g, b):
    mu = jnp.mean(x, axis=-1, keepdims=True)
    var = jnp.mean((x - mu) ** 2, axis=-1, keepdims=True)
    return (x - mu) * lax.rsqrt(var + EPS) * g + b


def _erf(x):
    # Abramowitz & Stegun 7.1.26 rational approximation of erf (f32-level
    # accuracy), reproducing torch.nn.functional.gelu's erf-based GELU.
    # The 1/(1+p|x|) goes through the EUP approx reciprocal (off the VPU path).
    a1, a2, a3, a4, a5 = (0.254829592, -0.284496736, 1.421413741,
                          -1.453152027, 1.061405429)
    p = 0.3275911
    s = jnp.where(x >= 0.0, 1.0, -1.0)
    ax = jnp.abs(x)
    t = pl.reciprocal(1.0 + p * ax, approx=True)
    poly = ((((a5 * t + a4) * t + a3) * t + a2) * t + a1) * t
    return s * (1.0 - poly * jnp.exp(-ax * ax))


def _gelu_exact(x):
    return 0.5 * x * (1.0 + _erf(x * (1.0 / math.sqrt(2.0))))


# --------------------------------- kernels -----------------------------------

def embed_kernel(p_ref, g0_ref, b0_ref, w_ref, bias_ref, g1_ref, b1_ref,
                 cls_ref, pos_ref, out_ref):
    # ImageEmbedding + pos embedding, per batch element:
    # LayerNorm(P) -> Linear(P, D) [bf16 MXU, f32 acc] -> LayerNorm(D)
    # -> prepend cls token -> add positional embedding.
    x = _layernorm(p_ref[0], g0_ref[...], b0_ref[...])          # (N, P) f32
    e = jnp.dot(x.astype(jnp.bfloat16), w_ref[...],
                preferred_element_type=jnp.float32) + bias_ref[...]
    e = _layernorm(e, g1_ref[...], b1_ref[...])                 # (N, D) f32
    out_ref[0] = jnp.concatenate([cls_ref[...], e], axis=0) + pos_ref[...]


def encoder_stack_kernel(src_ref,
                         ln1g_ref, ln1b_ref, wqkv_ref, bqkv_ref,
                         wo_ref, bo_ref, ln2g_ref, ln2b_ref,
                         w1_ref, b1_ref, w2_ref, b2_ref,
                         lnfg_ref, lnfb_ref, wout_ref, bout_ref,
                         logits_ref, attn_ref,
                         x_ref,
                         *, nhead, head_dim, batch, seq, kpad):
    # One grid step == one Pre-LN encoder layer; activations stay in x_ref
    # (VMEM scratch) for the whole stack. Last step also runs the classifier.
    l = pl.program_id(0)
    D = nhead * head_dim
    BL = batch * seq

    @pl.when(l == 0)
    def _():
        x_ref[...] = src_ref[...]

    # ---- per-layer weights for this grid step (hoisted loads) ----
    ln1_g, ln1_b = ln1g_ref[0], ln1b_ref[0]
    w_qkv, b_qkv = wqkv_ref[0], bqkv_ref[0]
    wo_l, bo_l = wo_ref[0], bo_ref[0]
    ln2_g, ln2_b = ln2g_ref[0], ln2b_ref[0]
    w1_l, b1_l = w1_ref[0], b1_ref[0]
    w2_l, b2_l = w2_ref[0], b2_ref[0]

    x0 = x_ref[...]                                             # (BL, D) f32
    xln = _layernorm(x0, ln1_g, ln1_b)

    # ---- fused Q/K/V projection: one (BL, D) @ (D, 3D) matmul ----
    qkv = jnp.dot(xln.astype(jnp.bfloat16), w_qkv,
                  preferred_element_type=jnp.float32) + b_qkv   # (BL, 3D) f32
    q = qkv[:, 0 * D:1 * D].reshape(batch, seq, D)
    k = qkv[:, 1 * D:2 * D].reshape(batch, seq, D)
    v = qkv[:, 2 * D:3 * D].reshape(batch, seq, D)

    scale = 1.0 / math.sqrt(head_dim)
    key_pad = jnp.zeros((batch, seq, kpad - seq), jnp.float32)  # hoisted
    acc = jnp.zeros((BL, D), jnp.float32)
    for h in range(nhead):                                      # static unroll
        sl = slice(h * head_dim, (h + 1) * head_dim)
        qh = q[:, :, sl].astype(jnp.bfloat16)
        kh = k[:, :, sl].astype(jnp.bfloat16)
        vh = v[:, :, sl].astype(jnp.bfloat16)
        s = jnp.einsum('bqd,bkd->bqk', qh, kh,
                       preferred_element_type=jnp.float32) * scale   # (B, L, L)
        s = s - jnp.max(s, axis=-1, keepdims=True)
        e = jnp.exp(s)
        p = e * pl.reciprocal(jnp.sum(e, axis=-1, keepdims=True), approx=True)
        # lane-dense (key axis padded to 128) attention writeback
        attn_ref[0, h] = jnp.concatenate([p, key_pad], axis=-1)
        ctx = jnp.einsum('bqk,bkd->bqd', p.astype(jnp.bfloat16), vh,
                         preferred_element_type=jnp.float32)          # (B, L, hd)
        # accumulate the output projection per head (no lane-axis concat)
        acc = acc + jnp.dot(ctx.reshape(BL, head_dim).astype(jnp.bfloat16),
                            wo_l[sl, :],
                            preferred_element_type=jnp.float32)
    x1 = x0 + acc + bo_l                                        # residual 1

    xln2 = _layernorm(x1, ln2_g, ln2_b)
    hdn = _gelu_exact(jnp.dot(xln2.astype(jnp.bfloat16), w1_l,
                              preferred_element_type=jnp.float32) + b1_l)
    ff = jnp.dot(hdn.astype(jnp.bfloat16), w2_l,
                 preferred_element_type=jnp.float32) + b2_l
    x2 = x1 + ff                                                # residual 2
    x_ref[...] = x2

    # ---- classifier epilogue, fused into the last layer step ----
    @pl.when(l == pl.num_programs(0) - 1)
    def _():
        cls = x2.reshape(batch, seq, D)[:, 0, :]                # (B, D)
        cls = _layernorm(cls, lnfg_ref[...], lnfb_ref[...])
        logits_ref[...] = jnp.dot(cls.astype(jnp.bfloat16), wout_ref[...],
                                  preferred_element_type=jnp.float32) + bout_ref[...]


# ------------------------------- wrappers -------------------------------------

def patch_embed(patches, pp):
    B, N, P = patches.shape
    D = pp["pe_w"].shape[1]
    L = N + 1

    def fix(shape):
        n = len(shape)
        return pl.BlockSpec(tuple(shape), lambda i, _n=n: (0,) * _n)

    return pl.pallas_call(
        embed_kernel,
        out_shape=jax.ShapeDtypeStruct((B, L, D), jnp.float32),
        grid=(B,),
        in_specs=[
            pl.BlockSpec((1, N, P), lambda i: (i, 0, 0)),
            fix((1, P)), fix((1, P)),
            fix((P, D)), fix((1, D)),
            fix((1, D)), fix((1, D)),
            fix((1, D)), fix((L, D)),
        ],
        out_specs=pl.BlockSpec((1, L, D), lambda i: (i, 0, 0)),
        compiler_params=pltpu.CompilerParams(dimension_semantics=("parallel",)),
    )(patches, pp["pe_ln0_g"], pp["pe_ln0_b"], pp["pe_w"], pp["pe_b"],
      pp["pe_ln1_g"], pp["pe_ln1_b"], pp["cls_token"], pp["pos_embedding"])


def encoder_stack(src, layers, head, *, n_head, batch, seq):
    BL, D = src.shape
    n_layers = layers["wqkv"].shape[0]
    F = layers["w1"].shape[-1]
    kpad = LANE * pl.cdiv(seq, LANE)         # lane-dense attention key axis
    opad = head["w_out_pad"].shape[-1]       # lane-dense classifier width

    def inv(shape):
        n = len(shape)
        return pl.BlockSpec(tuple(shape), lambda l, _n=n: (0,) * _n)

    def per_layer(rest):
        blk = (1,) + tuple(rest)
        nz = len(rest)
        return pl.BlockSpec(blk, lambda l, _nz=nz: (l,) + (0,) * _nz)

    kernel = functools.partial(encoder_stack_kernel, nhead=n_head,
                               head_dim=D // n_head, batch=batch, seq=seq,
                               kpad=kpad)
    logits, attn = pl.pallas_call(
        kernel,
        out_shape=(jax.ShapeDtypeStruct((batch, opad), jnp.float32),
                   jax.ShapeDtypeStruct((n_layers, n_head, batch, seq, kpad),
                                        jnp.float32)),
        grid=(n_layers,),
        in_specs=[
            inv((BL, D)),
            per_layer((1, D)), per_layer((1, D)),
            per_layer((D, 3 * D)), per_layer((1, 3 * D)),
            per_layer((D, D)), per_layer((1, D)),
            per_layer((1, D)), per_layer((1, D)),
            per_layer((D, F)), per_layer((1, F)),
            per_layer((F, D)), per_layer((1, D)),
            inv((1, D)), inv((1, D)),
            inv((D, opad)), inv((1, opad)),
        ],
        out_specs=(
            inv((batch, opad)),
            per_layer((n_head, batch, seq, kpad)),
        ),
        scratch_shapes=[pltpu.VMEM((BL, D), jnp.float32)],
        compiler_params=pltpu.CompilerParams(
            dimension_semantics=("arbitrary",)),   # layers are sequential
    )(src,
      layers["ln1_g"], layers["ln1_b"], layers["wqkv"], layers["bqkv"],
      layers["wo"], layers["bo"], layers["ln2_g"], layers["ln2_b"],
      layers["w1"], layers["b1"], layers["w2"], layers["b2"],
      head["ln_f_g"], head["ln_f_b"], head["w_out_pad"], head["b_out_pad"])
    return logits, attn


# ------------------------------ parameters ------------------------------------

def _xavier(key, in_dim, out_dim):
    lim = math.sqrt(6.0 / (in_dim + out_dim))
    return jax.random.uniform(key, (in_dim, out_dim), jnp.float32, -lim, lim)


def _bias(key, fan_in, dim):
    lim = 1.0 / math.sqrt(fan_in)
    return jax.random.uniform(key, (1, dim), jnp.float32, -lim, lim)


def init_params(key, *, ch, img_size, patch, d_model, n_layers, n_head,
                ff_dim, output_dim):
    P = ch * patch * patch
    num_patches = (img_size[0] // patch) * (img_size[1] // patch)
    L = num_patches + 1
    keys = iter(jax.random.split(key, 16 + 12 * n_layers))
    nk = lambda: next(keys)

    params = {
        # ImageEmbedding: LayerNorm(P) -> Linear(P, D) -> LayerNorm(D)
        "pe_ln0_g": jnp.ones((1, P), jnp.float32),
        "pe_ln0_b": jnp.zeros((1, P), jnp.float32),
        "pe_w": _xavier(nk(), P, d_model).astype(jnp.bfloat16),
        "pe_b": _bias(nk(), P, d_model),
        "pe_ln1_g": jnp.ones((1, d_model), jnp.float32),
        "pe_ln1_b": jnp.zeros((1, d_model), jnp.float32),
        "cls_token": _xavier(nk(), 1, d_model),            # (1, D)
        "pos_embedding": _xavier(nk(), L, d_model),        # (L, D)
    }

    # Per-layer weights stacked on a leading axis (= grid axis of the fused
    # encoder kernel); Q/K/V fused into one (D, 3D) weight; MXU weights bf16.
    wqkv, bqkv, wo, bo, w1, b1, w2, b2 = [], [], [], [], [], [], [], []
    for _ in range(n_layers):
        wq, wk, wv = (_xavier(nk(), d_model, d_model) for _ in range(3))
        wqkv.append(jnp.concatenate([wq, wk, wv], axis=1))
        bqkv.append(jnp.concatenate(
            [_bias(nk(), d_model, d_model) for _ in range(3)], axis=1))
        wo.append(_xavier(nk(), d_model, d_model))
        bo.append(_bias(nk(), d_model, d_model))
        w1.append(_xavier(nk(), d_model, ff_dim))
        b1.append(_bias(nk(), d_model, ff_dim))
        w2.append(_xavier(nk(), ff_dim, d_model))
        b2.append(_bias(nk(), ff_dim, d_model))
    params["layers"] = {
        "ln1_g": jnp.ones((n_layers, 1, d_model), jnp.float32),
        "ln1_b": jnp.zeros((n_layers, 1, d_model), jnp.float32),
        "wqkv": jnp.stack(wqkv).astype(jnp.bfloat16),
        "bqkv": jnp.stack(bqkv),
        "wo": jnp.stack(wo).astype(jnp.bfloat16),
        "bo": jnp.stack(bo),
        "ln2_g": jnp.ones((n_layers, 1, d_model), jnp.float32),
        "ln2_b": jnp.zeros((n_layers, 1, d_model), jnp.float32),
        "w1": jnp.stack(w1).astype(jnp.bfloat16),
        "b1": jnp.stack(b1),
        "w2": jnp.stack(w2).astype(jnp.bfloat16),
        "b2": jnp.stack(b2),
    }

    # Final LayerNorm + classifier, padded to a lane-dense (128) output width.
    opad = LANE * ((output_dim + LANE - 1) // LANE)
    w_out = _xavier(nk(), d_model, output_dim)
    b_out = _bias(nk(), d_model, output_dim)
    params["head"] = {
        "ln_f_g": jnp.ones((1, d_model), jnp.float32),
        "ln_f_b": jnp.zeros((1, d_model), jnp.float32),
        "w_out_pad": jnp.pad(w_out, ((0, 0), (0, opad - output_dim))).astype(jnp.bfloat16),
        "b_out_pad": jnp.pad(b_out, ((0, 0), (0, opad - output_dim))),
    }
    # TODO(synk): nn.Embedding(100, d_model) in TokPosEmbedding is never used in
    # forward() and is omitted; all nn.Dropout layers are identity (inference).
    return params


# ------------------------------- forward --------------------------------------

def vit_forward(x, params, *, patch, n_head, output_dim):
    b, c, H, W = x.shape
    hp, wp = H // patch, W // patch
    # rearrange 'b c (h p1) (w p2) -> b (h w) (p1 p2 c)'  (pure data movement)
    patches = x.reshape(b, c, hp, patch, wp, patch)
    patches = jnp.transpose(patches, (0, 2, 4, 3, 5, 1))
    patches = patches.reshape(b, hp * wp, patch * patch * c)

    emb = patch_embed(patches, params)                 # (B, L, D), cls+pos fused
    B, L, D = emb.shape
    src = emb.reshape(B * L, D)                        # flatten batch into M

    logits_pad, attn_all = encoder_stack(src, params["layers"], params["head"],
                                         n_head=n_head, batch=B, seq=L)
    output = logits_pad[:, :output_dim]                # drop lane padding
    n_layers = attn_all.shape[0]
    # attn_all: (n_layers, n_head, B, L, kpad) -> per layer (B, n_head, L, L)
    attentions = [jnp.transpose(attn_all[l, :, :, :, :L], (1, 0, 2, 3))
                  for l in range(n_layers)]
    return output, attentions


# --------------------------------- main ----------------------------------------

if __name__ == "__main__":
    ch = 4
    img_size = (16, 16)
    patch = 4
    d_model = 32
    n_layers = 2
    n_head = 4
    ff_dim = 64
    output_dim = 10
    batch = 2

    key = jax.random.PRNGKey(0)
    pkey, xkey = jax.random.split(key)
    params = init_params(pkey, ch=ch, img_size=img_size, patch=patch,
                         d_model=d_model, n_layers=n_layers, n_head=n_head,
                         ff_dim=ff_dim, output_dim=output_dim)

    x = jax.random.normal(xkey, (batch, ch, img_size[0], img_size[1]), jnp.float32)

    fwd = jax.jit(functools.partial(vit_forward, patch=patch, n_head=n_head,
                                    output_dim=output_dim))
    output, attentions = fwd(x, params)
    output = jax.block_until_ready(output)
    attentions = [jax.block_until_ready(a) for a in attentions]

    seq_len = (img_size[0] // patch) * (img_size[1] // patch) + 1
    assert output.shape == (batch, output_dim)
    assert len(attentions) == n_layers
    assert all(a.shape == (batch, n_head, seq_len, seq_len) for a in attentions)
    assert bool(jnp.all(jnp.isfinite(output)))
    # softmax rows should sum to ~1 (approx-reciprocal / bf16 tolerance)
    row_sums = jnp.stack([a.sum(-1) for a in attentions])
    assert bool(jnp.allclose(row_sums, 1.0, atol=1e-2))

    print("KERNEL_OK")
</pallas_src>

<mosaic_0001>
module attributes {stable_mosaic.version = 11 : i64} {
  func.func @embed_kernel(%arg0: i32, %arg1: memref<1x16x64xf32, #tpu.memory_space<vmem>>, %arg2: memref<1x64xf32, #tpu.memory_space<vmem>>, %arg3: memref<1x64xf32, #tpu.memory_space<vmem>>, %arg4: memref<64x32xbf16, #tpu.memory_space<vmem>>, %arg5: memref<1x32xf32, #tpu.memory_space<vmem>>, %arg6: memref<1x32xf32, #tpu.memory_space<vmem>>, %arg7: memref<1x32xf32, #tpu.memory_space<vmem>>, %arg8: memref<1x32xf32, #tpu.memory_space<vmem>>, %arg9: memref<17x32xf32, #tpu.memory_space<vmem>>, %arg10: memref<1x17x32xf32, #tpu.memory_space<vmem>>) attributes {dimension_semantics = [#tpu.dimension_semantics<parallel>], iteration_bounds = array<i64: 2>, scalar_prefetch = 0 : i64, scratch_operands = 0 : i64, tpu.core_type = #tpu.core_type<tc>, window_params = [{transform_indices = @transform_0, window_bounds = array<i64: 1, 16, 64>}, {pipeline_mode = #tpu.pipeline_mode<synchronous>, transform_indices = @transform_1, window_bounds = array<i64: 1, 64>}, {pipeline_mode = #tpu.pipeline_mode<synchronous>, transform_indices = @transform_2, window_bounds = array<i64: 1, 64>}, {pipeline_mode = #tpu.pipeline_mode<synchronous>, transform_indices = @transform_3, window_bounds = array<i64: 64, 32>}, {pipeline_mode = #tpu.pipeline_mode<synchronous>, transform_indices = @transform_4, window_bounds = array<i64: 1, 32>}, {pipeline_mode = #tpu.pipeline_mode<synchronous>, transform_indices = @transform_5, window_bounds = array<i64: 1, 32>}, {pipeline_mode = #tpu.pipeline_mode<synchronous>, transform_indices = @transform_6, window_bounds = array<i64: 1, 32>}, {pipeline_mode = #tpu.pipeline_mode<synchronous>, transform_indices = @transform_7, window_bounds = array<i64: 1, 32>}, {pipeline_mode = #tpu.pipeline_mode<synchronous>, transform_indices = @transform_8, window_bounds = array<i64: 17, 32>}, {transform_indices = @transform_9, window_bounds = array<i64: 1, 17, 32>}]} {
    %c0 = arith.constant 0 : index
    %c0_0 = arith.constant 0 : index
    %c0_1 = arith.constant 0 : index
    %0 = vector.load %arg1[%c0, %c0_0, %c0_1] : memref<1x16x64xf32, #tpu.memory_space<vmem>>, vector<1x16x64xf32>
    %1 = vector.shape_cast %0 : vector<1x16x64xf32> to vector<16x64xf32>
    %c0_2 = arith.constant 0 : index
    %c0_3 = arith.constant 0 : index
    %2 = vector.load %arg2[%c0_2, %c0_3] : memref<1x64xf32, #tpu.memory_space<vmem>>, vector<1x64xf32>
    %c0_4 = arith.constant 0 : index
    %c0_5 = arith.constant 0 : index
    %3 = vector.load %arg3[%c0_4, %c0_5] : memref<1x64xf32, #tpu.memory_space<vmem>>, vector<1x64xf32>
    %cst = arith.constant dense<0.000000e+00> : vector<16xf32>
    %4 = vector.multi_reduction <add>, %1, %cst [1] : vector<16x64xf32> to vector<16xf32>
    %5 = vector.shape_cast %4 : vector<16xf32> to vector<16x1xf32>
    %cst_6 = arith.constant 6.400000e+01 : f32
    %6 = vector.broadcast %cst_6 : f32 to vector<16x1xf32>
    %7 = arith.divf %5, %6 : vector<16x1xf32>
    %8 = vector.broadcast %7 : vector<16x1xf32> to vector<16x64xf32>
    %9 = arith.subf %1, %8 : vector<16x64xf32>
    %10 = arith.mulf %9, %9 : vector<16x64xf32>
    %cst_7 = arith.constant dense<0.000000e+00> : vector<16xf32>
    %11 = vector.multi_reduction <add>, %10, %cst_7 [1] : vector<16x64xf32> to vector<16xf32>
    %12 = vector.shape_cast %11 : vector<16xf32> to vector<16x1xf32>
    %cst_8 = arith.constant 6.400000e+01 : f32
    %13 = vector.broadcast %cst_8 : f32 to vector<16x1xf32>
    %14 = arith.divf %12, %13 : vector<16x1xf32>
    %15 = vector.broadcast %7 : vector<16x1xf32> to vector<16x64xf32>
    %16 = arith.subf %1, %15 : vector<16x64xf32>
    %cst_9 = arith.constant 9.99999974E-6 : f32
    %17 = vector.broadcast %cst_9 : f32 to vector<16x1xf32>
    %18 = arith.addf %14, %17 : vector<16x1xf32>
    %19 = math.rsqrt %18 : vector<16x1xf32>
    %20 = vector.broadcast %19 : vector<16x1xf32> to vector<16x64xf32>
    %21 = arith.mulf %16, %20 : vector<16x64xf32>
    %22 = vector.broadcast %2 : vector<1x64xf32> to vector<16x64xf32>
    %23 = arith.mulf %21, %22 : vector<16x64xf32>
    %24 = vector.broadcast %3 : vector<1x64xf32> to vector<16x64xf32>
    %25 = arith.addf %23, %24 : vector<16x64xf32>
    %26 = arith.truncf %25 : vector<16x64xf32> to vector<16x64xbf16>
    %c0_10 = arith.constant 0 : index
    %c0_11 = arith.constant 0 : index
    %27 = vector.load %arg4[%c0_10, %c0_11] : memref<64x32xbf16, #tpu.memory_space<vmem>>, vector<64x32xbf16>
    %cst_12 = arith.constant dense<0.000000e+00> : vector<16x32xf32>
    %28 = tpu.matmul %26, %27, %cst_12 {dimension_numbers = #tpu.dot_dimension_numbers<[1], [0], [0], [1], [0, 0, 1, 1], [], []>} : vector<16x64xbf16>, vector<64x32xbf16>, vector<16x32xf32> -> vector<16x32xf32>
    %c0_13 = arith.constant 0 : index
    %c0_14 = arith.constant 0 : index
    %29 = vector.load %arg5[%c0_13, %c0_14] : memref<1x32xf32, #tpu.memory_space<vmem>>, vector<1x32xf32>
    %30 = vector.broadcast %29 : vector<1x32xf32> to vector<16x32xf32>
    %31 = arith.addf %28, %30 : vector<16x32xf32>
    %c0_15 = arith.constant 0 : index
    %c0_16 = arith.constant 0 : index
    %32 = vector.load %arg6[%c0_15, %c0_16] : memref<1x32xf32, #tpu.memory_space<vmem>>, vector<1x32xf32>
    %c0_17 = arith.constant 0 : index
    %c0_18 = arith.constant 0 : index
    %33 = vector.load %arg7[%c0_17, %c0_18] : memref<1x32xf32, #tpu.memory_space<vmem>>, vector<1x32xf32>
    %cst_19 = arith.constant dense<0.000000e+00> : vector<16xf32>
    %34 = vector.multi_reduction <add>, %31, %cst_19 [1] : vector<16x32xf32> to vector<16xf32>
    %35 = vector.shape_cast %34 : vector<16xf32> to vector<16x1xf32>
    %cst_20 = arith.constant 3.200000e+01 : f32
    %36 = vector.broadcast %cst_20 : f32 to vector<16x1xf32>
    %37 = arith.divf %35, %36 : vector<16x1xf32>
    %38 = vector.broadcast %37 : vector<16x1xf32> to vector<16x32xf32>
    %39 = arith.subf %31, %38 : vector<16x32xf32>
    %40 = arith.mulf %39, %39 : vector<16x32xf32>
    %cst_21 = arith.constant dense<0.000000e+00> : vector<16xf32>
    %41 = vector.multi_reduction <add>, %40, %cst_21 [1] : vector<16x32xf32> to vector<16xf32>
    %42 = vector.shape_cast %41 : vector<16xf32> to vector<16x1xf32>
    %cst_22 = arith.constant 3.200000e+01 : f32
    %43 = vector.broadcast %cst_22 : f32 to vector<16x1xf32>
    %44 = arith.divf %42, %43 : vector<16x1xf32>
    %45 = vector.broadcast %37 : vector<16x1xf32> to vector<16x32xf32>
    %46 = arith.subf %31, %45 : vector<16x32xf32>
    %cst_23 = arith.constant 9.99999974E-6 : f32
    %47 = vector.broadcast %cst_23 : f32 to vector<16x1xf32>
    %48 = arith.addf %44, %47 : vector<16x1xf32>
    %49 = math.rsqrt %48 : vector<16x1xf32>
    %50 = vector.broadcast %49 : vector<16x1xf32> to vector<16x32xf32>
    %51 = arith.mulf %46, %50 : vector<16x32xf32>
    %52 = vector.broadcast %32 : vector<1x32xf32> to vector<16x32xf32>
    %53 = arith.mulf %51, %52 : vector<16x32xf32>
    %54 = vector.broadcast %33 : vector<1x32xf32> to vector<16x32xf32>
    %55 = arith.addf %53, %54 : vector<16x32xf32>
    %c0_24 = arith.constant 0 : index
    %c0_25 = arith.constant 0 : index
    %56 = vector.load %arg8[%c0_24, %c0_25] : memref<1x32xf32, #tpu.memory_space<vmem>>, vector<1x32xf32>
    %57 = tpu.concatenate %56, %55 in 0 : vector<1x32xf32>, vector<16x32xf32> -> vector<17x32xf32>
    %c0_26 = arith.constant 0 : index
    %c0_27 = arith.constant 0 : index
    %58 = vector.load %arg9[%c0_26, %c0_27] : memref<17x32xf32, #tpu.memory_space<vmem>>, vector<17x32xf32>
    %59 = arith.addf %57, %58 : vector<17x32xf32>
    %c0_28 = arith.constant 0 : index
    %c0_29 = arith.constant 0 : index
    %c0_30 = arith.constant 0 : index
    %60 = vector.load %arg10[%c0_28, %c0_29, %c0_30] : memref<1x17x32xf32, #tpu.memory_space<vmem>>, vector<1x17x32xf32>
    %61 = vector.shape_cast %60 : vector<1x17x32xf32> to vector<17x32xf32>
    %62 = vector.shape_cast %59 : vector<17x32xf32> to vector<1x17x32xf32>
    tpu.vector_store %arg10[%c0_28, %c0_29, %c0_30], %62 {strides = array<i32>} : memref<1x17x32xf32, #tpu.memory_space<vmem>>, vector<1x17x32xf32>,
    return
  }
  func.func @transform_0(%arg0: i32) -> (i32, i32, i32) {
    %c0_i32 = arith.constant 0 : i32
    %c0_i32_0 = arith.constant 0 : i32
    %c0_i32_1 = arith.constant 0 : i32
    return %arg0, %c0_i32, %c0_i32_0 : i32, i32, i32
  }
  func.func @transform_1(%arg0: i32) -> (i32, i32) {
    %c0_i32 = arith.constant 0 : i32
    %c0_i32_0 = arith.constant 0 : i32
    %c0_i32_1 = arith.constant 0 : i32
    return %c0_i32, %c0_i32_0 : i32, i32
  }
  func.func @transform_2(%arg0: i32) -> (i32, i32) {
    %c0_i32 = arith.constant 0 : i32
    %c0_i32_0 = arith.constant 0 : i32
    %c0_i32_1 = arith.constant 0 : i32
    return %c0_i32, %c0_i32_0 : i32, i32
  }
  func.func @transform_3(%arg0: i32) -> (i32, i32) {
    %c0_i32 = arith.constant 0 : i32
    %c0_i32_0 = arith.constant 0 : i32
    %c0_i32_1 = arith.constant 0 : i32
    return %c0_i32, %c0_i32_0 : i32, i32
  }
  func.func @transform_4(%arg0: i32) -> (i32, i32) {
    %c0_i32 = arith.constant 0 : i32
    %c0_i32_0 = arith.constant 0 : i32
    %c0_i32_1 = arith.constant 0 : i32
    return %c0_i32, %c0_i32_0 : i32, i32
  }
  func.func @transform_5(%arg0: i32) -> (i32, i32) {
    %c0_i32 = arith.constant 0 : i32
    %c0_i32_0 = arith.constant 0 : i32
    %c0_i32_1 = arith.constant 0 : i32
    return %c0_i32, %c0_i32_0 : i32, i32
  }
  func.func @transform_6(%arg0: i32) -> (i32, i32) {
    %c0_i32 = arith.constant 0 : i32
    %c0_i32_0 = arith.constant 0 : i32
    %c0_i32_1 = arith.constant 0 : i32
    return %c0_i32, %c0_i32_0 : i32, i32
  }
  func.func @transform_7(%arg0: i32) -> (i32, i32) {
    %c0_i32 = arith.constant 0 : i32
    %c0_i32_0 = arith.constant 0 : i32
    %c0_i32_1 = arith.constant 0 : i32
    return %c0_i32, %c0_i32_0 : i32, i32
  }
  func.func @transform_8(%arg0: i32) -> (i32, i32) {
    %c0_i32 = arith.constant 0 : i32
    %c0_i32_0 = arith.constant 0 : i32
    %c0_i32_1 = arith.constant 0 : i32
    return %c0_i32, %c0_i32_0 : i32, i32
  }
  func.func @transform_9(%arg0: i32) -> (i32, i32, i32) {
    %c0_i32 = arith.constant 0 : i32
    %c0_i32_0 = arith.constant 0 : i32
    %c0_i32_1 = arith.constant 0 : i32
    return %arg0, %c0_i32, %c0_i32_0 : i32, i32, i32
  }
}

module attributes {stable_mosaic.version = 11 : i64} {
  func.func @encoder_stack_kernel(%arg0: i32, %arg1: memref<34x32xf32, #tpu.memory_space<vmem>>, %arg2: memref<1x1x32xf32, #tpu.memory_space<vmem>>, %arg3: memref<1x1x32xf32, #tpu.memory_space<vmem>>, %arg4: memref<1x32x96xbf16, #tpu.memory_space<vmem>>, %arg5: memref<1x1x96xf32, #tpu.memory_space<vmem>>, %arg6: memref<1x32x32xbf16, #tpu.memory_space<vmem>>, %arg7: memref<1x1x32xf32, #tpu.memory_space<vmem>>, %arg8: memref<1x1x32xf32, #tpu.memory_space<vmem>>, %arg9: memref<1x1x32xf32, #tpu.memory_space<vmem>>, %arg10: memref<1x32x64xbf16, #tpu.memory_space<vmem>>, %arg11: memref<1x1x64xf32, #tpu.memory_space<vmem>>, %arg12: memref<1x64x32xbf16, #tpu.memory_space<vmem>>, %arg13: memref<1x1x32xf32, #tpu.memory_space<vmem>>, %arg14: memref<1x32xf32, #tpu.memory_space<vmem>>, %arg15: memref<1x32xf32, #tpu.memory_space<vmem>>, %arg16: memref<32x128xbf16, #tpu.memory_space<vmem>>, %arg17: memref<1x128xf32, #tpu.memory_space<vmem>>, %arg18: memref<2x128xf32, #tpu.memory_space<vmem>>, %arg19: memref<1x4x2x17x128xf32, #tpu.memory_space<vmem>>, %arg20: memref<34x32xf32, #tpu.memory_space<vmem>>) attributes {dimension_semantics = [#tpu.dimension_semantics<arbitrary>], iteration_bounds = array<i64: 2>, scalar_prefetch = 0 : i64, scratch_operands = 1 : i64, tpu.core_type = #tpu.core_type<tc>, window_params = [{pipeline_mode = #tpu.pipeline_mode<synchronous>, transform_indices = @transform_0, window_bounds = array<i64: 34, 32>}, {transform_indices = @transform_1, window_bounds = array<i64: 1, 1, 32>}, {transform_indices = @transform_2, window_bounds = array<i64: 1, 1, 32>}, {transform_indices = @transform_3, window_bounds = array<i64: 1, 32, 96>}, {transform_indices = @transform_4, window_bounds = array<i64: 1, 1, 96>}, {transform_indices = @transform_5, window_bounds = array<i64: 1, 32, 32>}, {transform_indices = @transform_6, window_bounds = array<i64: 1, 1, 32>}, {transform_indices = @transform_7, window_bounds = array<i64: 1, 1, 32>}, {transform_indices = @transform_8, window_bounds = array<i64: 1, 1, 32>}, {transform_indices = @transform_9, window_bounds = array<i64: 1, 32, 64>}, {transform_indices = @transform_10, window_bounds = array<i64: 1, 1, 64>}, {transform_indices = @transform_11, window_bounds = array<i64: 1, 64, 32>}, {transform_indices = @transform_12, window_bounds = array<i64: 1, 1, 32>}, {pipeline_mode = #tpu.pipeline_mode<synchronous>, transform_indices = @transform_13, window_bounds = array<i64: 1, 32>}, {pipeline_mode = #tpu.pipeline_mode<synchronous>, transform_indices = @transform_14, window_bounds = array<i64: 1, 32>}, {pipeline_mode = #tpu.pipeline_mode<synchronous>, transform_indices = @transform_15, window_bounds = array<i64: 32, 128>}, {pipeline_mode = #tpu.pipeline_mode<synchronous>, transform_indices = @transform_16, window_bounds = array<i64: 1, 128>}, {pipeline_mode = #tpu.pipeline_mode<synchronous>, transform_indices = @transform_17, window_bounds = array<i64: 2, 128>}, {transform_indices = @transform_18, window_bounds = array<i64: 1, 4, 2, 17, 128>}]} {
    %c0_i32 = arith.constant 0 : i32
    %0 = arith.cmpi eq, %arg0, %c0_i32 : i32
    %1 = arith.extui %0 : i1 to i32
    %c0_i32_0 = arith.constant 0 : i32
    %2 = arith.cmpi ne, %1, %c0_i32_0 : i32
    scf.if %2 {
      %c0_111 = arith.constant 0 : index
      %c0_112 = arith.constant 0 : index
      %260 = vector.load %arg1[%c0_111, %c0_112] : memref<34x32xf32, #tpu.memory_space<vmem>>, vector<34x32xf32>
      %c0_113 = arith.constant 0 : index
      %c0_114 = arith.constant 0 : index
      %261 = vector.load %arg20[%c0_113, %c0_114] : memref<34x32xf32, #tpu.memory_space<vmem>>, vector<34x32xf32>
      tpu.vector_store %arg20[%c0_113, %c0_114], %260 {strides = array<i32>} : memref<34x32xf32, #tpu.memory_space<vmem>>, vector<34x32xf32>,
    } else {
    }
    %c0 = arith.constant 0 : index
    %c0_1 = arith.constant 0 : index
    %c0_2 = arith.constant 0 : index
    %3 = vector.load %arg2[%c0, %c0_1, %c0_2] : memref<1x1x32xf32, #tpu.memory_space<vmem>>, vector<1x1x32xf32>
    %4 = vector.shape_cast %3 : vector<1x1x32xf32> to vector<1x32xf32>
    %c0_3 = arith.constant 0 : index
    %c0_4 = arith.constant 0 : index
    %c0_5 = arith.constant 0 : index
    %5 = vector.load %arg3[%c0_3, %c0_4, %c0_5] : memref<1x1x32xf32, #tpu.memory_space<vmem>>, vector<1x1x32xf32>
    %6 = vector.shape_cast %5 : vector<1x1x32xf32> to vector<1x32xf32>
    %c0_6 = arith.constant 0 : index
    %c0_7 = arith.constant 0 : index
    %c0_8 = arith.constant 0 : index
    %7 = vector.load %arg4[%c0_6, %c0_7, %c0_8] : memref<1x32x96xbf16, #tpu.memory_space<vmem>>, vector<1x32x96xbf16>
    %8 = vector.shape_cast %7 : vector<1x32x96xbf16> to vector<32x96xbf16>
    %c0_9 = arith.constant 0 : index
    %c0_10 = arith.constant 0 : index
    %c0_11 = arith.constant 0 : index
    %9 = vector.load %arg5[%c0_9, %c0_10, %c0_11] : memref<1x1x96xf32, #tpu.memory_space<vmem>>, vector<1x1x96xf32>
    %10 = vector.shape_cast %9 : vector<1x1x96xf32> to vector<1x96xf32>
    %c0_12 = arith.constant 0 : index
    %c0_13 = arith.constant 0 : index
    %c0_14 = arith.constant 0 : index
    %11 = vector.load %arg6[%c0_12, %c0_13, %c0_14] : memref<1x32x32xbf16, #tpu.memory_space<vmem>>, vector<1x32x32xbf16>
    %12 = vector.shape_cast %11 : vector<1x32x32xbf16> to vector<32x32xbf16>
    %c0_15 = arith.constant 0 : index
    %c0_16 = arith.constant 0 : index
    %c0_17 = arith.constant 0 : index
    %13 = vector.load %arg7[%c0_15, %c0_16, %c0_17] : memref<1x1x32xf32, #tpu.memory_space<vmem>>, vector<1x1x32xf32>
    %14 = vector.shape_cast %13 : vector<1x1x32xf32> to vector<1x32xf32>
    %c0_18 = arith.constant 0 : index
    %c0_19 = arith.constant 0 : index
    %c0_20 = arith.constant 0 : index
    %15 = vector.load %arg8[%c0_18, %c0_19, %c0_20] : memref<1x1x32xf32, #tpu.memory_space<vmem>>, vector<1x1x32xf32>
    %16 = vector.shape_cast %15 : vector<1x1x32xf32> to vector<1x32xf32>
    %c0_21 = arith.constant 0 : index
    %c0_22 = arith.constant 0 : index
    %c0_23 = arith.constant 0 : index
    %17 = vector.load %arg9[%c0_21, %c0_22, %c0_23] : memref<1x1x32xf32, #tpu.memory_space<vmem>>, vector<1x1x32xf32>
    %18 = vector.shape_cast %17 : vector<1x1x32xf32> to vector<1x32xf32>
    %c0_24 = arith.constant 0 : index
    %c0_25 = arith.constant 0 : index
    %c0_26 = arith.constant 0 : index
    %19 = vector.load %arg10[%c0_24, %c0_25, %c0_26] : memref<1x32x64xbf16, #tpu.memory_space<vmem>>, vector<1x32x64xbf16>
    %20 = vector.shape_cast %19 : vector<1x32x64xbf16> to vector<32x64xbf16>
    %c0_27 = arith.constant 0 : index
    %c0_28 = arith.constant 0 : index
    %c0_29 = arith.constant 0 : index
    %21 = vector.load %arg11[%c0_27, %c0_28, %c0_29] : memref<1x1x64xf32, #tpu.memory_space<vmem>>, vector<1x1x64xf32>
    %22 = vector.shape_cast %21 : vector<1x1x64xf32> to vector<1x64xf32>
    %c0_30 = arith.constant 0 : index
    %c0_31 = arith.constant 0 : index
    %c0_32 = arith.constant 0 : index
    %23 = vector.load %arg12[%c0_30, %c0_31, %c0_32] : memref<1x64x32xbf16, #tpu.memory_space<vmem>>, vector<1x64x32xbf16>
    %24 = vector.shape_cast %23 : vector<1x64x32xbf16> to vector<64x32xbf16>
    %c0_33 = arith.constant 0 : index
    %c0_34 = arith.constant 0 : index
    %c0_35 = arith.constant 0 : index
    %25 = vector.load %arg13[%c0_33, %c0_34, %c0_35] : memref<1x1x32xf32, #tpu.memory_space<vmem>>, vector<1x1x32xf32>
    %26 = vector.shape_cast %25 : vector<1x1x32xf32> to vector<1x32xf32>
    %c0_36 = arith.constant 0 : index
    %c0_37 = arith.constant 0 : index
    %27 = vector.load %arg20[%c0_36, %c0_37] : memref<34x32xf32, #tpu.memory_space<vmem>>, vector<34x32xf32>
    %cst = arith.constant dense<0.000000e+00> : vector<34xf32>
    %28 = vector.multi_reduction <add>, %27, %cst [1] : vector<34x32xf32> to vector<34xf32>
    %29 = vector.shape_cast %28 : vector<34xf32> to vector<34x1xf32>
    %cst_38 = arith.constant 3.200000e+01 : f32
    %30 = vector.broadcast %cst_38 : f32 to vector<34x1xf32>
    %31 = arith.divf %29, %30 : vector<34x1xf32>
    %32 = vector.broadcast %31 : vector<34x1xf32> to vector<34x32xf32>
    %33 = arith.subf %27, %32 : vector<34x32xf32>
    %34 = arith.mulf %33, %33 : vector<34x32xf32>
    %cst_39 = arith.constant dense<0.000000e+00> : vector<34xf32>
    %35 = vector.multi_reduction <add>, %34, %cst_39 [1] : vector<34x32xf32> to vector<34xf32>
    %36 = vector.shape_cast %35 : vector<34xf32> to vector<34x1xf32>
    %cst_40 = arith.constant 3.200000e+01 : f32
    %37 = vector.broadcast %cst_40 : f32 to vector<34x1xf32>
    %38 = arith.divf %36, %37 : vector<34x1xf32>
    %39 = vector.broadcast %31 : vector<34x1xf32> to vector<34x32xf32>
    %40 = arith.subf %27, %39 : vector<34x32xf32>
    %cst_41 = arith.constant 9.99999974E-6 : f32
    %41 = vector.broadcast %cst_41 : f32 to vector<34x1xf32>
    %42 = arith.addf %38, %41 : vector<34x1xf32>
    %43 = math.rsqrt %42 : vector<34x1xf32>
    %44 = vector.broadcast %43 : vector<34x1xf32> to vector<34x32xf32>
    %45 = arith.mulf %40, %44 : vector<34x32xf32>
    %46 = vector.broadcast %4 : vector<1x32xf32> to vector<34x32xf32>
    %47 = arith.mulf %45, %46 : vector<34x32xf32>
    %48 = vector.broadcast %6 : vector<1x32xf32> to vector<34x32xf32>
    %49 = arith.addf %47, %48 : vector<34x32xf32>
    %50 = arith.truncf %49 : vector<34x32xf32> to vector<34x32xbf16>
    %cst_42 = arith.constant dense<0.000000e+00> : vector<34x96xf32>
    %51 = tpu.matmul %50, %8, %cst_42 {dimension_numbers = #tpu.dot_dimension_numbers<[1], [0], [0], [1], [0, 0, 1, 1], [], []>} : vector<34x32xbf16>, vector<32x96xbf16>, vector<34x96xf32> -> vector<34x96xf32>
    %52 = vector.broadcast %10 : vector<1x96xf32> to vector<34x96xf32>
    %53 = arith.addf %51, %52 : vector<34x96xf32>
    %54 = vector.extract_strided_slice %53 {offsets = [0, 0], sizes = [34, 32], strides = [1, 1]} : vector<34x96xf32> to vector<34x32xf32>
    %55 = vector.shape_cast %54 : vector<34x32xf32> to vector<2x17x32xf32>
    %56 = vector.extract_strided_slice %53 {offsets = [0, 32], sizes = [34, 32], strides = [1, 1]} : vector<34x96xf32> to vector<34x32xf32>
    %57 = vector.shape_cast %56 : vector<34x32xf32> to vector<2x17x32xf32>
    %58 = vector.extract_strided_slice %53 {offsets = [0, 64], sizes = [34, 32], strides = [1, 1]} : vector<34x96xf32> to vector<34x32xf32>
    %59 = vector.shape_cast %58 : vector<34x32xf32> to vector<2x17x32xf32>
    %cst_43 = arith.constant 0.000000e+00 : f32
    %60 = vector.broadcast %cst_43 : f32 to vector<2x17x111xf32>
    %cst_44 = arith.constant 0.000000e+00 : f32
    %61 = vector.broadcast %cst_44 : f32 to vector<34x32xf32>
    %62 = vector.extract_strided_slice %55 {offsets = [0, 0, 0], sizes = [2, 17, 8], strides = [1, 1, 1]} : vector<2x17x32xf32> to vector<2x17x8xf32>
    %63 = arith.truncf %62 : vector<2x17x8xf32> to vector<2x17x8xbf16>
    %64 = vector.extract_strided_slice %57 {offsets = [0, 0, 0], sizes = [2, 17, 8], strides = [1, 1, 1]} : vector<2x17x32xf32> to vector<2x17x8xf32>
    %65 = arith.truncf %64 : vector<2x17x8xf32> to vector<2x17x8xbf16>
    %66 = vector.extract_strided_slice %59 {offsets = [0, 0, 0], sizes = [2, 17, 8], strides = [1, 1, 1]} : vector<2x17x32xf32> to vector<2x17x8xf32>
    %67 = arith.truncf %66 : vector<2x17x8xf32> to vector<2x17x8xbf16>
    "tpu.trace_start"() <{level = 10 : i32, message = "bqd,bkd->bqk"}> : () -> ()
    %cst_45 = arith.constant dense<0.000000e+00> : vector<2x17x17xf32>
    %68 = tpu.matmul %63, %65, %cst_45 {dimension_numbers = #tpu.dot_dimension_numbers<[2], [2], [1], [1], [0, 0, 0, 1, 1, 1], [0], [0]>} : vector<2x17x8xbf16>, vector<2x17x8xbf16>, vector<2x17x17xf32> -> vector<2x17x17xf32>
    "tpu.trace_stop"() : () -> ()
    %cst_46 = arith.constant 0.353553385 : f32
    %69 = vector.broadcast %cst_46 : f32 to vector<2x17x17xf32>
    %70 = arith.mulf %68, %69 : vector<2x17x17xf32>
    %cst_47 = arith.constant dense<0xFF800000> : vector<2x17xf32>
    %71 = vector.multi_reduction <maximumf>, %70, %cst_47 [2] : vector<2x17x17xf32> to vector<2x17xf32>
    %72 = vector.shape_cast %71 : vector<2x17xf32> to vector<2x17x1xf32>
    %73 = vector.broadcast %72 : vector<2x17x1xf32> to vector<2x17x17xf32>
    %74 = arith.subf %70, %73 : vector<2x17x17xf32>
    %75 = math.exp %74 : vector<2x17x17xf32>
    %cst_48 = arith.constant dense<0.000000e+00> : vector<2x17xf32>
    %76 = vector.multi_reduction <add>, %75, %cst_48 [2] : vector<2x17x17xf32> to vector<2x17xf32>
    %77 = vector.shape_cast %76 : vector<2x17xf32> to vector<2x17x1xf32>
    %78 = tpu.reciprocal %77 {approx = true} : vector<2x17x1xf32> -> vector<2x17x1xf32>
    %79 = vector.broadcast %78 : vector<2x17x1xf32> to vector<2x17x17xf32>
    %80 = arith.mulf %75, %79 : vector<2x17x17xf32>
    %81 = tpu.concatenate %80, %60 in 2 : vector<2x17x17xf32>, vector<2x17x111xf32> -> vector<2x17x128xf32>
    %c0_49 = arith.constant 0 : index
    %c0_50 = arith.constant 0 : index
    %c0_51 = arith.constant 0 : index
    %c0_52 = arith.constant 0 : index
    %c0_53 = arith.constant 0 : index
    %82 = vector.load %arg19[%c0_49, %c0_50, %c0_51, %c0_52, %c0_53] : memref<1x4x2x17x128xf32, #tpu.memory_space<vmem>>, vector<1x1x2x17x128xf32>
    %83 = vector.shape_cast %82 : vector<1x1x2x17x128xf32> to vector<2x17x128xf32>
    %84 = vector.shape_cast %81 : vector<2x17x128xf32> to vector<1x1x2x17x128xf32>
    tpu.vector_store %arg19[%c0_49, %c0_50, %c0_51, %c0_52, %c0_53], %84 {strides = array<i32>} : memref<1x4x2x17x128xf32, #tpu.memory_space<vmem>>, vector<1x1x2x17x128xf32>,
    %85 = arith.truncf %80 : vector<2x17x17xf32> to vector<2x17x17xbf16>
    "tpu.trace_start"() <{level = 10 : i32, message = "bqk,bkd->bqd"}> : () -> ()
    %cst_54 = arith.constant dense<0.000000e+00> : vector<2x17x8xf32>
    %86 = tpu.matmul %85, %67, %cst_54 {dimension_numbers = #tpu.dot_dimension_numbers<[2], [1], [1], [2], [0, 0, 0, 1, 1, 2], [0], [0]>} : vector<2x17x17xbf16>, vector<2x17x8xbf16>, vector<2x17x8xf32> -> vector<2x17x8xf32>
    "tpu.trace_stop"() : () -> ()
    %87 = vector.shape_cast %86 : vector<2x17x8xf32> to vector<34x8xf32>
    %88 = arith.truncf %87 : vector<34x8xf32> to vector<34x8xbf16>
    %89 = vector.extract_strided_slice %12 {offsets = [0, 0], sizes = [8, 32], strides = [1, 1]} : vector<32x32xbf16> to vector<8x32xbf16>
    %cst_55 = arith.constant dense<0.000000e+00> : vector<34x32xf32>
    %90 = tpu.matmul %88, %89, %cst_55 {dimension_numbers = #tpu.dot_dimension_numbers<[1], [0], [0], [1], [0, 0, 1, 1], [], []>} : vector<34x8xbf16>, vector<8x32xbf16>, vector<34x32xf32> -> vector<34x32xf32>
    %91 = arith.addf %61, %90 : vector<34x32xf32>
    %92 = vector.extract_strided_slice %55 {offsets = [0, 0, 8], sizes = [2, 17, 8], strides = [1, 1, 1]} : vector<2x17x32xf32> to vector<2x17x8xf32>
    %93 = arith.truncf %92 : vector<2x17x8xf32> to vector<2x17x8xbf16>
    %94 = vector.extract_strided_slice %57 {offsets = [0, 0, 8], sizes = [2, 17, 8], strides = [1, 1, 1]} : vector<2x17x32xf32> to vector<2x17x8xf32>
    %95 = arith.truncf %94 : vector<2x17x8xf32> to vector<2x17x8xbf16>
    %96 = vector.extract_strided_slice %59 {offsets = [0, 0, 8], sizes = [2, 17, 8], strides = [1, 1, 1]} : vector<2x17x32xf32> to vector<2x17x8xf32>
    %97 = arith.truncf %96 : vector<2x17x8xf32> to vector<2x17x8xbf16>
    "tpu.trace_start"() <{level = 10 : i32, message = "bqd,bkd->bqk"}> : () -> ()
    %cst_56 = arith.constant dense<0.000000e+00> : vector<2x17x17xf32>
    %98 = tpu.matmul %93, %95, %cst_56 {dimension_numbers = #tpu.dot_dimension_numbers<[2], [2], [1], [1], [0, 0, 0, 1, 1, 1], [0], [0]>} : vector<2x17x8xbf16>, vector<2x17x8xbf16>, vector<2x17x17xf32> -> vector<2x17x17xf32>
    "tpu.trace_stop"() : () -> ()
    %cst_57 = arith.constant 0.353553385 : f32
    %99 = vector.broadcast %cst_57 : f32 to vector<2x17x17xf32>
    %100 = arith.mulf %98, %99 : vector<2x17x17xf32>
    %cst_58 = arith.constant dense<0xFF800000> : vector<2x17xf32>
    %101 = vector.multi_reduction <maximumf>, %100, %cst_58 [2] : vector<2x17x17xf32> to vector<2x17xf32>
    %102 = vector.shape_cast %101 : vector<2x17xf32> to vector<2x17x1xf32>
    %103 = vector.broadcast %102 : vector<2x17x1xf32> to vector<2x17x17xf32>
    %104 = arith.subf %100, %103 : vector<2x17x17xf32>
    %105 = math.exp %104 : vector<2x17x17xf32>
    %cst_59 = arith.constant dense<0.000000e+00> : vector<2x17xf32>
    %106 = vector.multi_reduction <add>, %105, %cst_59 [2] : vector<2x17x17xf32> to vector<2x17xf32>
    %107 = vector.shape_cast %106 : vector<2x17xf32> to vector<2x17x1xf32>
    %108 = tpu.reciprocal %107 {approx = true} : vector<2x17x1xf32> -> vector<2x17x1xf32>
    %109 = vector.broadcast %108 : vector<2x17x1xf32> to vector<2x17x17xf32>
    %110 = arith.mulf %105, %109 : vector<2x17x17xf32>
    %111 = tpu.concatenate %110, %60 in 2 : vector<2x17x17xf32>, vector<2x17x111xf32> -> vector<2x17x128xf32>
    %c0_60 = arith.constant 0 : index
    %c1 = arith.constant 1 : index
    %c0_61 = arith.constant 0 : index
    %c0_62 = arith.constant 0 : index
    %c0_63 = arith.constant 0 : index
    %112 = vector.load %arg19[%c0_60, %c1, %c0_61, %c0_62, %c0_63] : memref<1x4x2x17x128xf32, #tpu.memory_space<vmem>>, vector<1x1x2x17x128xf32>
    %113 = vector.shape_cast %112 : vector<1x1x2x17x128xf32> to vector<2x17x128xf32>
    %114 = vector.shape_cast %111 : vector<2x17x128xf32> to vector<1x1x2x17x128xf32>
    tpu.vector_store %arg19[%c0_60, %c1, %c0_61, %c0_62, %c0_63], %114 {strides = array<i32>} : memref<1x4x2x17x128xf32, #tpu.memory_space<vmem>>, vector<1x1x2x17x128xf32>,
    %115 = arith.truncf %110 : vector<2x17x17xf32> to vector<2x17x17xbf16>
    "tpu.trace_start"() <{level = 10 : i32, message = "bqk,bkd->bqd"}> : () -> ()
    %cst_64 = arith.constant dense<0.000000e+00> : vector<2x17x8xf32>
    %116 = tpu.matmul %115, %97, %cst_64 {dimension_numbers = #tpu.dot_dimension_numbers<[2], [1], [1], [2], [0, 0, 0, 1, 1, 2], [0], [0]>} : vector<2x17x17xbf16>, vector<2x17x8xbf16>, vector<2x17x8xf32> -> vector<2x17x8xf32>
    "tpu.trace_stop"() : () -> ()
    %117 = vector.shape_cast %116 : vector<2x17x8xf32> to vector<34x8xf32>
    %118 = arith.truncf %117 : vector<34x8xf32> to vector<34x8xbf16>
    %119 = vector.extract_strided_slice %12 {offsets = [8, 0], sizes = [8, 32], strides = [1, 1]} : vector<32x32xbf16> to vector<8x32xbf16>
    %cst_65 = arith.constant dense<0.000000e+00> : vector<34x32xf32>
    %120 = tpu.matmul %118, %119, %cst_65 {dimension_numbers = #tpu.dot_dimension_numbers<[1], [0], [0], [1], [0, 0, 1, 1], [], []>} : vector<34x8xbf16>, vector<8x32xbf16>, vector<34x32xf32> -> vector<34x32xf32>
    %121 = arith.addf %91, %120 : vector<34x32xf32>
    %122 = vector.extract_strided_slice %55 {offsets = [0, 0, 16], sizes = [2, 17, 8], strides = [1, 1, 1]} : vector<2x17x32xf32> to vector<2x17x8xf32>
    %123 = arith.truncf %122 : vector<2x17x8xf32> to vector<2x17x8xbf16>
    %124 = vector.extract_strided_slice %57 {offsets = [0, 0, 16], sizes = [2, 17, 8], strides = [1, 1, 1]} : vector<2x17x32xf32> to vector<2x17x8xf32>
    %125 = arith.truncf %124 : vector<2x17x8xf32> to vector<2x17x8xbf16>
    %126 = vector.extract_strided_slice %59 {offsets = [0, 0, 16], sizes = [2, 17, 8], strides = [1, 1, 1]} : vector<2x17x32xf32> to vector<2x17x8xf32>
    %127 = arith.truncf %126 : vector<2x17x8xf32> to vector<2x17x8xbf16>
    "tpu.trace_start"() <{level = 10 : i32, message = "bqd,bkd->bqk"}> : () -> ()
    %cst_66 = arith.constant dense<0.000000e+00> : vector<2x17x17xf32>
    %128 = tpu.matmul %123, %125, %cst_66 {dimension_numbers = #tpu.dot_dimension_numbers<[2], [2], [1], [1], [0, 0, 0, 1, 1, 1], [0], [0]>} : vector<2x17x8xbf16>, vector<2x17x8xbf16>, vector<2x17x17xf32> -> vector<2x17x17xf32>
    "tpu.trace_stop"() : () -> ()
    %cst_67 = arith.constant 0.353553385 : f32
    %129 = vector.broadcast %cst_67 : f32 to vector<2x17x17xf32>
    %130 = arith.mulf %128, %129 : vector<2x17x17xf32>
    %cst_68 = arith.constant dense<0xFF800000> : vector<2x17xf32>
    %131 = vector.multi_reduction <maximumf>, %130, %cst_68 [2] : vector<2x17x17xf32> to vector<2x17xf32>
    %132 = vector.shape_cast %131 : vector<2x17xf32> to vector<2x17x1xf32>
    %133 = vector.broadcast %132 : vector<2x17x1xf32> to vector<2x17x17xf32>
    %134 = arith.subf %130, %133 : vector<2x17x17xf32>
    %135 = math.exp %134 : vector<2x17x17xf32>
    %cst_69 = arith.constant dense<0.000000e+00> : vector<2x17xf32>
    %136 = vector.multi_reduction <add>, %135, %cst_69 [2] : vector<2x17x17xf32> to vector<2x17xf32>
    %137 = vector.shape_cast %136 : vector<2x17xf32> to vector<2x17x1xf32>
    %138 = tpu.reciprocal %137 {approx = true} : vector<2x17x1xf32> -> vector<2x17x1xf32>
    %139 = vector.broadcast %138 : vector<2x17x1xf32> to vector<2x17x17xf32>
    %140 = arith.mulf %135, %139 : vector<2x17x17xf32>
    %141 = tpu.concatenate %140, %60 in 2 : vector<2x17x17xf32>, vector<2x17x111xf32> -> vector<2x17x128xf32>
    %c0_70 = arith.constant 0 : index
    %c2 = arith.constant 2 : index
    %c0_71 = arith.constant 0 : index
    %c0_72 = arith.constant 0 : index
    %c0_73 = arith.constant 0 : index
    %142 = vector.load %arg19[%c0_70, %c2, %c0_71, %c0_72, %c0_73] : memref<1x4x2x17x128xf32, #tpu.memory_space<vmem>>, vector<1x1x2x17x128xf32>
    %143 = vector.shape_cast %142 : vector<1x1x2x17x128xf32> to vector<2x17x128xf32>
    %144 = vector.shape_cast %141 : vector<2x17x128xf32> to vector<1x1x2x17x128xf32>
    tpu.vector_store %arg19[%c0_70, %c2, %c0_71, %c0_72, %c0_73], %144 {strides = array<i32>} : memref<1x4x2x17x128xf32, #tpu.memory_space<vmem>>, vector<1x1x2x17x128xf32>,
    %145 = arith.truncf %140 : vector<2x17x17xf32> to vector<2x17x17xbf16>
    "tpu.trace_start"() <{level = 10 : i32, message = "bqk,bkd->bqd"}> : () -> ()
    %cst_74 = arith.constant dense<0.000000e+00> : vector<2x17x8xf32>
    %146 = tpu.matmul %145, %127, %cst_74 {dimension_numbers = #tpu.dot_dimension_numbers<[2], [1], [1], [2], [0, 0, 0, 1, 1, 2], [0], [0]>} : vector<2x17x17xbf16>, vector<2x17x8xbf16>, vector<2x17x8xf32> -> vector<2x17x8xf32>
    "tpu.trace_stop"() : () -> ()
    %147 = vector.shape_cast %146 : vector<2x17x8xf32> to vector<34x8xf32>
    %148 = arith.truncf %147 : vector<34x8xf32> to vector<34x8xbf16>
    %149 = vector.extract_strided_slice %12 {offsets = [16, 0], sizes = [8, 32], strides = [1, 1]} : vector<32x32xbf16> to vector<8x32xbf16>
    %cst_75 = arith.constant dense<0.000000e+00> : vector<34x32xf32>
    %150 = tpu.matmul %148, %149, %cst_75 {dimension_numbers = #tpu.dot_dimension_numbers<[1], [0], [0], [1], [0, 0, 1, 1], [], []>} : vector<34x8xbf16>, vector<8x32xbf16>, vector<34x32xf32> -> vector<34x32xf32>
    %151 = arith.addf %121, %150 : vector<34x32xf32>
    %152 = vector.extract_strided_slice %55 {offsets = [0, 0, 24], sizes = [2, 17, 8], strides = [1, 1, 1]} : vector<2x17x32xf32> to vector<2x17x8xf32>
    %153 = arith.truncf %152 : vector<2x17x8xf32> to vector<2x17x8xbf16>
    %154 = vector.extract_strided_slice %57 {offsets = [0, 0, 24], sizes = [2, 17, 8], strides = [1, 1, 1]} : vector<2x17x32xf32> to vector<2x17x8xf32>
    %155 = arith.truncf %154 : vector<2x17x8xf32> to vector<2x17x8xbf16>
    %156 = vector.extract_strided_slice %59 {offsets = [0, 0, 24], sizes = [2, 17, 8], strides = [1, 1, 1]} : vector<2x17x32xf32> to vector<2x17x8xf32>
    %157 = arith.truncf %156 : vector<2x17x8xf32> to vector<2x17x8xbf16>
    "tpu.trace_start"() <{level = 10 : i32, message = "bqd,bkd->bqk"}> : () -> ()
    %cst_76 = arith.constant dense<0.000000e+00> : vector<2x17x17xf32>
    %158 = tpu.matmul %153, %155, %cst_76 {dimension_numbers = #tpu.dot_dimension_numbers<[2], [2], [1], [1], [0, 0, 0, 1, 1, 1], [0], [0]>} : vector<2x17x8xbf16>, vector<2x17x8xbf16>, vector<2x17x17xf32> -> vector<2x17x17xf32>
    "tpu.trace_stop"() : () -> ()
    %cst_77 = arith.constant 0.353553385 : f32
    %159 = vector.broadcast %cst_77 : f32 to vector<2x17x17xf32>
    %160 = arith.mulf %158, %159 : vector<2x17x17xf32>
    %cst_78 = arith.constant dense<0xFF800000> : vector<2x17xf32>
    %161 = vector.multi_reduction <maximumf>, %160, %cst_78 [2] : vector<2x17x17xf32> to vector<2x17xf32>
    %162 = vector.shape_cast %161 : vector<2x17xf32> to vector<2x17x1xf32>
    %163 = vector.broadcast %162 : vector<2x17x1xf32> to vector<2x17x17xf32>
    %164 = arith.subf %160, %163 : vector<2x17x17xf32>
    %165 = math.exp %164 : vector<2x17x17xf32>
    %cst_79 = arith.constant dense<0.000000e+00> : vector<2x17xf32>
    %166 = vector.multi_reduction <add>, %165, %cst_79 [2] : vector<2x17x17xf32> to vector<2x17xf32>
    %167 = vector.shape_cast %166 : vector<2x17xf32> to vector<2x17x1xf32>
    %168 = tpu.reciprocal %167 {approx = true} : vector<2x17x1xf32> -> vector<2x17x1xf32>
    %169 = vector.broadcast %168 : vector<2x17x1xf32> to vector<2x17x17xf32>
    %170 = arith.mulf %165, %169 : vector<2x17x17xf32>
    %171 = tpu.concatenate %170, %60 in 2 : vector<2x17x17xf32>, vector<2x17x111xf32> -> vector<2x17x128xf32>
    %c0_80 = arith.constant 0 : index
    %c3 = arith.constant 3 : index
    %c0_81 = arith.constant 0 : index
    %c0_82 = arith.constant 0 : index
    %c0_83 = arith.constant 0 : index
    %172 = vector.load %arg19[%c0_80, %c3, %c0_81, %c0_82, %c0_83] : memref<1x4x2x17x128xf32, #tpu.memory_space<vmem>>, vector<1x1x2x17x128xf32>
    %173 = vector.shape_cast %172 : vector<1x1x2x17x128xf32> to vector<2x17x128xf32>
    %174 = vector.shape_cast %171 : vector<2x17x128xf32> to vector<1x1x2x17x128xf32>
    tpu.vector_store %arg19[%c0_80, %c3, %c0_81, %c0_82, %c0_83], %174 {strides = array<i32>} : memref<1x4x2x17x128xf32, #tpu.memory_space<vmem>>, vector<1x1x2x17x128xf32>,
    %175 = arith.truncf %170 : vector<2x17x17xf32> to vector<2x17x17xbf16>
    "tpu.trace_start"() <{level = 10 : i32, message = "bqk,bkd->bqd"}> : () -> ()
    %cst_84 = arith.constant dense<0.000000e+00> : vector<2x17x8xf32>
    %176 = tpu.matmul %175, %157, %cst_84 {dimension_numbers = #tpu.dot_dimension_numbers<[2], [1], [1], [2], [0, 0, 0, 1, 1, 2], [0], [0]>} : vector<2x17x17xbf16>, vector<2x17x8xbf16>, vector<2x17x8xf32> -> vector<2x17x8xf32>
    "tpu.trace_stop"() : () -> ()
    %177 = vector.shape_cast %176 : vector<2x17x8xf32> to vector<34x8xf32>
    %178 = arith.truncf %177 : vector<34x8xf32> to vector<34x8xbf16>
    %179 = vector.extract_strided_slice %12 {offsets = [24, 0], sizes = [8, 32], strides = [1, 1]} : vector<32x32xbf16> to vector<8x32xbf16>
    %cst_85 = arith.constant dense<0.000000e+00> : vector<34x32xf32>
    %180 = tpu.matmul %178, %179, %cst_85 {dimension_numbers = #tpu.dot_dimension_numbers<[1], [0], [0], [1], [0, 0, 1, 1], [], []>} : vector<34x8xbf16>, vector<8x32xbf16>, vector<34x32xf32> -> vector<34x32xf32>
    %181 = arith.addf %151, %180 : vector<34x32xf32>
    %182 = arith.addf %27, %181 : vector<34x32xf32>
    %183 = vector.broadcast %14 : vector<1x32xf32> to vector<34x32xf32>
    %184 = arith.addf %182, %183 : vector<34x32xf32>
    %cst_86 = arith.constant dense<0.000000e+00> : vector<34xf32>
    %185 = vector.multi_reduction <add>, %184, %cst_86 [1] : vector<34x32xf32> to vector<34xf32>
    %186 = vector.shape_cast %185 : vector<34xf32> to vector<34x1xf32>
    %cst_87 = arith.constant 3.200000e+01 : f32
    %187 = vector.broadcast %cst_87 : f32 to vector<34x1xf32>
    %188 = arith.divf %186, %187 : vector<34x1xf32>
    %189 = vector.broadcast %188 : vector<34x1xf32> to vector<34x32xf32>
    %190 = arith.subf %184, %189 : vector<34x32xf32>
    %191 = arith.mulf %190, %190 : vector<34x32xf32>
    %cst_88 = arith.constant dense<0.000000e+00> : vector<34xf32>
    %192 = vector.multi_reduction <add>, %191, %cst_88 [1] : vector<34x32xf32> to vector<34xf32>
    %193 = vector.shape_cast %192 : vector<34xf32> to vector<34x1xf32>
    %cst_89 = arith.constant 3.200000e+01 : f32
    %194 = vector.broadcast %cst_89 : f32 to vector<34x1xf32>
    %195 = arith.divf %193, %194 : vector<34x1xf32>
    %196 = vector.broadcast %188 : vector<34x1xf32> to vector<34x32xf32>
    %197 = arith.subf %184, %196 : vector<34x32xf32>
    %cst_90 = arith.constant 9.99999974E-6 : f32
    %198 = vector.broadcast %cst_90 : f32 to vector<34x1xf32>
    %199 = arith.addf %195, %198 : vector<34x1xf32>
    %200 = math.rsqrt %199 : vector<34x1xf32>
    %201 = vector.broadcast %200 : vector<34x1xf32> to vector<34x32xf32>
    %202 = arith.mulf %197, %201 : vector<34x32xf32>
    %203 = vector.broadcast %16 : vector<1x32xf32> to vector<34x32xf32>
    %204 = arith.mulf %202, %203 : vector<34x32xf32>
    %205 = vector.broadcast %18 : vector<1x32xf32> to vector<34x32xf32>
    %206 = arith.addf %204, %205 : vector<34x32xf32>
    %207 = arith.truncf %206 : vector<34x32xf32> to vector<34x32xbf16>
    %cst_91 = arith.constant dense<0.000000e+00> : vector<34x64xf32>
    %208 = tpu.matmul %207, %20, %cst_91 {dimension_numbers = #tpu.dot_dimension_numbers<[1], [0], [0], [1], [0, 0, 1, 1], [], []>} : vector<34x32xbf16>, vector<32x64xbf16>, vector<34x64xf32> -> vector<34x64xf32>
    %209 = vector.broadcast %22 : vector<1x64xf32> to vector<34x64xf32>
    %210 = arith.addf %208, %209 : vector<34x64xf32>
    %cst_92 = arith.constant 5.000000e-01 : f32
    %211 = vector.broadcast %cst_92 : f32 to vector<34x64xf32>
    %212 = arith.mulf %211, %210 : vector<34x64xf32>
    %cst_93 = arith.constant 0.707106769 : f32
    %213 = vector.broadcast %cst_93 : f32 to vector<34x64xf32>
    %214 = arith.mulf %210, %213 : vector<34x64xf32>
    %cst_94 = arith.constant 0.000000e+00 : f32
    %215 = vector.broadcast %cst_94 : f32 to vector<34x64xf32>
    %216 = arith.cmpf oge, %214, %215 : vector<34x64xf32>
    %cst_95 = arith.constant 1.000000e+00 : f32
    %cst_96 = arith.constant -1.000000e+00 : f32
    %217 = vector.broadcast %cst_95 : f32 to vector<34x64xf32>
    %218 = vector.broadcast %cst_96 : f32 to vector<34x64xf32>
    %219 = arith.select %216, %217, %218 : vector<34x64xi1>, vector<34x64xf32>
    %220 = math.absf %214 : vector<34x64xf32>
    %cst_97 = arith.constant 0.327591091 : f32
    %221 = vector.broadcast %cst_97 : f32 to vector<34x64xf32>
    %222 = arith.mulf %221, %220 : vector<34x64xf32>
    %cst_98 = arith.constant 1.000000e+00 : f32
    %223 = vector.broadcast %cst_98 : f32 to vector<34x64xf32>
    %224 = arith.addf %223, %222 : vector<34x64xf32>
    %225 = tpu.reciprocal %224 {approx = true} : vector<34x64xf32> -> vector<34x64xf32>
    %cst_99 = arith.constant 1.06140542 : f32
    %226 = vector.broadcast %cst_99 : f32 to vector<34x64xf32>
    %227 = arith.mulf %226, %225 : vector<34x64xf32>
    %cst_100 = arith.constant -1.45315206 : f32
    %228 = vector.broadcast %cst_100 : f32 to vector<34x64xf32>
    %229 = arith.addf %227, %228 : vector<34x64xf32>
    %230 = arith.mulf %229, %225 : vector<34x64xf32>
    %cst_101 = arith.constant 1.42141378 : f32
    %231 = vector.broadcast %cst_101 : f32 to vector<34x64xf32>
    %232 = arith.addf %230, %231 : vector<34x64xf32>
    %233 = arith.mulf %232, %225 : vector<34x64xf32>
    %cst_102 = arith.constant -0.284496725 : f32
    %234 = vector.broadcast %cst_102 : f32 to vector<34x64xf32>
    %235 = arith.addf %233, %234 : vector<34x64xf32>
    %236 = arith.mulf %235, %225 : vector<34x64xf32>
    %cst_103 = arith.constant 0.254829586 : f32
    %237 = vector.broadcast %cst_103 : f32 to vector<34x64xf32>
    %238 = arith.addf %236, %237 : vector<34x64xf32>
    %239 = arith.mulf %238, %225 : vector<34x64xf32>
    %cst_104 = arith.constant 0.000000e+00 : f32
    %240 = vector.broadcast %cst_104 : f32 to vector<34x64xf32>
    %241 = arith.subf %240, %220 : vector<34x64xf32>
    %242 = arith.mulf %241, %220 : vector<34x64xf32>
    %243 = math.exp %242 : vector<34x64xf32>
    %244 = arith.mulf %239, %243 : vector<34x64xf32>
    %cst_105 = arith.constant 1.000000e+00 : f32
    %245 = vector.broadcast %cst_105 : f32 to vector<34x64xf32>
    %246 = arith.subf %245, %244 : vector<34x64xf32>
    %247 = arith.mulf %219, %246 : vector<34x64xf32>
    %cst_106 = arith.constant 1.000000e+00 : f32
    %248 = vector.broadcast %cst_106 : f32 to vector<34x64xf32>
    %249 = arith.addf %248, %247 : vector<34x64xf32>
    %250 = arith.mulf %212, %249 : vector<34x64xf32>
    %251 = arith.truncf %250 : vector<34x64xf32> to vector<34x64xbf16>
    %cst_107 = arith.constant dense<0.000000e+00> : vector<34x32xf32>
    %252 = tpu.matmul %251, %24, %cst_107 {dimension_numbers = #tpu.dot_dimension_numbers<[1], [0], [0], [1], [0, 0, 1, 1], [], []>} : vector<34x64xbf16>, vector<64x32xbf16>, vector<34x32xf32> -> vector<34x32xf32>
    %253 = vector.broadcast %26 : vector<1x32xf32> to vector<34x32xf32>
    %254 = arith.addf %252, %253 : vector<34x32xf32>
    %255 = arith.addf %184, %254 : vector<34x32xf32>
    %c0_108 = arith.constant 0 : index
    %c0_109 = arith.constant 0 : index
    %256 = vector.load %arg20[%c0_108, %c0_109] : memref<34x32xf32, #tpu.memory_space<vmem>>, vector<34x32xf32>
    tpu.vector_store %arg20[%c0_108, %c0_109], %255 {strides = array<i32>} : memref<34x32xf32, #tpu.memory_space<vmem>>, vector<34x32xf32>,
    %c1_i32 = arith.constant 1 : i32
    %257 = arith.cmpi eq, %arg0, %c1_i32 : i32
    %258 = arith.extui %257 : i1 to i32
    %c0_i32_110 = arith.constant 0 : i32
    %259 = arith.cmpi ne, %258, %c0_i32_110 : i32
    scf.if %259 {
      %260 = vector.shape_cast %255 : vector<34x32xf32> to vector<2x17x32xf32>
      %261 = vector.extract_strided_slice %260 {offsets = [0, 0, 0], sizes = [2, 1, 32], strides = [1, 1, 1]} : vector<2x17x32xf32> to vector<2x1x32xf32>
      %262 = vector.shape_cast %261 : vector<2x1x32xf32> to vector<2x32xf32>
      %c0_111 = arith.constant 0 : index
      %c0_112 = arith.constant 0 : index
      %263 = vector.load %arg14[%c0_111, %c0_112] : memref<1x32xf32, #tpu.memory_space<vmem>>, vector<1x32xf32>
      %c0_113 = arith.constant 0 : index
      %c0_114 = arith.constant 0 : index
      %264 = vector.load %arg15[%c0_113, %c0_114] : memref<1x32xf32, #tpu.memory_space<vmem>>, vector<1x32xf32>
      %cst_115 = arith.constant dense<0.000000e+00> : vector<2xf32>
      %265 = vector.multi_reduction <add>, %262, %cst_115 [1] : vector<2x32xf32> to vector<2xf32>
      %266 = vector.shape_cast %265 : vector<2xf32> to vector<2x1xf32>
      %cst_116 = arith.constant 3.200000e+01 : f32
      %267 = vector.broadcast %cst_116 : f32 to vector<2x1xf32>
      %268 = arith.divf %266, %267 : vector<2x1xf32>
      %269 = vector.broadcast %268 : vector<2x1xf32> to vector<2x32xf32>
      %270 = arith.subf %262, %269 : vector<2x32xf32>
      %271 = arith.mulf %270, %270 : vector<2x32xf32>
      %cst_117 = arith.constant dense<0.000000e+00> : vector<2xf32>
      %272 = vector.multi_reduction <add>, %271, %cst_117 [1] : vector<2x32xf32> to vector<2xf32>
      %273 = vector.shape_cast %272 : vector<2xf32> to vector<2x1xf32>
      %cst_118 = arith.constant 3.200000e+01 : f32
      %274 = vector.broadcast %cst_118 : f32 to vector<2x1xf32>
      %275 = arith.divf %273, %274 : vector<2x1xf32>
      %276 = vector.broadcast %268 : vector<2x1xf32> to vector<2x32xf32>
      %277 = arith.subf %262, %276 : vector<2x32xf32>
      %cst_119 = arith.constant 9.99999974E-6 : f32
      %278 = vector.broadcast %cst_119 : f32 to vector<2x1xf32>
      %279 = arith.addf %275, %278 : vector<2x1xf32>
      %280 = math.rsqrt %279 : vector<2x1xf32>
      %281 = vector.broadcast %280 : vector<2x1xf32> to vector<2x32xf32>
      %282 = arith.mulf %277, %281 : vector<2x32xf32>
      %283 = vector.broadcast %263 : vector<1x32xf32> to vector<2x32xf32>
      %284 = arith.mulf %282, %283 : vector<2x32xf32>
      %285 = vector.broadcast %264 : vector<1x32xf32> to vector<2x32xf32>
      %286 = arith.addf %284, %285 : vector<2x32xf32>
      %287 = arith.truncf %286 : vector<2x32xf32> to vector<2x32xbf16>
      %c0_120 = arith.constant 0 : index
      %c0_121 = arith.constant 0 : index
      %288 = vector.load %arg16[%c0_120, %c0_121] : memref<32x128xbf16, #tpu.memory_space<vmem>>, vector<32x128xbf16>
      %cst_122 = arith.constant dense<0.000000e+00> : vector<2x128xf32>
      %289 = tpu.matmul %287, %288, %cst_122 {dimension_numbers = #tpu.dot_dimension_numbers<[1], [0], [0], [1], [0, 0, 1, 1], [], []>} : vector<2x32xbf16>, vector<32x128xbf16>, vector<2x128xf32> -> vector<2x128xf32>
      %c0_123 = arith.constant 0 : index
      %c0_124 = arith.constant 0 : index
      %290 = vector.load %arg17[%c0_123, %c0_124] : memref<1x128xf32, #tpu.memory_space<vmem>>, vector<1x128xf32>
      %291 = vector.broadcast %290 : vector<1x128xf32> to vector<2x128xf32>
      %292 = arith.addf %289, %291 : vector<2x128xf32>
      %c0_125 = arith.constant 0 : index
      %c0_126 = arith.constant 0 : index
      %293 = vector.load %arg18[%c0_125, %c0_126] : memref<2x128xf32, #tpu.memory_space<vmem>>, vector<2x128xf32>
      tpu.vector_store %arg18[%c0_125, %c0_126], %292 {strides = array<i32>} : memref<2x128xf32, #tpu.memory_space<vmem>>, vector<2x128xf32>,
    } else {
    }
    return
  }
  func.func @transform_0(%arg0: i32) -> (i32, i32) {
    %c0_i32 = arith.constant 0 : i32
    %c0_i32_0 = arith.constant 0 : i32
    %c0_i32_1 = arith.constant 0 : i32
    return %c0_i32, %c0_i32_0 : i32, i32
  }
  func.func @transform_1(%arg0: i32) -> (i32, i32, i32) {
    %c0_i32 = arith.constant 0 : i32
    %c0_i32_0 = arith.constant 0 : i32
    %c0_i32_1 = arith.constant 0 : i32
    return %arg0, %c0_i32, %c0_i32_0 : i32, i32, i32
  }
  func.func @transform_2(%arg0: i32) -> (i32, i32, i32) {
    %c0_i32 = arith.constant 0 : i32
    %c0_i32_0 = arith.constant 0 : i32
    %c0_i32_1 = arith.constant 0 : i32
    return %arg0, %c0_i32, %c0_i32_0 : i32, i32, i32
  }
  func.func @transform_3(%arg0: i32) -> (i32, i32, i32) {
    %c0_i32 = arith.constant 0 : i32
    %c0_i32_0 = arith.constant 0 : i32
    %c0_i32_1 = arith.constant 0 : i32
    return %arg0, %c0_i32, %c0_i32_0 : i32, i32, i32
  }
  func.func @transform_4(%arg0: i32) -> (i32, i32, i32) {
    %c0_i32 = arith.constant 0 : i32
    %c0_i32_0 = arith.constant 0 : i32
    %c0_i32_1 = arith.constant 0 : i32
    return %arg0, %c0_i32, %c0_i32_0 : i32, i32, i32
  }
  func.func @transform_5(%arg0: i32) -> (i32, i32, i32) {
    %c0_i32 = arith.constant 0 : i32
    %c0_i32_0 = arith.constant 0 : i32
    %c0_i32_1 = arith.constant 0 : i32
    return %arg0, %c0_i32, %c0_i32_0 : i32, i32, i32
  }
  func.func @transform_6(%arg0: i32) -> (i32, i32, i32) {
    %c0_i32 = arith.constant 0 : i32
    %c0_i32_0 = arith.constant 0 : i32
    %c0_i32_1 = arith.constant 0 : i32
    return %arg0, %c0_i32, %c0_i32_0 : i32, i32, i32
  }
  func.func @transform_7(%arg0: i32) -> (i32, i32, i32) {
    %c0_i32 = arith.constant 0 : i32
    %c0_i32_0 = arith.constant 0 : i32
    %c0_i32_1 = arith.constant 0 : i32
    return %arg0, %c0_i32, %c0_i32_0 : i32, i32, i32
  }
  func.func @transform_8(%arg0: i32) -> (i32, i32, i32) {
    %c0_i32 = arith.constant 0 : i32
    %c0_i32_0 = arith.constant 0 : i32
    %c0_i32_1 = arith.constant 0 : i32
    return %arg0, %c0_i32, %c0_i32_0 : i32, i32, i32
  }
  func.func @transform_9(%arg0: i32) -> (i32, i32, i32) {
    %c0_i32 = arith.constant 0 : i32
    %c0_i32_0 = arith.constant 0 : i32
    %c0_i32_1 = arith.constant 0 : i32
    return %arg0, %c0_i32, %c0_i32_0 : i32, i32, i32
  }
  func.func @transform_10(%arg0: i32) -> (i32, i32, i32) {
    %c0_i32 = arith.constant 0 : i32
    %c0_i32_0 = arith.constant 0 : i32
    %c0_i32_1 = arith.constant 0 : i32
    return %arg0, %c0_i32, %c0_i32_0 : i32, i32, i32
  }
  func.func @transform_11(%arg0: i32) -> (i32, i32, i32) {
    %c0_i32 = arith.constant 0 : i32
    %c0_i32_0 = arith.constant 0 : i32
    %c0_i32_1 = arith.constant 0 : i32
    return %arg0, %c0_i32, %c0_i32_0 : i32, i32, i32
  }
  func.func @transform_12(%arg0: i32) -> (i32, i32, i32) {
    %c0_i32 = arith.constant 0 : i32
    %c0_i32_0 = arith.constant 0 : i32
    %c0_i32_1 = arith.constant 0 : i32
    return %arg0, %c0_i32, %c0_i32_0 : i32, i32, i32
  }
  func.func @transform_13(%arg0: i32) -> (i32, i32) {
    %c0_i32 = arith.constant 0 : i32
    %c0_i32_0 = arith.constant 0 : i32
    %c0_i32_1 = arith.constant 0 : i32
    return %c0_i32, %c0_i32_0 : i32, i32
  }
  func.func @transform_14(%arg0: i32) -> (i32, i32) {
    %c0_i32 = arith.constant 0 : i32
    %c0_i32_0 = arith.constant 0 : i32
    %c0_i32_1 = arith.constant 0 : i32
    return %c0_i32, %c0_i32_0 : i32, i32
  }
  func.func @transform_15(%arg0: i32) -> (i32, i32) {
    %c0_i32 = arith.constant 0 : i32
    %c0_i32_0 = arith.constant 0 : i32
    %c0_i32_1 = arith.constant 0 : i32
    return %c0_i32, %c0_i32_0 : i32, i32
  }
  func.func @transform_16(%arg0: i32) -> (i32, i32) {
    %c0_i32 = arith.constant 0 : i32
    %c0_i32_0 = arith.constant 0 : i32
    %c0_i32_1 = arith.constant 0 : i32
    return %c0_i32, %c0_i32_0 : i32, i32
  }
  func.func @transform_17(%arg0: i32) -> (i32, i32) {
    %c0_i32 = arith.constant 0 : i32
    %c0_i32_0 = arith.constant 0 : i32
    %c0_i32_1 = arith.constant 0 : i32
    return %c0_i32, %c0_i32_0 : i32, i32
  }
  func.func @transform_18(%arg0: i32) -> (i32, i32, i32, i32, i32) {
    %c0_i32 = arith.constant 0 : i32
    %c0_i32_0 = arith.constant 0 : i32
    %c0_i32_1 = arith.constant 0 : i32
    %c0_i32_2 = arith.constant 0 : i32
    %c0_i32_3 = arith.constant 0 : i32
    return %arg0, %c0_i32, %c0_i32_0, %c0_i32_1, %c0_i32_2 : i32, i32, i32, i32, i32
  }
}

</mosaic_0001>

<llo_original>
// kernel: vit_forward.2
$region0: #{vit_forward.2}
  #allocation0 [shape = 'u32[]', space=smem, size = 0x4, offset = 0x4, fixed_abs, tag = 'smem constant byte address 0x4 - core index']
  #allocation1 [shape = 'u32[144,128]{1,0:T(1,128)}', space=vmem, size = 0x12000, scoped, tag = 'internal scratch']
  %s0 = inlined_call_operand.vmem [shape: f32[2,16,64], index: 0, kind: input, shape index: {}]
  %s1 = inlined_call_operand.vmem [shape: f32[1,64], index: 1, kind: input, shape index: {}]
  %s2 = inlined_call_operand.vmem [shape: f32[1,64], index: 2, kind: input, shape index: {}]
  %s3 = inlined_call_operand.vmem [shape: bf16[64,32], index: 3, kind: input, shape index: {}]
  %s4 = inlined_call_operand.vmem [shape: f32[1,32], index: 4, kind: input, shape index: {}]
  %s5 = inlined_call_operand.vmem [shape: f32[1,32], index: 5, kind: input, shape index: {}]
  %s6 = inlined_call_operand.vmem [shape: f32[1,32], index: 6, kind: input, shape index: {}]
  %s7 = inlined_call_operand.vmem [shape: f32[1,32], index: 7, kind: input, shape index: {}]
  %s8 = inlined_call_operand.vmem [shape: f32[17,32], index: 8, kind: input, shape index: {}]
  %s9 = inlined_call_operand.vmem [shape: f32[2,17,32], index: 9, kind: output, shape index: {}]
  %s10 = sld [smem:[#allocation0]]
  $region69: #{vit_forward.2} parent=0
    _
  %s12 = ssub.s32 1, %s10
  %s13 = scalar_select 0, %s12, %s10
  loop: start=0, step=1, limit=4
  $region2: #{vit_forward.2} parent=0 // loop_pre_header
    _
  $region3: #{vit_forward.2} parent=0 // loop_header
    %s15 = sphi 0, %s19
    %p16 = scmp.ge.s32.totalorder %s15, 4
    %s25 = sphi 0, %s27
    %s28 = sphi 0, %s25
    %s29 = sphi 0, %s28
    %s45 = sphi 0, %s29
    %s49 = sphi 0, %s49
    %s51 = sphi 0, %s49
    %s52 = sphi 0, %s51
    %s66 = sphi 0, %s52
    %s70 = sphi 0, %s70
    %s72 = sphi 0, %s70
    %s73 = sphi 0, %s72
    %s87 = sphi 0, %s73
    %s91 = sphi 0, %s91
    %s93 = sphi 0, %s91
    %s94 = sphi 0, %s93
    %s108 = sphi 0, %s94
    %s112 = sphi 0, %s112
    %s114 = sphi 0, %s112
    %s115 = sphi 0, %s114
    %s129 = sphi 0, %s115
    %s133 = sphi 0, %s133
    %s135 = sphi 0, %s133
    %s136 = sphi 0, %s135
    %s150 = sphi 0, %s136
    %s154 = sphi 0, %s154
    %s156 = sphi 0, %s154
    %s157 = sphi 0, %s156
    %s171 = sphi 0, %s157
    %s175 = sphi 0, %s175
    %s177 = sphi 0, %s175
    %s178 = sphi 0, %s177
    %s192 = sphi 0, %s178
    %s196 = sphi 0, %s196
    %s198 = sphi 0, %s196
    %s199 = sphi 0, %s198
    %s213 = sphi 0, %s199
    %s219 = sphi 0, %s221
    %s222 = sphi 0, %s219
    %s223 = sphi 0, %s222
    %s239 = sphi 0, %s223
  $region4: #{vit_forward.2} parent=0 // loop_header_branch
    %18 = sbr.rel (%p16) target = $region8
  $region5: #{vit_forward.2} parent=0 // loop_body
    %s20 = ssub.s32 %s15, 1
    %s21 = ssub.s32 %s15, 2
    %s22 = sadd.s32 %s15, 1
    %s23 = ssub.s32 %s15, %s22
    %p24 = scmp.eq.s32.totalorder %s23, 0
    %s26 = sadd.s32 %s25, 1
    %s27 = scalar_select %p24, %s25, %s26
    %p30 = pneg %p24
    %p31 = scmp.eq.s32.totalorder %s15, 1
    %p32 = por %p30, %p31
    %p33 = scmp.ne.s32.totalorder %s25, %s28
    %p34 = scmp.eq.s32.totalorder %s15, 0
    %p35 = por %p33, %p34
    %p36 = scmp.ne.s32.totalorder %s25, %s28
    %p37 = scmp.eq.s32.totalorder %s20, 1
    %p38 = por %p36, %p37
    %p39 = scmp.ne.s32.totalorder %s28, %s29
    %p40 = scmp.eq.s32.totalorder %s20, 0
    %p41 = por %p39, %p40
    %p42 = scmp.ne.s32.totalorder %s28, %s29
    %p43 = scmp.eq.s32.totalorder %s21, 1
    %p44 = por %p42, %p43
    %p46 = scmp.ne.s32.totalorder %s29, %s45
    %p47 = scmp.eq.s32.totalorder %s21, 0
    %p48 = por %p46, %p47
    %s50 = sadd.s32 %s49, 1
    %p53 = scmp.eq.s32.totalorder %s15, 1
    %p54 = scmp.ne.s32.totalorder %s49, %s51
    %p55 = scmp.eq.s32.totalorder %s15, 0
    %p56 = por %p54, %p55
    %p57 = scmp.ne.s32.totalorder %s49, %s51
    %p58 = scmp.eq.s32.totalorder %s20, 1
    %p59 = por %p57, %p58
    %p60 = scmp.ne.s32.totalorder %s51, %s52
    %p61 = scmp.eq.s32.totalorder %s20, 0
    %p62 = por %p60, %p61
    %p63 = scmp.ne.s32.totalorder %s51, %s52
    %p64 = scmp.eq.s32.totalorder %s21, 1
    %p65 = por %p63, %p64
    %p67 = scmp.ne.s32.totalorder %s52, %s66
    %p68 = scmp.eq.s32.totalorder %s21, 0
    %p69 = por %p67, %p68
    %s71 = sadd.s32 %s70, 1
    %p74 = scmp.eq.s32.totalorder %s15, 1
    %p75 = scmp.ne.s32.totalorder %s70, %s72
    %p76 = scmp.eq.s32.totalorder %s15, 0
    %p77 = por %p75, %p76
    %p78 = scmp.ne.s32.totalorder %s70, %s72
    %p79 = scmp.eq.s32.totalorder %s20, 1
    %p80 = por %p78, %p79
    %p81 = scmp.ne.s32.totalorder %s72, %s73
    %p82 = scmp.eq.s32.totalorder %s20, 0
    %p83 = por %p81, %p82
    %p84 = scmp.ne.s32.totalorder %s72, %s73
    %p85 = scmp.eq.s32.totalorder %s21, 1
    %p86 = por %p84, %p85
    %p88 = scmp.ne.s32.totalorder %s73, %s87
    %p89 = scmp.eq.s32.totalorder %s21, 0
    %p90 = por %p88, %p89
    %s92 = sadd.s32 %s91, 1
    %p95 = scmp.eq.s32.totalorder %s15, 1
    %p96 = scmp.ne.s32.totalorder %s91, %s93
    %p97 = scmp.eq.s32.totalorder %s15, 0
    %p98 = por %p96, %p97
    %p99 = scmp.ne.s32.totalorder %s91, %s93
    %p100 = scmp.eq.s32.totalorder %s20, 1
    %p101 = por %p99, %p100
    %p102 = scmp.ne.s32.totalorder %s93, %s94
    %p103 = scmp.eq.s32.totalorder %s20, 0
    %p104 = por %p102, %p103
    %p105 = scmp.ne.s32.totalorder %s93, %s94
    %p106 = scmp.eq.s32.totalorder %s21, 1
    %p107 = por %p105, %p106
    %p109 = scmp.ne.s32.totalorder %s94, %s108
    %p110 = scmp.eq.s32.totalorder %s21, 0
    %p111 = por %p109, %p110
    %s113 = sadd.s32 %s112, 1
    %p116 = scmp.eq.s32.totalorder %s15, 1
    %p117 = scmp.ne.s32.totalorder %s112, %s114
    %p118 = scmp.eq.s32.totalorder %s15, 0
    %p119 = por %p117, %p118
    %p120 = scmp.ne.s32.totalorder %s112, %s114
    %p121 = scmp.eq.s32.totalorder %s20, 1
    %p122 = por %p120, %p121
    %p123 = scmp.ne.s32.totalorder %s114, %s115
    %p124 = scmp.eq.s32.totalorder %s20, 0
    %p125 = por %p123, %p124
    %p126 = scmp.ne.s32.totalorder %s114, %s115
    %p127 = scmp.eq.s32.totalorder %s21, 1
    %p128 = por %p126, %p127
    %p130 = scmp.ne.s32.totalorder %s115, %s129
    %p131 = scmp.eq.s32.totalorder %s21, 0
    %p132 = por %p130, %p131
    %s134 = sadd.s32 %s133, 1
    %p137 = scmp.eq.s32.totalorder %s15, 1
    %p138 = scmp.ne.s32.totalorder %s133, %s135
    %p139 = scmp.eq.s32.totalorder %s15, 0
    %p140 = por %p138, %p139
    %p141 = scmp.ne.s32.totalorder %s133, %s135
    %p142 = scmp.eq.s32.totalorder %s20, 1
    %p143 = por %p141, %p142
    %p144 = scmp.ne.s32.totalorder %s135, %s136
    %p145 = scmp.eq.s32.totalorder %s20, 0
    %p146 = por %p144, %p145
    %p147 = scmp.ne.s32.totalorder %s135, %s136
    %p148 = scmp.eq.s32.totalorder %s21, 1
    %p149 = por %p147, %p148
    %p151 = scmp.ne.s32.totalorder %s136, %s150
    %p152 = scmp.eq.s32.totalorder %s21, 0
    %p153 = por %p151, %p152
    %s155 = sadd.s32 %s154, 1
    %p158 = scmp.eq.s32.totalorder %s15, 1
    %p159 = scmp.ne.s32.totalorder %s154, %s156
    %p160 = scmp.eq.s32.totalorder %s15, 0
    %p161 = por %p159, %p160
    %p162 = scmp.ne.s32.totalorder %s154, %s156
    %p163 = scmp.eq.s32.totalorder %s20, 1
    %p164 = por %p162, %p163
    %p165 = scmp.ne.s32.totalorder %s156, %s157
    %p166 = scmp.eq.s32.totalorder %s20, 0
    %p167 = por %p165, %p166
    %p168 = scmp.ne.s32.totalorder %s156, %s157
    %p169 = scmp.eq.s32.totalorder %s21, 1
    %p170 = por %p168, %p169
    %p172 = scmp.ne.s32.totalorder %s157, %s171
    %p173 = scmp.eq.s32.totalorder %s21, 0
    %p174 = por %p172, %p173
    %s176 = sadd.s32 %s175, 1
    %p179 = scmp.eq.s32.totalorder %s15, 1
    %p180 = scmp.ne.s32.totalorder %s175, %s177
    %p181 = scmp.eq.s32.totalorder %s15, 0
    %p182 = por %p180, %p181
    %p183 = scmp.ne.s32.totalorder %s175, %s177
    %p184 = scmp.eq.s32.totalorder %s20, 1
    %p185 = por %p183, %p184
    %p186 = scmp.ne.s32.totalorder %s177, %s178
    %p187 = scmp.eq.s32.totalorder %s20, 0
    %p188 = por %p186, %p187
    %p189 = scmp.ne.s32.totalorder %s177, %s178
    %p190 = scmp.eq.s32.totalorder %s21, 1
    %p191 = por %p189, %p190
    %p193 = scmp.ne.s32.totalorder %s178, %s192
    %p194 = scmp.eq.s32.totalorder %s21, 0
    %p195 = por %p193, %p194
    %s197 = sadd.s32 %s196, 1
    %p200 = scmp.eq.s32.totalorder %s15, 1
    %p201 = scmp.ne.s32.totalorder %s196, %s198
    %p202 = scmp.eq.s32.totalorder %s15, 0
    %p203 = por %p201, %p202
    %p204 = scmp.ne.s32.totalorder %s196, %s198
    %p205 = scmp.eq.s32.totalorder %s20, 1
    %p206 = por %p204, %p205
    %p207 = scmp.ne.s32.totalorder %s198, %s199
    %p208 = scmp.eq.s32.totalorder %s20, 0
    %p209 = por %p207, %p208
    %p210 = scmp.ne.s32.totalorder %s198, %s199
    %p211 = scmp.eq.s32.totalorder %s21, 1
    %p212 = por %p210, %p211
    %p214 = scmp.ne.s32.totalorder %s199, %s213
    %p215 = scmp.eq.s32.totalorder %s21, 0
    %p216 = por %p214, %p215
    %s217 = ssub.s32 %s15, %s22
    %p218 = scmp.eq.s32.totalorder %s217, 0
    %s220 = sadd.s32 %s219, 1
    %s221 = scalar_select %p218, %s219, %s220
    %p224 = pneg %p218
    %p225 = scmp.eq.s32.totalorder %s15, 1
    %p226 = por %p224, %p225
    %p227 = scmp.ne.s32.totalorder %s219, %s222
    %p228 = scmp.eq.s32.totalorder %s15, 0
    %p229 = por %p227, %p228
    %p230 = scmp.ne.s32.totalorder %s219, %s222
    %p231 = scmp.eq.s32.totalorder %s20, 1
    %p232 = por %p230, %p231
    %p233 = scmp.ne.s32.totalorder %s222, %s223
    %p234 = scmp.eq.s32.totalorder %s20, 0
    %p235 = por %p233, %p234
    %p236 = scmp.ne.s32.totalorder %s222, %s223
    %p237 = scmp.eq.s32.totalorder %s21, 1
    %p238 = por %p236, %p237
    %p240 = scmp.ne.s32.totalorder %s223, %s239
    %p241 = scmp.eq.s32.totalorder %s21, 0
    %p242 = por %p240, %p241
    %p243 = scmp.le.s32.totalorder 1, %s15
    %p244 = scmp.lt.s32.totalorder %s15, 3
    %p245 = pnand %p243, %p244
    %p246 = pneg %p245
    // Predicated region
    $region9: #{vit_forward.2} parent=5 // pred_check
      _
    $region10: #{vit_forward.2} parent=5 // pred_check_branch
      %248 = sbr.rel (%p245) target = $region12
    $region11: #{vit_forward.2} parent=5 // pred_region
      %s249 = ssub.s32 %s15, 1
      // Predicated region
      $region13: #{vit_forward.2} parent=11 // pred_check
        %p250 = pneg %p62
      $region14: #{vit_forward.2} parent=11 // pred_check_branch
        %252 = sbr.rel (%p250) target = $region16
      $region15: #{vit_forward.2} parent=11 // pred_region
        _
      $region16: #{vit_forward.2} parent=11 // pred_fallthru
        _
      // Predicated region
      $region17: #{vit_forward.2} parent=11 // pred_check
        %p253 = pneg %p83
      $region18: #{vit_forward.2} parent=11 // pred_check_branch
        %255 = sbr.rel (%p253) target = $region20
      $region19: #{vit_forward.2} parent=11 // pred_region
        _
      $region20: #{vit_forward.2} parent=11 // pred_fallthru
        _
      // Predicated region
      $region21: #{vit_forward.2} parent=11 // pred_check
        %p256 = pneg %p104
      $region22: #{vit_forward.2} parent=11 // pred_check_branch
        %258 = sbr.rel (%p256) target = $region24
      $region23: #{vit_forward.2} parent=11 // pred_region
        _
      $region24: #{vit_forward.2} parent=11 // pred_fallthru
        _
      // Predicated region
      $region25: #{vit_forward.2} parent=11 // pred_check
        %p259 = pneg %p125
      $region26: #{vit_forward.2} parent=11 // pred_check_branch
        %261 = sbr.rel (%p259) target = $region28
      $region27: #{vit_forward.2} parent=11 // pred_region
        _
      $region28: #{vit_forward.2} parent=11 // pred_fallthru
        _
      // Predicated region
      $region29: #{vit_forward.2} parent=11 // pred_check
        %p262 = pneg %p146
      $region30: #{vit_forward.2} parent=11 // pred_check_branch
        %264 = sbr.rel (%p262) target = $region32
      $region31: #{vit_forward.2} parent=11 // pred_region
        _
      $region32: #{vit_forward.2} parent=11 // pred_fallthru
        _
      // Predicated region
      $region33: #{vit_forward.2} parent=11 // pred_check
        %p265 = pneg %p167
      $region34: #{vit_forward.2} parent=11 // pred_check_branch
        %267 = sbr.rel (%p265) target = $region36
      $region35: #{vit_forward.2} parent=11 // pred_region
        _
      $region36: #{vit_forward.2} parent=11 // pred_fallthru
        _
      // Predicated region
      $region37: #{vit_forward.2} parent=11 // pred_check
        %p268 = pneg %p188
      $region38: #{vit_forward.2} parent=11 // pred_check_branch
        %270 = sbr.rel (%p268) target = $region40
      $region39: #{vit_forward.2} parent=11 // pred_region
        _
      $region40: #{vit_forward.2} parent=11 // pred_fallthru
        _
      // Predicated region
      $region41: #{vit_forward.2} parent=11 // pred_check
        %p271 = pneg %p209
      $region42: #{vit_forward.2} parent=11 // pred_check_branch
        %273 = sbr.rel (%p271) target = $region44
      $region43: #{vit_forward.2} parent=11 // pred_region
        _
      $region44: #{vit_forward.2} parent=11 // pred_fallthru
        _
    $region12: #{vit_forward.2} parent=5 // pred_fallthru
      _
    %p274 = scmp.lt.s32.totalorder %s15, 2
    // Predicated region
    $region45: #{vit_forward.2} parent=5 // pred_check
      %p275 = pneg %p274
    $region46: #{vit_forward.2} parent=5 // pred_check_branch
      %277 = sbr.rel (%p275) target = $region48
    $region47: #{vit_forward.2} parent=5 // pred_region
      // Predicated region
      $region49: #{vit_forward.2} parent=47 // pred_check
        %p278 = pneg %p35
      $region50: #{vit_forward.2} parent=47 // pred_check_branch
        %280 = sbr.rel (%p278) target = $region52
      $region51: #{vit_forward.2} parent=47 // pred_region
        %p281 = scmp.lt.s32.totalorder %s15, 1
        %s282 = scalar_select %p281, %s15, 1
        %s283 = smul.addr %s282, 2
        %s284 = smul.addr %s283, 8
        %s285 = scalar_lea.vmem %s0, %s284
      $region52: #{vit_forward.2} parent=47 // pred_fallthru
        _
    $region48: #{vit_forward.2} parent=5 // pred_fallthru
      _
    %p286 = scmp.le.s32.totalorder 1, %s15
    %p287 = scmp.lt.s32.totalorder %s15, 3
    %p288 = pnand %p286, %p287
    %p289 = pneg %p288
    // Predicated region
    $region53: #{vit_forward.2} parent=5 // pred_check
      _
    $region54: #{vit_forward.2} parent=5 // pred_check_branch
      %291 = sbr.rel (%p288) target = $region56
    $region55: #{vit_forward.2} parent=5 // pred_region
      %s292 = ssub.s32 %s15, 1
      %p293 = scmp.lt.s32.totalorder %s20, 1
      %s294 = scalar_select %p293, %s20, 1
      %s295 = smul.addr %s294, 2
      %s296 = smul.addr %s295, 8
      %s297 = scalar_lea.vmem %s0, %s296
      %p298 = pneg %p41
      %p299 = pneg %p38
      %p300 = pneg %p62
      %p301 = pneg %p59
      %p302 = pneg %p83
      %p303 = pneg %p80
      %p304 = pneg %p104
      %p305 = pneg %p101
      %p306 = pneg %p125
      %p307 = pneg %p122
      %p308 = pneg %p146
      %p309 = pneg %p143
      %p310 = pneg %p167
      %p311 = pneg %p164
      %p312 = pneg %p188
      %p313 = pneg %p185
      %p314 = pneg %p209
      %p315 = pneg %p206
      %p316 = pneg %p235
      %p317 = pneg %p232
      %p318 = scmp.lt.s32.totalorder %s20, 1
      %s319 = scalar_select %p318, %s20, 1
      %s320 = smul.addr %s319, 3
      %s321 = smul.addr %s320, 8
      %s322 = scalar_lea.vmem %s9, %s321
      %p323 = scmp.lt.s32.totalorder %s20, 1
      %s324 = scalar_select %p323, %s20, 1
      %s325 = smul.addr %s324, 2
      %s326 = smul.addr %s325, 8
      %s327 = scalar_lea.vmem %s0, %s326
      %p328 = scmp.lt.s32.totalorder %s20, 1
      %s329 = scalar_select %p328, %s20, 1
      %s330 = smul.addr %s329, 3
      %s331 = smul.addr %s330, 8
      %s332 = scalar_lea.vmem %s9, %s331
      %v334 = vld [vmem:[%s327] sm:$0xff]
      %v335 = vld [vmem:[%s327 + $0x8] sm:$0xff]
      %v336 = vld [vmem:[%s1] sm:$0x1]
      %v337 = vld [vmem:[%s2] sm:$0x1]
      %vm338 = vcmask 523264
      %v339 = vsel %vm338, %v334, 0.0
      %340 = vadd.xlane.f32.xlu0 %v339
      %v341 = vpop.xlane.xlu0 %340
      %v342 = vsel %vm338, %v335, 0.0
      %343 = vadd.xlane.f32.xlu0 %v342
      %v344 = vpop.xlane.xlu0 %343
      %v345 = vrcp.pop 64.0
      %v346 = vmul.f32 %v341, %v345
      %v347 = vmul.f32 %v344, %v345
      %v348 = vsub.f32 %v334, %v346
      %v349 = vsub.f32 %v335, %v347
      %v350 = vmul.f32 %v348, %v348
      %v351 = vmul.f32 %v349, %v349
      %v352 = vsel %vm338, %v350, 0.0
      %353 = vadd.xlane.f32.xlu0 %v352
      %v354 = vpop.xlane.xlu0 %353
      %v355 = vsel %vm338, %v351, 0.0
      %356 = vadd.xlane.f32.xlu0 %v355
      %v357 = vpop.xlane.xlu0 %356
      %v358 = vmul.f32 %v354, %v345
      %v359 = vmul.f32 %v357, %v345
      %v360 = vadd.f32 %v358, 1e-05
      %v361 = vadd.f32 %v359, 1e-05
      %v362 = vrsqrt.pop %v360
      %v363 = vrsqrt.pop %v361
      %v364 = vmul.f32 %v348, %v362
      %v365 = vmul.f32 %v349, %v363
      %v367 = vlaneseq
      %v368 = vshrl.u32 %v367, 7
      %v369 = vsub.s32 0, %v368
      %v370 = vrot.slane %v336, %v369
      %v372 = vmul.f32 %v364, %v370
      %v373 = vmul.f32 %v365, %v370
      %v375 = vlaneseq
      %v376 = vshrl.u32 %v375, 7
      %v377 = vsub.s32 0, %v376
      %v378 = vrot.slane %v337, %v377
      %v380 = vadd.f32 %v372, %v378
      %v381 = vadd.f32 %v373, %v378
      %v382 = vpack.c.bf16 %v381, %v380
      %v383 = vld [vmem:[%s3] sm:$0xf]
      %v384 = vld [vmem:[%s3 + $0x4] sm:$0xf]
      %v385 = vld [vmem:[%s3 + $0x8] sm:$0xf]
      %v386 = vld [vmem:[%s3 + $0xc] sm:$0xf]
      %v387 = vld [vmem:[%s3 + $0x10] sm:$0xf]
      %v388 = vld [vmem:[%s3 + $0x14] sm:$0xf]
      %v389 = vld [vmem:[%s3 + $0x18] sm:$0xf]
      %v390 = vld [vmem:[%s3 + $0x1c] sm:$0xf]
      %v391 = vld [vmem:[%s4] sm:$0x1]
      %v393 = vlaneseq
      %v394 = vshrl.u32 %v393, 7
      %v395 = vsub.s32 0, %v394
      %v396 = vrot.slane %v391, %v395
      %v406 = vunpack.c.l.b16 %v383
      %v407 = vunpack.c.l.b16 %v384
      %v408 = vunpack.c.l.b16 %v385
      %v409 = vunpack.c.l.b16 %v386
      %v410 = vunpack.c.l.b16 %v387
      %v411 = vunpack.c.l.b16 %v388
      %v412 = vunpack.c.l.b16 %v389
      %v413 = vunpack.c.l.b16 %v390
      %v414 = vpack.c.b16 %v407, %v406
      %v415 = vpack.c.b16 %v409, %v408
      %v416 = vpack.c.b16 %v411, %v410
      %v417 = vpack.c.b16 %v413, %v412
      %v423 = vsel %vm338, %v382, 0
      %425 = vmatprep.subr.bf16.mxu0 0
      %426 = vmatpush1.bf16.msra.mxu0 %v414
      %427 = vmatprep.subr.bf16.mxu0 0
      %428 = vmatpush1.bf16.msra.mxu0 %v415
      %429 = vmatprep.subr.bf16.mxu0 0
      %430 = vmatpush1.bf16.msra.mxu0 %v416
      %431 = vmatprep.subr.bf16.mxu0 0
      %432 = vmatpush1.bf16.msra.mxu0 %v417
      %433 = vmatprep.subr.bf16.mxu0 0
      %434 = vmatpush1.bf16.msra.mxu0 0
      %435 = vmatprep.subr.bf16.mxu0 0
      %436 = vmatpush1.bf16.msra.mxu0 0
      %437 = vmatprep.subr.bf16.mxu0 0
      %438 = vmatpush1.bf16.msra.mxu0 0
      %439 = vmatprep.subr.bf16.mxu0 0
      %440 = vmatpush1.bf16.msra.mxu0 0
      %441 = vmatprep.subr.bf16.mxu0 0
      %442 = vmatpush1.bf16.msra.mxu0 0
      %443 = vmatprep.subr.bf16.mxu0 0
      %444 = vmatpush1.bf16.msra.mxu0 0
      %445 = vmatprep.subr.bf16.mxu0 0
      %446 = vmatpush1.bf16.msra.mxu0 0
      %447 = vmatprep.subr.bf16.mxu0 0
      %448 = vmatpush1.bf16.msra.mxu0 0
      %449 = vmatprep.subr.bf16.mxu0 0
      %450 = vmatpush1.bf16.msra.mxu0 0
      %451 = vmatprep.subr.bf16.mxu0 0
      %452 = vmatpush1.bf16.msra.mxu0 0
      %453 = vmatprep.subr.bf16.mxu0 0
      %454 = vmatpush1.bf16.msra.mxu0 0
      %455 = vmatprep.subr.bf16.mxu0 0
      %456 = vmatpush1.bf16.msra.mxu0 0
      %457 = vmatprep.mubr.bf16.mxu0 0
      %458 = vmatmul.mubr.bf16.gmra.mrb[0].mxu0 %v423
      %v459 = vpop.f32.mrb[0].mxu0
      %v460 = vadd.f32 %v396, %v459
      %v461 = vpop.f32.mrb[0].mxu0
      %v462 = vpop.f32.mrb[0].mxu0
      %v463 = vadd.f32 %v396, %v462
      %v464 = vpop.f32.mrb[0].mxu0
      %465 = vdwg.mxu0
      %v466 = vld [vmem:[%s5] sm:$0x1]
      %v467 = vld [vmem:[%s6] sm:$0x1]
      %vm468 = vcmask 261120
      %v469 = vsel %vm468, %v460, 0.0
      %470 = vadd.xlane.f32.xlu0 %v469
      %v471 = vpop.xlane.xlu0 %470
      %v472 = vsel %vm468, %v463, 0.0
      %473 = vadd.xlane.f32.xlu0 %v472
      %v474 = vpop.xlane.xlu0 %473
      %v475 = vrcp.pop 32.0
      %v476 = vmul.f32 %v471, %v475
      %v477 = vmul.f32 %v474, %v475
      %v478 = vsub.f32 %v460, %v476
      %v479 = vsub.f32 %v463, %v477
      %v480 = vmul.f32 %v478, %v478
      %v481 = vmul.f32 %v479, %v479
      %v482 = vsel %vm468, %v480, 0.0
      %483 = vadd.xlane.f32.xlu0 %v482
      %v484 = vpop.xlane.xlu0 %483
      %v485 = vsel %vm468, %v481, 0.0
      %486 = vadd.xlane.f32.xlu0 %v485
      %v487 = vpop.xlane.xlu0 %486
      %v488 = vmul.f32 %v484, %v475
      %v489 = vmul.f32 %v487, %v475
      %v490 = vadd.f32 %v488, 1e-05
      %v491 = vadd.f32 %v489, 1e-05
      %v492 = vrsqrt.pop %v490
      %v493 = vrsqrt.pop %v491
      %v494 = vmul.f32 %v478, %v492
      %v495 = vmul.f32 %v479, %v493
      %v497 = vlaneseq
      %v498 = vshrl.u32 %v497, 7
      %v499 = vsub.s32 0, %v498
      %v500 = vrot.slane %v466, %v499
      %v502 = vmul.f32 %v494, %v500
      %v503 = vmul.f32 %v495, %v500
      %v505 = vlaneseq
      %v506 = vshrl.u32 %v505, 7
      %v507 = vsub.s32 0, %v506
      %v508 = vrot.slane %v467, %v507
      %v510 = vadd.f32 %v502, %v508
      %v511 = vadd.f32 %v503, %v508
      %v512 = vld [vmem:[%s7] sm:$0x1]
      %vm515 = vcmask 1040384
      %v516 = vrot.slane %v510, 7
      %v517 = vrot.slane %v511, 7
      %v518 = vsel %vm515, %v516, %v517
      %v522 = vsel %vm515, %v512, %v516
      %v523 = vld [vmem:[%s8] sm:$0xff]
      %v524 = vld [vmem:[%s8 + $0x8] sm:$0xff]
      %v525 = vld [vmem:[%s8 + $0x10] sm:$0x1]
      %v526 = vadd.f32 %v522, %v523
      %v527 = vadd.f32 %v518, %v524
      %v528 = vadd.f32 %v517, %v525
      %529 = vst.msk [vmem:[%s332] sm:$0xff] %vm468, %v526
      %530 = vst.msk [vmem:[%s332 + $0x8] sm:$0xff] %vm468, %v527
      %vm531 = vcmask 253952
      %532 = vst.msk [vmem:[%s332 + $0x10] sm:$0x1] %vm531, %v528
      %p533 = scmp.lt.s32.totalorder %s20, 1
      %s534 = scalar_select %p533, %s20, 1
      %s535 = smul.addr %s534, 3
      %s536 = smul.addr %s535, 8
      %s537 = scalar_lea.vmem %s9, %s536
      // Predicated region
      $region57: #{vit_forward.2} parent=55 // pred_check
        %p538 = pneg %p232
      $region58: #{vit_forward.2} parent=55 // pred_check_branch
        %540 = sbr.rel (%p538) target = $region60
      $region59: #{vit_forward.2} parent=55 // pred_region
        _
      $region60: #{vit_forward.2} parent=55 // pred_fallthru
        _
    $region56: #{vit_forward.2} parent=5 // pred_fallthru
      _
    %p541 = scmp.le.s32.totalorder 2, %s15
    // Predicated region
    $region61: #{vit_forward.2} parent=5 // pred_check
      %p542 = pneg %p541
    $region62: #{vit_forward.2} parent=5 // pred_check_branch
      %544 = sbr.rel (%p542) target = $region64
    $region63: #{vit_forward.2} parent=5 // pred_region
      %s545 = ssub.s32 %s15, 2
      // Predicated region
      $region65: #{vit_forward.2} parent=63 // pred_check
        %p546 = pneg %p238
      $region66: #{vit_forward.2} parent=63 // pred_check_branch
        %548 = sbr.rel (%p546) target = $region68
      $region67: #{vit_forward.2} parent=63 // pred_region
        %p549 = scmp.lt.s32.totalorder %s21, 1
        %s550 = scalar_select %p549, %s21, 1
        %s551 = smul.addr %s550, 3
        %s552 = smul.addr %s551, 8
        %s553 = scalar_lea.vmem %s9, %s552
      $region68: #{vit_forward.2} parent=63 // pred_fallthru
        _
    $region64: #{vit_forward.2} parent=5 // pred_fallthru
      _
  $region6: #{vit_forward.2} parent=0 // loop_footer
    %s19 = sadd.s32 1, %s15
  $region7: #{vit_forward.2} parent=0 // loop_footer_branch
    %14 = sbr.rel target = $region3
  $region8: #{vit_forward.2} parent=0 // loop_exit
    _

// kernel: vit_forward.3
$region0: #{vit_forward.3}
  #allocation0 [shape = 'u32[]', space=smem, size = 0x4, offset = 0x4, fixed_abs, tag = 'smem constant byte address 0x4 - core index']
  #allocation1 [shape = 'u32[144,128]{1,0:T(1,128)}', space=vmem, size = 0x12000, scoped, tag = 'internal scratch']
  #allocation2 [shape = 'f32[34,32]{1,0:T(8,128)}', space=vmem, size = 0x5000, scoped, tag = 'scratch operand']
  %s0 = inlined_call_operand.vmem [shape: f32[34,32], index: 0, kind: input, shape index: {}]
  %s1 = inlined_call_operand.vmem [shape: f32[2,1,32], index: 1, kind: input, shape index: {}]
  %s2 = inlined_call_operand.vmem [shape: f32[2,1,32], index: 2, kind: input, shape index: {}]
  %s3 = inlined_call_operand.vmem [shape: bf16[2,32,96], index: 3, kind: input, shape index: {}]
  %s4 = inlined_call_operand.vmem [shape: f32[2,1,96], index: 4, kind: input, shape index: {}]
  %s5 = inlined_call_operand.vmem [shape: bf16[2,32,32], index: 5, kind: input, shape index: {}]
  %s6 = inlined_call_operand.vmem [shape: f32[2,1,32], index: 6, kind: input, shape index: {}]
  %s7 = inlined_call_operand.vmem [shape: f32[2,1,32], index: 7, kind: input, shape index: {}]
  %s8 = inlined_call_operand.vmem [shape: f32[2,1,32], index: 8, kind: input, shape index: {}]
  %s9 = inlined_call_operand.vmem [shape: bf16[2,32,64], index: 9, kind: input, shape index: {}]
  %s10 = inlined_call_operand.vmem [shape: f32[2,1,64], index: 10, kind: input, shape index: {}]
  %s11 = inlined_call_operand.vmem [shape: bf16[2,64,32], index: 11, kind: input, shape index: {}]
  %s12 = inlined_call_operand.vmem [shape: f32[2,1,32], index: 12, kind: input, shape index: {}]
  %s13 = inlined_call_operand.vmem [shape: f32[1,32], index: 13, kind: input, shape index: {}]
  %s14 = inlined_call_operand.vmem [shape: f32[1,32], index: 14, kind: input, shape index: {}]
  %s15 = inlined_call_operand.vmem [shape: bf16[32,128], index: 15, kind: input, shape index: {}]
  %s16 = inlined_call_operand.vmem [shape: f32[1,128], index: 16, kind: input, shape index: {}]
  %s17 = inlined_call_operand.hbm [shape: f32[2,128], index: 17, kind: output, shape index: {0}]
  %s18 = inlined_call_operand.vmem [shape: f32[2,4,2,17,128], index: 18, kind: output, shape index: {1}]
  %19 = xla_tuple %s17, %s18
  %s20 = sld [smem:[#allocation0]]
  $region117: #{vit_forward.3} parent=0
    _
  %s22 = ssub.s32 1, %s20
  %s23 = scalar_select 0, %s22, %s20
  $region1: #{vit_forward.3} parent=0
    #allocation3 [shape = 'u8[1024]{0}', space=vmem, size = 0x400, scoped, tag = 'output window, operand 0, single buffered']
    #allocation4 [shape = 's32[2]{0}', space=sflag, size = 0x8, scoped, tag = 'scoped memory for vit_forward.3']
    %24 = vsyncpa [#allocation4], 0
    loop: start=0, step=1, limit=4
    $region2: #{vit_forward.3} parent=1 // loop_pre_header
      _
    $region3: #{vit_forward.3} parent=1 // loop_header
      %s26 = sphi 0, %s30
      %p27 = scmp.ge.s32.totalorder %s26, 4
      %s34 = sphi 0, %s34
      %s36 = sphi 0, %s34
      %s37 = sphi 0, %s36
      %s51 = sphi 0, %s37
      %s57 = sphi 0, %s59
      %s60 = sphi 0, %s57
      %s61 = sphi 0, %s60
      %s77 = sphi 0, %s61
      %s83 = sphi 0, %s85
      %s86 = sphi 0, %s83
      %s87 = sphi 0, %s86
      %s103 = sphi 0, %s87
      %s109 = sphi 0, %s111
      %s112 = sphi 0, %s109
      %s113 = sphi 0, %s112
      %s129 = sphi 0, %s113
      %s135 = sphi 0, %s137
      %s138 = sphi 0, %s135
      %s139 = sphi 0, %s138
      %s155 = sphi 0, %s139
      %s161 = sphi 0, %s163
      %s164 = sphi 0, %s161
      %s165 = sphi 0, %s164
      %s181 = sphi 0, %s165
      %s187 = sphi 0, %s189
      %s190 = sphi 0, %s187
      %s191 = sphi 0, %s190
      %s207 = sphi 0, %s191
      %s213 = sphi 0, %s215
      %s216 = sphi 0, %s213
      %s217 = sphi 0, %s216
      %s233 = sphi 0, %s217
      %s239 = sphi 0, %s241
      %s242 = sphi 0, %s239
      %s243 = sphi 0, %s242
      %s259 = sphi 0, %s243
      %s265 = sphi 0, %s267
      %s268 = sphi 0, %s265
      %s269 = sphi 0, %s268
      %s285 = sphi 0, %s269
      %s291 = sphi 0, %s293
      %s294 = sphi 0, %s291
      %s295 = sphi 0, %s294
      %s311 = sphi 0, %s295
      %s317 = sphi 0, %s319
      %s320 = sphi 0, %s317
      %s321 = sphi 0, %s320
      %s337 = sphi 0, %s321
      %s343 = sphi 0, %s345
      %s346 = sphi 0, %s343
      %s347 = sphi 0, %s346
      %s363 = sphi 0, %s347
      %s367 = sphi 0, %s367
      %s369 = sphi 0, %s367
      %s370 = sphi 0, %s369
      %s384 = sphi 0, %s370
      %s388 = sphi 0, %s388
      %s390 = sphi 0, %s388
      %s391 = sphi 0, %s390
      %s405 = sphi 0, %s391
      %s409 = sphi 0, %s409
      %s411 = sphi 0, %s409
      %s412 = sphi 0, %s411
      %s426 = sphi 0, %s412
      %s430 = sphi 0, %s430
      %s432 = sphi 0, %s430
      %s433 = sphi 0, %s432
      %s447 = sphi 0, %s433
      %s451 = sphi 0, %s451
      %s453 = sphi 0, %s451
      %s454 = sphi 0, %s453
      %s468 = sphi 0, %s454
      %s474 = sphi 0, %s476
      %s477 = sphi 0, %s474
      %s478 = sphi 0, %s477
      %s494 = sphi 0, %s478
    $region4: #{vit_forward.3} parent=1 // loop_header_branch
      %29 = sbr.rel (%p27) target = $region8
    $region5: #{vit_forward.3} parent=1 // loop_body
      %s31 = ssub.s32 %s26, 1
      %s32 = ssub.s32 %s26, 2
      %s33 = sadd.s32 %s26, 1
      %s35 = sadd.s32 %s34, 1
      %p38 = scmp.eq.s32.totalorder %s26, 1
      %p39 = scmp.ne.s32.totalorder %s34, %s36
      %p40 = scmp.eq.s32.totalorder %s26, 0
      %p41 = por %p39, %p40
      %p42 = scmp.ne.s32.totalorder %s34, %s36
      %p43 = scmp.eq.s32.totalorder %s31, 1
      %p44 = por %p42, %p43
      %p45 = scmp.ne.s32.totalorder %s36, %s37
      %p46 = scmp.eq.s32.totalorder %s31, 0
      %p47 = por %p45, %p46
      %p48 = scmp.ne.s32.totalorder %s36, %s37
      %p49 = scmp.eq.s32.totalorder %s32, 1
      %p50 = por %p48, %p49
      %p52 = scmp.ne.s32.totalorder %s37, %s51
      %p53 = scmp.eq.s32.totalorder %s32, 0
      %p54 = por %p52, %p53
      %s55 = ssub.s32 %s26, %s33
      %p56 = scmp.eq.s32.totalorder %s55, 0
      %s58 = sadd.s32 %s57, 1
      %s59 = scalar_select %p56, %s57, %s58
      %p62 = pneg %p56
      %p63 = scmp.eq.s32.totalorder %s26, 1
      %p64 = por %p62, %p63
      %p65 = scmp.ne.s32.totalorder %s57, %s60
      %p66 = scmp.eq.s32.totalorder %s26, 0
      %p67 = por %p65, %p66
      %p68 = scmp.ne.s32.totalorder %s57, %s60
      %p69 = scmp.eq.s32.totalorder %s31, 1
      %p70 = por %p68, %p69
      %p71 = scmp.ne.s32.totalorder %s60, %s61
      %p72 = scmp.eq.s32.totalorder %s31, 0
      %p73 = por %p71, %p72
      %p74 = scmp.ne.s32.totalorder %s60, %s61
      %p75 = scmp.eq.s32.totalorder %s32, 1
      %p76 = por %p74, %p75
      %p78 = scmp.ne.s32.totalorder %s61, %s77
      %p79 = scmp.eq.s32.totalorder %s32, 0
      %p80 = por %p78, %p79
      %s81 = ssub.s32 %s26, %s33
      %p82 = scmp.eq.s32.totalorder %s81, 0
      %s84 = sadd.s32 %s83, 1
      %s85 = scalar_select %p82, %s83, %s84
      %p88 = pneg %p82
      %p89 = scmp.eq.s32.totalorder %s26, 1
      %p90 = por %p88, %p89
      %p91 = scmp.ne.s32.totalorder %s83, %s86
      %p92 = scmp.eq.s32.totalorder %s26, 0
      %p93 = por %p91, %p92
      %p94 = scmp.ne.s32.totalorder %s83, %s86
      %p95 = scmp.eq.s32.totalorder %s31, 1
      %p96 = por %p94, %p95
      %p97 = scmp.ne.s32.totalorder %s86, %s87
      %p98 = scmp.eq.s32.totalorder %s31, 0
      %p99 = por %p97, %p98
      %p100 = scmp.ne.s32.totalorder %s86, %s87
      %p101 = scmp.eq.s32.totalorder %s32, 1
      %p102 = por %p100, %p101
      %p104 = scmp.ne.s32.totalorder %s87, %s103
      %p105 = scmp.eq.s32.totalorder %s32, 0
      %p106 = por %p104, %p105
      %s107 = ssub.s32 %s26, %s33
      %p108 = scmp.eq.s32.totalorder %s107, 0
      %s110 = sadd.s32 %s109, 1
      %s111 = scalar_select %p108, %s109, %s110
      %p114 = pneg %p108
      %p115 = scmp.eq.s32.totalorder %s26, 1
      %p116 = por %p114, %p115
      %p117 = scmp.ne.s32.totalorder %s109, %s112
      %p118 = scmp.eq.s32.totalorder %s26, 0
      %p119 = por %p117, %p118
      %p120 = scmp.ne.s32.totalorder %s109, %s112
      %p121 = scmp.eq.s32.totalorder %s31, 1
      %p122 = por %p120, %p121
      %p123 = scmp.ne.s32.totalorder %s112, %s113
      %p124 = scmp.eq.s32.totalorder %s31, 0
      %p125 = por %p123, %p124
      %p126 = scmp.ne.s32.totalorder %s112, %s113
      %p127 = scmp.eq.s32.totalorder %s32, 1
      %p128 = por %p126, %p127
      %p130 = scmp.ne.s32.totalorder %s113, %s129
      %p131 = scmp.eq.s32.totalorder %s32, 0
      %p132 = por %p130, %p131
      %s133 = ssub.s32 %s26, %s33
      %p134 = scmp.eq.s32.totalorder %s133, 0
      %s136 = sadd.s32 %s135, 1
      %s137 = scalar_select %p134, %s135, %s136
      %p140 = pneg %p134
      %p141 = scmp.eq.s32.totalorder %s26, 1
      %p142 = por %p140, %p141
      %p143 = scmp.ne.s32.totalorder %s135, %s138
      %p144 = scmp.eq.s32.totalorder %s26, 0
      %p145 = por %p143, %p144
      %p146 = scmp.ne.s32.totalorder %s135, %s138
      %p147 = scmp.eq.s32.totalorder %s31, 1
      %p148 = por %p146, %p147
      %p149 = scmp.ne.s32.totalorder %s138, %s139
      %p150 = scmp.eq.s32.totalorder %s31, 0
      %p151 = por %p149, %p150
      %p152 = scmp.ne.s32.totalorder %s138, %s139
      %p153 = scmp.eq.s32.totalorder %s32, 1
      %p154 = por %p152, %p153
      %p156 = scmp.ne.s32.totalorder %s139, %s155
      %p157 = scmp.eq.s32.totalorder %s32, 0
      %p158 = por %p156, %p157
      %s159 = ssub.s32 %s26, %s33
      %p160 = scmp.eq.s32.totalorder %s159, 0
      %s162 = sadd.s32 %s161, 1
      %s163 = scalar_select %p160, %s161, %s162
      %p166 = pneg %p160
      %p167 = scmp.eq.s32.totalorder %s26, 1
      %p168 = por %p166, %p167
      %p169 = scmp.ne.s32.totalorder %s161, %s164
      %p170 = scmp.eq.s32.totalorder %s26, 0
      %p171 = por %p169, %p170
      %p172 = scmp.ne.s32.totalorder %s161, %s164
      %p173 = scmp.eq.s32.totalorder %s31, 1
      %p174 = por %p172, %p173
      %p175 = scmp.ne.s32.totalorder %s164, %s165
      %p176 = scmp.eq.s32.totalorder %s31, 0
      %p177 = por %p175, %p176
      %p178 = scmp.ne.s32.totalorder %s164, %s165
      %p179 = scmp.eq.s32.totalorder %s32, 1
      %p180 = por %p178, %p179
      %p182 = scmp.ne.s32.totalorder %s165, %s181
      %p183 = scmp.eq.s32.totalorder %s32, 0
      %p184 = por %p182, %p183
      %s185 = ssub.s32 %s26, %s33
      %p186 = scmp.eq.s32.totalorder %s185, 0
      %s188 = sadd.s32 %s187, 1
      %s189 = scalar_select %p186, %s187, %s188
      %p192 = pneg %p186
      %p193 = scmp.eq.s32.totalorder %s26, 1
      %p194 = por %p192, %p193
      %p195 = scmp.ne.s32.totalorder %s187, %s190
      %p196 = scmp.eq.s32.totalorder %s26, 0
      %p197 = por %p195, %p196
      %p198 = scmp.ne.s32.totalorder %s187, %s190
      %p199 = scmp.eq.s32.totalorder %s31, 1
      %p200 = por %p198, %p199
      %p201 = scmp.ne.s32.totalorder %s190, %s191
      %p202 = scmp.eq.s32.totalorder %s31, 0
      %p203 = por %p201, %p202
      %p204 = scmp.ne.s32.totalorder %s190, %s191
      %p205 = scmp.eq.s32.totalorder %s32, 1
      %p206 = por %p204, %p205
      %p208 = scmp.ne.s32.totalorder %s191, %s207
      %p209 = scmp.eq.s32.totalorder %s32, 0
      %p210 = por %p208, %p209
      %s211 = ssub.s32 %s26, %s33
      %p212 = scmp.eq.s32.totalorder %s211, 0
      %s214 = sadd.s32 %s213, 1
      %s215 = scalar_select %p212, %s213, %s214
      %p218 = pneg %p212
      %p219 = scmp.eq.s32.totalorder %s26, 1
      %p220 = por %p218, %p219
      %p221 = scmp.ne.s32.totalorder %s213, %s216
      %p222 = scmp.eq.s32.totalorder %s26, 0
      %p223 = por %p221, %p222
      %p224 = scmp.ne.s32.totalorder %s213, %s216
      %p225 = scmp.eq.s32.totalorder %s31, 1
      %p226 = por %p224, %p225
      %p227 = scmp.ne.s32.totalorder %s216, %s217
      %p228 = scmp.eq.s32.totalorder %s31, 0
      %p229 = por %p227, %p228
      %p230 = scmp.ne.s32.totalorder %s216, %s217
      %p231 = scmp.eq.s32.totalorder %s32, 1
      %p232 = por %p230, %p231
      %p234 = scmp.ne.s32.totalorder %s217, %s233
      %p235 = scmp.eq.s32.totalorder %s32, 0
      %p236 = por %p234, %p235
      %s237 = ssub.s32 %s26, %s33
      %p238 = scmp.eq.s32.totalorder %s237, 0
      %s240 = sadd.s32 %s239, 1
      %s241 = scalar_select %p238, %s239, %s240
      %p244 = pneg %p238
      %p245 = scmp.eq.s32.totalorder %s26, 1
      %p246 = por %p244, %p245
      %p247 = scmp.ne.s32.totalorder %s239, %s242
      %p248 = scmp.eq.s32.totalorder %s26, 0
      %p249 = por %p247, %p248
      %p250 = scmp.ne.s32.totalorder %s239, %s242
      %p251 = scmp.eq.s32.totalorder %s31, 1
      %p252 = por %p250, %p251
      %p253 = scmp.ne.s32.totalorder %s242, %s243
      %p254 = scmp.eq.s32.totalorder %s31, 0
      %p255 = por %p253, %p254
      %p256 = scmp.ne.s32.totalorder %s242, %s243
      %p257 = scmp.eq.s32.totalorder %s32, 1
      %p258 = por %p256, %p257
      %p260 = scmp.ne.s32.totalorder %s243, %s259
      %p261 = scmp.eq.s32.totalorder %s32, 0
      %p262 = por %p260, %p261
      %s263 = ssub.s32 %s26, %s33
      %p264 = scmp.eq.s32.totalorder %s263, 0
      %s266 = sadd.s32 %s265, 1
      %s267 = scalar_select %p264, %s265, %s266
      %p270 = pneg %p264
      %p271 = scmp.eq.s32.totalorder %s26, 1
      %p272 = por %p270, %p271
      %p273 = scmp.ne.s32.totalorder %s265, %s268
      %p274 = scmp.eq.s32.totalorder %s26, 0
      %p275 = por %p273, %p274
      %p276 = scmp.ne.s32.totalorder %s265, %s268
      %p277 = scmp.eq.s32.totalorder %s31, 1
      %p278 = por %p276, %p277
      %p279 = scmp.ne.s32.totalorder %s268, %s269
      %p280 = scmp.eq.s32.totalorder %s31, 0
      %p281 = por %p279, %p280
      %p282 = scmp.ne.s32.totalorder %s268, %s269
      %p283 = scmp.eq.s32.totalorder %s32, 1
      %p284 = por %p282, %p283
      %p286 = scmp.ne.s32.totalorder %s269, %s285
      %p287 = scmp.eq.s32.totalorder %s32, 0
      %p288 = por %p286, %p287
      %s289 = ssub.s32 %s26, %s33
      %p290 = scmp.eq.s32.totalorder %s289, 0
      %s292 = sadd.s32 %s291, 1
      %s293 = scalar_select %p290, %s291, %s292
      %p296 = pneg %p290
      %p297 = scmp.eq.s32.totalorder %s26, 1
      %p298 = por %p296, %p297
      %p299 = scmp.ne.s32.totalorder %s291, %s294
      %p300 = scmp.eq.s32.totalorder %s26, 0
      %p301 = por %p299, %p300
      %p302 = scmp.ne.s32.totalorder %s291, %s294
      %p303 = scmp.eq.s32.totalorder %s31, 1
      %p304 = por %p302, %p303
      %p305 = scmp.ne.s32.totalorder %s294, %s295
      %p306 = scmp.eq.s32.totalorder %s31, 0
      %p307 = por %p305, %p306
      %p308 = scmp.ne.s32.totalorder %s294, %s295
      %p309 = scmp.eq.s32.totalorder %s32, 1
      %p310 = por %p308, %p309
      %p312 = scmp.ne.s32.totalorder %s295, %s311
      %p313 = scmp.eq.s32.totalorder %s32, 0
      %p314 = por %p312, %p313
      %s315 = ssub.s32 %s26, %s33
      %p316 = scmp.eq.s32.totalorder %s315, 0
      %s318 = sadd.s32 %s317, 1
      %s319 = scalar_select %p316, %s317, %s318
      %p322 = pneg %p316
      %p323 = scmp.eq.s32.totalorder %s26, 1
      %p324 = por %p322, %p323
      %p325 = scmp.ne.s32.totalorder %s317, %s320
      %p326 = scmp.eq.s32.totalorder %s26, 0
      %p327 = por %p325, %p326
      %p328 = scmp.ne.s32.totalorder %s317, %s320
      %p329 = scmp.eq.s32.totalorder %s31, 1
      %p330 = por %p328, %p329
      %p331 = scmp.ne.s32.totalorder %s320, %s321
      %p332 = scmp.eq.s32.totalorder %s31, 0
      %p333 = por %p331, %p332
      %p334 = scmp.ne.s32.totalorder %s320, %s321
      %p335 = scmp.eq.s32.totalorder %s32, 1
      %p336 = por %p334, %p335
      %p338 = scmp.ne.s32.totalorder %s321, %s337
      %p339 = scmp.eq.s32.totalorder %s32, 0
      %p340 = por %p338, %p339
      %s341 = ssub.s32 %s26, %s33
      %p342 = scmp.eq.s32.totalorder %s341, 0
      %s344 = sadd.s32 %s343, 1
      %s345 = scalar_select %p342, %s343, %s344
      %p348 = pneg %p342
      %p349 = scmp.eq.s32.totalorder %s26, 1
      %p350 = por %p348, %p349
      %p351 = scmp.ne.s32.totalorder %s343, %s346
      %p352 = scmp.eq.s32.totalorder %s26, 0
      %p353 = por %p351, %p352
      %p354 = scmp.ne.s32.totalorder %s343, %s346
      %p355 = scmp.eq.s32.totalorder %s31, 1
      %p356 = por %p354, %p355
      %p357 = scmp.ne.s32.totalorder %s346, %s347
      %p358 = scmp.eq.s32.totalorder %s31, 0
      %p359 = por %p357, %p358
      %p360 = scmp.ne.s32.totalorder %s346, %s347
      %p361 = scmp.eq.s32.totalorder %s32, 1
      %p362 = por %p360, %p361
      %p364 = scmp.ne.s32.totalorder %s347, %s363
      %p365 = scmp.eq.s32.totalorder %s32, 0
      %p366 = por %p364, %p365
      %s368 = sadd.s32 %s367, 1
      %p371 = scmp.eq.s32.totalorder %s26, 1
      %p372 = scmp.ne.s32.totalorder %s367, %s369
      %p373 = scmp.eq.s32.totalorder %s26, 0
      %p374 = por %p372, %p373
      %p375 = scmp.ne.s32.totalorder %s367, %s369
      %p376 = scmp.eq.s32.totalorder %s31, 1
      %p377 = por %p375, %p376
      %p378 = scmp.ne.s32.totalorder %s369, %s370
      %p379 = scmp.eq.s32.totalorder %s31, 0
      %p380 = por %p378, %p379
      %p381 = scmp.ne.s32.totalorder %s369, %s370
      %p382 = scmp.eq.s32.totalorder %s32, 1
      %p383 = por %p381, %p382
      %p385 = scmp.ne.s32.totalorder %s370, %s384
      %p386 = scmp.eq.s32.totalorder %s32, 0
      %p387 = por %p385, %p386
      %s389 = sadd.s32 %s388, 1
      %p392 = scmp.eq.s32.totalorder %s26, 1
      %p393 = scmp.ne.s32.totalorder %s388, %s390
      %p394 = scmp.eq.s32.totalorder %s26, 0
      %p395 = por %p393, %p394
      %p396 = scmp.ne.s32.totalorder %s388, %s390
      %p397 = scmp.eq.s32.totalorder %s31, 1
      %p398 = por %p396, %p397
      %p399 = scmp.ne.s32.totalorder %s390, %s391
      %p400 = scmp.eq.s32.totalorder %s31, 0
      %p401 = por %p399, %p400
      %p402 = scmp.ne.s32.totalorder %s390, %s391
      %p403 = scmp.eq.s32.totalorder %s32, 1
      %p404 = por %p402, %p403
      %p406 = scmp.ne.s32.totalorder %s391, %s405
      %p407 = scmp.eq.s32.totalorder %s32, 0
      %p408 = por %p406, %p407
      %s410 = sadd.s32 %s409, 1
      %p413 = scmp.eq.s32.totalorder %s26, 1
      %p414 = scmp.ne.s32.totalorder %s409, %s411
      %p415 = scmp.eq.s32.totalorder %s26, 0
      %p416 = por %p414, %p415
      %p417 = scmp.ne.s32.totalorder %s409, %s411
      %p418 = scmp.eq.s32.totalorder %s31, 1
      %p419 = por %p417, %p418
      %p420 = scmp.ne.s32.totalorder %s411, %s412
      %p421 = scmp.eq.s32.totalorder %s31, 0
      %p422 = por %p420, %p421
      %p423 = scmp.ne.s32.totalorder %s411, %s412
      %p424 = scmp.eq.s32.totalorder %s32, 1
      %p425 = por %p423, %p424
      %p427 = scmp.ne.s32.totalorder %s412, %s426
      %p428 = scmp.eq.s32.totalorder %s32, 0
      %p429 = por %p427, %p428
      %s431 = sadd.s32 %s430, 1
      %p434 = scmp.eq.s32.totalorder %s26, 1
      %p435 = scmp.ne.s32.totalorder %s430, %s432
      %p436 = scmp.eq.s32.totalorder %s26, 0
      %p437 = por %p435, %p436
      %p438 = scmp.ne.s32.totalorder %s430, %s432
      %p439 = scmp.eq.s32.totalorder %s31, 1
      %p440 = por %p438, %p439
      %p441 = scmp.ne.s32.totalorder %s432, %s433
      %p442 = scmp.eq.s32.totalorder %s31, 0
      %p443 = por %p441, %p442
      %p444 = scmp.ne.s32.totalorder %s432, %s433
      %p445 = scmp.eq.s32.totalorder %s32, 1
      %p446 = por %p444, %p445
      %p448 = scmp.ne.s32.totalorder %s433, %s447
      %p449 = scmp.eq.s32.totalorder %s32, 0
      %p450 = por %p448, %p449
      %s452 = sadd.s32 %s451, 1
      %p455 = scmp.eq.s32.totalorder %s26, 1
      %p456 = scmp.ne.s32.totalorder %s451, %s453
      %p457 = scmp.eq.s32.totalorder %s26, 0
      %p458 = por %p456, %p457
      %p459 = scmp.ne.s32.totalorder %s451, %s453
      %p460 = scmp.eq.s32.totalorder %s31, 1
      %p461 = por %p459, %p460
      %p462 = scmp.ne.s32.totalorder %s453, %s454
      %p463 = scmp.eq.s32.totalorder %s31, 0
      %p464 = por %p462, %p463
      %p465 = scmp.ne.s32.totalorder %s453, %s454
      %p466 = scmp.eq.s32.totalorder %s32, 1
      %p467 = por %p465, %p466
      %p469 = scmp.ne.s32.totalorder %s454, %s468
      %p470 = scmp.eq.s32.totalorder %s32, 0
      %p471 = por %p469, %p470
      %s472 = ssub.s32 %s26, %s33
      %p473 = scmp.eq.s32.totalorder %s472, 0
      %s475 = sadd.s32 %s474, 1
      %s476 = scalar_select %p473, %s474, %s475
      %p479 = pneg %p473
      %p480 = scmp.eq.s32.totalorder %s26, 1
      %p481 = por %p479, %p480
      %p482 = scmp.ne.s32.totalorder %s474, %s477
      %p483 = scmp.eq.s32.totalorder %s26, 0
      %p484 = por %p482, %p483
      %p485 = scmp.ne.s32.totalorder %s474, %s477
      %p486 = scmp.eq.s32.totalorder %s31, 1
      %p487 = por %p485, %p486
      %p488 = scmp.ne.s32.totalorder %s477, %s478
      %p489 = scmp.eq.s32.totalorder %s31, 0
      %p490 = por %p488, %p489
      %p491 = scmp.ne.s32.totalorder %s477, %s478
      %p492 = scmp.eq.s32.totalorder %s32, 1
      %p493 = por %p491, %p492
      %p495 = scmp.ne.s32.totalorder %s478, %s494
      %p496 = scmp.eq.s32.totalorder %s32, 0
      %p497 = por %p495, %p496
      %p498 = scmp.le.s32.totalorder 1, %s26
      %p499 = scmp.lt.s32.totalorder %s26, 3
      %p500 = pnand %p498, %p499
      %p501 = pneg %p500
      // Predicated region
      $region9: #{vit_forward.3} parent=5 // pred_check
        _
      $region10: #{vit_forward.3} parent=5 // pred_check_branch
        %503 = sbr.rel (%p500) target = $region12
      $region11: #{vit_forward.3} parent=5 // pred_region
        %s504 = ssub.s32 %s26, 1
        // Predicated region
        $region13: #{vit_forward.3} parent=11 // pred_check
          %p505 = pneg %p47
        $region14: #{vit_forward.3} parent=11 // pred_check_branch
          %507 = sbr.rel (%p505) target = $region16
        $region15: #{vit_forward.3} parent=11 // pred_region
          _
        $region16: #{vit_forward.3} parent=11 // pred_fallthru
          _
        // Predicated region
        $region17: #{vit_forward.3} parent=11 // pred_check
          %p508 = pneg %p380
        $region18: #{vit_forward.3} parent=11 // pred_check_branch
          %510 = sbr.rel (%p508) target = $region20
        $region19: #{vit_forward.3} parent=11 // pred_region
          _
        $region20: #{vit_forward.3} parent=11 // pred_fallthru
          _
        // Predicated region
        $region21: #{vit_forward.3} parent=11 // pred_check
          %p511 = pneg %p401
        $region22: #{vit_forward.3} parent=11 // pred_check_branch
          %513 = sbr.rel (%p511) target = $region24
        $region23: #{vit_forward.3} parent=11 // pred_region
          _
        $region24: #{vit_forward.3} parent=11 // pred_fallthru
          _
        // Predicated region
        $region25: #{vit_forward.3} parent=11 // pred_check
          %p514 = pneg %p422
        $region26: #{vit_forward.3} parent=11 // pred_check_branch
          %516 = sbr.rel (%p514) target = $region28
        $region27: #{vit_forward.3} parent=11 // pred_region
          _
        $region28: #{vit_forward.3} parent=11 // pred_fallthru
          _
        // Predicated region
        $region29: #{vit_forward.3} parent=11 // pred_check
          %p517 = pneg %p443
        $region30: #{vit_forward.3} parent=11 // pred_check_branch
          %519 = sbr.rel (%p517) target = $region32
        $region31: #{vit_forward.3} parent=11 // pred_region
          _
        $region32: #{vit_forward.3} parent=11 // pred_fallthru
          _
      $region12: #{vit_forward.3} parent=5 // pred_fallthru
        _
      %p520 = scmp.lt.s32.totalorder %s26, 2
      // Predicated region
      $region33: #{vit_forward.3} parent=5 // pred_check
        %p521 = pneg %p520
      $region34: #{vit_forward.3} parent=5 // pred_check_branch
        %523 = sbr.rel (%p521) target = $region36
      $region35: #{vit_forward.3} parent=5 // pred_region
        // Predicated region
        $region37: #{vit_forward.3} parent=35 // pred_check
          %p524 = pneg %p67
        $region38: #{vit_forward.3} parent=35 // pred_check_branch
          %526 = sbr.rel (%p524) target = $region40
        $region39: #{vit_forward.3} parent=35 // pred_region
          %p527 = scmp.lt.s32.totalorder %s26, 1
          %s528 = scalar_select %p527, %s26, 1
          %s529 = scalar_lea.vmem %s1, %s528
        $region40: #{vit_forward.3} parent=35 // pred_fallthru
          _
        // Predicated region
        $region41: #{vit_forward.3} parent=35 // pred_check
          %p530 = pneg %p93
        $region42: #{vit_forward.3} parent=35 // pred_check_branch
          %532 = sbr.rel (%p530) target = $region44
        $region43: #{vit_forward.3} parent=35 // pred_region
          %p533 = scmp.lt.s32.totalorder %s26, 1
          %s534 = scalar_select %p533, %s26, 1
          %s535 = scalar_lea.vmem %s2, %s534
        $region44: #{vit_forward.3} parent=35 // pred_fallthru
          _
        // Predicated region
        $region45: #{vit_forward.3} parent=35 // pred_check
          %p536 = pneg %p119
        $region46: #{vit_forward.3} parent=35 // pred_check_branch
          %538 = sbr.rel (%p536) target = $region48
        $region47: #{vit_forward.3} parent=35 // pred_region
          %p539 = scmp.lt.s32.totalorder %s26, 1
          %s540 = scalar_select %p539, %s26, 1
          %s541 = smul.addr %s540, 4
          %s542 = smul.addr %s541, 4
          %s543 = scalar_lea.vmem %s3, %s542
        $region48: #{vit_forward.3} parent=35 // pred_fallthru
          _
        // Predicated region
        $region49: #{vit_forward.3} parent=35 // pred_check
          %p544 = pneg %p145
        $region50: #{vit_forward.3} parent=35 // pred_check_branch
          %546 = sbr.rel (%p544) target = $region52
        $region51: #{vit_forward.3} parent=35 // pred_region
          %p547 = scmp.lt.s32.totalorder %s26, 1
          %s548 = scalar_select %p547, %s26, 1
          %s549 = scalar_lea.vmem %s4, %s548
        $region52: #{vit_forward.3} parent=35 // pred_fallthru
          _
        // Predicated region
        $region53: #{vit_forward.3} parent=35 // pred_check
          %p550 = pneg %p171
        $region54: #{vit_forward.3} parent=35 // pred_check_branch
          %552 = sbr.rel (%p550) target = $region56
        $region55: #{vit_forward.3} parent=35 // pred_region
          %p553 = scmp.lt.s32.totalorder %s26, 1
          %s554 = scalar_select %p553, %s26, 1
          %s555 = smul.addr %s554, 4
          %s556 = smul.addr %s555, 4
          %s557 = scalar_lea.vmem %s5, %s556
        $region56: #{vit_forward.3} parent=35 // pred_fallthru
          _
        // Predicated region
        $region57: #{vit_forward.3} parent=35 // pred_check
          %p558 = pneg %p197
        $region58: #{vit_forward.3} parent=35 // pred_check_branch
          %560 = sbr.rel (%p558) target = $region60
        $region59: #{vit_forward.3} parent=35 // pred_region
          %p561 = scmp.lt.s32.totalorder %s26, 1
          %s562 = scalar_select %p561, %s26, 1
          %s563 = scalar_lea.vmem %s6, %s562
        $region60: #{vit_forward.3} parent=35 // pred_fallthru
          _
        // Predicated region
        $region61: #{vit_forward.3} parent=35 // pred_check
          %p564 = pneg %p223
        $region62: #{vit_forward.3} parent=35 // pred_check_branch
          %566 = sbr.rel (%p564) target = $region64
        $region63: #{vit_forward.3} parent=35 // pred_region
          %p567 = scmp.lt.s32.totalorder %s26, 1
          %s568 = scalar_select %p567, %s26, 1
          %s569 = scalar_lea.vmem %s7, %s568
        $region64: #{vit_forward.3} parent=35 // pred_fallthru
          _
        // Predicated region
        $region65: #{vit_forward.3} parent=35 // pred_check
          %p570 = pneg %p249
        $region66: #{vit_forward.3} parent=35 // pred_check_branch
          %572 = sbr.rel (%p570) target = $region68
        $region67: #{vit_forward.3} parent=35 // pred_region
          %p573 = scmp.lt.s32.totalorder %s26, 1
          %s574 = scalar_select %p573, %s26, 1
          %s575 = scalar_lea.vmem %s8, %s574
        $region68: #{vit_forward.3} parent=35 // pred_fallthru
          _
        // Predicated region
        $region69: #{vit_forward.3} parent=35 // pred_check
          %p576 = pneg %p275
        $region70: #{vit_forward.3} parent=35 // pred_check_branch
          %578 = sbr.rel (%p576) target = $region72
        $region71: #{vit_forward.3} parent=35 // pred_region
          %p579 = scmp.lt.s32.totalorder %s26, 1
          %s580 = scalar_select %p579, %s26, 1
          %s581 = smul.addr %s580, 4
          %s582 = smul.addr %s581, 4
          %s583 = scalar_lea.vmem %s9, %s582
        $region72: #{vit_forward.3} parent=35 // pred_fallthru
          _
        // Predicated region
        $region73: #{vit_forward.3} parent=35 // pred_check
          %p584 = pneg %p301
        $region74: #{vit_forward.3} parent=35 // pred_check_branch
          %586 = sbr.rel (%p584) target = $region76
        $region75: #{vit_forward.3} parent=35 // pred_region
          %p587 = scmp.lt.s32.totalorder %s26, 1
          %s588 = scalar_select %p587, %s26, 1
          %s589 = scalar_lea.vmem %s10, %s588
        $region76: #{vit_forward.3} parent=35 // pred_fallthru
          _
        // Predicated region
        $region77: #{vit_forward.3} parent=35 // pred_check
          %p590 = pneg %p327
        $region78: #{vit_forward.3} parent=35 // pred_check_branch
          %592 = sbr.rel (%p590) target = $region80
        $region79: #{vit_forward.3} parent=35 // pred_region
          %p593 = scmp.lt.s32.totalorder %s26, 1
          %s594 = scalar_select %p593, %s26, 1
          %s595 = smul.addr %s594, 8
          %s596 = smul.addr %s595, 4
          %s597 = scalar_lea.vmem %s11, %s596
        $region80: #{vit_forward.3} parent=35 // pred_fallthru
          _
        // Predicated region
        $region81: #{vit_forward.3} parent=35 // pred_check
          %p598 = pneg %p353
        $region82: #{vit_forward.3} parent=35 // pred_check_branch
          %600 = sbr.rel (%p598) target = $region84
        $region83: #{vit_forward.3} parent=35 // pred_region
          %p601 = scmp.lt.s32.totalorder %s26, 1
          %s602 = scalar_select %p601, %s26, 1
          %s603 = scalar_lea.vmem %s12, %s602
        $region84: #{vit_forward.3} parent=35 // pred_fallthru
          _
      $region36: #{vit_forward.3} parent=5 // pred_fallthru
        _
      %p604 = scmp.le.s32.totalorder 1, %s26
      %p605 = scmp.lt.s32.totalorder %s26, 3
      %p606 = pnand %p604, %p605
      %p607 = pneg %p606
      // Predicated region
      $region85: #{vit_forward.3} parent=5 // pred_check
        _
      $region86: #{vit_forward.3} parent=5 // pred_check_branch
        %609 = sbr.rel (%p606) target = $region88
      $region87: #{vit_forward.3} parent=5 // pred_region
        %s610 = ssub.s32 %s26, 1
        %p611 = pneg %p47
        %p612 = pneg %p44
        %p613 = scmp.lt.s32.totalorder %s31, 1
        %s614 = scalar_select %p613, %s31, 1
        %s615 = scalar_lea.vmem %s1, %s614
        %p616 = pneg %p73
        %p617 = pneg %p70
        %p618 = scmp.lt.s32.totalorder %s31, 1
        %s619 = scalar_select %p618, %s31, 1
        %s620 = scalar_lea.vmem %s2, %s619
        %p621 = pneg %p99
        %p622 = pneg %p96
        %p623 = scmp.lt.s32.totalorder %s31, 1
        %s624 = scalar_select %p623, %s31, 1
        %s625 = smul.addr %s624, 4
        %s626 = smul.addr %s625, 4
        %s627 = scalar_lea.vmem %s3, %s626
        %p628 = pneg %p125
        %p629 = pneg %p122
        %p630 = scmp.lt.s32.totalorder %s31, 1
        %s631 = scalar_select %p630, %s31, 1
        %s632 = scalar_lea.vmem %s4, %s631
        %p633 = pneg %p151
        %p634 = pneg %p148
        %p635 = scmp.lt.s32.totalorder %s31, 1
        %s636 = scalar_select %p635, %s31, 1
        %s637 = smul.addr %s636, 4
        %s638 = smul.addr %s637, 4
        %s639 = scalar_lea.vmem %s5, %s638
        %p640 = pneg %p177
        %p641 = pneg %p174
        %p642 = scmp.lt.s32.totalorder %s31, 1
        %s643 = scalar_select %p642, %s31, 1
        %s644 = scalar_lea.vmem %s6, %s643
        %p645 = pneg %p203
        %p646 = pneg %p200
        %p647 = scmp.lt.s32.totalorder %s31, 1
        %s648 = scalar_select %p647, %s31, 1
        %s649 = scalar_lea.vmem %s7, %s648
        %p650 = pneg %p229
        %p651 = pneg %p226
        %p652 = scmp.lt.s32.totalorder %s31, 1
        %s653 = scalar_select %p652, %s31, 1
        %s654 = scalar_lea.vmem %s8, %s653
        %p655 = pneg %p255
        %p656 = pneg %p252
        %p657 = scmp.lt.s32.totalorder %s31, 1
        %s658 = scalar_select %p657, %s31, 1
        %s659 = smul.addr %s658, 4
        %s660 = smul.addr %s659, 4
        %s661 = scalar_lea.vmem %s9, %s660
        %p662 = pneg %p281
        %p663 = pneg %p278
        %p664 = scmp.lt.s32.totalorder %s31, 1
        %s665 = scalar_select %p664, %s31, 1
        %s666 = scalar_lea.vmem %s10, %s665
        %p667 = pneg %p307
        %p668 = pneg %p304
        %p669 = scmp.lt.s32.totalorder %s31, 1
        %s670 = scalar_select %p669, %s31, 1
        %s671 = smul.addr %s670, 8
        %s672 = smul.addr %s671, 4
        %s673 = scalar_lea.vmem %s11, %s672
        %p674 = pneg %p333
        %p675 = pneg %p330
        %p676 = scmp.lt.s32.totalorder %s31, 1
        %s677 = scalar_select %p676, %s31, 1
        %s678 = scalar_lea.vmem %s12, %s677
        %p679 = pneg %p359
        %p680 = pneg %p356
        %p681 = pneg %p380
        %p682 = pneg %p377
        %p683 = pneg %p401
        %p684 = pneg %p398
        %p685 = pneg %p422
        %p686 = pneg %p419
        %p687 = pneg %p443
        %p688 = pneg %p440
        %p689 = pneg %p464
        %p690 = pneg %p461
        %p691 = pneg %p490
        %p692 = pneg %p487
        %p693 = scmp.lt.s32.totalorder %s31, 1
        %s694 = scalar_select %p693, %s31, 1
        %s695 = smul.addr %s694, 24
        %s696 = smul.addr %s695, 8
        %s697 = scalar_lea.vmem %s18, %s696
        %p698 = scmp.lt.s32.totalorder %s31, 1
        %s699 = scalar_select %p698, %s31, 1
        %s700 = scalar_lea.vmem %s1, %s699
        %p701 = scmp.lt.s32.totalorder %s31, 1
        %s702 = scalar_select %p701, %s31, 1
        %s703 = scalar_lea.vmem %s2, %s702
        %p704 = scmp.lt.s32.totalorder %s31, 1
        %s705 = scalar_select %p704, %s31, 1
        %s706 = smul.addr %s705, 4
        %s707 = smul.addr %s706, 4
        %s708 = scalar_lea.vmem %s3, %s707
        %p709 = scmp.lt.s32.totalorder %s31, 1
        %s710 = scalar_select %p709, %s31, 1
        %s711 = scalar_lea.vmem %s4, %s710
        %p712 = scmp.lt.s32.totalorder %s31, 1
        %s713 = scalar_select %p712, %s31, 1
        %s714 = smul.addr %s713, 4
        %s715 = smul.addr %s714, 4
        %s716 = scalar_lea.vmem %s5, %s715
        %p717 = scmp.lt.s32.totalorder %s31, 1
        %s718 = scalar_select %p717, %s31, 1
        %s719 = scalar_lea.vmem %s6, %s718
        %p720 = scmp.lt.s32.totalorder %s31, 1
        %s721 = scalar_select %p720, %s31, 1
        %s722 = scalar_lea.vmem %s7, %s721
        %p723 = scmp.lt.s32.totalorder %s31, 1
        %s724 = scalar_select %p723, %s31, 1
        %s725 = scalar_lea.vmem %s8, %s724
        %p726 = scmp.lt.s32.totalorder %s31, 1
        %s727 = scalar_select %p726, %s31, 1
        %s728 = smul.addr %s727, 4
        %s729 = smul.addr %s728, 4
        %s730 = scalar_lea.vmem %s9, %s729
        %p731 = scmp.lt.s32.totalorder %s31, 1
        %s732 = scalar_select %p731, %s31, 1
        %s733 = scalar_lea.vmem %s10, %s732
        %p734 = scmp.lt.s32.totalorder %s31, 1
        %s735 = scalar_select %p734, %s31, 1
        %s736 = smul.addr %s735, 8
        %s737 = smul.addr %s736, 4
        %s738 = scalar_lea.vmem %s11, %s737
        %p739 = scmp.lt.s32.totalorder %s31, 1
        %s740 = scalar_select %p739, %s31, 1
        %s741 = scalar_lea.vmem %s12, %s740
        %p742 = scmp.lt.s32.totalorder %s31, 1
        %s743 = scalar_select %p742, %s31, 1
        %s744 = smul.addr %s743, 24
        %s745 = smul.addr %s744, 8
        %s746 = scalar_lea.vmem %s18, %s745
        %p748 = scmp.eq.s32.totalorder %s31, 0
        // Predicated region
        $region89: #{vit_forward.3} parent=87 // pred_check
          %p749 = pneg %p748
        $region90: #{vit_forward.3} parent=87 // pred_check_branch
          %751 = sbr.rel (%p749) target = $region92
        $region91: #{vit_forward.3} parent=87 // pred_region
          %v752 = vld [vmem:[%s0] sm:$0xff]
          %v753 = vld [vmem:[%s0 + $0x8] sm:$0xff]
          %v754 = vld [vmem:[%s0 + $0x10] sm:$0xff]
          %v755 = vld [vmem:[%s0 + $0x18] sm:$0xff]
          %v756 = vld [vmem:[%s0 + $0x20] sm:$0x3]
          %vm757 = vcmask 261120
          %758 = vst.msk [vmem:[#allocation2] sm:$0xff] %vm757, %v752
          %759 = vst.msk [vmem:[#allocation2 + $0x8] sm:$0xff] %vm757, %v753
          %760 = vst.msk [vmem:[#allocation2 + $0x10] sm:$0xff] %vm757, %v754
          %761 = vst.msk [vmem:[#allocation2 + $0x18] sm:$0xff] %vm757, %v755
          %vm762 = vcmask 254976
          %763 = vst.msk [vmem:[#allocation2 + $0x20] sm:$0x3] %vm762, %v756
        $region92: #{vit_forward.3} parent=87 // pred_fallthru
          _
        %v764 = vld [vmem:[%s700] sm:$0x1]
        %v765 = vld [vmem:[%s703] sm:$0x1]
        %v766 = vld [vmem:[%s708] sm:$0xf]
        %v767 = vld [vmem:[%s708 + $0x4] sm:$0xf]
        %v768 = vld [vmem:[%s708 + $0x8] sm:$0xf]
        %v769 = vld [vmem:[%s708 + $0xc] sm:$0xf]
        %v770 = vld [vmem:[%s711] sm:$0x1]
        %v771 = vld [vmem:[%s716] sm:$0xf]
        %v772 = vld [vmem:[%s716 + $0x4] sm:$0xf]
        %v773 = vld [vmem:[%s716 + $0x8] sm:$0xf]
        %v774 = vld [vmem:[%s716 + $0xc] sm:$0xf]
        %v775 = vld [vmem:[%s719] sm:$0x1]
        %v776 = vld [vmem:[%s722] sm:$0x1]
        %v777 = vld [vmem:[%s725] sm:$0x1]
        %v778 = vld [vmem:[%s730] sm:$0xf]
        %v779 = vld [vmem:[%s730 + $0x4] sm:$0xf]
        %v780 = vld [vmem:[%s730 + $0x8] sm:$0xf]
        %v781 = vld [vmem:[%s730 + $0xc] sm:$0xf]
        %v782 = vld [vmem:[%s733] sm:$0x1]
        %v783 = vld [vmem:[%s738] sm:$0xf]
        %v784 = vld [vmem:[%s738 + $0x4] sm:$0xf]
        %v785 = vld [vmem:[%s738 + $0x8] sm:$0xf]
        %v786 = vld [vmem:[%s738 + $0xc] sm:$0xf]
        %v787 = vld [vmem:[%s738 + $0x10] sm:$0xf]
        %v788 = vld [vmem:[%s738 + $0x14] sm:$0xf]
        %v789 = vld [vmem:[%s738 + $0x18] sm:$0xf]
        %v790 = vld [vmem:[%s738 + $0x1c] sm:$0xf]
        %v791 = vld [vmem:[%s741] sm:$0x1]
        %v792 = vld [vmem:[#allocation2] sm:$0xff]
        %v793 = vld [vmem:[#allocation2 + $0x8] sm:$0xff]
        %v794 = vld [vmem:[#allocation2 + $0x10] sm:$0xff]
        %v795 = vld [vmem:[#allocation2 + $0x18] sm:$0xff]
        %v796 = vld [vmem:[#allocation2 + $0x20] sm:$0x3]
        %vm797 = vcmask 261120
        %v798 = vsel %vm797, %v792, 0.0
        %799 = vadd.xlane.f32.xlu0 %v798
        %v800 = vpop.xlane.xlu0 %799
        %v801 = vsel %vm797, %v793, 0.0
        %802 = vadd.xlane.f32.xlu0 %v801
        %v803 = vpop.xlane.xlu0 %802
        %v804 = vsel %vm797, %v794, 0.0
        %805 = vadd.xlane.f32.xlu0 %v804
        %v806 = vpop.xlane.xlu0 %805
        %v807 = vsel %vm797, %v795, 0.0
        %808 = vadd.xlane.f32.xlu0 %v807
        %v809 = vpop.xlane.xlu0 %808
        %vm810 = vcmask 254976
        %v811 = vsel %vm810, %v796, 0.0
        %812 = vadd.xlane.f32.xlu0 %v811
        %v813 = vpop.xlane.xlu0 %812
        %v814 = vrcp.pop 32.0
        %v815 = vmul.f32 %v800, %v814
        %v816 = vmul.f32 %v803, %v814
        %v817 = vmul.f32 %v806, %v814
        %v818 = vmul.f32 %v809, %v814
        %v819 = vmul.f32 %v813, %v814
        %v820 = vsub.f32 %v792, %v815
        %v821 = vsub.f32 %v793, %v816
        %v822 = vsub.f32 %v794, %v817
        %v823 = vsub.f32 %v795, %v818
        %v824 = vsub.f32 %v796, %v819
        %v825 = vmul.f32 %v820, %v820
        %v826 = vmul.f32 %v821, %v821
        %v827 = vmul.f32 %v822, %v822
        %v828 = vmul.f32 %v823, %v823
        %v829 = vmul.f32 %v824, %v824
        %v830 = vsel %vm797, %v825, 0.0
        %831 = vadd.xlane.f32.xlu0 %v830
        %v832 = vpop.xlane.xlu0 %831
        %v833 = vsel %vm797, %v826, 0.0
        %834 = vadd.xlane.f32.xlu0 %v833
        %v835 = vpop.xlane.xlu0 %834
        %v836 = vsel %vm797, %v827, 0.0
        %837 = vadd.xlane.f32.xlu0 %v836
        %v838 = vpop.xlane.xlu0 %837
        %v839 = vsel %vm797, %v828, 0.0
        %840 = vadd.xlane.f32.xlu0 %v839
        %v841 = vpop.xlane.xlu0 %840
        %v842 = vsel %vm810, %v829, 0.0
        %843 = vadd.xlane.f32.xlu0 %v842
        %v844 = vpop.xlane.xlu0 %843
        %v845 = vmul.f32 %v832, %v814
        %v846 = vmul.f32 %v835, %v814
        %v847 = vmul.f32 %v838, %v814
        %v848 = vmul.f32 %v841, %v814
        %v849 = vmul.f32 %v844, %v814
        %v850 = vadd.f32 %v845, 1e-05
        %v851 = vadd.f32 %v846, 1e-05
        %v852 = vadd.f32 %v847, 1e-05
        %v853 = vadd.f32 %v848, 1e-05
        %v854 = vadd.f32 %v849, 1e-05
        %v855 = vrsqrt.pop %v850
        %v856 = vrsqrt.pop %v851
        %v857 = vrsqrt.pop %v852
        %v858 = vrsqrt.pop %v853
        %v859 = vrsqrt.pop %v854
        %v860 = vmul.f32 %v820, %v855
        %v861 = vmul.f32 %v821, %v856
        %v862 = vmul.f32 %v822, %v857
        %v863 = vmul.f32 %v823, %v858
        %v864 = vmul.f32 %v824, %v859
        %v866 = vlaneseq
        %v867 = vshrl.u32 %v866, 7
        %v868 = vsub.s32 0, %v867
        %v869 = vrot.slane %v764, %v868
        %v871 = vmul.f32 %v860, %v869
        %v872 = vmul.f32 %v861, %v869
        %v873 = vmul.f32 %v862, %v869
        %v874 = vmul.f32 %v863, %v869
        %v875 = vmul.f32 %v864, %v869
        %v877 = vlaneseq
        %v878 = vshrl.u32 %v877, 7
        %v879 = vsub.s32 0, %v878
        %v880 = vrot.slane %v765, %v879
        %v882 = vadd.f32 %v871, %v880
        %v883 = vadd.f32 %v872, %v880
        %v884 = vadd.f32 %v873, %v880
        %v885 = vadd.f32 %v874, %v880
        %v886 = vadd.f32 %v875, %v880
        %v887 = vpack.c.bf16 %v883, %v882
        %v888 = vpack.c.bf16 %v885, %v884
        %v889 = vpack.c.bf16 %v886, %v886
        %v891 = vlaneseq
        %v892 = vshrl.u32 %v891, 7
        %v893 = vsub.s32 0, %v892
        %v894 = vrot.slane %v770, %v893
        %v900 = vunpack.c.l.b16 %v766
        %v901 = vunpack.c.l.b16 %v767
        %v902 = vunpack.c.l.b16 %v768
        %v903 = vunpack.c.l.b16 %v769
        %v904 = vpack.c.b16 %v901, %v900
        %v905 = vpack.c.b16 %v903, %v902
        %v909 = vsel %vm797, %v887, 0
        %v912 = vsel %vm797, %v888, 0
        %v915 = vsel %vm797, %v889, 0
        %917 = vmatprep.subr.bf16.mxu0 0
        %918 = vmatpush1.bf16.msra.mxu0 %v904
        %919 = vmatprep.subr.bf16.mxu0 0
        %920 = vmatpush1.bf16.msra.mxu0 %v905
        %921 = vmatprep.subr.bf16.mxu0 0
        %922 = vmatpush1.bf16.msra.mxu0 0
        %923 = vmatprep.subr.bf16.mxu0 0
        %924 = vmatpush1.bf16.msra.mxu0 0
        %925 = vmatprep.subr.bf16.mxu0 0
        %926 = vmatpush1.bf16.msra.mxu0 0
        %927 = vmatprep.subr.bf16.mxu0 0
        %928 = vmatpush1.bf16.msra.mxu0 0
        %929 = vmatprep.subr.bf16.mxu0 0
        %930 = vmatpush1.bf16.msra.mxu0 0
        %931 = vmatprep.subr.bf16.mxu0 0
        %932 = vmatpush1.bf16.msra.mxu0 0
        %933 = vmatprep.subr.bf16.mxu0 0
        %934 = vmatpush1.bf16.msra.mxu0 0
        %935 = vmatprep.subr.bf16.mxu0 0
        %936 = vmatpush1.bf16.msra.mxu0 0
        %937 = vmatprep.subr.bf16.mxu0 0
        %938 = vmatpush1.bf16.msra.mxu0 0
        %939 = vmatprep.subr.bf16.mxu0 0
        %940 = vmatpush1.bf16.msra.mxu0 0
        %941 = vmatprep.subr.bf16.mxu0 0
        %942 = vmatpush1.bf16.msra.mxu0 0
        %943 = vmatprep.subr.bf16.mxu0 0
        %944 = vmatpush1.bf16.msra.mxu0 0
        %945 = vmatprep.subr.bf16.mxu0 0
        %946 = vmatpush1.bf16.msra.mxu0 0
        %947 = vmatprep.subr.bf16.mxu0 0
        %948 = vmatpush1.bf16.msra.mxu0 0
        %949 = vmatprep.mubr.bf16.mxu0 0
        %950 = vmatmul.mubr.bf16.gmra.mrb[0].mxu0 %v909
        %v951 = vpop.f32.mrb[0].mxu0
        %v952 = vadd.f32 %v894, %v951
        %v953 = vpop.f32.mrb[0].mxu0
        %v954 = vpop.f32.mrb[0].mxu0
        %v955 = vadd.f32 %v894, %v954
        %v956 = vpop.f32.mrb[0].mxu0
        %957 = vmatprep.mubr.bf16.mxu0 0
        %958 = vmatmul.mubr.bf16.gmra.mrb[0].mxu0 %v912
        %v959 = vpop.f32.mrb[0].mxu0
        %v960 = vadd.f32 %v894, %v959
        %v961 = vpop.f32.mrb[0].mxu0
        %v962 = vpop.f32.mrb[0].mxu0
        %v963 = vadd.f32 %v894, %v962
        %v964 = vpop.f32.mrb[0].mxu0
        %965 = vmatprep.mubr.bf16.mxu0 0
        %966 = vmatmul.mubr.bf16.gmra.mrb[0].mxu0 %v915
        %v967 = vpop.f32.mrb[0].mxu0
        %v968 = vadd.f32 %v894, %v967
        %v969 = vpop.f32.mrb[0].mxu0
        %v970 = vpop.f32.mrb[0].mxu0
        %v971 = vpop.f32.mrb[0].mxu0
        %972 = vdwg.mxu0
        %v978 = vcombine.high %v952, %v952
        %v980 = vunpack.c.l.s4 1966171168
        %v981 = vunpack.c.0.s8 %v980
        %v982 = vlaneseq
        %v983 = vshrl.u32 %v982, 7
        %v984 = vsub.s32 %v981, %v983
        %v985 = vrot.slane %v952, %v984
        %v987 = vunpack.c.l.s4 1966171168
        %v988 = vunpack.c.0.s8 %v987
        %v989 = vlaneseq
        %v990 = vshrl.u32 %v989, 7
        %v991 = vsub.s32 %v988, %v990
        %v992 = vrot.slane %v978, %v991
        %v993 = vcombine.high %v985, %v985
        %v994 = vcombine.high %v992, %v992
        %v996 = vunpack.c.l.s4 1966171168
        %v997 = vunpack.c.0.s8 %v996
        %v998 = vlaneseq
        %v999 = vshrl.u32 %v998, 7
        %v1000 = vsub.s32 %v997, %v999
        %v1001 = vrot.slane %v985, %v1000
        %v1003 = vunpack.c.l.s4 1966171168
        %v1004 = vunpack.c.0.s8 %v1003
        %v1005 = vlaneseq
        %v1006 = vshrl.u32 %v1005, 7
        %v1007 = vsub.s32 %v1004, %v1006
        %v1008 = vrot.slane %v992, %v1007
        %v1010 = vunpack.c.l.s4 1966171168
        %v1011 = vunpack.c.0.s8 %v1010
        %v1012 = vlaneseq
        %v1013 = vshrl.u32 %v1012, 7
        %v1014 = vsub.s32 %v1011, %v1013
        %v1015 = vrot.slane %v993, %v1014
        %v1017 = vunpack.c.l.s4 1966171168
        %v1018 = vunpack.c.0.s8 %v1017
        %v1019 = vlaneseq
        %v1020 = vshrl.u32 %v1019, 7
        %v1021 = vsub.s32 %v1018, %v1020
        %v1022 = vrot.slane %v994, %v1021
        %v1023 = vcombine.high %v1001, %v1001
        %v1024 = vcombine.high %v1008, %v1008
        %v1025 = vcombine.high %v1015, %v1015
        %v1026 = vcombine.high %v1022, %v1022
        %v1027 = vcombine.high %v955, %v955
        %v1029 = vunpack.c.l.s4 1966171168
        %v1030 = vunpack.c.0.s8 %v1029
        %v1031 = vlaneseq
        %v1032 = vshrl.u32 %v1031, 7
        %v1033 = vsub.s32 %v1030, %v1032
        %v1034 = vrot.slane %v955, %v1033
        %v1036 = vunpack.c.l.s4 1966171168
        %v1037 = vunpack.c.0.s8 %v1036
        %v1038 = vlaneseq
        %v1039 = vshrl.u32 %v1038, 7
        %v1040 = vsub.s32 %v1037, %v1039
        %v1041 = vrot.slane %v1027, %v1040
        %v1042 = vcombine.high %v1034, %v1034
        %v1043 = vcombine.high %v1041, %v1041
        %v1045 = vunpack.c.l.s4 1966171168
        %v1046 = vunpack.c.0.s8 %v1045
        %v1047 = vlaneseq
        %v1048 = vshrl.u32 %v1047, 7
        %v1049 = vsub.s32 %v1046, %v1048
        %v1050 = vrot.slane %v1034, %v1049
        %v1052 = vunpack.c.l.s4 1966171168
        %v1053 = vunpack.c.0.s8 %v1052
        %v1054 = vlaneseq
        %v1055 = vshrl.u32 %v1054, 7
        %v1056 = vsub.s32 %v1053, %v1055
        %v1057 = vrot.slane %v1041, %v1056
        %v1059 = vunpack.c.l.s4 1966171168
        %v1060 = vunpack.c.0.s8 %v1059
        %v1061 = vlaneseq
        %v1062 = vshrl.u32 %v1061, 7
        %v1063 = vsub.s32 %v1060, %v1062
        %v1064 = vrot.slane %v1042, %v1063
        %v1066 = vunpack.c.l.s4 1966171168
        %v1067 = vunpack.c.0.s8 %v1066
        %v1068 = vlaneseq
        %v1069 = vshrl.u32 %v1068, 7
        %v1070 = vsub.s32 %v1067, %v1069
        %v1071 = vrot.slane %v1043, %v1070
        %v1072 = vcombine.high %v1050, %v1050
        %v1073 = vcombine.high %v1057, %v1057
        %v1074 = vcombine.high %v1064, %v1064
        %v1075 = vcombine.high %v1071, %v1071
        %v1076 = vcombine.high %v960, %v960
        %v1078 = vunpack.c.l.s4 1966171168
        %v1079 = vunpack.c.0.s8 %v1078
        %v1080 = vlaneseq
        %v1081 = vshrl.u32 %v1080, 7
        %v1082 = vsub.s32 %v1079, %v1081
        %v1083 = vrot.slane %v960, %v1082
        %v1085 = vunpack.c.l.s4 1966171168
        %v1086 = vunpack.c.0.s8 %v1085
        %v1087 = vlaneseq
        %v1088 = vshrl.u32 %v1087, 7
        %v1089 = vsub.s32 %v1086, %v1088
        %v1090 = vrot.slane %v1076, %v1089
        %v1091 = vcombine.high %v1083, %v1083
        %v1092 = vcombine.high %v1090, %v1090
        %v1094 = vunpack.c.l.s4 1966171168
        %v1095 = vunpack.c.0.s8 %v1094
        %v1096 = vlaneseq
        %v1097 = vshrl.u32 %v1096, 7
        %v1098 = vsub.s32 %v1095, %v1097
        %v1099 = vrot.slane %v1083, %v1098
        %v1101 = vunpack.c.l.s4 1966171168
        %v1102 = vunpack.c.0.s8 %v1101
        %v1103 = vlaneseq
        %v1104 = vshrl.u32 %v1103, 7
        %v1105 = vsub.s32 %v1102, %v1104
        %v1106 = vrot.slane %v1090, %v1105
        %v1108 = vunpack.c.l.s4 1966171168
        %v1109 = vunpack.c.0.s8 %v1108
        %v1110 = vlaneseq
        %v1111 = vshrl.u32 %v1110, 7
        %v1112 = vsub.s32 %v1109, %v1111
        %v1113 = vrot.slane %v1091, %v1112
        %v1115 = vunpack.c.l.s4 1966171168
        %v1116 = vunpack.c.0.s8 %v1115
        %v1117 = vlaneseq
        %v1118 = vshrl.u32 %v1117, 7
        %v1119 = vsub.s32 %v1116, %v1118
        %v1120 = vrot.slane %v1092, %v1119
        %v1121 = vcombine.high %v1099, %v1099
        %v1122 = vcombine.high %v1106, %v1106
        %v1123 = vcombine.high %v1113, %v1113
        %v1124 = vcombine.high %v1120, %v1120
        %v1125 = vcombine.high %v963, %v963
        %v1127 = vunpack.c.l.s4 1966171168
        %v1128 = vunpack.c.0.s8 %v1127
        %v1129 = vlaneseq
        %v1130 = vshrl.u32 %v1129, 7
        %v1131 = vsub.s32 %v1128, %v1130
        %v1132 = vrot.slane %v963, %v1131
        %v1134 = vunpack.c.l.s4 1966171168
        %v1135 = vunpack.c.0.s8 %v1134
        %v1136 = vlaneseq
        %v1137 = vshrl.u32 %v1136, 7
        %v1138 = vsub.s32 %v1135, %v1137
        %v1139 = vrot.slane %v1125, %v1138
        %v1140 = vcombine.high %v1132, %v1132
        %v1141 = vcombine.high %v1139, %v1139
        %v1143 = vunpack.c.l.s4 1966171168
        %v1144 = vunpack.c.0.s8 %v1143
        %v1145 = vlaneseq
        %v1146 = vshrl.u32 %v1145, 7
        %v1147 = vsub.s32 %v1144, %v1146
        %v1148 = vrot.slane %v1132, %v1147
        %v1150 = vunpack.c.l.s4 1966171168
        %v1151 = vunpack.c.0.s8 %v1150
        %v1152 = vlaneseq
        %v1153 = vshrl.u32 %v1152, 7
        %v1154 = vsub.s32 %v1151, %v1153
        %v1155 = vrot.slane %v1139, %v1154
        %v1157 = vunpack.c.l.s4 1966171168
        %v1158 = vunpack.c.0.s8 %v1157
        %v1159 = vlaneseq
        %v1160 = vshrl.u32 %v1159, 7
        %v1161 = vsub.s32 %v1158, %v1160
        %v1162 = vrot.slane %v1140, %v1161
        %v1164 = vunpack.c.l.s4 1966171168
        %v1165 = vunpack.c.0.s8 %v1164
        %v1166 = vlaneseq
        %v1167 = vshrl.u32 %v1166, 7
        %v1168 = vsub.s32 %v1165, %v1167
        %v1169 = vrot.slane %v1141, %v1168
        %v1170 = vcombine.high %v1148, %v1148
        %v1171 = vcombine.high %v1155, %v1155
        %v1172 = vcombine.high %v1162, %v1162
        %v1173 = vcombine.high %v1169, %v1169
        %v1175 = vunpack.c.l.s4 1966171168
        %v1176 = vunpack.c.0.s8 %v1175
        %v1177 = vlaneseq
        %v1178 = vshrl.u32 %v1177, 7
        %v1179 = vsub.s32 %v1176, %v1178
        %v1180 = vrot.slane %v968, %v1179
        %v1181 = vcombine.high %v1180, %v1180
        %v1183 = vunpack.c.l.s4 1966171168
        %v1184 = vunpack.c.0.s8 %v1183
        %v1185 = vlaneseq
        %v1186 = vshrl.u32 %v1185, 7
        %v1187 = vsub.s32 %v1184, %v1186
        %v1188 = vrot.slane %v1180, %v1187
        %v1190 = vunpack.c.l.s4 1966171168
        %v1191 = vunpack.c.0.s8 %v1190
        %v1192 = vlaneseq
        %v1193 = vshrl.u32 %v1192, 7
        %v1194 = vsub.s32 %v1191, %v1193
        %v1195 = vrot.slane %v1181, %v1194
        %v1196 = vcombine.low %v1001, %v1015
        %v1197 = vcombine.low %v1023, %v1025
        %v1198 = vcombine.low %v1008, %v1022
        %v1199 = vcombine.low %v1024, %v1026
        %v1201 = vunpack.c.l.s4 1966171168
        %v1202 = vunpack.c.0.s8 %v1201
        %v1203 = vlaneseq
        %v1204 = vshrl.u32 %v1203, 7
        %v1205 = vsub.s32 %v1202, %v1204
        %v1206 = vrot.slane %v1196, %v1205
        %v1208 = vunpack.c.l.s4 1966171168
        %v1209 = vunpack.c.0.s8 %v1208
        %v1210 = vlaneseq
        %v1211 = vshrl.u32 %v1210, 7
        %v1212 = vsub.s32 %v1209, %v1211
        %v1213 = vrot.slane %v1197, %v1212
        %v1215 = vunpack.c.l.s4 1966171168
        %v1216 = vunpack.c.0.s8 %v1215
        %v1217 = vlaneseq
        %v1218 = vshrl.u32 %v1217, 7
        %v1219 = vsub.s32 %v1216, %v1218
        %v1220 = vrot.slane %v1198, %v1219
        %v1222 = vunpack.c.l.s4 1966171168
        %v1223 = vunpack.c.0.s8 %v1222
        %v1224 = vlaneseq
        %v1225 = vshrl.u32 %v1224, 7
        %v1226 = vsub.s32 %v1223, %v1225
        %v1227 = vrot.slane %v1199, %v1226
        %v1228 = vcombine.low %v1206, %v1213
        %v1229 = vcombine.low %v1220, %v1227
        %v1231 = vunpack.c.l.s4 1966171168
        %v1232 = vunpack.c.0.s8 %v1231
        %v1233 = vlaneseq
        %v1234 = vshrl.u32 %v1233, 7
        %v1235 = vsub.s32 %v1232, %v1234
        %v1236 = vrot.slane %v1228, %v1235
        %v1238 = vunpack.c.l.s4 1966171168
        %v1239 = vunpack.c.0.s8 %v1238
        %v1240 = vlaneseq
        %v1241 = vshrl.u32 %v1240, 7
        %v1242 = vsub.s32 %v1239, %v1241
        %v1243 = vrot.slane %v1229, %v1242
        %v1244 = vcombine.low %v1236, %v1243
        %v1245 = vcombine.low %v1050, %v1064
        %v1246 = vcombine.low %v1072, %v1074
        %v1247 = vcombine.low %v1057, %v1071
        %v1248 = vcombine.low %v1073, %v1075
        %v1250 = vunpack.c.l.s4 1966171168
        %v1251 = vunpack.c.0.s8 %v1250
        %v1252 = vlaneseq
        %v1253 = vshrl.u32 %v1252, 7
        %v1254 = vsub.s32 %v1251, %v1253
        %v1255 = vrot.slane %v1245, %v1254
        %v1257 = vunpack.c.l.s4 1966171168
        %v1258 = vunpack.c.0.s8 %v1257
        %v1259 = vlaneseq
        %v1260 = vshrl.u32 %v1259, 7
        %v1261 = vsub.s32 %v1258, %v1260
        %v1262 = vrot.slane %v1246, %v1261
        %v1264 = vunpack.c.l.s4 1966171168
        %v1265 = vunpack.c.0.s8 %v1264
        %v1266 = vlaneseq
        %v1267 = vshrl.u32 %v1266, 7
        %v1268 = vsub.s32 %v1265, %v1267
        %v1269 = vrot.slane %v1247, %v1268
        %v1271 = vunpack.c.l.s4 1966171168
        %v1272 = vunpack.c.0.s8 %v1271
        %v1273 = vlaneseq
        %v1274 = vshrl.u32 %v1273, 7
        %v1275 = vsub.s32 %v1272, %v1274
        %v1276 = vrot.slane %v1248, %v1275
        %v1277 = vcombine.low %v1255, %v1262
        %v1278 = vcombine.low %v1269, %v1276
        %v1280 = vunpack.c.l.s4 1966171168
        %v1281 = vunpack.c.0.s8 %v1280
        %v1282 = vlaneseq
        %v1283 = vshrl.u32 %v1282, 7
        %v1284 = vsub.s32 %v1281, %v1283
        %v1285 = vrot.slane %v1277, %v1284
        %v1287 = vunpack.c.l.s4 1966171168
        %v1288 = vunpack.c.0.s8 %v1287
        %v1289 = vlaneseq
        %v1290 = vshrl.u32 %v1289, 7
        %v1291 = vsub.s32 %v1288, %v1290
        %v1292 = vrot.slane %v1278, %v1291
        %v1293 = vcombine.low %v1285, %v1292
        %v1295 = vunpack.c.l.s4 1966171168
        %v1296 = vunpack.c.0.s8 %v1295
        %v1297 = vlaneseq
        %v1298 = vshrl.u32 %v1297, 7
        %v1299 = vsub.s32 %v1296, %v1298
        %v1300 = vrot.slane %v1099, %v1299
        %v1302 = vunpack.c.l.s4 1966171168
        %v1303 = vunpack.c.0.s8 %v1302
        %v1304 = vlaneseq
        %v1305 = vshrl.u32 %v1304, 7
        %v1306 = vsub.s32 %v1303, %v1305
        %v1307 = vrot.slane %v1300, %v1306
        %v1308 = vcombine.low %v1113, %v1121
        %v1309 = vcombine.low %v1123, %v1106
        %v1310 = vcombine.low %v1120, %v1122
        %v1311 = vcombine.low %v1124, %v1148
        %v1313 = vunpack.c.l.s4 1966171168
        %v1314 = vunpack.c.0.s8 %v1313
        %v1315 = vlaneseq
        %v1316 = vshrl.u32 %v1315, 7
        %v1317 = vsub.s32 %v1314, %v1316
        %v1318 = vrot.slane %v1308, %v1317
        %v1320 = vunpack.c.l.s4 1966171168
        %v1321 = vunpack.c.0.s8 %v1320
        %v1322 = vlaneseq
        %v1323 = vshrl.u32 %v1322, 7
        %v1324 = vsub.s32 %v1321, %v1323
        %v1325 = vrot.slane %v1309, %v1324
        %v1327 = vunpack.c.l.s4 1966171168
        %v1328 = vunpack.c.0.s8 %v1327
        %v1329 = vlaneseq
        %v1330 = vshrl.u32 %v1329, 7
        %v1331 = vsub.s32 %v1328, %v1330
        %v1332 = vrot.slane %v1310, %v1331
        %v1334 = vunpack.c.l.s4 1966171168
        %v1335 = vunpack.c.0.s8 %v1334
        %v1336 = vlaneseq
        %v1337 = vshrl.u32 %v1336, 7
        %v1338 = vsub.s32 %v1335, %v1337
        %v1339 = vrot.slane %v1311, %v1338
        %v1340 = vcombine.low %v1318, %v1325
        %v1341 = vcombine.low %v1332, %v1339
        %v1343 = vunpack.c.l.s4 1966171168
        %v1344 = vunpack.c.0.s8 %v1343
        %v1345 = vlaneseq
        %v1346 = vshrl.u32 %v1345, 7
        %v1347 = vsub.s32 %v1344, %v1346
        %v1348 = vrot.slane %v1340, %v1347
        %v1350 = vunpack.c.l.s4 1966171168
        %v1351 = vunpack.c.0.s8 %v1350
        %v1352 = vlaneseq
        %v1353 = vshrl.u32 %v1352, 7
        %v1354 = vsub.s32 %v1351, %v1353
        %v1355 = vrot.slane %v1341, %v1354
        %v1356 = vcombine.low %v1348, %v1355
        %v1357 = vcombine.low %v1162, %v1170
        %v1358 = vcombine.low %v1172, %v1155
        %v1359 = vcombine.low %v1169, %v1171
        %v1360 = vcombine.low %v1173, %v1188
        %v1362 = vunpack.c.l.s4 1966171168
        %v1363 = vunpack.c.0.s8 %v1362
        %v1364 = vlaneseq
        %v1365 = vshrl.u32 %v1364, 7
        %v1366 = vsub.s32 %v1363, %v1365
        %v1367 = vrot.slane %v1357, %v1366
        %v1369 = vunpack.c.l.s4 1966171168
        %v1370 = vunpack.c.0.s8 %v1369
        %v1371 = vlaneseq
        %v1372 = vshrl.u32 %v1371, 7
        %v1373 = vsub.s32 %v1370, %v1372
        %v1374 = vrot.slane %v1358, %v1373
        %v1376 = vunpack.c.l.s4 1966171168
        %v1377 = vunpack.c.0.s8 %v1376
        %v1378 = vlaneseq
        %v1379 = vshrl.u32 %v1378, 7
        %v1380 = vsub.s32 %v1377, %v1379
        %v1381 = vrot.slane %v1359, %v1380
        %v1383 = vunpack.c.l.s4 1966171168
        %v1384 = vunpack.c.0.s8 %v1383
        %v1385 = vlaneseq
        %v1386 = vshrl.u32 %v1385, 7
        %v1387 = vsub.s32 %v1384, %v1386
        %v1388 = vrot.slane %v1360, %v1387
        %v1389 = vcombine.low %v1367, %v1374
        %v1390 = vcombine.low %v1381, %v1388
        %v1392 = vunpack.c.l.s4 1966171168
        %v1393 = vunpack.c.0.s8 %v1392
        %v1394 = vlaneseq
        %v1395 = vshrl.u32 %v1394, 7
        %v1396 = vsub.s32 %v1393, %v1395
        %v1397 = vrot.slane %v1389, %v1396
        %v1399 = vunpack.c.l.s4 1966171168
        %v1400 = vunpack.c.0.s8 %v1399
        %v1401 = vlaneseq
        %v1402 = vshrl.u32 %v1401, 7
        %v1403 = vsub.s32 %v1400, %v1402
        %v1404 = vrot.slane %v1390, %v1403
        %v1405 = vcombine.low %v1397, %v1404
        %v1407 = vunpack.c.l.s4 1966171168
        %v1408 = vunpack.c.0.s8 %v1407
        %v1409 = vlaneseq
        %v1410 = vshrl.u32 %v1409, 7
        %v1411 = vsub.s32 %v1408, %v1410
        %v1412 = vrot.slane %v1195, %v1411
        %v1414 = vunpack.c.l.s4 1966171168
        %v1415 = vunpack.c.0.s8 %v1414
        %v1416 = vlaneseq
        %v1417 = vshrl.u32 %v1416, 7
        %v1418 = vsub.s32 %v1415, %v1417
        %v1419 = vrot.slane %v1412, %v1418
        %v1426 = vpack.c.bf16 %v1293, %v1244
        %v1427 = vpack.c.bf16 %v1307, %v1307
        %v1428 = vpack.c.bf16 %v1405, %v1356
        %v1429 = vpack.c.bf16 %v1419, %v1419
        %1432 = vrot.lane.b32.xlu0 %v1426, 96
        %v1433 = vpop.permute.xlu0 %1432
        %1434 = vrot.lane.b32.xlu0 %v1427, 96
        %v1435 = vpop.permute.xlu0 %1434
        %vm1436 = vcmask 64512
        %v1438 = vsel %vm1436, %v1426, 0
        %v1441 = vsel %vm1436, %v1427, 0
        %v1444 = vsel %vm1436, %v1433, 0
        %v1447 = vsel %vm1436, %v1435, 0
        %1449 = vmatprep.subr.bf16.mxu0 0
        %1450 = vmatpush1.bf16.xpose.msra.mxu0 %v1444
        %1451 = vmatprep.subr.bf16.mxu0 0
        %1452 = vmatpush1.bf16.xpose.msra.mxu0 %v1447
        %1453 = vmatprep.subr.bf16.mxu0 0
        %1454 = vmatpush1.bf16.xpose.msra.mxu0 0
        %1455 = vmatprep.subr.bf16.mxu0 0
        %1456 = vmatpush1.bf16.xpose.msra.mxu0 0
        %1457 = vmatprep.subr.bf16.mxu0 0
        %1458 = vmatpush1.bf16.xpose.msra.mxu0 0
        %1459 = vmatprep.subr.bf16.mxu0 0
        %1460 = vmatpush1.bf16.xpose.msra.mxu0 0
        %1461 = vmatprep.subr.bf16.mxu0 0
        %1462 = vmatpush1.bf16.xpose.msra.mxu0 0
        %1463 = vmatprep.subr.bf16.mxu0 0
        %1464 = vmatpush1.bf16.xpose.msra.mxu0 0
        %1465 = vmatprep.subr.bf16.mxu0 0
        %1466 = vmatpush1.bf16.xpose.msra.mxu0 0
        %1467 = vmatprep.subr.bf16.mxu0 0
        %1468 = vmatpush1.bf16.xpose.msra.mxu0 0
        %1469 = vmatprep.subr.bf16.mxu0 0
        %1470 = vmatpush1.bf16.xpose.msra.mxu0 0
        %1471 = vmatprep.subr.bf16.mxu0 0
        %1472 = vmatpush1.bf16.xpose.msra.mxu0 0
        %1473 = vmatprep.subr.bf16.mxu0 0
        %1474 = vmatpush1.bf16.xpose.msra.mxu0 0
        %1475 = vmatprep.subr.bf16.mxu0 0
        %1476 = vmatpush1.bf16.xpose.msra.mxu0 0
        %1477 = vmatprep.subr.bf16.mxu0 0
        %1478 = vmatpush1.bf16.xpose.msra.mxu0 0
        %1479 = vmatprep.subr.bf16.mxu0 0
        %1480 = vmatpush1.bf16.xpose.msra.mxu0 0
        %1481 = vmatprep.mubr.bf16.mxu0 0
        %1482 = vmatmul.mubr.bf16.gmra.mrb[0].mxu0 %v1438
        %v1483 = vpop.f32.mrb[0].mxu0
        %v1484 = vadd.f32 0.0, %v1483
        %v1485 = vpop.f32.mrb[0].mxu0
        %v1486 = vpop.f32.mrb[0].mxu0
        %v1487 = vadd.f32 0.0, %v1486
        %v1488 = vpop.f32.mrb[0].mxu0
        %1489 = vmatprep.mubr.bf16.mxu0 0
        %1490 = vmatmul.mubr.bf16.gmra.mrb[0].mxu0 %v1441
        %v1491 = vpop.f32.mrb[0].mxu0
        %v1492 = vadd.f32 0.0, %v1491
        %v1493 = vpop.f32.mrb[0].mxu0
        %v1494 = vpop.f32.mrb[0].mxu0
        %v1495 = vpop.f32.mrb[0].mxu0
        %1496 = vdwg.mxu0
        %1499 = vrot.lane.b32.xlu0 %v1428, 96
        %v1500 = vpop.permute.xlu0 %1499
        %1501 = vrot.lane.b32.xlu0 %v1429, 96
        %v1502 = vpop.permute.xlu0 %1501
        %v1504 = vsel %vm1436, %v1428, 0
        %v1507 = vsel %vm1436, %v1429, 0
        %v1510 = vsel %vm1436, %v1500, 0
        %v1513 = vsel %vm1436, %v1502, 0
        %1515 = vmatprep.subr.bf16.mxu0 0
        %1516 = vmatpush1.bf16.xpose.msra.mxu0 %v1510
        %1517 = vmatprep.subr.bf16.mxu0 0
        %1518 = vmatpush1.bf16.xpose.msra.mxu0 %v1513
        %1519 = vmatprep.subr.bf16.mxu0 0
        %1520 = vmatpush1.bf16.xpose.msra.mxu0 0
        %1521 = vmatprep.subr.bf16.mxu0 0
        %1522 = vmatpush1.bf16.xpose.msra.mxu0 0
        %1523 = vmatprep.subr.bf16.mxu0 0
        %1524 = vmatpush1.bf16.xpose.msra.mxu0 0
        %1525 = vmatprep.subr.bf16.mxu0 0
        %1526 = vmatpush1.bf16.xpose.msra.mxu0 0
        %1527 = vmatprep.subr.bf16.mxu0 0
        %1528 = vmatpush1.bf16.xpose.msra.mxu0 0
        %1529 = vmatprep.subr.bf16.mxu0 0
        %1530 = vmatpush1.bf16.xpose.msra.mxu0 0
        %1531 = vmatprep.subr.bf16.mxu0 0
        %1532 = vmatpush1.bf16.xpose.msra.mxu0 0
        %1533 = vmatprep.subr.bf16.mxu0 0
        %1534 = vmatpush1.bf16.xpose.msra.mxu0 0
        %1535 = vmatprep.subr.bf16.mxu0 0
        %1536 = vmatpush1.bf16.xpose.msra.mxu0 0
        %1537 = vmatprep.subr.bf16.mxu0 0
        %1538 = vmatpush1.bf16.xpose.msra.mxu0 0
        %1539 = vmatprep.subr.bf16.mxu0 0
        %1540 = vmatpush1.bf16.xpose.msra.mxu0 0
        %1541 = vmatprep.subr.bf16.mxu0 0
        %1542 = vmatpush1.bf16.xpose.msra.mxu0 0
        %1543 = vmatprep.subr.bf16.mxu0 0
        %1544 = vmatpush1.bf16.xpose.msra.mxu0 0
        %1545 = vmatprep.subr.bf16.mxu0 0
        %1546 = vmatpush1.bf16.xpose.msra.mxu0 0
        %1547 = vmatprep.mubr.bf16.mxu0 0
        %1548 = vmatmul.mubr.bf16.gmra.mrb[0].mxu0 %v1504
        %v1549 = vpop.f32.mrb[0].mxu0
        %v1550 = vadd.f32 0.0, %v1549
        %v1551 = vpop.f32.mrb[0].mxu0
        %v1552 = vpop.f32.mrb[0].mxu0
        %v1553 = vadd.f32 0.0, %v1552
        %v1554 = vpop.f32.mrb[0].mxu0
        %1555 = vmatprep.mubr.bf16.mxu0 0
        %1556 = vmatmul.mubr.bf16.gmra.mrb[0].mxu0 %v1507
        %v1557 = vpop.f32.mrb[0].mxu0
        %v1558 = vadd.f32 0.0, %v1557
        %v1559 = vpop.f32.mrb[0].mxu0
        %v1560 = vpop.f32.mrb[0].mxu0
        %v1561 = vpop.f32.mrb[0].mxu0
        %1562 = vdwg.mxu0
        %v1563 = vmul.f32 %v1484, 0.35355338
        %v1564 = vmul.f32 %v1487, 0.35355338
        %v1565 = vmul.f32 %v1492, 0.35355338
        %v1566 = vmul.f32 %v1550, 0.35355338
        %v1567 = vmul.f32 %v1553, 0.35355338
        %v1568 = vmul.f32 %v1558, 0.35355338
        %vm1569 = vcmask 138240
        %v1570 = vsel %vm1569, %v1563, -inf
        %1571 = vmax.xlane.f32.xlu0 %v1570
        %v1572 = vpop.xlane.xlu0 %1571
        %v1573 = vsel %vm1569, %v1564, -inf
        %1574 = vmax.xlane.f32.xlu0 %v1573
        %v1575 = vpop.xlane.xlu0 %1574
        %vm1576 = vcmask 131072
        %v1577 = vsel %vm1576, %v1565, -inf
        %1578 = vmax.xlane.f32.xlu0 %v1577
        %v1579 = vpop.xlane.xlu0 %1578
        %v1580 = vsel %vm1569, %v1566, -inf
        %1581 = vmax.xlane.f32.xlu0 %v1580
        %v1582 = vpop.xlane.xlu0 %1581
        %v1583 = vsel %vm1569, %v1567, -inf
        %1584 = vmax.xlane.f32.xlu0 %v1583
        %v1585 = vpop.xlane.xlu0 %1584
        %v1586 = vsel %vm1576, %v1568, -inf
        %1587 = vmax.xlane.f32.xlu0 %v1586
        %v1588 = vpop.xlane.xlu0 %1587
        %v1589 = vsub.f32 %v1563, %v1572
        %v1590 = vsub.f32 %v1564, %v1575
        %v1591 = vsub.f32 %v1565, %v1579
        %v1592 = vsub.f32 %v1566, %v1582
        %v1593 = vsub.f32 %v1567, %v1585
        %v1594 = vsub.f32 %v1568, %v1588
        %v1595 = vmul.f32 %v1589, 1.442695
        %v1596 = vpow.pop %v1595
        %v1597 = vmul.f32 %v1590, 1.442695
        %v1598 = vpow.pop %v1597
        %v1599 = vmul.f32 %v1591, 1.442695
        %v1600 = vpow.pop %v1599
        %v1601 = vmul.f32 %v1592, 1.442695
        %v1602 = vpow.pop %v1601
        %v1603 = vmul.f32 %v1593, 1.442695
        %v1604 = vpow.pop %v1603
        %v1605 = vmul.f32 %v1594, 1.442695
        %v1606 = vpow.pop %v1605
        %v1607 = vsel %vm1569, %v1596, 0.0
        %1608 = vadd.xlane.f32.xlu0 %v1607
        %v1609 = vpop.xlane.xlu0 %1608
        %v1610 = vsel %vm1569, %v1598, 0.0
        %1611 = vadd.xlane.f32.xlu0 %v1610
        %v1612 = vpop.xlane.xlu0 %1611
        %v1613 = vsel %vm1576, %v1600, 0.0
        %1614 = vadd.xlane.f32.xlu0 %v1613
        %v1615 = vpop.xlane.xlu0 %1614
        %v1616 = vsel %vm1569, %v1602, 0.0
        %1617 = vadd.xlane.f32.xlu0 %v1616
        %v1618 = vpop.xlane.xlu0 %1617
        %v1619 = vsel %vm1569, %v1604, 0.0
        %1620 = vadd.xlane.f32.xlu0 %v1619
        %v1621 = vpop.xlane.xlu0 %1620
        %v1622 = vsel %vm1576, %v1606, 0.0
        %1623 = vadd.xlane.f32.xlu0 %v1622
        %v1624 = vpop.xlane.xlu0 %1623
        %v1625 = vrcp.pop %v1609
        %v1626 = vrcp.pop %v1612
        %v1627 = vrcp.pop %v1615
        %v1628 = vrcp.pop %v1618
        %v1629 = vrcp.pop %v1621
        %v1630 = vrcp.pop %v1624
        %v1631 = vmul.f32 %v1596, %v1625
        %v1632 = vmul.f32 %v1598, %v1626
        %v1633 = vmul.f32 %v1600, %v1627
        %v1634 = vmul.f32 %v1602, %v1628
        %v1635 = vmul.f32 %v1604, %v1629
        %v1636 = vmul.f32 %v1606, %v1630
        %v1637 = vsel %vm1569, %v1631, 0.0
        %v1638 = vsel %vm1569, %v1632, 0.0
        %v1639 = vsel %vm1569, %v1633, 0.0
        %v1640 = vsel %vm1569, %v1634, 0.0
        %v1641 = vsel %vm1569, %v1635, 0.0
        %v1642 = vsel %vm1569, %v1636, 0.0
        %1643 = vst [vmem:[%s746] sm:$0xff] %v1637
        %1644 = vst [vmem:[%s746 + $0x8] sm:$0xff] %v1638
        %1645 = vst [vmem:[%s746 + $0x10] sm:$0x1] %v1639
        %1646 = vst [vmem:[%s746 + $0x18] sm:$0xff] %v1640
        %1647 = vst [vmem:[%s746 + $0x20] sm:$0xff] %v1641
        %1648 = vst [vmem:[%s746 + $0x28] sm:$0x1] %v1642
        %v1649 = vpack.c.bf16 %v1632, %v1631
        %v1650 = vpack.c.bf16 %v1633, %v1633
        %v1651 = vpack.c.bf16 %v1635, %v1634
        %v1652 = vpack.c.bf16 %v1636, %v1636
        %1653 = vrot.lane.b32.xlu0 %v1426, 64
        %v1654 = vpop.permute.xlu0 %1653
        %1655 = vrot.lane.b32.xlu0 %v1427, 64
        %v1656 = vpop.permute.xlu0 %1655
        %v1659 = vsel %vm1569, %v1649, 0
        %v1662 = vsel %vm1569, %v1650, 0
        %vm1664 = vcmask 1040384
        %v1665 = vsel 0, 4294967295, 65535
        %v1666 = vsel %vm1664, %v1665, 0
        %v1668 = vand.u32 %v1656, %v1666
        %1670 = vmatprep.subr.bf16.mxu0 0
        %1671 = vmatpush1.bf16.msra.mxu0 %v1654
        %1672 = vmatprep.subr.bf16.mxu0 0
        %1673 = vmatpush1.bf16.msra.mxu0 %v1668
        %1674 = vmatprep.subr.bf16.mxu0 0
        %1675 = vmatpush1.bf16.msra.mxu0 0
        %1676 = vmatprep.subr.bf16.mxu0 0
        %1677 = vmatpush1.bf16.msra.mxu0 0
        %1678 = vmatprep.subr.bf16.mxu0 0
        %1679 = vmatpush1.bf16.msra.mxu0 0
        %1680 = vmatprep.subr.bf16.mxu0 0
        %1681 = vmatpush1.bf16.msra.mxu0 0
        %1682 = vmatprep.subr.bf16.mxu0 0
        %1683 = vmatpush1.bf16.msra.mxu0 0
        %1684 = vmatprep.subr.bf16.mxu0 0
        %1685 = vmatpush1.bf16.msra.mxu0 0
        %1686 = vmatprep.subr.bf16.mxu0 0
        %1687 = vmatpush1.bf16.msra.mxu0 0
        %1688 = vmatprep.subr.bf16.mxu0 0
        %1689 = vmatpush1.bf16.msra.mxu0 0
        %1690 = vmatprep.subr.bf16.mxu0 0
        %1691 = vmatpush1.bf16.msra.mxu0 0
        %1692 = vmatprep.subr.bf16.mxu0 0
        %1693 = vmatpush1.bf16.msra.mxu0 0
        %1694 = vmatprep.subr.bf16.mxu0 0
        %1695 = vmatpush1.bf16.msra.mxu0 0
        %1696 = vmatprep.subr.bf16.mxu0 0
        %1697 = vmatpush1.bf16.msra.mxu0 0
        %1698 = vmatprep.subr.bf16.mxu0 0
        %1699 = vmatpush1.bf16.msra.mxu0 0
        %1700 = vmatprep.subr.bf16.mxu0 0
        %1701 = vmatpush1.bf16.msra.mxu0 0
        %1702 = vmatprep.mubr.bf16.mxu0 0
        %1703 = vmatmul.mubr.bf16.gmra.mrb[0].mxu0 %v1659
        %v1704 = vpop.f32.mrb[0].mxu0
        %v1705 = vadd.f32 0.0, %v1704
        %v1706 = vpop.f32.mrb[0].mxu0
        %v1707 = vpop.f32.mrb[0].mxu0
        %v1708 = vadd.f32 0.0, %v1707
        %v1709 = vpop.f32.mrb[0].mxu0
        %1710 = vmatprep.mubr.bf16.mxu0 0
        %1711 = vmatmul.mubr.bf16.gmra.mrb[0].mxu0 %v1662
        %v1712 = vpop.f32.mrb[0].mxu0
        %v1713 = vadd.f32 0.0, %v1712
        %v1714 = vpop.f32.mrb[0].mxu0
        %v1715 = vpop.f32.mrb[0].mxu0
        %v1716 = vpop.f32.mrb[0].mxu0
        %1717 = vdwg.mxu0
        %1718 = vrot.lane.b32.xlu0 %v1428, 64
        %v1719 = vpop.permute.xlu0 %1718
        %1720 = vrot.lane.b32.xlu0 %v1429, 64
        %v1721 = vpop.permute.xlu0 %1720
        %v1724 = vsel %vm1569, %v1651, 0
        %v1727 = vsel %vm1569, %v1652, 0
        %v1730 = vand.u32 %v1721, %v1666
        %1732 = vmatprep.subr.bf16.mxu0 0
        %1733 = vmatpush1.bf16.msra.mxu0 %v1719
        %1734 = vmatprep.subr.bf16.mxu0 0
        %1735 = vmatpush1.bf16.msra.mxu0 %v1730
        %1736 = vmatprep.subr.bf16.mxu0 0
        %1737 = vmatpush1.bf16.msra.mxu0 0
        %1738 = vmatprep.subr.bf16.mxu0 0
        %1739 = vmatpush1.bf16.msra.mxu0 0
        %1740 = vmatprep.subr.bf16.mxu0 0
        %1741 = vmatpush1.bf16.msra.mxu0 0
        %1742 = vmatprep.subr.bf16.mxu0 0
        %1743 = vmatpush1.bf16.msra.mxu0 0
        %1744 = vmatprep.subr.bf16.mxu0 0
        %1745 = vmatpush1.bf16.msra.mxu0 0
        %1746 = vmatprep.subr.bf16.mxu0 0
        %1747 = vmatpush1.bf16.msra.mxu0 0
        %1748 = vmatprep.subr.bf16.mxu0 0
        %1749 = vmatpush1.bf16.msra.mxu0 0
        %1750 = vmatprep.subr.bf16.mxu0 0
        %1751 = vmatpush1.bf16.msra.mxu0 0
        %1752 = vmatprep.subr.bf16.mxu0 0
        %1753 = vmatpush1.bf16.msra.mxu0 0
        %1754 = vmatprep.subr.bf16.mxu0 0
        %1755 = vmatpush1.bf16.msra.mxu0 0
        %1756 = vmatprep.subr.bf16.mxu0 0
        %1757 = vmatpush1.bf16.msra.mxu0 0
        %1758 = vmatprep.subr.bf16.mxu0 0
        %1759 = vmatpush1.bf16.msra.mxu0 0
        %1760 = vmatprep.subr.bf16.mxu0 0
        %1761 = vmatpush1.bf16.msra.mxu0 0
        %1762 = vmatprep.subr.bf16.mxu0 0
        %1763 = vmatpush1.bf16.msra.mxu0 0
        %1764 = vmatprep.mubr.bf16.mxu0 0
        %1765 = vmatmul.mubr.bf16.gmra.mrb[0].mxu0 %v1724
        %v1766 = vpop.f32.mrb[0].mxu0
        %v1767 = vadd.f32 0.0, %v1766
        %v1768 = vpop.f32.mrb[0].mxu0
        %v1769 = vpop.f32.mrb[0].mxu0
        %v1770 = vadd.f32 0.0, %v1769
        %v1771 = vpop.f32.mrb[0].mxu0
        %1772 = vmatprep.mubr.bf16.mxu0 0
        %1773 = vmatmul.mubr.bf16.gmra.mrb[0].mxu0 %v1727
        %v1774 = vpop.f32.mrb[0].mxu0
        %v1775 = vadd.f32 0.0, %v1774
        %v1776 = vpop.f32.mrb[0].mxu0
        %v1777 = vpop.f32.mrb[0].mxu0
        %v1778 = vpop.f32.mrb[0].mxu0
        %1779 = vdwg.mxu0
        %v1786 = vcombine.high %v1705, %v1705
        %v1788 = vunpack.c.l.s4 1966171168
        %v1789 = vunpack.c.0.s8 %v1788
        %v1790 = vlaneseq
        %v1791 = vshrl.u32 %v1790, 7
        %v1792 = vsub.s32 %v1789, %v1791
        %v1793 = vrot.slane %v1705, %v1792
        %v1795 = vunpack.c.l.s4 1966171168
        %v1796 = vunpack.c.0.s8 %v1795
        %v1797 = vlaneseq
        %v1798 = vshrl.u32 %v1797, 7
        %v1799 = vsub.s32 %v1796, %v1798
        %v1800 = vrot.slane %v1786, %v1799
        %v1801 = vcombine.high %v1793, %v1793
        %v1802 = vcombine.high %v1800, %v1800
        %v1804 = vunpack.c.l.s4 1966171168
        %v1805 = vunpack.c.0.s8 %v1804
        %v1806 = vlaneseq
        %v1807 = vshrl.u32 %v1806, 7
        %v1808 = vsub.s32 %v1805, %v1807
        %v1809 = vrot.slane %v1793, %v1808
        %v1811 = vunpack.c.l.s4 1966171168
        %v1812 = vunpack.c.0.s8 %v1811
        %v1813 = vlaneseq
        %v1814 = vshrl.u32 %v1813, 7
        %v1815 = vsub.s32 %v1812, %v1814
        %v1816 = vrot.slane %v1800, %v1815
        %v1818 = vunpack.c.l.s4 1966171168
        %v1819 = vunpack.c.0.s8 %v1818
        %v1820 = vlaneseq
        %v1821 = vshrl.u32 %v1820, 7
        %v1822 = vsub.s32 %v1819, %v1821
        %v1823 = vrot.slane %v1801, %v1822
        %v1825 = vunpack.c.l.s4 1966171168
        %v1826 = vunpack.c.0.s8 %v1825
        %v1827 = vlaneseq
        %v1828 = vshrl.u32 %v1827, 7
        %v1829 = vsub.s32 %v1826, %v1828
        %v1830 = vrot.slane %v1802, %v1829
        %v1831 = vcombine.high %v1809, %v1809
        %v1832 = vcombine.high %v1816, %v1816
        %v1833 = vcombine.high %v1823, %v1823
        %v1834 = vcombine.high %v1830, %v1830
        %v1835 = vcombine.high %v1708, %v1708
        %v1837 = vunpack.c.l.s4 1966171168
        %v1838 = vunpack.c.0.s8 %v1837
        %v1839 = vlaneseq
        %v1840 = vshrl.u32 %v1839, 7
        %v1841 = vsub.s32 %v1838, %v1840
        %v1842 = vrot.slane %v1708, %v1841
        %v1844 = vunpack.c.l.s4 1966171168
        %v1845 = vunpack.c.0.s8 %v1844
        %v1846 = vlaneseq
        %v1847 = vshrl.u32 %v1846, 7
        %v1848 = vsub.s32 %v1845, %v1847
        %v1849 = vrot.slane %v1835, %v1848
        %v1850 = vcombine.high %v1842, %v1842
        %v1851 = vcombine.high %v1849, %v1849
        %v1853 = vunpack.c.l.s4 1966171168
        %v1854 = vunpack.c.0.s8 %v1853
        %v1855 = vlaneseq
        %v1856 = vshrl.u32 %v1855, 7
        %v1857 = vsub.s32 %v1854, %v1856
        %v1858 = vrot.slane %v1842, %v1857
        %v1860 = vunpack.c.l.s4 1966171168
        %v1861 = vunpack.c.0.s8 %v1860
        %v1862 = vlaneseq
        %v1863 = vshrl.u32 %v1862, 7
        %v1864 = vsub.s32 %v1861, %v1863
        %v1865 = vrot.slane %v1849, %v1864
        %v1867 = vunpack.c.l.s4 1966171168
        %v1868 = vunpack.c.0.s8 %v1867
        %v1869 = vlaneseq
        %v1870 = vshrl.u32 %v1869, 7
        %v1871 = vsub.s32 %v1868, %v1870
        %v1872 = vrot.slane %v1850, %v1871
        %v1874 = vunpack.c.l.s4 1966171168
        %v1875 = vunpack.c.0.s8 %v1874
        %v1876 = vlaneseq
        %v1877 = vshrl.u32 %v1876, 7
        %v1878 = vsub.s32 %v1875, %v1877
        %v1879 = vrot.slane %v1851, %v1878
        %v1880 = vcombine.high %v1858, %v1858
        %v1881 = vcombine.high %v1865, %v1865
        %v1882 = vcombine.high %v1872, %v1872
        %v1883 = vcombine.high %v1879, %v1879
        %v1885 = vunpack.c.l.s4 1966171168
        %v1886 = vunpack.c.0.s8 %v1885
        %v1887 = vlaneseq
        %v1888 = vshrl.u32 %v1887, 7
        %v1889 = vsub.s32 %v1886, %v1888
        %v1890 = vrot.slane %v1713, %v1889
        %v1892 = vunpack.c.l.s4 1966171168
        %v1893 = vunpack.c.0.s8 %v1892
        %v1894 = vlaneseq
        %v1895 = vshrl.u32 %v1894, 7
        %v1896 = vsub.s32 %v1893, %v1895
        %v1897 = vrot.slane %v1890, %v1896
        %v1898 = vcombine.high %v1767, %v1767
        %v1900 = vunpack.c.l.s4 1966171168
        %v1901 = vunpack.c.0.s8 %v1900
        %v1902 = vlaneseq
        %v1903 = vshrl.u32 %v1902, 7
        %v1904 = vsub.s32 %v1901, %v1903
        %v1905 = vrot.slane %v1767, %v1904
        %v1907 = vunpack.c.l.s4 1966171168
        %v1908 = vunpack.c.0.s8 %v1907
        %v1909 = vlaneseq
        %v1910 = vshrl.u32 %v1909, 7
        %v1911 = vsub.s32 %v1908, %v1910
        %v1912 = vrot.slane %v1898, %v1911
        %v1913 = vcombine.high %v1905, %v1905
        %v1914 = vcombine.high %v1912, %v1912
        %v1916 = vunpack.c.l.s4 1966171168
        %v1917 = vunpack.c.0.s8 %v1916
        %v1918 = vlaneseq
        %v1919 = vshrl.u32 %v1918, 7
        %v1920 = vsub.s32 %v1917, %v1919
        %v1921 = vrot.slane %v1905, %v1920
        %v1923 = vunpack.c.l.s4 1966171168
        %v1924 = vunpack.c.0.s8 %v1923
        %v1925 = vlaneseq
        %v1926 = vshrl.u32 %v1925, 7
        %v1927 = vsub.s32 %v1924, %v1926
        %v1928 = vrot.slane %v1912, %v1927
        %v1930 = vunpack.c.l.s4 1966171168
        %v1931 = vunpack.c.0.s8 %v1930
        %v1932 = vlaneseq
        %v1933 = vshrl.u32 %v1932, 7
        %v1934 = vsub.s32 %v1931, %v1933
        %v1935 = vrot.slane %v1913, %v1934
        %v1937 = vunpack.c.l.s4 1966171168
        %v1938 = vunpack.c.0.s8 %v1937
        %v1939 = vlaneseq
        %v1940 = vshrl.u32 %v1939, 7
        %v1941 = vsub.s32 %v1938, %v1940
        %v1942 = vrot.slane %v1914, %v1941
        %v1943 = vcombine.high %v1921, %v1921
        %v1944 = vcombine.high %v1928, %v1928
        %v1945 = vcombine.high %v1935, %v1935
        %v1946 = vcombine.high %v1942, %v1942
        %v1947 = vcombine.high %v1770, %v1770
        %v1949 = vunpack.c.l.s4 1966171168
        %v1950 = vunpack.c.0.s8 %v1949
        %v1951 = vlaneseq
        %v1952 = vshrl.u32 %v1951, 7
        %v1953 = vsub.s32 %v1950, %v1952
        %v1954 = vrot.slane %v1770, %v1953
        %v1956 = vunpack.c.l.s4 1966171168
        %v1957 = vunpack.c.0.s8 %v1956
        %v1958 = vlaneseq
        %v1959 = vshrl.u32 %v1958, 7
        %v1960 = vsub.s32 %v1957, %v1959
        %v1961 = vrot.slane %v1947, %v1960
        %v1962 = vcombine.high %v1954, %v1954
        %v1963 = vcombine.high %v1961, %v1961
        %v1965 = vunpack.c.l.s4 1966171168
        %v1966 = vunpack.c.0.s8 %v1965
        %v1967 = vlaneseq
        %v1968 = vshrl.u32 %v1967, 7
        %v1969 = vsub.s32 %v1966, %v1968
        %v1970 = vrot.slane %v1954, %v1969
        %v1972 = vunpack.c.l.s4 1966171168
        %v1973 = vunpack.c.0.s8 %v1972
        %v1974 = vlaneseq
        %v1975 = vshrl.u32 %v1974, 7
        %v1976 = vsub.s32 %v1973, %v1975
        %v1977 = vrot.slane %v1961, %v1976
        %v1979 = vunpack.c.l.s4 1966171168
        %v1980 = vunpack.c.0.s8 %v1979
        %v1981 = vlaneseq
        %v1982 = vshrl.u32 %v1981, 7
        %v1983 = vsub.s32 %v1980, %v1982
        %v1984 = vrot.slane %v1962, %v1983
        %v1986 = vunpack.c.l.s4 1966171168
        %v1987 = vunpack.c.0.s8 %v1986
        %v1988 = vlaneseq
        %v1989 = vshrl.u32 %v1988, 7
        %v1990 = vsub.s32 %v1987, %v1989
        %v1991 = vrot.slane %v1963, %v1990
        %v1992 = vcombine.high %v1970, %v1970
        %v1993 = vcombine.high %v1977, %v1977
        %v1994 = vcombine.high %v1984, %v1984
        %v1995 = vcombine.high %v1991, %v1991
        %v1997 = vunpack.c.l.s4 1966171168
        %v1998 = vunpack.c.0.s8 %v1997
        %v1999 = vlaneseq
        %v2000 = vshrl.u32 %v1999, 7
        %v2001 = vsub.s32 %v1998, %v2000
        %v2002 = vrot.slane %v1775, %v2001
        %v2004 = vunpack.c.l.s4 1966171168
        %v2005 = vunpack.c.0.s8 %v2004
        %v2006 = vlaneseq
        %v2007 = vshrl.u32 %v2006, 7
        %v2008 = vsub.s32 %v2005, %v2007
        %v2009 = vrot.slane %v2002, %v2008
        %v2010 = vcombine.low %v1809, %v1823
        %v2011 = vcombine.low %v1831, %v1833
        %v2012 = vcombine.low %v1816, %v1830
        %v2013 = vcombine.low %v1832, %v1834
        %v2015 = vunpack.c.l.s4 1966171168
        %v2016 = vunpack.c.0.s8 %v2015
        %v2017 = vlaneseq
        %v2018 = vshrl.u32 %v2017, 7
        %v2019 = vsub.s32 %v2016, %v2018
        %v2020 = vrot.slane %v2010, %v2019
        %v2022 = vunpack.c.l.s4 1966171168
        %v2023 = vunpack.c.0.s8 %v2022
        %v2024 = vlaneseq
        %v2025 = vshrl.u32 %v2024, 7
        %v2026 = vsub.s32 %v2023, %v2025
        %v2027 = vrot.slane %v2011, %v2026
        %v2029 = vunpack.c.l.s4 1966171168
        %v2030 = vunpack.c.0.s8 %v2029
        %v2031 = vlaneseq
        %v2032 = vshrl.u32 %v2031, 7
        %v2033 = vsub.s32 %v2030, %v2032
        %v2034 = vrot.slane %v2012, %v2033
        %v2036 = vunpack.c.l.s4 1966171168
        %v2037 = vunpack.c.0.s8 %v2036
        %v2038 = vlaneseq
        %v2039 = vshrl.u32 %v2038, 7
        %v2040 = vsub.s32 %v2037, %v2039
        %v2041 = vrot.slane %v2013, %v2040
        %v2042 = vcombine.low %v2020, %v2027
        %v2043 = vcombine.low %v2034, %v2041
        %v2045 = vunpack.c.l.s4 1966171168
        %v2046 = vunpack.c.0.s8 %v2045
        %v2047 = vlaneseq
        %v2048 = vshrl.u32 %v2047, 7
        %v2049 = vsub.s32 %v2046, %v2048
        %v2050 = vrot.slane %v2042, %v2049
        %v2052 = vunpack.c.l.s4 1966171168
        %v2053 = vunpack.c.0.s8 %v2052
        %v2054 = vlaneseq
        %v2055 = vshrl.u32 %v2054, 7
        %v2056 = vsub.s32 %v2053, %v2055
        %v2057 = vrot.slane %v2043, %v2056
        %v2058 = vcombine.low %v2050, %v2057
        %v2059 = vcombine.low %v1858, %v1872
        %v2060 = vcombine.low %v1880, %v1882
        %v2061 = vcombine.low %v1865, %v1879
        %v2062 = vcombine.low %v1881, %v1883
        %v2064 = vunpack.c.l.s4 1966171168
        %v2065 = vunpack.c.0.s8 %v2064
        %v2066 = vlaneseq
        %v2067 = vshrl.u32 %v2066, 7
        %v2068 = vsub.s32 %v2065, %v2067
        %v2069 = vrot.slane %v2059, %v2068
        %v2071 = vunpack.c.l.s4 1966171168
        %v2072 = vunpack.c.0.s8 %v2071
        %v2073 = vlaneseq
        %v2074 = vshrl.u32 %v2073, 7
        %v2075 = vsub.s32 %v2072, %v2074
        %v2076 = vrot.slane %v2060, %v2075
        %v2078 = vunpack.c.l.s4 1966171168
        %v2079 = vunpack.c.0.s8 %v2078
        %v2080 = vlaneseq
        %v2081 = vshrl.u32 %v2080, 7
        %v2082 = vsub.s32 %v2079, %v2081
        %v2083 = vrot.slane %v2061, %v2082
        %v2085 = vunpack.c.l.s4 1966171168
        %v2086 = vunpack.c.0.s8 %v2085
        %v2087 = vlaneseq
        %v2088 = vshrl.u32 %v2087, 7
        %v2089 = vsub.s32 %v2086, %v2088
        %v2090 = vrot.slane %v2062, %v2089
        %v2091 = vcombine.low %v2069, %v2076
        %v2092 = vcombine.low %v2083, %v2090
        %v2094 = vunpack.c.l.s4 1966171168
        %v2095 = vunpack.c.0.s8 %v2094
        %v2096 = vlaneseq
        %v2097 = vshrl.u32 %v2096, 7
        %v2098 = vsub.s32 %v2095, %v2097
        %v2099 = vrot.slane %v2091, %v2098
        %v2101 = vunpack.c.l.s4 1966171168
        %v2102 = vunpack.c.0.s8 %v2101
        %v2103 = vlaneseq
        %v2104 = vshrl.u32 %v2103, 7
        %v2105 = vsub.s32 %v2102, %v2104
        %v2106 = vrot.slane %v2092, %v2105
        %v2107 = vcombine.low %v2099, %v2106
        %v2108 = vcombine.low %v1897, %v1921
        %v2109 = vcombine.low %v1935, %v1943
        %v2110 = vcombine.low %v1945, %v1928
        %v2111 = vcombine.low %v1942, %v1944
        %v2113 = vunpack.c.l.s4 1966171168
        %v2114 = vunpack.c.0.s8 %v2113
        %v2115 = vlaneseq
        %v2116 = vshrl.u32 %v2115, 7
        %v2117 = vsub.s32 %v2114, %v2116
        %v2118 = vrot.slane %v2108, %v2117
        %v2120 = vunpack.c.l.s4 1966171168
        %v2121 = vunpack.c.0.s8 %v2120
        %v2122 = vlaneseq
        %v2123 = vshrl.u32 %v2122, 7
        %v2124 = vsub.s32 %v2121, %v2123
        %v2125 = vrot.slane %v2109, %v2124
        %v2127 = vunpack.c.l.s4 1966171168
        %v2128 = vunpack.c.0.s8 %v2127
        %v2129 = vlaneseq
        %v2130 = vshrl.u32 %v2129, 7
        %v2131 = vsub.s32 %v2128, %v2130
        %v2132 = vrot.slane %v2110, %v2131
        %v2134 = vunpack.c.l.s4 1966171168
        %v2135 = vunpack.c.0.s8 %v2134
        %v2136 = vlaneseq
        %v2137 = vshrl.u32 %v2136, 7
        %v2138 = vsub.s32 %v2135, %v2137
        %v2139 = vrot.slane %v2111, %v2138
        %v2140 = vcombine.low %v2118, %v2125
        %v2141 = vcombine.low %v2132, %v2139
        %v2143 = vunpack.c.l.s4 1966171168
        %v2144 = vunpack.c.0.s8 %v2143
        %v2145 = vlaneseq
        %v2146 = vshrl.u32 %v2145, 7
        %v2147 = vsub.s32 %v2144, %v2146
        %v2148 = vrot.slane %v2140, %v2147
        %v2150 = vunpack.c.l.s4 1966171168
        %v2151 = vunpack.c.0.s8 %v2150
        %v2152 = vlaneseq
        %v2153 = vshrl.u32 %v2152, 7
        %v2154 = vsub.s32 %v2151, %v2153
        %v2155 = vrot.slane %v2141, %v2154
        %v2156 = vcombine.low %v2148, %v2155
        %v2157 = vcombine.low %v1946, %v1970
        %v2158 = vcombine.low %v1984, %v1992
        %v2159 = vcombine.low %v1994, %v1977
        %v2160 = vcombine.low %v1991, %v1993
        %v2162 = vunpack.c.l.s4 1966171168
        %v2163 = vunpack.c.0.s8 %v2162
        %v2164 = vlaneseq
        %v2165 = vshrl.u32 %v2164, 7
        %v2166 = vsub.s32 %v2163, %v2165
        %v2167 = vrot.slane %v2157, %v2166
        %v2169 = vunpack.c.l.s4 1966171168
        %v2170 = vunpack.c.0.s8 %v2169
        %v2171 = vlaneseq
        %v2172 = vshrl.u32 %v2171, 7
        %v2173 = vsub.s32 %v2170, %v2172
        %v2174 = vrot.slane %v2158, %v2173
        %v2176 = vunpack.c.l.s4 1966171168
        %v2177 = vunpack.c.0.s8 %v2176
        %v2178 = vlaneseq
        %v2179 = vshrl.u32 %v2178, 7
        %v2180 = vsub.s32 %v2177, %v2179
        %v2181 = vrot.slane %v2159, %v2180
        %v2183 = vunpack.c.l.s4 1966171168
        %v2184 = vunpack.c.0.s8 %v2183
        %v2185 = vlaneseq
        %v2186 = vshrl.u32 %v2185, 7
        %v2187 = vsub.s32 %v2184, %v2186
        %v2188 = vrot.slane %v2160, %v2187
        %v2189 = vcombine.low %v2167, %v2174
        %v2190 = vcombine.low %v2181, %v2188
        %v2192 = vunpack.c.l.s4 1966171168
        %v2193 = vunpack.c.0.s8 %v2192
        %v2194 = vlaneseq
        %v2195 = vshrl.u32 %v2194, 7
        %v2196 = vsub.s32 %v2193, %v2195
        %v2197 = vrot.slane %v2189, %v2196
        %v2199 = vunpack.c.l.s4 1966171168
        %v2200 = vunpack.c.0.s8 %v2199
        %v2201 = vlaneseq
        %v2202 = vshrl.u32 %v2201, 7
        %v2203 = vsub.s32 %v2200, %v2202
        %v2204 = vrot.slane %v2190, %v2203
        %v2205 = vcombine.low %v2197, %v2204
        %v2206 = vcombine.low %v1995, %v2009
        %v2208 = vunpack.c.l.s4 1966171168
        %v2209 = vunpack.c.0.s8 %v2208
        %v2210 = vlaneseq
        %v2211 = vshrl.u32 %v2210, 7
        %v2212 = vsub.s32 %v2209, %v2211
        %v2213 = vrot.slane %v2206, %v2212
        %v2215 = vunpack.c.l.s4 1966171168
        %v2216 = vunpack.c.0.s8 %v2215
        %v2217 = vlaneseq
        %v2218 = vshrl.u32 %v2217, 7
        %v2219 = vsub.s32 %v2216, %v2218
        %v2220 = vrot.slane %v2213, %v2219
        %v2226 = vpack.c.bf16 %v2107, %v2058
        %v2227 = vpack.c.bf16 %v2205, %v2156
        %v2228 = vpack.c.bf16 %v2220, %v2220
        %2229 = vrot.lane.b32.xlu0 %v1426, 120
        %v2230 = vpop.permute.xlu0 %2229
        %2231 = vrot.lane.b32.xlu0 %v1427, 120
        %v2232 = vpop.permute.xlu0 %2231
        %2233 = vrot.lane.b32.xlu0 %v1426, 88
        %v2234 = vpop.permute.xlu0 %2233
        %2235 = vrot.lane.b32.xlu0 %v1427, 88
        %v2236 = vpop.permute.xlu0 %2235
        %v2238 = vsel %vm1436, %v2230, 0
        %v2241 = vsel %vm1436, %v2232, 0
        %v2244 = vsel %vm1436, %v2234, 0
        %v2247 = vsel %vm1436, %v2236, 0
        %2249 = vmatprep.subr.bf16.mxu0 0
        %2250 = vmatpush1.bf16.xpose.msra.mxu0 %v2244
        %2251 = vmatprep.subr.bf16.mxu0 0
        %2252 = vmatpush1.bf16.xpose.msra.mxu0 %v2247
        %2253 = vmatprep.subr.bf16.mxu0 0
        %2254 = vmatpush1.bf16.xpose.msra.mxu0 0
        %2255 = vmatprep.subr.bf16.mxu0 0
        %2256 = vmatpush1.bf16.xpose.msra.mxu0 0
        %2257 = vmatprep.subr.bf16.mxu0 0
        %2258 = vmatpush1.bf16.xpose.msra.mxu0 0
        %2259 = vmatprep.subr.bf16.mxu0 0
        %2260 = vmatpush1.bf16.xpose.msra.mxu0 0
        %2261 = vmatprep.subr.bf16.mxu0 0
        %2262 = vmatpush1.bf16.xpose.msra.mxu0 0
        %2263 = vmatprep.subr.bf16.mxu0 0
        %2264 = vmatpush1.bf16.xpose.msra.mxu0 0
        %2265 = vmatprep.subr.bf16.mxu0 0
        %2266 = vmatpush1.bf16.xpose.msra.mxu0 0
        %2267 = vmatprep.subr.bf16.mxu0 0
        %2268 = vmatpush1.bf16.xpose.msra.mxu0 0
        %2269 = vmatprep.subr.bf16.mxu0 0
        %2270 = vmatpush1.bf16.xpose.msra.mxu0 0
        %2271 = vmatprep.subr.bf16.mxu0 0
        %2272 = vmatpush1.bf16.xpose.msra.mxu0 0
        %2273 = vmatprep.subr.bf16.mxu0 0
        %2274 = vmatpush1.bf16.xpose.msra.mxu0 0
        %2275 = vmatprep.subr.bf16.mxu0 0
        %2276 = vmatpush1.bf16.xpose.msra.mxu0 0
        %2277 = vmatprep.subr.bf16.mxu0 0
        %2278 = vmatpush1.bf16.xpose.msra.mxu0 0
        %2279 = vmatprep.subr.bf16.mxu0 0
        %2280 = vmatpush1.bf16.xpose.msra.mxu0 0
        %2281 = vmatprep.mubr.bf16.mxu0 0
        %2282 = vmatmul.mubr.bf16.gmra.mrb[0].mxu0 %v2238
        %v2283 = vpop.f32.mrb[0].mxu0
        %v2284 = vadd.f32 0.0, %v2283
        %v2285 = vpop.f32.mrb[0].mxu0
        %v2286 = vpop.f32.mrb[0].mxu0
        %v2287 = vadd.f32 0.0, %v2286
        %v2288 = vpop.f32.mrb[0].mxu0
        %2289 = vmatprep.mubr.bf16.mxu0 0
        %2290 = vmatmul.mubr.bf16.gmra.mrb[0].mxu0 %v2241
        %v2291 = vpop.f32.mrb[0].mxu0
        %v2292 = vadd.f32 0.0, %v2291
        %v2293 = vpop.f32.mrb[0].mxu0
        %v2294 = vpop.f32.mrb[0].mxu0
        %v2295 = vpop.f32.mrb[0].mxu0
        %2296 = vdwg.mxu0
        %2297 = vrot.lane.b32.xlu0 %v1428, 120
        %v2298 = vpop.permute.xlu0 %2297
        %2299 = vrot.lane.b32.xlu0 %v1429, 120
        %v2300 = vpop.permute.xlu0 %2299
        %2301 = vrot.lane.b32.xlu0 %v1428, 88
        %v2302 = vpop.permute.xlu0 %2301
        %2303 = vrot.lane.b32.xlu0 %v1429, 88
        %v2304 = vpop.permute.xlu0 %2303
        %v2306 = vsel %vm1436, %v2298, 0
        %v2309 = vsel %vm1436, %v2300, 0
        %v2312 = vsel %vm1436, %v2302, 0
        %v2315 = vsel %vm1436, %v2304, 0
        %2317 = vmatprep.subr.bf16.mxu0 0
        %2318 = vmatpush1.bf16.xpose.msra.mxu0 %v2312
        %2319 = vmatprep.subr.bf16.mxu0 0
        %2320 = vmatpush1.bf16.xpose.msra.mxu0 %v2315
        %2321 = vmatprep.subr.bf16.mxu0 0
        %2322 = vmatpush1.bf16.xpose.msra.mxu0 0
        %2323 = vmatprep.subr.bf16.mxu0 0
        %2324 = vmatpush1.bf16.xpose.msra.mxu0 0
        %2325 = vmatprep.subr.bf16.mxu0 0
        %2326 = vmatpush1.bf16.xpose.msra.mxu0 0
        %2327 = vmatprep.subr.bf16.mxu0 0
        %2328 = vmatpush1.bf16.xpose.msra.mxu0 0
        %2329 = vmatprep.subr.bf16.mxu0 0
        %2330 = vmatpush1.bf16.xpose.msra.mxu0 0
        %2331 = vmatprep.subr.bf16.mxu0 0
        %2332 = vmatpush1.bf16.xpose.msra.mxu0 0
        %2333 = vmatprep.subr.bf16.mxu0 0
        %2334 = vmatpush1.bf16.xpose.msra.mxu0 0
        %2335 = vmatprep.subr.bf16.mxu0 0
        %2336 = vmatpush1.bf16.xpose.msra.mxu0 0
        %2337 = vmatprep.subr.bf16.mxu0 0
        %2338 = vmatpush1.bf16.xpose.msra.mxu0 0
        %2339 = vmatprep.subr.bf16.mxu0 0
        %2340 = vmatpush1.bf16.xpose.msra.mxu0 0
        %2341 = vmatprep.subr.bf16.mxu0 0
        %2342 = vmatpush1.bf16.xpose.msra.mxu0 0
        %2343 = vmatprep.subr.bf16.mxu0 0
        %2344 = vmatpush1.bf16.xpose.msra.mxu0 0
        %2345 = vmatprep.subr.bf16.mxu0 0
        %2346 = vmatpush1.bf16.xpose.msra.mxu0 0
        %2347 = vmatprep.subr.bf16.mxu0 0
        %2348 = vmatpush1.bf16.xpose.msra.mxu0 0
        %2349 = vmatprep.mubr.bf16.mxu0 0
        %2350 = vmatmul.mubr.bf16.gmra.mrb[0].mxu0 %v2306
        %v2351 = vpop.f32.mrb[0].mxu0
        %v2352 = vadd.f32 0.0, %v2351
        %v2353 = vpop.f32.mrb[0].mxu0
        %v2354 = vpop.f32.mrb[0].mxu0
        %v2355 = vadd.f32 0.0, %v2354
        %v2356 = vpop.f32.mrb[0].mxu0
        %2357 = vmatprep.mubr.bf16.mxu0 0
        %2358 = vmatmul.mubr.bf16.gmra.mrb[0].mxu0 %v2309
        %v2359 = vpop.f32.mrb[0].mxu0
        %v2360 = vadd.f32 0.0, %v2359
        %v2361 = vpop.f32.mrb[0].mxu0
        %v2362 = vpop.f32.mrb[0].mxu0
        %v2363 = vpop.f32.mrb[0].mxu0
        %2364 = vdwg.mxu0
        %v2365 = vmul.f32 %v2284, 0.35355338
        %v2366 = vmul.f32 %v2287, 0.35355338
        %v2367 = vmul.f32 %v2292, 0.35355338
        %v2368 = vmul.f32 %v2352, 0.35355338
        %v2369 = vmul.f32 %v2355, 0.35355338
        %v2370 = vmul.f32 %v2360, 0.35355338
        %v2371 = vsel %vm1569, %v2365, -inf
        %2372 = vmax.xlane.f32.xlu0 %v2371
        %v2373 = vpop.xlane.xlu0 %2372
        %v2374 = vsel %vm1569, %v2366, -inf
        %2375 = vmax.xlane.f32.xlu0 %v2374
        %v2376 = vpop.xlane.xlu0 %2375
        %v2377 = vsel %vm1576, %v2367, -inf
        %2378 = vmax.xlane.f32.xlu0 %v2377
        %v2379 = vpop.xlane.xlu0 %2378
        %v2380 = vsel %vm1569, %v2368, -inf
        %2381 = vmax.xlane.f32.xlu0 %v2380
        %v2382 = vpop.xlane.xlu0 %2381
        %v2383 = vsel %vm1569, %v2369, -inf
        %2384 = vmax.xlane.f32.xlu0 %v2383
        %v2385 = vpop.xlane.xlu0 %2384
        %v2386 = vsel %vm1576, %v2370, -inf
        %2387 = vmax.xlane.f32.xlu0 %v2386
        %v2388 = vpop.xlane.xlu0 %2387
        %v2389 = vsub.f32 %v2365, %v2373
        %v2390 = vsub.f32 %v2366, %v2376
        %v2391 = vsub.f32 %v2367, %v2379
        %v2392 = vsub.f32 %v2368, %v2382
        %v2393 = vsub.f32 %v2369, %v2385
        %v2394 = vsub.f32 %v2370, %v2388
        %v2395 = vmul.f32 %v2389, 1.442695
        %v2396 = vpow.pop %v2395
        %v2397 = vmul.f32 %v2390, 1.442695
        %v2398 = vpow.pop %v2397
        %v2399 = vmul.f32 %v2391, 1.442695
        %v2400 = vpow.pop %v2399
        %v2401 = vmul.f32 %v2392, 1.442695
        %v2402 = vpow.pop %v2401
        %v2403 = vmul.f32 %v2393, 1.442695
        %v2404 = vpow.pop %v2403
        %v2405 = vmul.f32 %v2394, 1.442695
        %v2406 = vpow.pop %v2405
        %v2407 = vsel %vm1569, %v2396, 0.0
        %2408 = vadd.xlane.f32.xlu0 %v2407
        %v2409 = vpop.xlane.xlu0 %2408
        %v2410 = vsel %vm1569, %v2398, 0.0
        %2411 = vadd.xlane.f32.xlu0 %v2410
        %v2412 = vpop.xlane.xlu0 %2411
        %v2413 = vsel %vm1576, %v2400, 0.0
        %2414 = vadd.xlane.f32.xlu0 %v2413
        %v2415 = vpop.xlane.xlu0 %2414
        %v2416 = vsel %vm1569, %v2402, 0.0
        %2417 = vadd.xlane.f32.xlu0 %v2416
        %v2418 = vpop.xlane.xlu0 %2417
        %v2419 = vsel %vm1569, %v2404, 0.0
        %2420 = vadd.xlane.f32.xlu0 %v2419
        %v2421 = vpop.xlane.xlu0 %2420
        %v2422 = vsel %vm1576, %v2406, 0.0
        %2423 = vadd.xlane.f32.xlu0 %v2422
        %v2424 = vpop.xlane.xlu0 %2423
        %v2425 = vrcp.pop %v2409
        %v2426 = vrcp.pop %v2412
        %v2427 = vrcp.pop %v2415
        %v2428 = vrcp.pop %v2418
        %v2429 = vrcp.pop %v2421
        %v2430 = vrcp.pop %v2424
        %v2431 = vmul.f32 %v2396, %v2425
        %v2432 = vmul.f32 %v2398, %v2426
        %v2433 = vmul.f32 %v2400, %v2427
        %v2434 = vmul.f32 %v2402, %v2428
        %v2435 = vmul.f32 %v2404, %v2429
        %v2436 = vmul.f32 %v2406, %v2430
        %v2437 = vsel %vm1569, %v2431, 0.0
        %v2438 = vsel %vm1569, %v2432, 0.0
        %v2439 = vsel %vm1569, %v2433, 0.0
        %v2440 = vsel %vm1569, %v2434, 0.0
        %v2441 = vsel %vm1569, %v2435, 0.0
        %v2442 = vsel %vm1569, %v2436, 0.0
        %s2443 = scalar_lea.vmem %s746, 48
        %2444 = vst [vmem:[%s2443] sm:$0xff] %v2437
        %2445 = vst [vmem:[%s2443 + $0x8] sm:$0xff] %v2438
        %2446 = vst [vmem:[%s2443 + $0x10] sm:$0x1] %v2439
        %2447 = vst [vmem:[%s2443 + $0x18] sm:$0xff] %v2440
        %2448 = vst [vmem:[%s2443 + $0x20] sm:$0xff] %v2441
        %2449 = vst [vmem:[%s2443 + $0x28] sm:$0x1] %v2442
        %v2450 = vpack.c.bf16 %v2432, %v2431
        %v2451 = vpack.c.bf16 %v2433, %v2433
        %v2452 = vpack.c.bf16 %v2435, %v2434
        %v2453 = vpack.c.bf16 %v2436, %v2436
        %2454 = vrot.lane.b32.xlu0 %v1426, 56
        %v2455 = vpop.permute.xlu0 %2454
        %2456 = vrot.lane.b32.xlu0 %v1427, 56
        %v2457 = vpop.permute.xlu0 %2456
        %v2460 = vsel %vm1569, %v2450, 0
        %v2463 = vsel %vm1569, %v2451, 0
        %v2466 = vand.u32 %v2457, %v1666
        %2468 = vmatprep.subr.bf16.mxu0 0
        %2469 = vmatpush1.bf16.msra.mxu0 %v2455
        %2470 = vmatprep.subr.bf16.mxu0 0
        %2471 = vmatpush1.bf16.msra.mxu0 %v2466
        %2472 = vmatprep.subr.bf16.mxu0 0
        %2473 = vmatpush1.bf16.msra.mxu0 0
        %2474 = vmatprep.subr.bf16.mxu0 0
        %2475 = vmatpush1.bf16.msra.mxu0 0
        %2476 = vmatprep.subr.bf16.mxu0 0
        %2477 = vmatpush1.bf16.msra.mxu0 0
        %2478 = vmatprep.subr.bf16.mxu0 0
        %2479 = vmatpush1.bf16.msra.mxu0 0
        %2480 = vmatprep.subr.bf16.mxu0 0
        %2481 = vmatpush1.bf16.msra.mxu0 0
        %2482 = vmatprep.subr.bf16.mxu0 0
        %2483 = vmatpush1.bf16.msra.mxu0 0
        %2484 = vmatprep.subr.bf16.mxu0 0
        %2485 = vmatpush1.bf16.msra.mxu0 0
        %2486 = vmatprep.subr.bf16.mxu0 0
        %2487 = vmatpush1.bf16.msra.mxu0 0
        %2488 = vmatprep.subr.bf16.mxu0 0
        %2489 = vmatpush1.bf16.msra.mxu0 0
        %2490 = vmatprep.subr.bf16.mxu0 0
        %2491 = vmatpush1.bf16.msra.mxu0 0
        %2492 = vmatprep.subr.bf16.mxu0 0
        %2493 = vmatpush1.bf16.msra.mxu0 0
        %2494 = vmatprep.subr.bf16.mxu0 0
        %2495 = vmatpush1.bf16.msra.mxu0 0
        %2496 = vmatprep.subr.bf16.mxu0 0
        %2497 = vmatpush1.bf16.msra.mxu0 0
        %2498 = vmatprep.subr.bf16.mxu0 0
        %2499 = vmatpush1.bf16.msra.mxu0 0
        %2500 = vmatprep.mubr.bf16.mxu0 0
        %2501 = vmatmul.mubr.bf16.gmra.mrb[0].mxu0 %v2460
        %v2502 = vpop.f32.mrb[0].mxu0
        %v2503 = vadd.f32 0.0, %v2502
        %v2504 = vpop.f32.mrb[0].mxu0
        %v2505 = vpop.f32.mrb[0].mxu0
        %v2506 = vadd.f32 0.0, %v2505
        %v2507 = vpop.f32.mrb[0].mxu0
        %2508 = vmatprep.mubr.bf16.mxu0 0
        %2509 = vmatmul.mubr.bf16.gmra.mrb[0].mxu0 %v2463
        %v2510 = vpop.f32.mrb[0].mxu0
        %v2511 = vadd.f32 0.0, %v2510
        %v2512 = vpop.f32.mrb[0].mxu0
        %v2513 = vpop.f32.mrb[0].mxu0
        %v2514 = vpop.f32.mrb[0].mxu0
        %2515 = vdwg.mxu0
        %2516 = vrot.lane.b32.xlu0 %v1428, 56
        %v2517 = vpop.permute.xlu0 %2516
        %2518 = vrot.lane.b32.xlu0 %v1429, 56
        %v2519 = vpop.permute.xlu0 %2518
        %v2522 = vsel %vm1569, %v2452, 0
        %v2525 = vsel %vm1569, %v2453, 0
        %v2528 = vand.u32 %v2519, %v1666
        %2530 = vmatprep.subr.bf16.mxu0 0
        %2531 = vmatpush1.bf16.msra.mxu0 %v2517
        %2532 = vmatprep.subr.bf16.mxu0 0
        %2533 = vmatpush1.bf16.msra.mxu0 %v2528
        %2534 = vmatprep.subr.bf16.mxu0 0
        %2535 = vmatpush1.bf16.msra.mxu0 0
        %2536 = vmatprep.subr.bf16.mxu0 0
        %2537 = vmatpush1.bf16.msra.mxu0 0
        %2538 = vmatprep.subr.bf16.mxu0 0
        %2539 = vmatpush1.bf16.msra.mxu0 0
        %2540 = vmatprep.subr.bf16.mxu0 0
        %2541 = vmatpush1.bf16.msra.mxu0 0
        %2542 = vmatprep.subr.bf16.mxu0 0
        %2543 = vmatpush1.bf16.msra.mxu0 0
        %2544 = vmatprep.subr.bf16.mxu0 0
        %2545 = vmatpush1.bf16.msra.mxu0 0
        %2546 = vmatprep.subr.bf16.mxu0 0
        %2547 = vmatpush1.bf16.msra.mxu0 0
        %2548 = vmatprep.subr.bf16.mxu0 0
        %2549 = vmatpush1.bf16.msra.mxu0 0
        %2550 = vmatprep.subr.bf16.mxu0 0
        %2551 = vmatpush1.bf16.msra.mxu0 0
        %2552 = vmatprep.subr.bf16.mxu0 0
        %2553 = vmatpush1.bf16.msra.mxu0 0
        %2554 = vmatprep.subr.bf16.mxu0 0
        %2555 = vmatpush1.bf16.msra.mxu0 0
        %2556 = vmatprep.subr.bf16.mxu0 0
        %2557 = vmatpush1.bf16.msra.mxu0 0
        %2558 = vmatprep.subr.bf16.mxu0 0
        %2559 = vmatpush1.bf16.msra.mxu0 0
        %2560 = vmatprep.subr.bf16.mxu0 0
        %2561 = vmatpush1.bf16.msra.mxu0 0
        %2562 = vmatprep.mubr.bf16.mxu0 0
        %2563 = vmatmul.mubr.bf16.gmra.mrb[0].mxu0 %v2522
        %v2564 = vpop.f32.mrb[0].mxu0
        %v2565 = vadd.f32 0.0, %v2564
        %v2566 = vpop.f32.mrb[0].mxu0
        %v2567 = vpop.f32.mrb[0].mxu0
        %v2568 = vadd.f32 0.0, %v2567
        %v2569 = vpop.f32.mrb[0].mxu0
        %2570 = vmatprep.mubr.bf16.mxu0 0
        %2571 = vmatmul.mubr.bf16.gmra.mrb[0].mxu0 %v2525
        %v2572 = vpop.f32.mrb[0].mxu0
        %v2573 = vadd.f32 0.0, %v2572
        %v2574 = vpop.f32.mrb[0].mxu0
        %v2575 = vpop.f32.mrb[0].mxu0
        %v2576 = vpop.f32.mrb[0].mxu0
        %2577 = vdwg.mxu0
        %v2584 = vcombine.high %v2503, %v2503
        %v2586 = vunpack.c.l.s4 1966171168
        %v2587 = vunpack.c.0.s8 %v2586
        %v2588 = vlaneseq
        %v2589 = vshrl.u32 %v2588, 7
        %v2590 = vsub.s32 %v2587, %v2589
        %v2591 = vrot.slane %v2503, %v2590
        %v2593 = vunpack.c.l.s4 1966171168
        %v2594 = vunpack.c.0.s8 %v2593
        %v2595 = vlaneseq
        %v2596 = vshrl.u32 %v2595, 7
        %v2597 = vsub.s32 %v2594, %v2596
        %v2598 = vrot.slane %v2584, %v2597
        %v2599 = vcombine.high %v2591, %v2591
        %v2600 = vcombine.high %v2598, %v2598
        %v2602 = vunpack.c.l.s4 1966171168
        %v2603 = vunpack.c.0.s8 %v2602
        %v2604 = vlaneseq
        %v2605 = vshrl.u32 %v2604, 7
        %v2606 = vsub.s32 %v2603, %v2605
        %v2607 = vrot.slane %v2591, %v2606
        %v2609 = vunpack.c.l.s4 1966171168
        %v2610 = vunpack.c.0.s8 %v2609
        %v2611 = vlaneseq
        %v2612 = vshrl.u32 %v2611, 7
        %v2613 = vsub.s32 %v2610, %v2612
        %v2614 = vrot.slane %v2598, %v2613
        %v2616 = vunpack.c.l.s4 1966171168
        %v2617 = vunpack.c.0.s8 %v2616
        %v2618 = vlaneseq
        %v2619 = vshrl.u32 %v2618, 7
        %v2620 = vsub.s32 %v2617, %v2619
        %v2621 = vrot.slane %v2599, %v2620
        %v2623 = vunpack.c.l.s4 1966171168
        %v2624 = vunpack.c.0.s8 %v2623
        %v2625 = vlaneseq
        %v2626 = vshrl.u32 %v2625, 7
        %v2627 = vsub.s32 %v2624, %v2626
        %v2628 = vrot.slane %v2600, %v2627
        %v2629 = vcombine.high %v2607, %v2607
        %v2630 = vcombine.high %v2614, %v2614
        %v2631 = vcombine.high %v2621, %v2621
        %v2632 = vcombine.high %v2628, %v2628
        %v2633 = vcombine.high %v2506, %v2506
        %v2635 = vunpack.c.l.s4 1966171168
        %v2636 = vunpack.c.0.s8 %v2635
        %v2637 = vlaneseq
        %v2638 = vshrl.u32 %v2637, 7
        %v2639 = vsub.s32 %v2636, %v2638
        %v2640 = vrot.slane %v2506, %v2639
        %v2642 = vunpack.c.l.s4 1966171168
        %v2643 = vunpack.c.0.s8 %v2642
        %v2644 = vlaneseq
        %v2645 = vshrl.u32 %v2644, 7
        %v2646 = vsub.s32 %v2643, %v2645
        %v2647 = vrot.slane %v2633, %v2646
        %v2648 = vcombine.high %v2640, %v2640
        %v2649 = vcombine.high %v2647, %v2647
        %v2651 = vunpack.c.l.s4 1966171168
        %v2652 = vunpack.c.0.s8 %v2651
        %v2653 = vlaneseq
        %v2654 = vshrl.u32 %v2653, 7
        %v2655 = vsub.s32 %v2652, %v2654
        %v2656 = vrot.slane %v2640, %v2655
        %v2658 = vunpack.c.l.s4 1966171168
        %v2659 = vunpack.c.0.s8 %v2658
        %v2660 = vlaneseq
        %v2661 = vshrl.u32 %v2660, 7
        %v2662 = vsub.s32 %v2659, %v2661
        %v2663 = vrot.slane %v2647, %v2662
        %v2665 = vunpack.c.l.s4 1966171168
        %v2666 = vunpack.c.0.s8 %v2665
        %v2667 = vlaneseq
        %v2668 = vshrl.u32 %v2667, 7
        %v2669 = vsub.s32 %v2666, %v2668
        %v2670 = vrot.slane %v2648, %v2669
        %v2672 = vunpack.c.l.s4 1966171168
        %v2673 = vunpack.c.0.s8 %v2672
        %v2674 = vlaneseq
        %v2675 = vshrl.u32 %v2674, 7
        %v2676 = vsub.s32 %v2673, %v2675
        %v2677 = vrot.slane %v2649, %v2676
        %v2678 = vcombine.high %v2656, %v2656
        %v2679 = vcombine.high %v2663, %v2663
        %v2680 = vcombine.high %v2670, %v2670
        %v2681 = vcombine.high %v2677, %v2677
        %v2683 = vunpack.c.l.s4 1966171168
        %v2684 = vunpack.c.0.s8 %v2683
        %v2685 = vlaneseq
        %v2686 = vshrl.u32 %v2685, 7
        %v2687 = vsub.s32 %v2684, %v2686
        %v2688 = vrot.slane %v2511, %v2687
        %v2690 = vunpack.c.l.s4 1966171168
        %v2691 = vunpack.c.0.s8 %v2690
        %v2692 = vlaneseq
        %v2693 = vshrl.u32 %v2692, 7
        %v2694 = vsub.s32 %v2691, %v2693
        %v2695 = vrot.slane %v2688, %v2694
        %v2696 = vcombine.high %v2565, %v2565
        %v2698 = vunpack.c.l.s4 1966171168
        %v2699 = vunpack.c.0.s8 %v2698
        %v2700 = vlaneseq
        %v2701 = vshrl.u32 %v2700, 7
        %v2702 = vsub.s32 %v2699, %v2701
        %v2703 = vrot.slane %v2565, %v2702
        %v2705 = vunpack.c.l.s4 1966171168
        %v2706 = vunpack.c.0.s8 %v2705
        %v2707 = vlaneseq
        %v2708 = vshrl.u32 %v2707, 7
        %v2709 = vsub.s32 %v2706, %v2708
        %v2710 = vrot.slane %v2696, %v2709
        %v2711 = vcombine.high %v2703, %v2703
        %v2712 = vcombine.high %v2710, %v2710
        %v2714 = vunpack.c.l.s4 1966171168
        %v2715 = vunpack.c.0.s8 %v2714
        %v2716 = vlaneseq
        %v2717 = vshrl.u32 %v2716, 7
        %v2718 = vsub.s32 %v2715, %v2717
        %v2719 = vrot.slane %v2703, %v2718
        %v2721 = vunpack.c.l.s4 1966171168
        %v2722 = vunpack.c.0.s8 %v2721
        %v2723 = vlaneseq
        %v2724 = vshrl.u32 %v2723, 7
        %v2725 = vsub.s32 %v2722, %v2724
        %v2726 = vrot.slane %v2710, %v2725
        %v2728 = vunpack.c.l.s4 1966171168
        %v2729 = vunpack.c.0.s8 %v2728
        %v2730 = vlaneseq
        %v2731 = vshrl.u32 %v2730, 7
        %v2732 = vsub.s32 %v2729, %v2731
        %v2733 = vrot.slane %v2711, %v2732
        %v2735 = vunpack.c.l.s4 1966171168
        %v2736 = vunpack.c.0.s8 %v2735
        %v2737 = vlaneseq
        %v2738 = vshrl.u32 %v2737, 7
        %v2739 = vsub.s32 %v2736, %v2738
        %v2740 = vrot.slane %v2712, %v2739
        %v2741 = vcombine.high %v2719, %v2719
        %v2742 = vcombine.high %v2726, %v2726
        %v2743 = vcombine.high %v2733, %v2733
        %v2744 = vcombine.high %v2740, %v2740
        %v2745 = vcombine.high %v2568, %v2568
        %v2747 = vunpack.c.l.s4 1966171168
        %v2748 = vunpack.c.0.s8 %v2747
        %v2749 = vlaneseq
        %v2750 = vshrl.u32 %v2749, 7
        %v2751 = vsub.s32 %v2748, %v2750
        %v2752 = vrot.slane %v2568, %v2751
        %v2754 = vunpack.c.l.s4 1966171168
        %v2755 = vunpack.c.0.s8 %v2754
        %v2756 = vlaneseq
        %v2757 = vshrl.u32 %v2756, 7
        %v2758 = vsub.s32 %v2755, %v2757
        %v2759 = vrot.slane %v2745, %v2758
        %v2760 = vcombine.high %v2752, %v2752
        %v2761 = vcombine.high %v2759, %v2759
        %v2763 = vunpack.c.l.s4 1966171168
        %v2764 = vunpack.c.0.s8 %v2763
        %v2765 = vlaneseq
        %v2766 = vshrl.u32 %v2765, 7
        %v2767 = vsub.s32 %v2764, %v2766
        %v2768 = vrot.slane %v2752, %v2767
        %v2770 = vunpack.c.l.s4 1966171168
        %v2771 = vunpack.c.0.s8 %v2770
        %v2772 = vlaneseq
        %v2773 = vshrl.u32 %v2772, 7
        %v2774 = vsub.s32 %v2771, %v2773
        %v2775 = vrot.slane %v2759, %v2774
        %v2777 = vunpack.c.l.s4 1966171168
        %v2778 = vunpack.c.0.s8 %v2777
        %v2779 = vlaneseq
        %v2780 = vshrl.u32 %v2779, 7
        %v2781 = vsub.s32 %v2778, %v2780
        %v2782 = vrot.slane %v2760, %v2781
        %v2784 = vunpack.c.l.s4 1966171168
        %v2785 = vunpack.c.0.s8 %v2784
        %v2786 = vlaneseq
        %v2787 = vshrl.u32 %v2786, 7
        %v2788 = vsub.s32 %v2785, %v2787
        %v2789 = vrot.slane %v2761, %v2788
        %v2790 = vcombine.high %v2768, %v2768
        %v2791 = vcombine.high %v2775, %v2775
        %v2792 = vcombine.high %v2782, %v2782
        %v2793 = vcombine.high %v2789, %v2789
        %v2795 = vunpack.c.l.s4 1966171168
        %v2796 = vunpack.c.0.s8 %v2795
        %v2797 = vlaneseq
        %v2798 = vshrl.u32 %v2797, 7
        %v2799 = vsub.s32 %v2796, %v2798
        %v2800 = vrot.slane %v2573, %v2799
        %v2802 = vunpack.c.l.s4 1966171168
        %v2803 = vunpack.c.0.s8 %v2802
        %v2804 = vlaneseq
        %v2805 = vshrl.u32 %v2804, 7
        %v2806 = vsub.s32 %v2803, %v2805
        %v2807 = vrot.slane %v2800, %v2806
        %v2808 = vcombine.low %v2607, %v2621
        %v2809 = vcombine.low %v2629, %v2631
        %v2810 = vcombine.low %v2614, %v2628
        %v2811 = vcombine.low %v2630, %v2632
        %v2813 = vunpack.c.l.s4 1966171168
        %v2814 = vunpack.c.0.s8 %v2813
        %v2815 = vlaneseq
        %v2816 = vshrl.u32 %v2815, 7
        %v2817 = vsub.s32 %v2814, %v2816
        %v2818 = vrot.slane %v2808, %v2817
        %v2820 = vunpack.c.l.s4 1966171168
        %v2821 = vunpack.c.0.s8 %v2820
        %v2822 = vlaneseq
        %v2823 = vshrl.u32 %v2822, 7
        %v2824 = vsub.s32 %v2821, %v2823
        %v2825 = vrot.slane %v2809, %v2824
        %v2827 = vunpack.c.l.s4 1966171168
        %v2828 = vunpack.c.0.s8 %v2827
        %v2829 = vlaneseq
        %v2830 = vshrl.u32 %v2829, 7
        %v2831 = vsub.s32 %v2828, %v2830
        %v2832 = vrot.slane %v2810, %v2831
        %v2834 = vunpack.c.l.s4 1966171168
        %v2835 = vunpack.c.0.s8 %v2834
        %v2836 = vlaneseq
        %v2837 = vshrl.u32 %v2836, 7
        %v2838 = vsub.s32 %v2835, %v2837
        %v2839 = vrot.slane %v2811, %v2838
        %v2840 = vcombine.low %v2818, %v2825
        %v2841 = vcombine.low %v2832, %v2839
        %v2843 = vunpack.c.l.s4 1966171168
        %v2844 = vunpack.c.0.s8 %v2843
        %v2845 = vlaneseq
        %v2846 = vshrl.u32 %v2845, 7
        %v2847 = vsub.s32 %v2844, %v2846
        %v2848 = vrot.slane %v2840, %v2847
        %v2850 = vunpack.c.l.s4 1966171168
        %v2851 = vunpack.c.0.s8 %v2850
        %v2852 = vlaneseq
        %v2853 = vshrl.u32 %v2852, 7
        %v2854 = vsub.s32 %v2851, %v2853
        %v2855 = vrot.slane %v2841, %v2854
        %v2856 = vcombine.low %v2848, %v2855
        %v2857 = vcombine.low %v2656, %v2670
        %v2858 = vcombine.low %v2678, %v2680
        %v2859 = vcombine.low %v2663, %v2677
        %v2860 = vcombine.low %v2679, %v2681
        %v2862 = vunpack.c.l.s4 1966171168
        %v2863 = vunpack.c.0.s8 %v2862
        %v2864 = vlaneseq
        %v2865 = vshrl.u32 %v2864, 7
        %v2866 = vsub.s32 %v2863, %v2865
        %v2867 = vrot.slane %v2857, %v2866
        %v2869 = vunpack.c.l.s4 1966171168
        %v2870 = vunpack.c.0.s8 %v2869
        %v2871 = vlaneseq
        %v2872 = vshrl.u32 %v2871, 7
        %v2873 = vsub.s32 %v2870, %v2872
        %v2874 = vrot.slane %v2858, %v2873
        %v2876 = vunpack.c.l.s4 1966171168
        %v2877 = vunpack.c.0.s8 %v2876
        %v2878 = vlaneseq
        %v2879 = vshrl.u32 %v2878, 7
        %v2880 = vsub.s32 %v2877, %v2879
        %v2881 = vrot.slane %v2859, %v2880
        %v2883 = vunpack.c.l.s4 1966171168
        %v2884 = vunpack.c.0.s8 %v2883
        %v2885 = vlaneseq
        %v2886 = vshrl.u32 %v2885, 7
        %v2887 = vsub.s32 %v2884, %v2886
        %v2888 = vrot.slane %v2860, %v2887
        %v2889 = vcombine.low %v2867, %v2874
        %v2890 = vcombine.low %v2881, %v2888
        %v2892 = vunpack.c.l.s4 1966171168
        %v2893 = vunpack.c.0.s8 %v2892
        %v2894 = vlaneseq
        %v2895 = vshrl.u32 %v2894, 7
        %v2896 = vsub.s32 %v2893, %v2895
        %v2897 = vrot.slane %v2889, %v2896
        %v2899 = vunpack.c.l.s4 1966171168
        %v2900 = vunpack.c.0.s8 %v2899
        %v2901 = vlaneseq
        %v2902 = vshrl.u32 %v2901, 7
        %v2903 = vsub.s32 %v2900, %v2902
        %v2904 = vrot.slane %v2890, %v2903
        %v2905 = vcombine.low %v2897, %v2904
        %v2906 = vcombine.low %v2695, %v2719
        %v2907 = vcombine.low %v2733, %v2741
        %v2908 = vcombine.low %v2743, %v2726
        %v2909 = vcombine.low %v2740, %v2742
        %v2911 = vunpack.c.l.s4 1966171168
        %v2912 = vunpack.c.0.s8 %v2911
        %v2913 = vlaneseq
        %v2914 = vshrl.u32 %v2913, 7
        %v2915 = vsub.s32 %v2912, %v2914
        %v2916 = vrot.slane %v2906, %v2915
        %v2918 = vunpack.c.l.s4 1966171168
        %v2919 = vunpack.c.0.s8 %v2918
        %v2920 = vlaneseq
        %v2921 = vshrl.u32 %v2920, 7
        %v2922 = vsub.s32 %v2919, %v2921
        %v2923 = vrot.slane %v2907, %v2922
        %v2925 = vunpack.c.l.s4 1966171168
        %v2926 = vunpack.c.0.s8 %v2925
        %v2927 = vlaneseq
        %v2928 = vshrl.u32 %v2927, 7
        %v2929 = vsub.s32 %v2926, %v2928
        %v2930 = vrot.slane %v2908, %v2929
        %v2932 = vunpack.c.l.s4 1966171168
        %v2933 = vunpack.c.0.s8 %v2932
        %v2934 = vlaneseq
        %v2935 = vshrl.u32 %v2934, 7
        %v2936 = vsub.s32 %v2933, %v2935
        %v2937 = vrot.slane %v2909, %v2936
        %v2938 = vcombine.low %v2916, %v2923
        %v2939 = vcombine.low %v2930, %v2937
        %v2941 = vunpack.c.l.s4 1966171168
        %v2942 = vunpack.c.0.s8 %v2941
        %v2943 = vlaneseq
        %v2944 = vshrl.u32 %v2943, 7
        %v2945 = vsub.s32 %v2942, %v2944
        %v2946 = vrot.slane %v2938, %v2945
        %v2948 = vunpack.c.l.s4 1966171168
        %v2949 = vunpack.c.0.s8 %v2948
        %v2950 = vlaneseq
        %v2951 = vshrl.u32 %v2950, 7
        %v2952 = vsub.s32 %v2949, %v2951
        %v2953 = vrot.slane %v2939, %v2952
        %v2954 = vcombine.low %v2946, %v2953
        %v2955 = vcombine.low %v2744, %v2768
        %v2956 = vcombine.low %v2782, %v2790
        %v2957 = vcombine.low %v2792, %v2775
        %v2958 = vcombine.low %v2789, %v2791
        %v2960 = vunpack.c.l.s4 1966171168
        %v2961 = vunpack.c.0.s8 %v2960
        %v2962 = vlaneseq
        %v2963 = vshrl.u32 %v2962, 7
        %v2964 = vsub.s32 %v2961, %v2963
        %v2965 = vrot.slane %v2955, %v2964
        %v2967 = vunpack.c.l.s4 1966171168
        %v2968 = vunpack.c.0.s8 %v2967
        %v2969 = vlaneseq
        %v2970 = vshrl.u32 %v2969, 7
        %v2971 = vsub.s32 %v2968, %v2970
        %v2972 = vrot.slane %v2956, %v2971
        %v2974 = vunpack.c.l.s4 1966171168
        %v2975 = vunpack.c.0.s8 %v2974
        %v2976 = vlaneseq
        %v2977 = vshrl.u32 %v2976, 7
        %v2978 = vsub.s32 %v2975, %v2977
        %v2979 = vrot.slane %v2957, %v2978
        %v2981 = vunpack.c.l.s4 1966171168
        %v2982 = vunpack.c.0.s8 %v2981
        %v2983 = vlaneseq
        %v2984 = vshrl.u32 %v2983, 7
        %v2985 = vsub.s32 %v2982, %v2984
        %v2986 = vrot.slane %v2958, %v2985
        %v2987 = vcombine.low %v2965, %v2972
        %v2988 = vcombine.low %v2979, %v2986
        %v2990 = vunpack.c.l.s4 1966171168
        %v2991 = vunpack.c.0.s8 %v2990
        %v2992 = vlaneseq
        %v2993 = vshrl.u32 %v2992, 7
        %v2994 = vsub.s32 %v2991, %v2993
        %v2995 = vrot.slane %v2987, %v2994
        %v2997 = vunpack.c.l.s4 1966171168
        %v2998 = vunpack.c.0.s8 %v2997
        %v2999 = vlaneseq
        %v3000 = vshrl.u32 %v2999, 7
        %v3001 = vsub.s32 %v2998, %v3000
        %v3002 = vrot.slane %v2988, %v3001
        %v3003 = vcombine.low %v2995, %v3002
        %v3004 = vcombine.low %v2793, %v2807
        %v3006 = vunpack.c.l.s4 1966171168
        %v3007 = vunpack.c.0.s8 %v3006
        %v3008 = vlaneseq
        %v3009 = vshrl.u32 %v3008, 7
        %v3010 = vsub.s32 %v3007, %v3009
        %v3011 = vrot.slane %v3004, %v3010
        %v3013 = vunpack.c.l.s4 1966171168
        %v3014 = vunpack.c.0.s8 %v3013
        %v3015 = vlaneseq
        %v3016 = vshrl.u32 %v3015, 7
        %v3017 = vsub.s32 %v3014, %v3016
        %v3018 = vrot.slane %v3011, %v3017
        %v3024 = vpack.c.bf16 %v2905, %v2856
        %v3025 = vpack.c.bf16 %v3003, %v2954
        %v3026 = vpack.c.bf16 %v3018, %v3018
        %v3028 = vsel %vm1436, %v3024, 0
        %v3031 = vsel %vm1436, %v3025, 0
        %v3034 = vsel %vm1436, %v3026, 0
        %vm3036 = vcmask 1043456
        %v3038 = vsel %vm3036, %v772, 0
        %3040 = vmatprep.subr.bf16.mxu0 0
        %3041 = vmatpush1.bf16.msra.mxu0 %v3038
        %3042 = vmatprep.subr.bf16.mxu0 0
        %3043 = vmatpush1.bf16.msra.mxu0 0
        %3044 = vmatprep.subr.bf16.mxu0 0
        %3045 = vmatpush1.bf16.msra.mxu0 0
        %3046 = vmatprep.subr.bf16.mxu0 0
        %3047 = vmatpush1.bf16.msra.mxu0 0
        %3048 = vmatprep.subr.bf16.mxu0 0
        %3049 = vmatpush1.bf16.msra.mxu0 0
        %3050 = vmatprep.subr.bf16.mxu0 0
        %3051 = vmatpush1.bf16.msra.mxu0 0
        %3052 = vmatprep.subr.bf16.mxu0 0
        %3053 = vmatpush1.bf16.msra.mxu0 0
        %3054 = vmatprep.subr.bf16.mxu0 0
        %3055 = vmatpush1.bf16.msra.mxu0 0
        %3056 = vmatprep.subr.bf16.mxu0 0
        %3057 = vmatpush1.bf16.msra.mxu0 0
        %3058 = vmatprep.subr.bf16.mxu0 0
        %3059 = vmatpush1.bf16.msra.mxu0 0
        %3060 = vmatprep.subr.bf16.mxu0 0
        %3061 = vmatpush1.bf16.msra.mxu0 0
        %3062 = vmatprep.subr.bf16.mxu0 0
        %3063 = vmatpush1.bf16.msra.mxu0 0
        %3064 = vmatprep.subr.bf16.mxu0 0
        %3065 = vmatpush1.bf16.msra.mxu0 0
        %3066 = vmatprep.subr.bf16.mxu0 0
        %3067 = vmatpush1.bf16.msra.mxu0 0
        %3068 = vmatprep.subr.bf16.mxu0 0
        %3069 = vmatpush1.bf16.msra.mxu0 0
        %3070 = vmatprep.subr.bf16.mxu0 0
        %3071 = vmatpush1.bf16.msra.mxu0 0
        %3072 = vmatprep.mubr.bf16.mxu0 0
        %3073 = vmatmul.mubr.bf16.gmra.mrb[0].mxu0 %v3028
        %v3074 = vpop.f32.mrb[0].mxu0
        %v3075 = vadd.f32 0.0, %v3074
        %v3076 = vpop.f32.mrb[0].mxu0
        %v3077 = vpop.f32.mrb[0].mxu0
        %v3078 = vadd.f32 0.0, %v3077
        %v3079 = vpop.f32.mrb[0].mxu0
        %3080 = vmatprep.mubr.bf16.mxu0 0
        %3081 = vmatmul.mubr.bf16.gmra.mrb[0].mxu0 %v3031
        %v3082 = vpop.f32.mrb[0].mxu0
        %v3083 = vadd.f32 0.0, %v3082
        %v3084 = vpop.f32.mrb[0].mxu0
        %v3085 = vpop.f32.mrb[0].mxu0
        %v3086 = vadd.f32 0.0, %v3085
        %v3087 = vpop.f32.mrb[0].mxu0
        %3088 = vmatprep.mubr.bf16.mxu0 0
        %3089 = vmatmul.mubr.bf16.gmra.mrb[0].mxu0 %v3034
        %v3090 = vpop.f32.mrb[0].mxu0
        %v3091 = vadd.f32 0.0, %v3090
        %v3092 = vpop.f32.mrb[0].mxu0
        %v3093 = vpop.f32.mrb[0].mxu0
        %v3094 = vpop.f32.mrb[0].mxu0
        %3095 = vdwg.mxu0
        %v3097 = vsel %vm1436, %v2226, 0
        %v3100 = vsel %vm1436, %v2227, 0
        %v3103 = vsel %vm1436, %v2228, 0
        %v3106 = vsel %vm3036, %v771, 0
        %3108 = vmatprep.subr.bf16.mxu0 0
        %3109 = vmatpush1.bf16.msra.mxu0 %v3106
        %3110 = vmatprep.subr.bf16.mxu0 0
        %3111 = vmatpush1.bf16.msra.mxu0 0
        %3112 = vmatprep.subr.bf16.mxu0 0
        %3113 = vmatpush1.bf16.msra.mxu0 0
        %3114 = vmatprep.subr.bf16.mxu0 0
        %3115 = vmatpush1.bf16.msra.mxu0 0
        %3116 = vmatprep.subr.bf16.mxu0 0
        %3117 = vmatpush1.bf16.msra.mxu0 0
        %3118 = vmatprep.subr.bf16.mxu0 0
        %3119 = vmatpush1.bf16.msra.mxu0 0
        %3120 = vmatprep.subr.bf16.mxu0 0
        %3121 = vmatpush1.bf16.msra.mxu0 0
        %3122 = vmatprep.subr.bf16.mxu0 0
        %3123 = vmatpush1.bf16.msra.mxu0 0
        %3124 = vmatprep.subr.bf16.mxu0 0
        %3125 = vmatpush1.bf16.msra.mxu0 0
        %3126 = vmatprep.subr.bf16.mxu0 0
        %3127 = vmatpush1.bf16.msra.mxu0 0
        %3128 = vmatprep.subr.bf16.mxu0 0
        %3129 = vmatpush1.bf16.msra.mxu0 0
        %3130 = vmatprep.subr.bf16.mxu0 0
        %3131 = vmatpush1.bf16.msra.mxu0 0
        %3132 = vmatprep.subr.bf16.mxu0 0
        %3133 = vmatpush1.bf16.msra.mxu0 0
        %3134 = vmatprep.subr.bf16.mxu0 0
        %3135 = vmatpush1.bf16.msra.mxu0 0
        %3136 = vmatprep.subr.bf16.mxu0 0
        %3137 = vmatpush1.bf16.msra.mxu0 0
        %3138 = vmatprep.subr.bf16.mxu0 0
        %3139 = vmatpush1.bf16.msra.mxu0 0
        %3140 = vmatprep.mubr.bf16.mxu0 0
        %3141 = vmatmul.mubr.bf16.gmra.mrb[0].mxu0 %v3097
        %v3142 = vpop.f32.mrb[0].mxu0
        %v3143 = vadd.f32 %v3075, %v3142
        %v3144 = vpop.f32.mrb[0].mxu0
        %v3145 = vpop.f32.mrb[0].mxu0
        %v3146 = vadd.f32 %v3078, %v3145
        %v3147 = vpop.f32.mrb[0].mxu0
        %3148 = vmatprep.mubr.bf16.mxu0 0
        %3149 = vmatmul.mubr.bf16.gmra.mrb[0].mxu0 %v3100
        %v3150 = vpop.f32.mrb[0].mxu0
        %v3151 = vadd.f32 %v3083, %v3150
        %v3152 = vpop.f32.mrb[0].mxu0
        %v3153 = vpop.f32.mrb[0].mxu0
        %v3154 = vadd.f32 %v3086, %v3153
        %v3155 = vpop.f32.mrb[0].mxu0
        %3156 = vmatprep.mubr.bf16.mxu0 0
        %3157 = vmatmul.mubr.bf16.gmra.mrb[0].mxu0 %v3103
        %v3158 = vpop.f32.mrb[0].mxu0
        %v3159 = vadd.f32 %v3091, %v3158
        %v3160 = vpop.f32.mrb[0].mxu0
        %v3161 = vpop.f32.mrb[0].mxu0
        %v3162 = vpop.f32.mrb[0].mxu0
        %3163 = vdwg.mxu0
        %3164 = vrot.lane.b32.xlu0 %v1426, 112
        %v3165 = vpop.permute.xlu0 %3164
        %3166 = vrot.lane.b32.xlu0 %v1427, 112
        %v3167 = vpop.permute.xlu0 %3166
        %3168 = vrot.lane.b32.xlu0 %v1426, 80
        %v3169 = vpop.permute.xlu0 %3168
        %3170 = vrot.lane.b32.xlu0 %v1427, 80
        %v3171 = vpop.permute.xlu0 %3170
        %v3173 = vsel %vm1436, %v3165, 0
        %v3176 = vsel %vm1436, %v3167, 0
        %v3179 = vsel %vm1436, %v3169, 0
        %v3182 = vsel %vm1436, %v3171, 0
        %3184 = vmatprep.subr.bf16.mxu0 0
        %3185 = vmatpush1.bf16.xpose.msra.mxu0 %v3179
        %3186 = vmatprep.subr.bf16.mxu0 0
        %3187 = vmatpush1.bf16.xpose.msra.mxu0 %v3182
        %3188 = vmatprep.subr.bf16.mxu0 0
        %3189 = vmatpush1.bf16.xpose.msra.mxu0 0
        %3190 = vmatprep.subr.bf16.mxu0 0
        %3191 = vmatpush1.bf16.xpose.msra.mxu0 0
        %3192 = vmatprep.subr.bf16.mxu0 0
        %3193 = vmatpush1.bf16.xpose.msra.mxu0 0
        %3194 = vmatprep.subr.bf16.mxu0 0
        %3195 = vmatpush1.bf16.xpose.msra.mxu0 0
        %3196 = vmatprep.subr.bf16.mxu0 0
        %3197 = vmatpush1.bf16.xpose.msra.mxu0 0
        %3198 = vmatprep.subr.bf16.mxu0 0
        %3199 = vmatpush1.bf16.xpose.msra.mxu0 0
        %3200 = vmatprep.subr.bf16.mxu0 0
        %3201 = vmatpush1.bf16.xpose.msra.mxu0 0
        %3202 = vmatprep.subr.bf16.mxu0 0
        %3203 = vmatpush1.bf16.xpose.msra.mxu0 0
        %3204 = vmatprep.subr.bf16.mxu0 0
        %3205 = vmatpush1.bf16.xpose.msra.mxu0 0
        %3206 = vmatprep.subr.bf16.mxu0 0
        %3207 = vmatpush1.bf16.xpose.msra.mxu0 0
        %3208 = vmatprep.subr.bf16.mxu0 0
        %3209 = vmatpush1.bf16.xpose.msra.mxu0 0
        %3210 = vmatprep.subr.bf16.mxu0 0
        %3211 = vmatpush1.bf16.xpose.msra.mxu0 0
        %3212 = vmatprep.subr.bf16.mxu0 0
        %3213 = vmatpush1.bf16.xpose.msra.mxu0 0
        %3214 = vmatprep.subr.bf16.mxu0 0
        %3215 = vmatpush1.bf16.xpose.msra.mxu0 0
        %3216 = vmatprep.mubr.bf16.mxu0 0
        %3217 = vmatmul.mubr.bf16.gmra.mrb[0].mxu0 %v3173
        %v3218 = vpop.f32.mrb[0].mxu0
        %v3219 = vadd.f32 0.0, %v3218
        %v3220 = vpop.f32.mrb[0].mxu0
        %v3221 = vpop.f32.mrb[0].mxu0
        %v3222 = vadd.f32 0.0, %v3221
        %v3223 = vpop.f32.mrb[0].mxu0
        %3224 = vmatprep.mubr.bf16.mxu0 0
        %3225 = vmatmul.mubr.bf16.gmra.mrb[0].mxu0 %v3176
        %v3226 = vpop.f32.mrb[0].mxu0
        %v3227 = vadd.f32 0.0, %v3226
        %v3228 = vpop.f32.mrb[0].mxu0
        %v3229 = vpop.f32.mrb[0].mxu0
        %v3230 = vpop.f32.mrb[0].mxu0
        %3231 = vdwg.mxu0
        %3232 = vrot.lane.b32.xlu0 %v1428, 112
        %v3233 = vpop.permute.xlu0 %3232
        %3234 = vrot.lane.b32.xlu0 %v1429, 112
        %v3235 = vpop.permute.xlu0 %3234
        %3236 = vrot.lane.b32.xlu0 %v1428, 80
        %v3237 = vpop.permute.xlu0 %3236
        %3238 = vrot.lane.b32.xlu0 %v1429, 80
        %v3239 = vpop.permute.xlu0 %3238
        %v3241 = vsel %vm1436, %v3233, 0
        %v3244 = vsel %vm1436, %v3235, 0
        %v3247 = vsel %vm1436, %v3237, 0
        %v3250 = vsel %vm1436, %v3239, 0
        %3252 = vmatprep.subr.bf16.mxu0 0
        %3253 = vmatpush1.bf16.xpose.msra.mxu0 %v3247
        %3254 = vmatprep.subr.bf16.mxu0 0
        %3255 = vmatpush1.bf16.xpose.msra.mxu0 %v3250
        %3256 = vmatprep.subr.bf16.mxu0 0
        %3257 = vmatpush1.bf16.xpose.msra.mxu0 0
        %3258 = vmatprep.subr.bf16.mxu0 0
        %3259 = vmatpush1.bf16.xpose.msra.mxu0 0
        %3260 = vmatprep.subr.bf16.mxu0 0
        %3261 = vmatpush1.bf16.xpose.msra.mxu0 0
        %3262 = vmatprep.subr.bf16.mxu0 0
        %3263 = vmatpush1.bf16.xpose.msra.mxu0 0
        %3264 = vmatprep.subr.bf16.mxu0 0
        %3265 = vmatpush1.bf16.xpose.msra.mxu0 0
        %3266 = vmatprep.subr.bf16.mxu0 0
        %3267 = vmatpush1.bf16.xpose.msra.mxu0 0
        %3268 = vmatprep.subr.bf16.mxu0 0
        %3269 = vmatpush1.bf16.xpose.msra.mxu0 0
        %3270 = vmatprep.subr.bf16.mxu0 0
        %3271 = vmatpush1.bf16.xpose.msra.mxu0 0
        %3272 = vmatprep.subr.bf16.mxu0 0
        %3273 = vmatpush1.bf16.xpose.msra.mxu0 0
        %3274 = vmatprep.subr.bf16.mxu0 0
        %3275 = vmatpush1.bf16.xpose.msra.mxu0 0
        %3276 = vmatprep.subr.bf16.mxu0 0
        %3277 = vmatpush1.bf16.xpose.msra.mxu0 0
        %3278 = vmatprep.subr.bf16.mxu0 0
        %3279 = vmatpush1.bf16.xpose.msra.mxu0 0
        %3280 = vmatprep.subr.bf16.mxu0 0
        %3281 = vmatpush1.bf16.xpose.msra.mxu0 0
        %3282 = vmatprep.subr.bf16.mxu0 0
        %3283 = vmatpush1.bf16.xpose.msra.mxu0 0
        %3284 = vmatprep.mubr.bf16.mxu0 0
        %3285 = vmatmul.mubr.bf16.gmra.mrb[0].mxu0 %v3241
        %v3286 = vpop.f32.mrb[0].mxu0
        %v3287 = vadd.f32 0.0, %v3286
        %v3288 = vpop.f32.mrb[0].mxu0
        %v3289 = vpop.f32.mrb[0].mxu0
        %v3290 = vadd.f32 0.0, %v3289
        %v3291 = vpop.f32.mrb[0].mxu0
        %3292 = vmatprep.mubr.bf16.mxu0 0
        %3293 = vmatmul.mubr.bf16.gmra.mrb[0].mxu0 %v3244
        %v3294 = vpop.f32.mrb[0].mxu0
        %v3295 = vadd.f32 0.0, %v3294
        %v3296 = vpop.f32.mrb[0].mxu0
        %v3297 = vpop.f32.mrb[0].mxu0
        %v3298 = vpop.f32.mrb[0].mxu0
        %3299 = vdwg.mxu0
        %v3300 = vmul.f32 %v3219, 0.35355338
        %v3301 = vmul.f32 %v3222, 0.35355338
        %v3302 = vmul.f32 %v3227, 0.35355338
        %v3303 = vmul.f32 %v3287, 0.35355338
        %v3304 = vmul.f32 %v3290, 0.35355338
        %v3305 = vmul.f32 %v3295, 0.35355338
        %v3306 = vsel %vm1569, %v3300, -inf
        %3307 = vmax.xlane.f32.xlu0 %v3306
        %v3308 = vpop.xlane.xlu0 %3307
        %v3309 = vsel %vm1569, %v3301, -inf
        %3310 = vmax.xlane.f32.xlu0 %v3309
        %v3311 = vpop.xlane.xlu0 %3310
        %v3312 = vsel %vm1576, %v3302, -inf
        %3313 = vmax.xlane.f32.xlu0 %v3312
        %v3314 = vpop.xlane.xlu0 %3313
        %v3315 = vsel %vm1569, %v3303, -inf
        %3316 = vmax.xlane.f32.xlu0 %v3315
        %v3317 = vpop.xlane.xlu0 %3316
        %v3318 = vsel %vm1569, %v3304, -inf
        %3319 = vmax.xlane.f32.xlu0 %v3318
        %v3320 = vpop.xlane.xlu0 %3319
        %v3321 = vsel %vm1576, %v3305, -inf
        %3322 = vmax.xlane.f32.xlu0 %v3321
        %v3323 = vpop.xlane.xlu0 %3322
        %v3324 = vsub.f32 %v3300, %v3308
        %v3325 = vsub.f32 %v3301, %v3311
        %v3326 = vsub.f32 %v3302, %v3314
        %v3327 = vsub.f32 %v3303, %v3317
        %v3328 = vsub.f32 %v3304, %v3320
        %v3329 = vsub.f32 %v3305, %v3323
        %v3330 = vmul.f32 %v3324, 1.442695
        %v3331 = vpow.pop %v3330
        %v3332 = vmul.f32 %v3325, 1.442695
        %v3333 = vpow.pop %v3332
        %v3334 = vmul.f32 %v3326, 1.442695
        %v3335 = vpow.pop %v3334
        %v3336 = vmul.f32 %v3327, 1.442695
        %v3337 = vpow.pop %v3336
        %v3338 = vmul.f32 %v3328, 1.442695
        %v3339 = vpow.pop %v3338
        %v3340 = vmul.f32 %v3329, 1.442695
        %v3341 = vpow.pop %v3340
        %v3342 = vsel %vm1569, %v3331, 0.0
        %3343 = vadd.xlane.f32.xlu0 %v3342
        %v3344 = vpop.xlane.xlu0 %3343
        %v3345 = vsel %vm1569, %v3333, 0.0
        %3346 = vadd.xlane.f32.xlu0 %v3345
        %v3347 = vpop.xlane.xlu0 %3346
        %v3348 = vsel %vm1576, %v3335, 0.0
        %3349 = vadd.xlane.f32.xlu0 %v3348
        %v3350 = vpop.xlane.xlu0 %3349
        %v3351 = vsel %vm1569, %v3337, 0.0
        %3352 = vadd.xlane.f32.xlu0 %v3351
        %v3353 = vpop.xlane.xlu0 %3352
        %v3354 = vsel %vm1569, %v3339, 0.0
        %3355 = vadd.xlane.f32.xlu0 %v3354
        %v3356 = vpop.xlane.xlu0 %3355
        %v3357 = vsel %vm1576, %v3341, 0.0
        %3358 = vadd.xlane.f32.xlu0 %v3357
        %v3359 = vpop.xlane.xlu0 %3358
        %v3360 = vrcp.pop %v3344
        %v3361 = vrcp.pop %v3347
        %v3362 = vrcp.pop %v3350
        %v3363 = vrcp.pop %v3353
        %v3364 = vrcp.pop %v3356
        %v3365 = vrcp.pop %v3359
        %v3366 = vmul.f32 %v3331, %v3360
        %v3367 = vmul.f32 %v3333, %v3361
        %v3368 = vmul.f32 %v3335, %v3362
        %v3369 = vmul.f32 %v3337, %v3363
        %v3370 = vmul.f32 %v3339, %v3364
        %v3371 = vmul.f32 %v3341, %v3365
        %v3372 = vsel %vm1569, %v3366, 0.0
        %v3373 = vsel %vm1569, %v3367, 0.0
        %v3374 = vsel %vm1569, %v3368, 0.0
        %v3375 = vsel %vm1569, %v3369, 0.0
        %v3376 = vsel %vm1569, %v3370, 0.0
        %v3377 = vsel %vm1569, %v3371, 0.0
        %s3378 = scalar_lea.vmem %s746, 96
        %3379 = vst [vmem:[%s3378] sm:$0xff] %v3372
        %3380 = vst [vmem:[%s3378 + $0x8] sm:$0xff] %v3373
        %3381 = vst [vmem:[%s3378 + $0x10] sm:$0x1] %v3374
        %3382 = vst [vmem:[%s3378 + $0x18] sm:$0xff] %v3375
        %3383 = vst [vmem:[%s3378 + $0x20] sm:$0xff] %v3376
        %3384 = vst [vmem:[%s3378 + $0x28] sm:$0x1] %v3377
        %v3385 = vpack.c.bf16 %v3367, %v3366
        %v3386 = vpack.c.bf16 %v3368, %v3368
        %v3387 = vpack.c.bf16 %v3370, %v3369
        %v3388 = vpack.c.bf16 %v3371, %v3371
        %3389 = vrot.lane.b32.xlu0 %v1426, 48
        %v3390 = vpop.permute.xlu0 %3389
        %3391 = vrot.lane.b32.xlu0 %v1427, 48
        %v3392 = vpop.permute.xlu0 %3391
        %v3395 = vsel %vm1569, %v3385, 0
        %v3398 = vsel %vm1569, %v3386, 0
        %v3401 = vand.u32 %v3392, %v1666
        %3403 = vmatprep.subr.bf16.mxu0 0
        %3404 = vmatpush1.bf16.msra.mxu0 %v3390
        %3405 = vmatprep.subr.bf16.mxu0 0
        %3406 = vmatpush1.bf16.msra.mxu0 %v3401
        %3407 = vmatprep.subr.bf16.mxu0 0
        %3408 = vmatpush1.bf16.msra.mxu0 0
        %3409 = vmatprep.subr.bf16.mxu0 0
        %3410 = vmatpush1.bf16.msra.mxu0 0
        %3411 = vmatprep.subr.bf16.mxu0 0
        %3412 = vmatpush1.bf16.msra.mxu0 0
        %3413 = vmatprep.subr.bf16.mxu0 0
        %3414 = vmatpush1.bf16.msra.mxu0 0
        %3415 = vmatprep.subr.bf16.mxu0 0
        %3416 = vmatpush1.bf16.msra.mxu0 0
        %3417 = vmatprep.subr.bf16.mxu0 0
        %3418 = vmatpush1.bf16.msra.mxu0 0
        %3419 = vmatprep.subr.bf16.mxu0 0
        %3420 = vmatpush1.bf16.msra.mxu0 0
        %3421 = vmatprep.subr.bf16.mxu0 0
        %3422 = vmatpush1.bf16.msra.mxu0 0
        %3423 = vmatprep.subr.bf16.mxu0 0
        %3424 = vmatpush1.bf16.msra.mxu0 0
        %3425 = vmatprep.subr.bf16.mxu0 0
        %3426 = vmatpush1.bf16.msra.mxu0 0
        %3427 = vmatprep.subr.bf16.mxu0 0
        %3428 = vmatpush1.bf16.msra.mxu0 0
        %3429 = vmatprep.subr.bf16.mxu0 0
        %3430 = vmatpush1.bf16.msra.mxu0 0
        %3431 = vmatprep.subr.bf16.mxu0 0
        %3432 = vmatpush1.bf16.msra.mxu0 0
        %3433 = vmatprep.subr.bf16.mxu0 0
        %3434 = vmatpush1.bf16.msra.mxu0 0
        %3435 = vmatprep.mubr.bf16.mxu0 0
        %3436 = vmatmul.mubr.bf16.gmra.mrb[0].mxu0 %v3395
        %v3437 = vpop.f32.mrb[0].mxu0
        %v3438 = vadd.f32 0.0, %v3437
        %v3439 = vpop.f32.mrb[0].mxu0
        %v3440 = vpop.f32.mrb[0].mxu0
        %v3441 = vadd.f32 0.0, %v3440
        %v3442 = vpop.f32.mrb[0].mxu0
        %3443 = vmatprep.mubr.bf16.mxu0 0
        %3444 = vmatmul.mubr.bf16.gmra.mrb[0].mxu0 %v3398
        %v3445 = vpop.f32.mrb[0].mxu0
        %v3446 = vadd.f32 0.0, %v3445
        %v3447 = vpop.f32.mrb[0].mxu0
        %v3448 = vpop.f32.mrb[0].mxu0
        %v3449 = vpop.f32.mrb[0].mxu0
        %3450 = vdwg.mxu0
        %3451 = vrot.lane.b32.xlu0 %v1428, 48
        %v3452 = vpop.permute.xlu0 %3451
        %3453 = vrot.lane.b32.xlu0 %v1429, 48
        %v3454 = vpop.permute.xlu0 %3453
        %v3457 = vsel %vm1569, %v3387, 0
        %v3460 = vsel %vm1569, %v3388, 0
        %v3463 = vand.u32 %v3454, %v1666
        %3465 = vmatprep.subr.bf16.mxu0 0
        %3466 = vmatpush1.bf16.msra.mxu0 %v3452
        %3467 = vmatprep.subr.bf16.mxu0 0
        %3468 = vmatpush1.bf16.msra.mxu0 %v3463
        %3469 = vmatprep.subr.bf16.mxu0 0
        %3470 = vmatpush1.bf16.msra.mxu0 0
        %3471 = vmatprep.subr.bf16.mxu0 0
        %3472 = vmatpush1.bf16.msra.mxu0 0
        %3473 = vmatprep.subr.bf16.mxu0 0
        %3474 = vmatpush1.bf16.msra.mxu0 0
        %3475 = vmatprep.subr.bf16.mxu0 0
        %3476 = vmatpush1.bf16.msra.mxu0 0
        %3477 = vmatprep.subr.bf16.mxu0 0
        %3478 = vmatpush1.bf16.msra.mxu0 0
        %3479 = vmatprep.subr.bf16.mxu0 0
        %3480 = vmatpush1.bf16.msra.mxu0 0
        %3481 = vmatprep.subr.bf16.mxu0 0
        %3482 = vmatpush1.bf16.msra.mxu0 0
        %3483 = vmatprep.subr.bf16.mxu0 0
        %3484 = vmatpush1.bf16.msra.mxu0 0
        %3485 = vmatprep.subr.bf16.mxu0 0
        %3486 = vmatpush1.bf16.msra.mxu0 0
        %3487 = vmatprep.subr.bf16.mxu0 0
        %3488 = vmatpush1.bf16.msra.mxu0 0
        %3489 = vmatprep.subr.bf16.mxu0 0
        %3490 = vmatpush1.bf16.msra.mxu0 0
        %3491 = vmatprep.subr.bf16.mxu0 0
        %3492 = vmatpush1.bf16.msra.mxu0 0
        %3493 = vmatprep.subr.bf16.mxu0 0
        %3494 = vmatpush1.bf16.msra.mxu0 0
        %3495 = vmatprep.subr.bf16.mxu0 0
        %3496 = vmatpush1.bf16.msra.mxu0 0
        %3497 = vmatprep.mubr.bf16.mxu0 0
        %3498 = vmatmul.mubr.bf16.gmra.mrb[0].mxu0 %v3457
        %v3499 = vpop.f32.mrb[0].mxu0
        %v3500 = vadd.f32 0.0, %v3499
        %v3501 = vpop.f32.mrb[0].mxu0
        %v3502 = vpop.f32.mrb[0].mxu0
        %v3503 = vadd.f32 0.0, %v3502
        %v3504 = vpop.f32.mrb[0].mxu0
        %3505 = vmatprep.mubr.bf16.mxu0 0
        %3506 = vmatmul.mubr.bf16.gmra.mrb[0].mxu0 %v3460
        %v3507 = vpop.f32.mrb[0].mxu0
        %v3508 = vadd.f32 0.0, %v3507
        %v3509 = vpop.f32.mrb[0].mxu0
        %v3510 = vpop.f32.mrb[0].mxu0
        %v3511 = vpop.f32.mrb[0].mxu0
        %3512 = vdwg.mxu0
        %v3519 = vcombine.high %v3438, %v3438
        %v3521 = vunpack.c.l.s4 1966171168
        %v3522 = vunpack.c.0.s8 %v3521
        %v3523 = vlaneseq
        %v3524 = vshrl.u32 %v3523, 7
        %v3525 = vsub.s32 %v3522, %v3524
        %v3526 = vrot.slane %v3438, %v3525
        %v3528 = vunpack.c.l.s4 1966171168
        %v3529 = vunpack.c.0.s8 %v3528
        %v3530 = vlaneseq
        %v3531 = vshrl.u32 %v3530, 7
        %v3532 = vsub.s32 %v3529, %v3531
        %v3533 = vrot.slane %v3519, %v3532
        %v3534 = vcombine.high %v3526, %v3526
        %v3535 = vcombine.high %v3533, %v3533
        %v3537 = vunpack.c.l.s4 1966171168
        %v3538 = vunpack.c.0.s8 %v3537
        %v3539 = vlaneseq
        %v3540 = vshrl.u32 %v3539, 7
        %v3541 = vsub.s32 %v3538, %v3540
        %v3542 = vrot.slane %v3526, %v3541
        %v3544 = vunpack.c.l.s4 1966171168
        %v3545 = vunpack.c.0.s8 %v3544
        %v3546 = vlaneseq
        %v3547 = vshrl.u32 %v3546, 7
        %v3548 = vsub.s32 %v3545, %v3547
        %v3549 = vrot.slane %v3533, %v3548
        %v3551 = vunpack.c.l.s4 1966171168
        %v3552 = vunpack.c.0.s8 %v3551
        %v3553 = vlaneseq
        %v3554 = vshrl.u32 %v3553, 7
        %v3555 = vsub.s32 %v3552, %v3554
        %v3556 = vrot.slane %v3534, %v3555
        %v3558 = vunpack.c.l.s4 1966171168
        %v3559 = vunpack.c.0.s8 %v3558
        %v3560 = vlaneseq
        %v3561 = vshrl.u32 %v3560, 7
        %v3562 = vsub.s32 %v3559, %v3561
        %v3563 = vrot.slane %v3535, %v3562
        %v3564 = vcombine.high %v3542, %v3542
        %v3565 = vcombine.high %v3549, %v3549
        %v3566 = vcombine.high %v3556, %v3556
        %v3567 = vcombine.high %v3563, %v3563
        %v3568 = vcombine.high %v3441, %v3441
        %v3570 = vunpack.c.l.s4 1966171168
        %v3571 = vunpack.c.0.s8 %v3570
        %v3572 = vlaneseq
        %v3573 = vshrl.u32 %v3572, 7
        %v3574 = vsub.s32 %v3571, %v3573
        %v3575 = vrot.slane %v3441, %v3574
        %v3577 = vunpack.c.l.s4 1966171168
        %v3578 = vunpack.c.0.s8 %v3577
        %v3579 = vlaneseq
        %v3580 = vshrl.u32 %v3579, 7
        %v3581 = vsub.s32 %v3578, %v3580
        %v3582 = vrot.slane %v3568, %v3581
        %v3583 = vcombine.high %v3575, %v3575
        %v3584 = vcombine.high %v3582, %v3582
        %v3586 = vunpack.c.l.s4 1966171168
        %v3587 = vunpack.c.0.s8 %v3586
        %v3588 = vlaneseq
        %v3589 = vshrl.u32 %v3588, 7
        %v3590 = vsub.s32 %v3587, %v3589
        %v3591 = vrot.slane %v3575, %v3590
        %v3593 = vunpack.c.l.s4 1966171168
        %v3594 = vunpack.c.0.s8 %v3593
        %v3595 = vlaneseq
        %v3596 = vshrl.u32 %v3595, 7
        %v3597 = vsub.s32 %v3594, %v3596
        %v3598 = vrot.slane %v3582, %v3597
        %v3600 = vunpack.c.l.s4 1966171168
        %v3601 = vunpack.c.0.s8 %v3600
        %v3602 = vlaneseq
        %v3603 = vshrl.u32 %v3602, 7
        %v3604 = vsub.s32 %v3601, %v3603
        %v3605 = vrot.slane %v3583, %v3604
        %v3607 = vunpack.c.l.s4 1966171168
        %v3608 = vunpack.c.0.s8 %v3607
        %v3609 = vlaneseq
        %v3610 = vshrl.u32 %v3609, 7
        %v3611 = vsub.s32 %v3608, %v3610
        %v3612 = vrot.slane %v3584, %v3611
        %v3613 = vcombine.high %v3591, %v3591
        %v3614 = vcombine.high %v3598, %v3598
        %v3615 = vcombine.high %v3605, %v3605
        %v3616 = vcombine.high %v3612, %v3612
        %v3618 = vunpack.c.l.s4 1966171168
        %v3619 = vunpack.c.0.s8 %v3618
        %v3620 = vlaneseq
        %v3621 = vshrl.u32 %v3620, 7
        %v3622 = vsub.s32 %v3619, %v3621
        %v3623 = vrot.slane %v3446, %v3622
        %v3625 = vunpack.c.l.s4 1966171168
        %v3626 = vunpack.c.0.s8 %v3625
        %v3627 = vlaneseq
        %v3628 = vshrl.u32 %v3627, 7
        %v3629 = vsub.s32 %v3626, %v3628
        %v3630 = vrot.slane %v3623, %v3629
        %v3631 = vcombine.high %v3500, %v3500
        %v3633 = vunpack.c.l.s4 1966171168
        %v3634 = vunpack.c.0.s8 %v3633
        %v3635 = vlaneseq
        %v3636 = vshrl.u32 %v3635, 7
        %v3637 = vsub.s32 %v3634, %v3636
        %v3638 = vrot.slane %v3500, %v3637
        %v3640 = vunpack.c.l.s4 1966171168
        %v3641 = vunpack.c.0.s8 %v3640
        %v3642 = vlaneseq
        %v3643 = vshrl.u32 %v3642, 7
        %v3644 = vsub.s32 %v3641, %v3643
        %v3645 = vrot.slane %v3631, %v3644
        %v3646 = vcombine.high %v3638, %v3638
        %v3647 = vcombine.high %v3645, %v3645
        %v3649 = vunpack.c.l.s4 1966171168
        %v3650 = vunpack.c.0.s8 %v3649
        %v3651 = vlaneseq
        %v3652 = vshrl.u32 %v3651, 7
        %v3653 = vsub.s32 %v3650, %v3652
        %v3654 = vrot.slane %v3638, %v3653
        %v3656 = vunpack.c.l.s4 1966171168
        %v3657 = vunpack.c.0.s8 %v3656
        %v3658 = vlaneseq
        %v3659 = vshrl.u32 %v3658, 7
        %v3660 = vsub.s32 %v3657, %v3659
        %v3661 = vrot.slane %v3645, %v3660
        %v3663 = vunpack.c.l.s4 1966171168
        %v3664 = vunpack.c.0.s8 %v3663
        %v3665 = vlaneseq
        %v3666 = vshrl.u32 %v3665, 7
        %v3667 = vsub.s32 %v3664, %v3666
        %v3668 = vrot.slane %v3646, %v3667
        %v3670 = vunpack.c.l.s4 1966171168
        %v3671 = vunpack.c.0.s8 %v3670
        %v3672 = vlaneseq
        %v3673 = vshrl.u32 %v3672, 7
        %v3674 = vsub.s32 %v3671, %v3673
        %v3675 = vrot.slane %v3647, %v3674
        %v3676 = vcombine.high %v3654, %v3654
        %v3677 = vcombine.high %v3661, %v3661
        %v3678 = vcombine.high %v3668, %v3668
        %v3679 = vcombine.high %v3675, %v3675
        %v3680 = vcombine.high %v3503, %v3503
        %v3682 = vunpack.c.l.s4 1966171168
        %v3683 = vunpack.c.0.s8 %v3682
        %v3684 = vlaneseq
        %v3685 = vshrl.u32 %v3684, 7
        %v3686 = vsub.s32 %v3683, %v3685
        %v3687 = vrot.slane %v3503, %v3686
        %v3689 = vunpack.c.l.s4 1966171168
        %v3690 = vunpack.c.0.s8 %v3689
        %v3691 = vlaneseq
        %v3692 = vshrl.u32 %v3691, 7
        %v3693 = vsub.s32 %v3690, %v3692
        %v3694 = vrot.slane %v3680, %v3693
        %v3695 = vcombine.high %v3687, %v3687
        %v3696 = vcombine.high %v3694, %v3694
        %v3698 = vunpack.c.l.s4 1966171168
        %v3699 = vunpack.c.0.s8 %v3698
        %v3700 = vlaneseq
        %v3701 = vshrl.u32 %v3700, 7
        %v3702 = vsub.s32 %v3699, %v3701
        %v3703 = vrot.slane %v3687, %v3702
        %v3705 = vunpack.c.l.s4 1966171168
        %v3706 = vunpack.c.0.s8 %v3705
        %v3707 = vlaneseq
        %v3708 = vshrl.u32 %v3707, 7
        %v3709 = vsub.s32 %v3706, %v3708
        %v3710 = vrot.slane %v3694, %v3709
        %v3712 = vunpack.c.l.s4 1966171168
        %v3713 = vunpack.c.0.s8 %v3712
        %v3714 = vlaneseq
        %v3715 = vshrl.u32 %v3714, 7
        %v3716 = vsub.s32 %v3713, %v3715
        %v3717 = vrot.slane %v3695, %v3716
        %v3719 = vunpack.c.l.s4 1966171168
        %v3720 = vunpack.c.0.s8 %v3719
        %v3721 = vlaneseq
        %v3722 = vshrl.u32 %v3721, 7
        %v3723 = vsub.s32 %v3720, %v3722
        %v3724 = vrot.slane %v3696, %v3723
        %v3725 = vcombine.high %v3703, %v3703
        %v3726 = vcombine.high %v3710, %v3710
        %v3727 = vcombine.high %v3717, %v3717
        %v3728 = vcombine.high %v3724, %v3724
        %v3730 = vunpack.c.l.s4 1966171168
        %v3731 = vunpack.c.0.s8 %v3730
        %v3732 = vlaneseq
        %v3733 = vshrl.u32 %v3732, 7
        %v3734 = vsub.s32 %v3731, %v3733
        %v3735 = vrot.slane %v3508, %v3734
        %v3737 = vunpack.c.l.s4 1966171168
        %v3738 = vunpack.c.0.s8 %v3737
        %v3739 = vlaneseq
        %v3740 = vshrl.u32 %v3739, 7
        %v3741 = vsub.s32 %v3738, %v3740
        %v3742 = vrot.slane %v3735, %v3741
        %v3743 = vcombine.low %v3542, %v3556
        %v3744 = vcombine.low %v3564, %v3566
        %v3745 = vcombine.low %v3549, %v3563
        %v3746 = vcombine.low %v3565, %v3567
        %v3748 = vunpack.c.l.s4 1966171168
        %v3749 = vunpack.c.0.s8 %v3748
        %v3750 = vlaneseq
        %v3751 = vshrl.u32 %v3750, 7
        %v3752 = vsub.s32 %v3749, %v3751
        %v3753 = vrot.slane %v3743, %v3752
        %v3755 = vunpack.c.l.s4 1966171168
        %v3756 = vunpack.c.0.s8 %v3755
        %v3757 = vlaneseq
        %v3758 = vshrl.u32 %v3757, 7
        %v3759 = vsub.s32 %v3756, %v3758
        %v3760 = vrot.slane %v3744, %v3759
        %v3762 = vunpack.c.l.s4 1966171168
        %v3763 = vunpack.c.0.s8 %v3762
        %v3764 = vlaneseq
        %v3765 = vshrl.u32 %v3764, 7
        %v3766 = vsub.s32 %v3763, %v3765
        %v3767 = vrot.slane %v3745, %v3766
        %v3769 = vunpack.c.l.s4 1966171168
        %v3770 = vunpack.c.0.s8 %v3769
        %v3771 = vlaneseq
        %v3772 = vshrl.u32 %v3771, 7
        %v3773 = vsub.s32 %v3770, %v3772
        %v3774 = vrot.slane %v3746, %v3773
        %v3775 = vcombine.low %v3753, %v3760
        %v3776 = vcombine.low %v3767, %v3774
        %v3778 = vunpack.c.l.s4 1966171168
        %v3779 = vunpack.c.0.s8 %v3778
        %v3780 = vlaneseq
        %v3781 = vshrl.u32 %v3780, 7
        %v3782 = vsub.s32 %v3779, %v3781
        %v3783 = vrot.slane %v3775, %v3782
        %v3785 = vunpack.c.l.s4 1966171168
        %v3786 = vunpack.c.0.s8 %v3785
        %v3787 = vlaneseq
        %v3788 = vshrl.u32 %v3787, 7
        %v3789 = vsub.s32 %v3786, %v3788
        %v3790 = vrot.slane %v3776, %v3789
        %v3791 = vcombine.low %v3783, %v3790
        %v3792 = vcombine.low %v3591, %v3605
        %v3793 = vcombine.low %v3613, %v3615
        %v3794 = vcombine.low %v3598, %v3612
        %v3795 = vcombine.low %v3614, %v3616
        %v3797 = vunpack.c.l.s4 1966171168
        %v3798 = vunpack.c.0.s8 %v3797
        %v3799 = vlaneseq
        %v3800 = vshrl.u32 %v3799, 7
        %v3801 = vsub.s32 %v3798, %v3800
        %v3802 = vrot.slane %v3792, %v3801
        %v3804 = vunpack.c.l.s4 1966171168
        %v3805 = vunpack.c.0.s8 %v3804
        %v3806 = vlaneseq
        %v3807 = vshrl.u32 %v3806, 7
        %v3808 = vsub.s32 %v3805, %v3807
        %v3809 = vrot.slane %v3793, %v3808
        %v3811 = vunpack.c.l.s4 1966171168
        %v3812 = vunpack.c.0.s8 %v3811
        %v3813 = vlaneseq
        %v3814 = vshrl.u32 %v3813, 7
        %v3815 = vsub.s32 %v3812, %v3814
        %v3816 = vrot.slane %v3794, %v3815
        %v3818 = vunpack.c.l.s4 1966171168
        %v3819 = vunpack.c.0.s8 %v3818
        %v3820 = vlaneseq
        %v3821 = vshrl.u32 %v3820, 7
        %v3822 = vsub.s32 %v3819, %v3821
        %v3823 = vrot.slane %v3795, %v3822
        %v3824 = vcombine.low %v3802, %v3809
        %v3825 = vcombine.low %v3816, %v3823
        %v3827 = vunpack.c.l.s4 1966171168
        %v3828 = vunpack.c.0.s8 %v3827
        %v3829 = vlaneseq
        %v3830 = vshrl.u32 %v3829, 7
        %v3831 = vsub.s32 %v3828, %v3830
        %v3832 = vrot.slane %v3824, %v3831
        %v3834 = vunpack.c.l.s4 1966171168
        %v3835 = vunpack.c.0.s8 %v3834
        %v3836 = vlaneseq
        %v3837 = vshrl.u32 %v3836, 7
        %v3838 = vsub.s32 %v3835, %v3837
        %v3839 = vrot.slane %v3825, %v3838
        %v3840 = vcombine.low %v3832, %v3839
        %v3841 = vcombine.low %v3630, %v3654
        %v3842 = vcombine.low %v3668, %v3676
        %v3843 = vcombine.low %v3678, %v3661
        %v3844 = vcombine.low %v3675, %v3677
        %v3846 = vunpack.c.l.s4 1966171168
        %v3847 = vunpack.c.0.s8 %v3846
        %v3848 = vlaneseq
        %v3849 = vshrl.u32 %v3848, 7
        %v3850 = vsub.s32 %v3847, %v3849
        %v3851 = vrot.slane %v3841, %v3850
        %v3853 = vunpack.c.l.s4 1966171168
        %v3854 = vunpack.c.0.s8 %v3853
        %v3855 = vlaneseq
        %v3856 = vshrl.u32 %v3855, 7
        %v3857 = vsub.s32 %v3854, %v3856
        %v3858 = vrot.slane %v3842, %v3857
        %v3860 = vunpack.c.l.s4 1966171168
        %v3861 = vunpack.c.0.s8 %v3860
        %v3862 = vlaneseq
        %v3863 = vshrl.u32 %v3862, 7
        %v3864 = vsub.s32 %v3861, %v3863
        %v3865 = vrot.slane %v3843, %v3864
        %v3867 = vunpack.c.l.s4 1966171168
        %v3868 = vunpack.c.0.s8 %v3867
        %v3869 = vlaneseq
        %v3870 = vshrl.u32 %v3869, 7
        %v3871 = vsub.s32 %v3868, %v3870
        %v3872 = vrot.slane %v3844, %v3871
        %v3873 = vcombine.low %v3851, %v3858
        %v3874 = vcombine.low %v3865, %v3872
        %v3876 = vunpack.c.l.s4 1966171168
        %v3877 = vunpack.c.0.s8 %v3876
        %v3878 = vlaneseq
        %v3879 = vshrl.u32 %v3878, 7
        %v3880 = vsub.s32 %v3877, %v3879
        %v3881 = vrot.slane %v3873, %v3880
        %v3883 = vunpack.c.l.s4 1966171168
        %v3884 = vunpack.c.0.s8 %v3883
        %v3885 = vlaneseq
        %v3886 = vshrl.u32 %v3885, 7
        %v3887 = vsub.s32 %v3884, %v3886
        %v3888 = vrot.slane %v3874, %v3887
        %v3889 = vcombine.low %v3881, %v3888
        %v3890 = vcombine.low %v3679, %v3703
        %v3891 = vcombine.low %v3717, %v3725
        %v3892 = vcombine.low %v3727, %v3710
        %v3893 = vcombine.low %v3724, %v3726
        %v3895 = vunpack.c.l.s4 1966171168
        %v3896 = vunpack.c.0.s8 %v3895
        %v3897 = vlaneseq
        %v3898 = vshrl.u32 %v3897, 7
        %v3899 = vsub.s32 %v3896, %v3898
        %v3900 = vrot.slane %v3890, %v3899
        %v3902 = vunpack.c.l.s4 1966171168
        %v3903 = vunpack.c.0.s8 %v3902
        %v3904 = vlaneseq
        %v3905 = vshrl.u32 %v3904, 7
        %v3906 = vsub.s32 %v3903, %v3905
        %v3907 = vrot.slane %v3891, %v3906
        %v3909 = vunpack.c.l.s4 1966171168
        %v3910 = vunpack.c.0.s8 %v3909
        %v3911 = vlaneseq
        %v3912 = vshrl.u32 %v3911, 7
        %v3913 = vsub.s32 %v3910, %v3912
        %v3914 = vrot.slane %v3892, %v3913
        %v3916 = vunpack.c.l.s4 1966171168
        %v3917 = vunpack.c.0.s8 %v3916
        %v3918 = vlaneseq
        %v3919 = vshrl.u32 %v3918, 7
        %v3920 = vsub.s32 %v3917, %v3919
        %v3921 = vrot.slane %v3893, %v3920
        %v3922 = vcombine.low %v3900, %v3907
        %v3923 = vcombine.low %v3914, %v3921
        %v3925 = vunpack.c.l.s4 1966171168
        %v3926 = vunpack.c.0.s8 %v3925
        %v3927 = vlaneseq
        %v3928 = vshrl.u32 %v3927, 7
        %v3929 = vsub.s32 %v3926, %v3928
        %v3930 = vrot.slane %v3922, %v3929
        %v3932 = vunpack.c.l.s4 1966171168
        %v3933 = vunpack.c.0.s8 %v3932
        %v3934 = vlaneseq
        %v3935 = vshrl.u32 %v3934, 7
        %v3936 = vsub.s32 %v3933, %v3935
        %v3937 = vrot.slane %v3923, %v3936
        %v3938 = vcombine.low %v3930, %v3937
        %v3939 = vcombine.low %v3728, %v3742
        %v3941 = vunpack.c.l.s4 1966171168
        %v3942 = vunpack.c.0.s8 %v3941
        %v3943 = vlaneseq
        %v3944 = vshrl.u32 %v3943, 7
        %v3945 = vsub.s32 %v3942, %v3944
        %v3946 = vrot.slane %v3939, %v3945
        %v3948 = vunpack.c.l.s4 1966171168
        %v3949 = vunpack.c.0.s8 %v3948
        %v3950 = vlaneseq
        %v3951 = vshrl.u32 %v3950, 7
        %v3952 = vsub.s32 %v3949, %v3951
        %v3953 = vrot.slane %v3946, %v3952
        %v3959 = vpack.c.bf16 %v3840, %v3791
        %v3960 = vpack.c.bf16 %v3938, %v3889
        %v3961 = vpack.c.bf16 %v3953, %v3953
        %v3963 = vsel %vm1436, %v3959, 0
        %v3966 = vsel %vm1436, %v3960, 0
        %v3969 = vsel %vm1436, %v3961, 0
        %v3972 = vsel %vm3036, %v773, 0
        %3974 = vmatprep.subr.bf16.mxu0 0
        %3975 = vmatpush1.bf16.msra.mxu0 %v3972
        %3976 = vmatprep.subr.bf16.mxu0 0
        %3977 = vmatpush1.bf16.msra.mxu0 0
        %3978 = vmatprep.subr.bf16.mxu0 0
        %3979 = vmatpush1.bf16.msra.mxu0 0
        %3980 = vmatprep.subr.bf16.mxu0 0
        %3981 = vmatpush1.bf16.msra.mxu0 0
        %3982 = vmatprep.subr.bf16.mxu0 0
        %3983 = vmatpush1.bf16.msra.mxu0 0
        %3984 = vmatprep.subr.bf16.mxu0 0
        %3985 = vmatpush1.bf16.msra.mxu0 0
        %3986 = vmatprep.subr.bf16.mxu0 0
        %3987 = vmatpush1.bf16.msra.mxu0 0
        %3988 = vmatprep.subr.bf16.mxu0 0
        %3989 = vmatpush1.bf16.msra.mxu0 0
        %3990 = vmatprep.subr.bf16.mxu0 0
        %3991 = vmatpush1.bf16.msra.mxu0 0
        %3992 = vmatprep.subr.bf16.mxu0 0
        %3993 = vmatpush1.bf16.msra.mxu0 0
        %3994 = vmatprep.subr.bf16.mxu0 0
        %3995 = vmatpush1.bf16.msra.mxu0 0
        %3996 = vmatprep.subr.bf16.mxu0 0
        %3997 = vmatpush1.bf16.msra.mxu0 0
        %3998 = vmatprep.subr.bf16.mxu0 0
        %3999 = vmatpush1.bf16.msra.mxu0 0
        %4000 = vmatprep.subr.bf16.mxu0 0
        %4001 = vmatpush1.bf16.msra.mxu0 0
        %4002 = vmatprep.subr.bf16.mxu0 0
        %4003 = vmatpush1.bf16.msra.mxu0 0
        %4004 = vmatprep.subr.bf16.mxu0 0
        %4005 = vmatpush1.bf16.msra.mxu0 0
        %4006 = vmatprep.mubr.bf16.mxu0 0
        %4007 = vmatmul.mubr.bf16.gmra.mrb[0].mxu0 %v3963
        %v4008 = vpop.f32.mrb[0].mxu0
        %v4009 = vadd.f32 0.0, %v4008
        %v4010 = vpop.f32.mrb[0].mxu0
        %v4011 = vpop.f32.mrb[0].mxu0
        %v4012 = vadd.f32 0.0, %v4011
        %v4013 = vpop.f32.mrb[0].mxu0
        %4014 = vmatprep.mubr.bf16.mxu0 0
        %4015 = vmatmul.mubr.bf16.gmra.mrb[0].mxu0 %v3966
        %v4016 = vpop.f32.mrb[0].mxu0
        %v4017 = vadd.f32 0.0, %v4016
        %v4018 = vpop.f32.mrb[0].mxu0
        %v4019 = vpop.f32.mrb[0].mxu0
        %v4020 = vadd.f32 0.0, %v4019
        %v4021 = vpop.f32.mrb[0].mxu0
        %4022 = vmatprep.mubr.bf16.mxu0 0
        %4023 = vmatmul.mubr.bf16.gmra.mrb[0].mxu0 %v3969
        %v4024 = vpop.f32.mrb[0].mxu0
        %v4025 = vadd.f32 0.0, %v4024
        %v4026 = vpop.f32.mrb[0].mxu0
        %v4027 = vpop.f32.mrb[0].mxu0
        %v4028 = vpop.f32.mrb[0].mxu0
        %4029 = vdwg.mxu0
        %v4030 = vadd.f32 %v3143, %v4009
        %v4031 = vadd.f32 %v3146, %v4012
        %v4032 = vadd.f32 %v3151, %v4017
        %v4033 = vadd.f32 %v3154, %v4020
        %v4034 = vadd.f32 %v3159, %v4025
        %4035 = vrot.lane.b32.xlu0 %v1426, 104
        %v4036 = vpop.permute.xlu0 %4035
        %4037 = vrot.lane.b32.xlu0 %v1427, 104
        %v4038 = vpop.permute.xlu0 %4037
        %4039 = vrot.lane.b32.xlu0 %v1426, 72
        %v4040 = vpop.permute.xlu0 %4039
        %4041 = vrot.lane.b32.xlu0 %v1427, 72
        %v4042 = vpop.permute.xlu0 %4041
        %v4044 = vsel %vm1436, %v4036, 0
        %v4047 = vsel %vm1436, %v4038, 0
        %v4050 = vsel %vm1436, %v4040, 0
        %v4053 = vsel %vm1436, %v4042, 0
        %4055 = vmatprep.subr.bf16.mxu0 0
        %4056 = vmatpush1.bf16.xpose.msra.mxu0 %v4050
        %4057 = vmatprep.subr.bf16.mxu0 0
        %4058 = vmatpush1.bf16.xpose.msra.mxu0 %v4053
        %4059 = vmatprep.subr.bf16.mxu0 0
        %4060 = vmatpush1.bf16.xpose.msra.mxu0 0
        %4061 = vmatprep.subr.bf16.mxu0 0
        %4062 = vmatpush1.bf16.xpose.msra.mxu0 0
        %4063 = vmatprep.subr.bf16.mxu0 0
        %4064 = vmatpush1.bf16.xpose.msra.mxu0 0
        %4065 = vmatprep.subr.bf16.mxu0 0
        %4066 = vmatpush1.bf16.xpose.msra.mxu0 0
        %4067 = vmatprep.subr.bf16.mxu0 0
        %4068 = vmatpush1.bf16.xpose.msra.mxu0 0
        %4069 = vmatprep.subr.bf16.mxu0 0
        %4070 = vmatpush1.bf16.xpose.msra.mxu0 0
        %4071 = vmatprep.subr.bf16.mxu0 0
        %4072 = vmatpush1.bf16.xpose.msra.mxu0 0
        %4073 = vmatprep.subr.bf16.mxu0 0
        %4074 = vmatpush1.bf16.xpose.msra.mxu0 0
        %4075 = vmatprep.subr.bf16.mxu0 0
        %4076 = vmatpush1.bf16.xpose.msra.mxu0 0
        %4077 = vmatprep.subr.bf16.mxu0 0
        %4078 = vmatpush1.bf16.xpose.msra.mxu0 0
        %4079 = vmatprep.subr.bf16.mxu0 0
        %4080 = vmatpush1.bf16.xpose.msra.mxu0 0
        %4081 = vmatprep.subr.bf16.mxu0 0
        %4082 = vmatpush1.bf16.xpose.msra.mxu0 0
        %4083 = vmatprep.subr.bf16.mxu0 0
        %4084 = vmatpush1.bf16.xpose.msra.mxu0 0
        %4085 = vmatprep.subr.bf16.mxu0 0
        %4086 = vmatpush1.bf16.xpose.msra.mxu0 0
        %4087 = vmatprep.mubr.bf16.mxu0 0
        %4088 = vmatmul.mubr.bf16.gmra.mrb[0].mxu0 %v4044
        %v4089 = vpop.f32.mrb[0].mxu0
        %v4090 = vadd.f32 0.0, %v4089
        %v4091 = vpop.f32.mrb[0].mxu0
        %v4092 = vpop.f32.mrb[0].mxu0
        %v4093 = vadd.f32 0.0, %v4092
        %v4094 = vpop.f32.mrb[0].mxu0
        %4095 = vmatprep.mubr.bf16.mxu0 0
        %4096 = vmatmul.mubr.bf16.gmra.mrb[0].mxu0 %v4047
        %v4097 = vpop.f32.mrb[0].mxu0
        %v4098 = vadd.f32 0.0, %v4097
        %v4099 = vpop.f32.mrb[0].mxu0
        %v4100 = vpop.f32.mrb[0].mxu0
        %v4101 = vpop.f32.mrb[0].mxu0
        %4102 = vdwg.mxu0
        %4103 = vrot.lane.b32.xlu0 %v1428, 104
        %v4104 = vpop.permute.xlu0 %4103
        %4105 = vrot.lane.b32.xlu0 %v1429, 104
        %v4106 = vpop.permute.xlu0 %4105
        %4107 = vrot.lane.b32.xlu0 %v1428, 72
        %v4108 = vpop.permute.xlu0 %4107
        %4109 = vrot.lane.b32.xlu0 %v1429, 72
        %v4110 = vpop.permute.xlu0 %4109
        %v4112 = vsel %vm1436, %v4104, 0
        %v4115 = vsel %vm1436, %v4106, 0
        %v4118 = vsel %vm1436, %v4108, 0
        %v4121 = vsel %vm1436, %v4110, 0
        %4123 = vmatprep.subr.bf16.mxu0 0
        %4124 = vmatpush1.bf16.xpose.msra.mxu0 %v4118
        %4125 = vmatprep.subr.bf16.mxu0 0
        %4126 = vmatpush1.bf16.xpose.msra.mxu0 %v4121
        %4127 = vmatprep.subr.bf16.mxu0 0
        %4128 = vmatpush1.bf16.xpose.msra.mxu0 0
        %4129 = vmatprep.subr.bf16.mxu0 0
        %4130 = vmatpush1.bf16.xpose.msra.mxu0 0
        %4131 = vmatprep.subr.bf16.mxu0 0
        %4132 = vmatpush1.bf16.xpose.msra.mxu0 0
        %4133 = vmatprep.subr.bf16.mxu0 0
        %4134 = vmatpush1.bf16.xpose.msra.mxu0 0
        %4135 = vmatprep.subr.bf16.mxu0 0
        %4136 = vmatpush1.bf16.xpose.msra.mxu0 0
        %4137 = vmatprep.subr.bf16.mxu0 0
        %4138 = vmatpush1.bf16.xpose.msra.mxu0 0
        %4139 = vmatprep.subr.bf16.mxu0 0
        %4140 = vmatpush1.bf16.xpose.msra.mxu0 0
        %4141 = vmatprep.subr.bf16.mxu0 0
        %4142 = vmatpush1.bf16.xpose.msra.mxu0 0
        %4143 = vmatprep.subr.bf16.mxu0 0
        %4144 = vmatpush1.bf16.xpose.msra.mxu0 0
        %4145 = vmatprep.subr.bf16.mxu0 0
        %4146 = vmatpush1.bf16.xpose.msra.mxu0 0
        %4147 = vmatprep.subr.bf16.mxu0 0
        %4148 = vmatpush1.bf16.xpose.msra.mxu0 0
        %4149 = vmatprep.subr.bf16.mxu0 0
        %4150 = vmatpush1.bf16.xpose.msra.mxu0 0
        %4151 = vmatprep.subr.bf16.mxu0 0
        %4152 = vmatpush1.bf16.xpose.msra.mxu0 0
        %4153 = vmatprep.subr.bf16.mxu0 0
        %4154 = vmatpush1.bf16.xpose.msra.mxu0 0
        %4155 = vmatprep.mubr.bf16.mxu0 0
        %4156 = vmatmul.mubr.bf16.gmra.mrb[0].mxu0 %v4112
        %v4157 = vpop.f32.mrb[0].mxu0
        %v4158 = vadd.f32 0.0, %v4157
        %v4159 = vpop.f32.mrb[0].mxu0
        %v4160 = vpop.f32.mrb[0].mxu0
        %v4161 = vadd.f32 0.0, %v4160
        %v4162 = vpop.f32.mrb[0].mxu0
        %4163 = vmatprep.mubr.bf16.mxu0 0
        %4164 = vmatmul.mubr.bf16.gmra.mrb[0].mxu0 %v4115
        %v4165 = vpop.f32.mrb[0].mxu0
        %v4166 = vadd.f32 0.0, %v4165
        %v4167 = vpop.f32.mrb[0].mxu0
        %v4168 = vpop.f32.mrb[0].mxu0
        %v4169 = vpop.f32.mrb[0].mxu0
        %4170 = vdwg.mxu0
        %v4171 = vmul.f32 %v4090, 0.35355338
        %v4172 = vmul.f32 %v4093, 0.35355338
        %v4173 = vmul.f32 %v4098, 0.35355338
        %v4174 = vmul.f32 %v4158, 0.35355338
        %v4175 = vmul.f32 %v4161, 0.35355338
        %v4176 = vmul.f32 %v4166, 0.35355338
        %v4177 = vsel %vm1569, %v4171, -inf
        %4178 = vmax.xlane.f32.xlu0 %v4177
        %v4179 = vpop.xlane.xlu0 %4178
        %v4180 = vsel %vm1569, %v4172, -inf
        %4181 = vmax.xlane.f32.xlu0 %v4180
        %v4182 = vpop.xlane.xlu0 %4181
        %v4183 = vsel %vm1576, %v4173, -inf
        %4184 = vmax.xlane.f32.xlu0 %v4183
        %v4185 = vpop.xlane.xlu0 %4184
        %v4186 = vsel %vm1569, %v4174, -inf
        %4187 = vmax.xlane.f32.xlu0 %v4186
        %v4188 = vpop.xlane.xlu0 %4187
        %v4189 = vsel %vm1569, %v4175, -inf
        %4190 = vmax.xlane.f32.xlu0 %v4189
        %v4191 = vpop.xlane.xlu0 %4190
        %v4192 = vsel %vm1576, %v4176, -inf
        %4193 = vmax.xlane.f32.xlu0 %v4192
        %v4194 = vpop.xlane.xlu0 %4193
        %v4195 = vsub.f32 %v4171, %v4179
        %v4196 = vsub.f32 %v4172, %v4182
        %v4197 = vsub.f32 %v4173, %v4185
        %v4198 = vsub.f32 %v4174, %v4188
        %v4199 = vsub.f32 %v4175, %v4191
        %v4200 = vsub.f32 %v4176, %v4194
        %v4201 = vmul.f32 %v4195, 1.442695
        %v4202 = vpow.pop %v4201
        %v4203 = vmul.f32 %v4196, 1.442695
        %v4204 = vpow.pop %v4203
        %v4205 = vmul.f32 %v4197, 1.442695
        %v4206 = vpow.pop %v4205
        %v4207 = vmul.f32 %v4198, 1.442695
        %v4208 = vpow.pop %v4207
        %v4209 = vmul.f32 %v4199, 1.442695
        %v4210 = vpow.pop %v4209
        %v4211 = vmul.f32 %v4200, 1.442695
        %v4212 = vpow.pop %v4211
        %v4213 = vsel %vm1569, %v4202, 0.0
        %4214 = vadd.xlane.f32.xlu0 %v4213
        %v4215 = vpop.xlane.xlu0 %4214
        %v4216 = vsel %vm1569, %v4204, 0.0
        %4217 = vadd.xlane.f32.xlu0 %v4216
        %v4218 = vpop.xlane.xlu0 %4217
        %v4219 = vsel %vm1576, %v4206, 0.0
        %4220 = vadd.xlane.f32.xlu0 %v4219
        %v4221 = vpop.xlane.xlu0 %4220
        %v4222 = vsel %vm1569, %v4208, 0.0
        %4223 = vadd.xlane.f32.xlu0 %v4222
        %v4224 = vpop.xlane.xlu0 %4223
        %v4225 = vsel %vm1569, %v4210, 0.0
        %4226 = vadd.xlane.f32.xlu0 %v4225
        %v4227 = vpop.xlane.xlu0 %4226
        %v4228 = vsel %vm1576, %v4212, 0.0
        %4229 = vadd.xlane.f32.xlu0 %v4228
        %v4230 = vpop.xlane.xlu0 %4229
        %v4231 = vrcp.pop %v4215
        %v4232 = vrcp.pop %v4218
        %v4233 = vrcp.pop %v4221
        %v4234 = vrcp.pop %v4224
        %v4235 = vrcp.pop %v4227
        %v4236 = vrcp.pop %v4230
        %v4237 = vmul.f32 %v4202, %v4231
        %v4238 = vmul.f32 %v4204, %v4232
        %v4239 = vmul.f32 %v4206, %v4233
        %v4240 = vmul.f32 %v4208, %v4234
        %v4241 = vmul.f32 %v4210, %v4235
        %v4242 = vmul.f32 %v4212, %v4236
        %v4243 = vsel %vm1569, %v4237, 0.0
        %v4244 = vsel %vm1569, %v4238, 0.0
        %v4245 = vsel %vm1569, %v4239, 0.0
        %v4246 = vsel %vm1569, %v4240, 0.0
        %v4247 = vsel %vm1569, %v4241, 0.0
        %v4248 = vsel %vm1569, %v4242, 0.0
        %s4249 = scalar_lea.vmem %s746, 144
        %4250 = vst [vmem:[%s4249] sm:$0xff] %v4243
        %4251 = vst [vmem:[%s4249 + $0x8] sm:$0xff] %v4244
        %4252 = vst [vmem:[%s4249 + $0x10] sm:$0x1] %v4245
        %4253 = vst [vmem:[%s4249 + $0x18] sm:$0xff] %v4246
        %4254 = vst [vmem:[%s4249 + $0x20] sm:$0xff] %v4247
        %4255 = vst [vmem:[%s4249 + $0x28] sm:$0x1] %v4248
        %v4256 = vpack.c.bf16 %v4238, %v4237
        %v4257 = vpack.c.bf16 %v4239, %v4239
        %v4258 = vpack.c.bf16 %v4241, %v4240
        %v4259 = vpack.c.bf16 %v4242, %v4242
        %4260 = vrot.lane.b32.xlu0 %v1426, 40
        %v4261 = vpop.permute.xlu0 %4260
        %4262 = vrot.lane.b32.xlu0 %v1427, 40
        %v4263 = vpop.permute.xlu0 %4262
        %v4266 = vsel %vm1569, %v4256, 0
        %v4269 = vsel %vm1569, %v4257, 0
        %v4272 = vand.u32 %v4263, %v1666
        %4274 = vmatprep.subr.bf16.mxu0 0
        %4275 = vmatpush1.bf16.msra.mxu0 %v4261
        %4276 = vmatprep.subr.bf16.mxu0 0
        %4277 = vmatpush1.bf16.msra.mxu0 %v4272
        %4278 = vmatprep.subr.bf16.mxu0 0
        %4279 = vmatpush1.bf16.msra.mxu0 0
        %4280 = vmatprep.subr.bf16.mxu0 0
        %4281 = vmatpush1.bf16.msra.mxu0 0
        %4282 = vmatprep.subr.bf16.mxu0 0
        %4283 = vmatpush1.bf16.msra.mxu0 0
        %4284 = vmatprep.subr.bf16.mxu0 0
        %4285 = vmatpush1.bf16.msra.mxu0 0
        %4286 = vmatprep.subr.bf16.mxu0 0
        %4287 = vmatpush1.bf16.msra.mxu0 0
        %4288 = vmatprep.subr.bf16.mxu0 0
        %4289 = vmatpush1.bf16.msra.mxu0 0
        %4290 = vmatprep.subr.bf16.mxu0 0
        %4291 = vmatpush1.bf16.msra.mxu0 0
        %4292 = vmatprep.subr.bf16.mxu0 0
        %4293 = vmatpush1.bf16.msra.mxu0 0
        %4294 = vmatprep.subr.bf16.mxu0 0
        %4295 = vmatpush1.bf16.msra.mxu0 0
        %4296 = vmatprep.subr.bf16.mxu0 0
        %4297 = vmatpush1.bf16.msra.mxu0 0
        %4298 = vmatprep.subr.bf16.mxu0 0
        %4299 = vmatpush1.bf16.msra.mxu0 0
        %4300 = vmatprep.subr.bf16.mxu0 0
        %4301 = vmatpush1.bf16.msra.mxu0 0
        %4302 = vmatprep.subr.bf16.mxu0 0
        %4303 = vmatpush1.bf16.msra.mxu0 0
        %4304 = vmatprep.subr.bf16.mxu0 0
        %4305 = vmatpush1.bf16.msra.mxu0 0
        %4306 = vmatprep.mubr.bf16.mxu0 0
        %4307 = vmatmul.mubr.bf16.gmra.mrb[0].mxu0 %v4266
        %v4308 = vpop.f32.mrb[0].mxu0
        %v4309 = vadd.f32 0.0, %v4308
        %v4310 = vpop.f32.mrb[0].mxu0
        %v4311 = vpop.f32.mrb[0].mxu0
        %v4312 = vadd.f32 0.0, %v4311
        %v4313 = vpop.f32.mrb[0].mxu0
        %4314 = vmatprep.mubr.bf16.mxu0 0
        %4315 = vmatmul.mubr.bf16.gmra.mrb[0].mxu0 %v4269
        %v4316 = vpop.f32.mrb[0].mxu0
        %v4317 = vadd.f32 0.0, %v4316
        %v4318 = vpop.f32.mrb[0].mxu0
        %v4319 = vpop.f32.mrb[0].mxu0
        %v4320 = vpop.f32.mrb[0].mxu0
        %4321 = vdwg.mxu0
        %4322 = vrot.lane.b32.xlu0 %v1428, 40
        %v4323 = vpop.permute.xlu0 %4322
        %4324 = vrot.lane.b32.xlu0 %v1429, 40
        %v4325 = vpop.permute.xlu0 %4324
        %v4328 = vsel %vm1569, %v4258, 0
        %v4331 = vsel %vm1569, %v4259, 0
        %v4334 = vand.u32 %v4325, %v1666
        %4336 = vmatprep.subr.bf16.mxu0 0
        %4337 = vmatpush1.bf16.msra.mxu0 %v4323
        %4338 = vmatprep.subr.bf16.mxu0 0
        %4339 = vmatpush1.bf16.msra.mxu0 %v4334
        %4340 = vmatprep.subr.bf16.mxu0 0
        %4341 = vmatpush1.bf16.msra.mxu0 0
        %4342 = vmatprep.subr.bf16.mxu0 0
        %4343 = vmatpush1.bf16.msra.mxu0 0
        %4344 = vmatprep.subr.bf16.mxu0 0
        %4345 = vmatpush1.bf16.msra.mxu0 0
        %4346 = vmatprep.subr.bf16.mxu0 0
        %4347 = vmatpush1.bf16.msra.mxu0 0
        %4348 = vmatprep.subr.bf16.mxu0 0
        %4349 = vmatpush1.bf16.msra.mxu0 0
        %4350 = vmatprep.subr.bf16.mxu0 0
        %4351 = vmatpush1.bf16.msra.mxu0 0
        %4352 = vmatprep.subr.bf16.mxu0 0
        %4353 = vmatpush1.bf16.msra.mxu0 0
        %4354 = vmatprep.subr.bf16.mxu0 0
        %4355 = vmatpush1.bf16.msra.mxu0 0
        %4356 = vmatprep.subr.bf16.mxu0 0
        %4357 = vmatpush1.bf16.msra.mxu0 0
        %4358 = vmatprep.subr.bf16.mxu0 0
        %4359 = vmatpush1.bf16.msra.mxu0 0
        %4360 = vmatprep.subr.bf16.mxu0 0
        %4361 = vmatpush1.bf16.msra.mxu0 0
        %4362 = vmatprep.subr.bf16.mxu0 0
        %4363 = vmatpush1.bf16.msra.mxu0 0
        %4364 = vmatprep.subr.bf16.mxu0 0
        %4365 = vmatpush1.bf16.msra.mxu0 0
        %4366 = vmatprep.subr.bf16.mxu0 0
        %4367 = vmatpush1.bf16.msra.mxu0 0
        %4368 = vmatprep.mubr.bf16.mxu0 0
        %4369 = vmatmul.mubr.bf16.gmra.mrb[0].mxu0 %v4328
        %v4370 = vpop.f32.mrb[0].mxu0
        %v4371 = vadd.f32 0.0, %v4370
        %v4372 = vpop.f32.mrb[0].mxu0
        %v4373 = vpop.f32.mrb[0].mxu0
        %v4374 = vadd.f32 0.0, %v4373
        %v4375 = vpop.f32.mrb[0].mxu0
        %4376 = vmatprep.mubr.bf16.mxu0 0
        %4377 = vmatmul.mubr.bf16.gmra.mrb[0].mxu0 %v4331
        %v4378 = vpop.f32.mrb[0].mxu0
        %v4379 = vadd.f32 0.0, %v4378
        %v4380 = vpop.f32.mrb[0].mxu0
        %v4381 = vpop.f32.mrb[0].mxu0
        %v4382 = vpop.f32.mrb[0].mxu0
        %4383 = vdwg.mxu0
        %v4390 = vcombine.high %v4309, %v4309
        %v4392 = vunpack.c.l.s4 1966171168
        %v4393 = vunpack.c.0.s8 %v4392
        %v4394 = vlaneseq
        %v4395 = vshrl.u32 %v4394, 7
        %v4396 = vsub.s32 %v4393, %v4395
        %v4397 = vrot.slane %v4309, %v4396
        %v4399 = vunpack.c.l.s4 1966171168
        %v4400 = vunpack.c.0.s8 %v4399
        %v4401 = vlaneseq
        %v4402 = vshrl.u32 %v4401, 7
        %v4403 = vsub.s32 %v4400, %v4402
        %v4404 = vrot.slane %v4390, %v4403
        %v4405 = vcombine.high %v4397, %v4397
        %v4406 = vcombine.high %v4404, %v4404
        %v4408 = vunpack.c.l.s4 1966171168
        %v4409 = vunpack.c.0.s8 %v4408
        %v4410 = vlaneseq
        %v4411 = vshrl.u32 %v4410, 7
        %v4412 = vsub.s32 %v4409, %v4411
        %v4413 = vrot.slane %v4397, %v4412
        %v4415 = vunpack.c.l.s4 1966171168
        %v4416 = vunpack.c.0.s8 %v4415
        %v4417 = vlaneseq
        %v4418 = vshrl.u32 %v4417, 7
        %v4419 = vsub.s32 %v4416, %v4418
        %v4420 = vrot.slane %v4404, %v4419
        %v4422 = vunpack.c.l.s4 1966171168
        %v4423 = vunpack.c.0.s8 %v4422
        %v4424 = vlaneseq
        %v4425 = vshrl.u32 %v4424, 7
        %v4426 = vsub.s32 %v4423, %v4425
        %v4427 = vrot.slane %v4405, %v4426
        %v4429 = vunpack.c.l.s4 1966171168
        %v4430 = vunpack.c.0.s8 %v4429
        %v4431 = vlaneseq
        %v4432 = vshrl.u32 %v4431, 7
        %v4433 = vsub.s32 %v4430, %v4432
        %v4434 = vrot.slane %v4406, %v4433
        %v4435 = vcombine.high %v4413, %v4413
        %v4436 = vcombine.high %v4420, %v4420
        %v4437 = vcombine.high %v4427, %v4427
        %v4438 = vcombine.high %v4434, %v4434
        %v4439 = vcombine.high %v4312, %v4312
        %v4441 = vunpack.c.l.s4 1966171168
        %v4442 = vunpack.c.0.s8 %v4441
        %v4443 = vlaneseq
        %v4444 = vshrl.u32 %v4443, 7
        %v4445 = vsub.s32 %v4442, %v4444
        %v4446 = vrot.slane %v4312, %v4445
        %v4448 = vunpack.c.l.s4 1966171168
        %v4449 = vunpack.c.0.s8 %v4448
        %v4450 = vlaneseq
        %v4451 = vshrl.u32 %v4450, 7
        %v4452 = vsub.s32 %v4449, %v4451
        %v4453 = vrot.slane %v4439, %v4452
        %v4454 = vcombine.high %v4446, %v4446
        %v4455 = vcombine.high %v4453, %v4453
        %v4457 = vunpack.c.l.s4 1966171168
        %v4458 = vunpack.c.0.s8 %v4457
        %v4459 = vlaneseq
        %v4460 = vshrl.u32 %v4459, 7
        %v4461 = vsub.s32 %v4458, %v4460
        %v4462 = vrot.slane %v4446, %v4461
        %v4464 = vunpack.c.l.s4 1966171168
        %v4465 = vunpack.c.0.s8 %v4464
        %v4466 = vlaneseq
        %v4467 = vshrl.u32 %v4466, 7
        %v4468 = vsub.s32 %v4465, %v4467
        %v4469 = vrot.slane %v4453, %v4468
        %v4471 = vunpack.c.l.s4 1966171168
        %v4472 = vunpack.c.0.s8 %v4471
        %v4473 = vlaneseq
        %v4474 = vshrl.u32 %v4473, 7
        %v4475 = vsub.s32 %v4472, %v4474
        %v4476 = vrot.slane %v4454, %v4475
        %v4478 = vunpack.c.l.s4 1966171168
        %v4479 = vunpack.c.0.s8 %v4478
        %v4480 = vlaneseq
        %v4481 = vshrl.u32 %v4480, 7
        %v4482 = vsub.s32 %v4479, %v4481
        %v4483 = vrot.slane %v4455, %v4482
        %v4484 = vcombine.high %v4462, %v4462
        %v4485 = vcombine.high %v4469, %v4469
        %v4486 = vcombine.high %v4476, %v4476
        %v4487 = vcombine.high %v4483, %v4483
        %v4489 = vunpack.c.l.s4 1966171168
        %v4490 = vunpack.c.0.s8 %v4489
        %v4491 = vlaneseq
        %v4492 = vshrl.u32 %v4491, 7
        %v4493 = vsub.s32 %v4490, %v4492
        %v4494 = vrot.slane %v4317, %v4493
        %v4496 = vunpack.c.l.s4 1966171168
        %v4497 = vunpack.c.0.s8 %v4496
        %v4498 = vlaneseq
        %v4499 = vshrl.u32 %v4498, 7
        %v4500 = vsub.s32 %v4497, %v4499
        %v4501 = vrot.slane %v4494, %v4500
        %v4502 = vcombine.high %v4371, %v4371
        %v4504 = vunpack.c.l.s4 1966171168
        %v4505 = vunpack.c.0.s8 %v4504
        %v4506 = vlaneseq
        %v4507 = vshrl.u32 %v4506, 7
        %v4508 = vsub.s32 %v4505, %v4507
        %v4509 = vrot.slane %v4371, %v4508
        %v4511 = vunpack.c.l.s4 1966171168
        %v4512 = vunpack.c.0.s8 %v4511
        %v4513 = vlaneseq
        %v4514 = vshrl.u32 %v4513, 7
        %v4515 = vsub.s32 %v4512, %v4514
        %v4516 = vrot.slane %v4502, %v4515
        %v4517 = vcombine.high %v4509, %v4509
        %v4518 = vcombine.high %v4516, %v4516
        %v4520 = vunpack.c.l.s4 1966171168
        %v4521 = vunpack.c.0.s8 %v4520
        %v4522 = vlaneseq
        %v4523 = vshrl.u32 %v4522, 7
        %v4524 = vsub.s32 %v4521, %v4523
        %v4525 = vrot.slane %v4509, %v4524
        %v4527 = vunpack.c.l.s4 1966171168
        %v4528 = vunpack.c.0.s8 %v4527
        %v4529 = vlaneseq
        %v4530 = vshrl.u32 %v4529, 7
        %v4531 = vsub.s32 %v4528, %v4530
        %v4532 = vrot.slane %v4516, %v4531
        %v4534 = vunpack.c.l.s4 1966171168
        %v4535 = vunpack.c.0.s8 %v4534
        %v4536 = vlaneseq
        %v4537 = vshrl.u32 %v4536, 7
        %v4538 = vsub.s32 %v4535, %v4537
        %v4539 = vrot.slane %v4517, %v4538
        %v4541 = vunpack.c.l.s4 1966171168
        %v4542 = vunpack.c.0.s8 %v4541
        %v4543 = vlaneseq
        %v4544 = vshrl.u32 %v4543, 7
        %v4545 = vsub.s32 %v4542, %v4544
        %v4546 = vrot.slane %v4518, %v4545
        %v4547 = vcombine.high %v4525, %v4525
        %v4548 = vcombine.high %v4532, %v4532
        %v4549 = vcombine.high %v4539, %v4539
        %v4550 = vcombine.high %v4546, %v4546
        %v4551 = vcombine.high %v4374, %v4374
        %v4553 = vunpack.c.l.s4 1966171168
        %v4554 = vunpack.c.0.s8 %v4553
        %v4555 = vlaneseq
        %v4556 = vshrl.u32 %v4555, 7
        %v4557 = vsub.s32 %v4554, %v4556
        %v4558 = vrot.slane %v4374, %v4557
        %v4560 = vunpack.c.l.s4 1966171168
        %v4561 = vunpack.c.0.s8 %v4560
        %v4562 = vlaneseq
        %v4563 = vshrl.u32 %v4562, 7
        %v4564 = vsub.s32 %v4561, %v4563
        %v4565 = vrot.slane %v4551, %v4564
        %v4566 = vcombine.high %v4558, %v4558
        %v4567 = vcombine.high %v4565, %v4565
        %v4569 = vunpack.c.l.s4 1966171168
        %v4570 = vunpack.c.0.s8 %v4569
        %v4571 = vlaneseq
        %v4572 = vshrl.u32 %v4571, 7
        %v4573 = vsub.s32 %v4570, %v4572
        %v4574 = vrot.slane %v4558, %v4573
        %v4576 = vunpack.c.l.s4 1966171168
        %v4577 = vunpack.c.0.s8 %v4576
        %v4578 = vlaneseq
        %v4579 = vshrl.u32 %v4578, 7
        %v4580 = vsub.s32 %v4577, %v4579
        %v4581 = vrot.slane %v4565, %v4580
        %v4583 = vunpack.c.l.s4 1966171168
        %v4584 = vunpack.c.0.s8 %v4583
        %v4585 = vlaneseq
        %v4586 = vshrl.u32 %v4585, 7
        %v4587 = vsub.s32 %v4584, %v4586
        %v4588 = vrot.slane %v4566, %v4587
        %v4590 = vunpack.c.l.s4 1966171168
        %v4591 = vunpack.c.0.s8 %v4590
        %v4592 = vlaneseq
        %v4593 = vshrl.u32 %v4592, 7
        %v4594 = vsub.s32 %v4591, %v4593
        %v4595 = vrot.slane %v4567, %v4594
        %v4596 = vcombine.high %v4574, %v4574
        %v4597 = vcombine.high %v4581, %v4581
        %v4598 = vcombine.high %v4588, %v4588
        %v4599 = vcombine.high %v4595, %v4595
        %v4601 = vunpack.c.l.s4 1966171168
        %v4602 = vunpack.c.0.s8 %v4601
        %v4603 = vlaneseq
        %v4604 = vshrl.u32 %v4603, 7
        %v4605 = vsub.s32 %v4602, %v4604
        %v4606 = vrot.slane %v4379, %v4605
        %v4608 = vunpack.c.l.s4 1966171168
        %v4609 = vunpack.c.0.s8 %v4608
        %v4610 = vlaneseq
        %v4611 = vshrl.u32 %v4610, 7
        %v4612 = vsub.s32 %v4609, %v4611
        %v4613 = vrot.slane %v4606, %v4612
        %v4614 = vcombine.low %v4413, %v4427
        %v4615 = vcombine.low %v4435, %v4437
        %v4616 = vcombine.low %v4420, %v4434
        %v4617 = vcombine.low %v4436, %v4438
        %v4619 = vunpack.c.l.s4 1966171168
        %v4620 = vunpack.c.0.s8 %v4619
        %v4621 = vlaneseq
        %v4622 = vshrl.u32 %v4621, 7
        %v4623 = vsub.s32 %v4620, %v4622
        %v4624 = vrot.slane %v4614, %v4623
        %v4626 = vunpack.c.l.s4 1966171168
        %v4627 = vunpack.c.0.s8 %v4626
        %v4628 = vlaneseq
        %v4629 = vshrl.u32 %v4628, 7
        %v4630 = vsub.s32 %v4627, %v4629
        %v4631 = vrot.slane %v4615, %v4630
        %v4633 = vunpack.c.l.s4 1966171168
        %v4634 = vunpack.c.0.s8 %v4633
        %v4635 = vlaneseq
        %v4636 = vshrl.u32 %v4635, 7
        %v4637 = vsub.s32 %v4634, %v4636
        %v4638 = vrot.slane %v4616, %v4637
        %v4640 = vunpack.c.l.s4 1966171168
        %v4641 = vunpack.c.0.s8 %v4640
        %v4642 = vlaneseq
        %v4643 = vshrl.u32 %v4642, 7
        %v4644 = vsub.s32 %v4641, %v4643
        %v4645 = vrot.slane %v4617, %v4644
        %v4646 = vcombine.low %v4624, %v4631
        %v4647 = vcombine.low %v4638, %v4645
        %v4649 = vunpack.c.l.s4 1966171168
        %v4650 = vunpack.c.0.s8 %v4649
        %v4651 = vlaneseq
        %v4652 = vshrl.u32 %v4651, 7
        %v4653 = vsub.s32 %v4650, %v4652
        %v4654 = vrot.slane %v4646, %v4653
        %v4656 = vunpack.c.l.s4 1966171168
        %v4657 = vunpack.c.0.s8 %v4656
        %v4658 = vlaneseq
        %v4659 = vshrl.u32 %v4658, 7
        %v4660 = vsub.s32 %v4657, %v4659
        %v4661 = vrot.slane %v4647, %v4660
        %v4662 = vcombine.low %v4654, %v4661
        %v4663 = vcombine.low %v4462, %v4476
        %v4664 = vcombine.low %v4484, %v4486
        %v4665 = vcombine.low %v4469, %v4483
        %v4666 = vcombine.low %v4485, %v4487
        %v4668 = vunpack.c.l.s4 1966171168
        %v4669 = vunpack.c.0.s8 %v4668
        %v4670 = vlaneseq
        %v4671 = vshrl.u32 %v4670, 7
        %v4672 = vsub.s32 %v4669, %v4671
        %v4673 = vrot.slane %v4663, %v4672
        %v4675 = vunpack.c.l.s4 1966171168
        %v4676 = vunpack.c.0.s8 %v4675
        %v4677 = vlaneseq
        %v4678 = vshrl.u32 %v4677, 7
        %v4679 = vsub.s32 %v4676, %v4678
        %v4680 = vrot.slane %v4664, %v4679
        %v4682 = vunpack.c.l.s4 1966171168
        %v4683 = vunpack.c.0.s8 %v4682
        %v4684 = vlaneseq
        %v4685 = vshrl.u32 %v4684, 7
        %v4686 = vsub.s32 %v4683, %v4685
        %v4687 = vrot.slane %v4665, %v4686
        %v4689 = vunpack.c.l.s4 1966171168
        %v4690 = vunpack.c.0.s8 %v4689
        %v4691 = vlaneseq
        %v4692 = vshrl.u32 %v4691, 7
        %v4693 = vsub.s32 %v4690, %v4692
        %v4694 = vrot.slane %v4666, %v4693
        %v4695 = vcombine.low %v4673, %v4680
        %v4696 = vcombine.low %v4687, %v4694
        %v4698 = vunpack.c.l.s4 1966171168
        %v4699 = vunpack.c.0.s8 %v4698
        %v4700 = vlaneseq
        %v4701 = vshrl.u32 %v4700, 7
        %v4702 = vsub.s32 %v4699, %v4701
        %v4703 = vrot.slane %v4695, %v4702
        %v4705 = vunpack.c.l.s4 1966171168
        %v4706 = vunpack.c.0.s8 %v4705
        %v4707 = vlaneseq
        %v4708 = vshrl.u32 %v4707, 7
        %v4709 = vsub.s32 %v4706, %v4708
        %v4710 = vrot.slane %v4696, %v4709
        %v4711 = vcombine.low %v4703, %v4710
        %v4712 = vcombine.low %v4501, %v4525
        %v4713 = vcombine.low %v4539, %v4547
        %v4714 = vcombine.low %v4549, %v4532
        %v4715 = vcombine.low %v4546, %v4548
        %v4717 = vunpack.c.l.s4 1966171168
        %v4718 = vunpack.c.0.s8 %v4717
        %v4719 = vlaneseq
        %v4720 = vshrl.u32 %v4719, 7
        %v4721 = vsub.s32 %v4718, %v4720
        %v4722 = vrot.slane %v4712, %v4721
        %v4724 = vunpack.c.l.s4 1966171168
        %v4725 = vunpack.c.0.s8 %v4724
        %v4726 = vlaneseq
        %v4727 = vshrl.u32 %v4726, 7
        %v4728 = vsub.s32 %v4725, %v4727
        %v4729 = vrot.slane %v4713, %v4728
        %v4731 = vunpack.c.l.s4 1966171168
        %v4732 = vunpack.c.0.s8 %v4731
        %v4733 = vlaneseq
        %v4734 = vshrl.u32 %v4733, 7
        %v4735 = vsub.s32 %v4732, %v4734
        %v4736 = vrot.slane %v4714, %v4735
        %v4738 = vunpack.c.l.s4 1966171168
        %v4739 = vunpack.c.0.s8 %v4738
        %v4740 = vlaneseq
        %v4741 = vshrl.u32 %v4740, 7
        %v4742 = vsub.s32 %v4739, %v4741
        %v4743 = vrot.slane %v4715, %v4742
        %v4744 = vcombine.low %v4722, %v4729
        %v4745 = vcombine.low %v4736, %v4743
        %v4747 = vunpack.c.l.s4 1966171168
        %v4748 = vunpack.c.0.s8 %v4747
        %v4749 = vlaneseq
        %v4750 = vshrl.u32 %v4749, 7
        %v4751 = vsub.s32 %v4748, %v4750
        %v4752 = vrot.slane %v4744, %v4751
        %v4754 = vunpack.c.l.s4 1966171168
        %v4755 = vunpack.c.0.s8 %v4754
        %v4756 = vlaneseq
        %v4757 = vshrl.u32 %v4756, 7
        %v4758 = vsub.s32 %v4755, %v4757
        %v4759 = vrot.slane %v4745, %v4758
        %v4760 = vcombine.low %v4752, %v4759
        %v4761 = vcombine.low %v4550, %v4574
        %v4762 = vcombine.low %v4588, %v4596
        %v4763 = vcombine.low %v4598, %v4581
        %v4764 = vcombine.low %v4595, %v4597
        %v4766 = vunpack.c.l.s4 1966171168
        %v4767 = vunpack.c.0.s8 %v4766
        %v4768 = vlaneseq
        %v4769 = vshrl.u32 %v4768, 7
        %v4770 = vsub.s32 %v4767, %v4769
        %v4771 = vrot.slane %v4761, %v4770
        %v4773 = vunpack.c.l.s4 1966171168
        %v4774 = vunpack.c.0.s8 %v4773
        %v4775 = vlaneseq
        %v4776 = vshrl.u32 %v4775, 7
        %v4777 = vsub.s32 %v4774, %v4776
        %v4778 = vrot.slane %v4762, %v4777
        %v4780 = vunpack.c.l.s4 1966171168
        %v4781 = vunpack.c.0.s8 %v4780
        %v4782 = vlaneseq
        %v4783 = vshrl.u32 %v4782, 7
        %v4784 = vsub.s32 %v4781, %v4783
        %v4785 = vrot.slane %v4763, %v4784
        %v4787 = vunpack.c.l.s4 1966171168
        %v4788 = vunpack.c.0.s8 %v4787
        %v4789 = vlaneseq
        %v4790 = vshrl.u32 %v4789, 7
        %v4791 = vsub.s32 %v4788, %v4790
        %v4792 = vrot.slane %v4764, %v4791
        %v4793 = vcombine.low %v4771, %v4778
        %v4794 = vcombine.low %v4785, %v4792
        %v4796 = vunpack.c.l.s4 1966171168
        %v4797 = vunpack.c.0.s8 %v4796
        %v4798 = vlaneseq
        %v4799 = vshrl.u32 %v4798, 7
        %v4800 = vsub.s32 %v4797, %v4799
        %v4801 = vrot.slane %v4793, %v4800
        %v4803 = vunpack.c.l.s4 1966171168
        %v4804 = vunpack.c.0.s8 %v4803
        %v4805 = vlaneseq
        %v4806 = vshrl.u32 %v4805, 7
        %v4807 = vsub.s32 %v4804, %v4806
        %v4808 = vrot.slane %v4794, %v4807
        %v4809 = vcombine.low %v4801, %v4808
        %v4810 = vcombine.low %v4599, %v4613
        %v4812 = vunpack.c.l.s4 1966171168
        %v4813 = vunpack.c.0.s8 %v4812
        %v4814 = vlaneseq
        %v4815 = vshrl.u32 %v4814, 7
        %v4816 = vsub.s32 %v4813, %v4815
        %v4817 = vrot.slane %v4810, %v4816
        %v4819 = vunpack.c.l.s4 1966171168
        %v4820 = vunpack.c.0.s8 %v4819
        %v4821 = vlaneseq
        %v4822 = vshrl.u32 %v4821, 7
        %v4823 = vsub.s32 %v4820, %v4822
        %v4824 = vrot.slane %v4817, %v4823
        %v4830 = vpack.c.bf16 %v4711, %v4662
        %v4831 = vpack.c.bf16 %v4809, %v4760
        %v4832 = vpack.c.bf16 %v4824, %v4824
        %v4834 = vsel %vm1436, %v4830, 0
        %v4837 = vsel %vm1436, %v4831, 0
        %v4840 = vsel %vm1436, %v4832, 0
        %v4843 = vsel %vm3036, %v774, 0
        %4845 = vmatprep.subr.bf16.mxu0 0
        %4846 = vmatpush1.bf16.msra.mxu0 %v4843
        %4847 = vmatprep.subr.bf16.mxu0 0
        %4848 = vmatpush1.bf16.msra.mxu0 0
        %4849 = vmatprep.subr.bf16.mxu0 0
        %4850 = vmatpush1.bf16.msra.mxu0 0
        %4851 = vmatprep.subr.bf16.mxu0 0
        %4852 = vmatpush1.bf16.msra.mxu0 0
        %4853 = vmatprep.subr.bf16.mxu0 0
        %4854 = vmatpush1.bf16.msra.mxu0 0
        %4855 = vmatprep.subr.bf16.mxu0 0
        %4856 = vmatpush1.bf16.msra.mxu0 0
        %4857 = vmatprep.subr.bf16.mxu0 0
        %4858 = vmatpush1.bf16.msra.mxu0 0
        %4859 = vmatprep.subr.bf16.mxu0 0
        %4860 = vmatpush1.bf16.msra.mxu0 0
        %4861 = vmatprep.subr.bf16.mxu0 0
        %4862 = vmatpush1.bf16.msra.mxu0 0
        %4863 = vmatprep.subr.bf16.mxu0 0
        %4864 = vmatpush1.bf16.msra.mxu0 0
        %4865 = vmatprep.subr.bf16.mxu0 0
        %4866 = vmatpush1.bf16.msra.mxu0 0
        %4867 = vmatprep.subr.bf16.mxu0 0
        %4868 = vmatpush1.bf16.msra.mxu0 0
        %4869 = vmatprep.subr.bf16.mxu0 0
        %4870 = vmatpush1.bf16.msra.mxu0 0
        %4871 = vmatprep.subr.bf16.mxu0 0
        %4872 = vmatpush1.bf16.msra.mxu0 0
        %4873 = vmatprep.subr.bf16.mxu0 0
        %4874 = vmatpush1.bf16.msra.mxu0 0
        %4875 = vmatprep.subr.bf16.mxu0 0
        %4876 = vmatpush1.bf16.msra.mxu0 0
        %4877 = vmatprep.mubr.bf16.mxu0 0
        %4878 = vmatmul.mubr.bf16.gmra.mrb[0].mxu0 %v4834
        %v4879 = vpop.f32.mrb[0].mxu0
        %v4880 = vadd.f32 0.0, %v4879
        %v4881 = vpop.f32.mrb[0].mxu0
        %v4882 = vpop.f32.mrb[0].mxu0
        %v4883 = vadd.f32 0.0, %v4882
        %v4884 = vpop.f32.mrb[0].mxu0
        %4885 = vmatprep.mubr.bf16.mxu0 0
        %4886 = vmatmul.mubr.bf16.gmra.mrb[0].mxu0 %v4837
        %v4887 = vpop.f32.mrb[0].mxu0
        %v4888 = vadd.f32 0.0, %v4887
        %v4889 = vpop.f32.mrb[0].mxu0
        %v4890 = vpop.f32.mrb[0].mxu0
        %v4891 = vadd.f32 0.0, %v4890
        %v4892 = vpop.f32.mrb[0].mxu0
        %4893 = vmatprep.mubr.bf16.mxu0 0
        %4894 = vmatmul.mubr.bf16.gmra.mrb[0].mxu0 %v4840
        %v4895 = vpop.f32.mrb[0].mxu0
        %v4896 = vadd.f32 0.0, %v4895
        %v4897 = vpop.f32.mrb[0].mxu0
        %v4898 = vpop.f32.mrb[0].mxu0
        %v4899 = vpop.f32.mrb[0].mxu0
        %4900 = vdwg.mxu0
        %v4901 = vadd.f32 %v4030, %v4880
        %v4902 = vadd.f32 %v4031, %v4883
        %v4903 = vadd.f32 %v4032, %v4888
        %v4904 = vadd.f32 %v4033, %v4891
        %v4905 = vadd.f32 %v4034, %v4896
        %v4906 = vadd.f32 %v792, %v4901
        %v4907 = vadd.f32 %v793, %v4902
        %v4908 = vadd.f32 %v794, %v4903
        %v4909 = vadd.f32 %v795, %v4904
        %v4910 = vadd.f32 %v796, %v4905
        %v4912 = vlaneseq
        %v4913 = vshrl.u32 %v4912, 7
        %v4914 = vsub.s32 0, %v4913
        %v4915 = vrot.slane %v775, %v4914
        %v4917 = vadd.f32 %v4906, %v4915
        %v4918 = vadd.f32 %v4907, %v4915
        %v4919 = vadd.f32 %v4908, %v4915
        %v4920 = vadd.f32 %v4909, %v4915
        %v4921 = vadd.f32 %v4910, %v4915
        %v4922 = vsel %vm797, %v4917, 0.0
        %4923 = vadd.xlane.f32.xlu0 %v4922
        %v4924 = vpop.xlane.xlu0 %4923
        %v4925 = vsel %vm797, %v4918, 0.0
        %4926 = vadd.xlane.f32.xlu0 %v4925
        %v4927 = vpop.xlane.xlu0 %4926
        %v4928 = vsel %vm797, %v4919, 0.0
        %4929 = vadd.xlane.f32.xlu0 %v4928
        %v4930 = vpop.xlane.xlu0 %4929
        %v4931 = vsel %vm797, %v4920, 0.0
        %4932 = vadd.xlane.f32.xlu0 %v4931
        %v4933 = vpop.xlane.xlu0 %4932
        %v4934 = vsel %vm810, %v4921, 0.0
        %4935 = vadd.xlane.f32.xlu0 %v4934
        %v4936 = vpop.xlane.xlu0 %4935
        %v4937 = vmul.f32 %v4924, %v814
        %v4938 = vmul.f32 %v4927, %v814
        %v4939 = vmul.f32 %v4930, %v814
        %v4940 = vmul.f32 %v4933, %v814
        %v4941 = vmul.f32 %v4936, %v814
        %v4942 = vsub.f32 %v4917, %v4937
        %v4943 = vsub.f32 %v4918, %v4938
        %v4944 = vsub.f32 %v4919, %v4939
        %v4945 = vsub.f32 %v4920, %v4940
        %v4946 = vsub.f32 %v4921, %v4941
        %v4947 = vmul.f32 %v4942, %v4942
        %v4948 = vmul.f32 %v4943, %v4943
        %v4949 = vmul.f32 %v4944, %v4944
        %v4950 = vmul.f32 %v4945, %v4945
        %v4951 = vmul.f32 %v4946, %v4946
        %v4952 = vsel %vm797, %v4947, 0.0
        %4953 = vadd.xlane.f32.xlu0 %v4952
        %v4954 = vpop.xlane.xlu0 %4953
        %v4955 = vsel %vm797, %v4948, 0.0
        %4956 = vadd.xlane.f32.xlu0 %v4955
        %v4957 = vpop.xlane.xlu0 %4956
        %v4958 = vsel %vm797, %v4949, 0.0
        %4959 = vadd.xlane.f32.xlu0 %v4958
        %v4960 = vpop.xlane.xlu0 %4959
        %v4961 = vsel %vm797, %v4950, 0.0
        %4962 = vadd.xlane.f32.xlu0 %v4961
        %v4963 = vpop.xlane.xlu0 %4962
        %v4964 = vsel %vm810, %v4951, 0.0
        %4965 = vadd.xlane.f32.xlu0 %v4964
        %v4966 = vpop.xlane.xlu0 %4965
        %v4967 = vmul.f32 %v4954, %v814
        %v4968 = vmul.f32 %v4957, %v814
        %v4969 = vmul.f32 %v4960, %v814
        %v4970 = vmul.f32 %v4963, %v814
        %v4971 = vmul.f32 %v4966, %v814
        %v4972 = vadd.f32 %v4967, 1e-05
        %v4973 = vadd.f32 %v4968, 1e-05
        %v4974 = vadd.f32 %v4969, 1e-05
        %v4975 = vadd.f32 %v4970, 1e-05
        %v4976 = vadd.f32 %v4971, 1e-05
        %v4977 = vrsqrt.pop %v4972
        %v4978 = vrsqrt.pop %v4973
        %v4979 = vrsqrt.pop %v4974
        %v4980 = vrsqrt.pop %v4975
        %v4981 = vrsqrt.pop %v4976
        %v4982 = vmul.f32 %v4942, %v4977
        %v4983 = vmul.f32 %v4943, %v4978
        %v4984 = vmul.f32 %v4944, %v4979
        %v4985 = vmul.f32 %v4945, %v4980
        %v4986 = vmul.f32 %v4946, %v4981
        %v4988 = vlaneseq
        %v4989 = vshrl.u32 %v4988, 7
        %v4990 = vsub.s32 0, %v4989
        %v4991 = vrot.slane %v776, %v4990
        %v4993 = vmul.f32 %v4982, %v4991
        %v4994 = vmul.f32 %v4983, %v4991
        %v4995 = vmul.f32 %v4984, %v4991
        %v4996 = vmul.f32 %v4985, %v4991
        %v4997 = vmul.f32 %v4986, %v4991
        %v4999 = vlaneseq
        %v5000 = vshrl.u32 %v4999, 7
        %v5001 = vsub.s32 0, %v5000
        %v5002 = vrot.slane %v777, %v5001
        %v5004 = vadd.f32 %v4993, %v5002
        %v5005 = vadd.f32 %v4994, %v5002
        %v5006 = vadd.f32 %v4995, %v5002
        %v5007 = vadd.f32 %v4996, %v5002
        %v5008 = vadd.f32 %v4997, %v5002
        %v5009 = vpack.c.bf16 %v5005, %v5004
        %v5010 = vpack.c.bf16 %v5007, %v5006
        %v5011 = vpack.c.bf16 %v5008, %v5008
        %v5013 = vlaneseq
        %v5014 = vshrl.u32 %v5013, 7
        %v5015 = vsub.s32 0, %v5014
        %v5016 = vrot.slane %v782, %v5015
        %v5022 = vunpack.c.l.b16 %v778
        %v5023 = vunpack.c.l.b16 %v779
        %v5024 = vunpack.c.l.b16 %v780
        %v5025 = vunpack.c.l.b16 %v781
        %v5026 = vpack.c.b16 %v5023, %v5022
        %v5027 = vpack.c.b16 %v5025, %v5024
        %v5031 = vsel %vm797, %v5009, 0
        %v5034 = vsel %vm797, %v5010, 0
        %v5037 = vsel %vm797, %v5011, 0
        %5039 = vmatprep.subr.bf16.mxu0 0
        %5040 = vmatpush1.bf16.msra.mxu0 %v5026
        %5041 = vmatprep.subr.bf16.mxu0 0
        %5042 = vmatpush1.bf16.msra.mxu0 %v5027
        %5043 = vmatprep.subr.bf16.mxu0 0
        %5044 = vmatpush1.bf16.msra.mxu0 0
        %5045 = vmatprep.subr.bf16.mxu0 0
        %5046 = vmatpush1.bf16.msra.mxu0 0
        %5047 = vmatprep.subr.bf16.mxu0 0
        %5048 = vmatpush1.bf16.msra.mxu0 0
        %5049 = vmatprep.subr.bf16.mxu0 0
        %5050 = vmatpush1.bf16.msra.mxu0 0
        %5051 = vmatprep.subr.bf16.mxu0 0
        %5052 = vmatpush1.bf16.msra.mxu0 0
        %5053 = vmatprep.subr.bf16.mxu0 0
        %5054 = vmatpush1.bf16.msra.mxu0 0
        %5055 = vmatprep.subr.bf16.mxu0 0
        %5056 = vmatpush1.bf16.msra.mxu0 0
        %5057 = vmatprep.subr.bf16.mxu0 0
        %5058 = vmatpush1.bf16.msra.mxu0 0
        %5059 = vmatprep.subr.bf16.mxu0 0
        %5060 = vmatpush1.bf16.msra.mxu0 0
        %5061 = vmatprep.subr.bf16.mxu0 0
        %5062 = vmatpush1.bf16.msra.mxu0 0
        %5063 = vmatprep.subr.bf16.mxu0 0
        %5064 = vmatpush1.bf16.msra.mxu0 0
        %5065 = vmatprep.subr.bf16.mxu0 0
        %5066 = vmatpush1.bf16.msra.mxu0 0
        %5067 = vmatprep.subr.bf16.mxu0 0
        %5068 = vmatpush1.bf16.msra.mxu0 0
        %5069 = vmatprep.subr.bf16.mxu0 0
        %5070 = vmatpush1.bf16.msra.mxu0 0
        %5071 = vmatprep.mubr.bf16.mxu0 0
        %5072 = vmatmul.mubr.bf16.gmra.mrb[0].mxu0 %v5031
        %v5073 = vpop.f32.mrb[0].mxu0
        %v5074 = vadd.f32 %v5016, %v5073
        %v5075 = vpop.f32.mrb[0].mxu0
        %v5076 = vpop.f32.mrb[0].mxu0
        %v5077 = vadd.f32 %v5016, %v5076
        %v5078 = vpop.f32.mrb[0].mxu0
        %5079 = vmatprep.mubr.bf16.mxu0 0
        %5080 = vmatmul.mubr.bf16.gmra.mrb[0].mxu0 %v5034
        %v5081 = vpop.f32.mrb[0].mxu0
        %v5082 = vadd.f32 %v5016, %v5081
        %v5083 = vpop.f32.mrb[0].mxu0
        %v5084 = vpop.f32.mrb[0].mxu0
        %v5085 = vadd.f32 %v5016, %v5084
        %v5086 = vpop.f32.mrb[0].mxu0
        %5087 = vmatprep.mubr.bf16.mxu0 0
        %5088 = vmatmul.mubr.bf16.gmra.mrb[0].mxu0 %v5037
        %v5089 = vpop.f32.mrb[0].mxu0
        %v5090 = vadd.f32 %v5016, %v5089
        %v5091 = vpop.f32.mrb[0].mxu0
        %v5092 = vpop.f32.mrb[0].mxu0
        %v5093 = vpop.f32.mrb[0].mxu0
        %5094 = vdwg.mxu0
        %v5095 = vmul.f32 %v5074, 0.5
        %v5096 = vmul.f32 %v5077, 0.5
        %v5097 = vmul.f32 %v5082, 0.5
        %v5098 = vmul.f32 %v5085, 0.5
        %v5099 = vmul.f32 %v5090, 0.5
        %v5100 = vmul.f32 %v5074, 0.70710677
        %v5101 = vmul.f32 %v5077, 0.70710677
        %v5102 = vmul.f32 %v5082, 0.70710677
        %v5103 = vmul.f32 %v5085, 0.70710677
        %v5104 = vmul.f32 %v5090, 0.70710677
        %vm5105 = vcmp.ge.f32.partialorder %v5100, 0.0
        %vm5106 = vcmp.ge.f32.partialorder %v5101, 0.0
        %vm5107 = vcmp.ge.f32.partialorder %v5102, 0.0
        %vm5108 = vcmp.ge.f32.partialorder %v5103, 0.0
        %vm5109 = vcmp.ge.f32.partialorder %v5104, 0.0
        %v5110 = vsel %vm5105, 1.0, -1.0
        %v5111 = vsel %vm5106, 1.0, -1.0
        %v5112 = vsel %vm5107, 1.0, -1.0
        %v5113 = vsel %vm5108, 1.0, -1.0
        %v5114 = vsel %vm5109, 1.0, -1.0
        %v5115 = vand.u32 2147483647, %v5100
        %v5116 = vand.u32 2147483647, %v5101
        %v5117 = vand.u32 2147483647, %v5102
        %v5118 = vand.u32 2147483647, %v5103
        %v5119 = vand.u32 2147483647, %v5104
        %v5120 = vmul.f32 %v5115, 0.3275911
        %v5121 = vmul.f32 %v5116, 0.3275911
        %v5122 = vmul.f32 %v5117, 0.3275911
        %v5123 = vmul.f32 %v5118, 0.3275911
        %v5124 = vmul.f32 %v5119, 0.3275911
        %v5125 = vadd.f32 %v5120, 1.0
        %v5126 = vadd.f32 %v5121, 1.0
        %v5127 = vadd.f32 %v5122, 1.0
        %v5128 = vadd.f32 %v5123, 1.0
        %v5129 = vadd.f32 %v5124, 1.0
        %v5130 = vrcp.pop %v5125
        %v5131 = vrcp.pop %v5126
        %v5132 = vrcp.pop %v5127
        %v5133 = vrcp.pop %v5128
        %v5134 = vrcp.pop %v5129
        %v5135 = vmul.f32 %v5130, 1.0614054
        %v5136 = vmul.f32 %v5131, 1.0614054
        %v5137 = vmul.f32 %v5132, 1.0614054
        %v5138 = vmul.f32 %v5133, 1.0614054
        %v5139 = vmul.f32 %v5134, 1.0614054
        %v5140 = vadd.f32 %v5135, -1.4531521
        %v5141 = vadd.f32 %v5136, -1.4531521
        %v5142 = vadd.f32 %v5137, -1.4531521
        %v5143 = vadd.f32 %v5138, -1.4531521
        %v5144 = vadd.f32 %v5139, -1.4531521
        %v5145 = vmul.f32 %v5140, %v5130
        %v5146 = vmul.f32 %v5141, %v5131
        %v5147 = vmul.f32 %v5142, %v5132
        %v5148 = vmul.f32 %v5143, %v5133
        %v5149 = vmul.f32 %v5144, %v5134
        %v5150 = vadd.f32 %v5145, 1.4214138
        %v5151 = vadd.f32 %v5146, 1.4214138
        %v5152 = vadd.f32 %v5147, 1.4214138
        %v5153 = vadd.f32 %v5148, 1.4214138
        %v5154 = vadd.f32 %v5149, 1.4214138
        %v5155 = vmul.f32 %v5150, %v5130
        %v5156 = vmul.f32 %v5151, %v5131
        %v5157 = vmul.f32 %v5152, %v5132
        %v5158 = vmul.f32 %v5153, %v5133
        %v5159 = vmul.f32 %v5154, %v5134
        %v5160 = vadd.f32 %v5155, -0.28449672
        %v5161 = vadd.f32 %v5156, -0.28449672
        %v5162 = vadd.f32 %v5157, -0.28449672
        %v5163 = vadd.f32 %v5158, -0.28449672
        %v5164 = vadd.f32 %v5159, -0.28449672
        %v5165 = vmul.f32 %v5160, %v5130
        %v5166 = vmul.f32 %v5161, %v5131
        %v5167 = vmul.f32 %v5162, %v5132
        %v5168 = vmul.f32 %v5163, %v5133
        %v5169 = vmul.f32 %v5164, %v5134
        %v5170 = vadd.f32 %v5165, 0.2548296
        %v5171 = vadd.f32 %v5166, 0.2548296
        %v5172 = vadd.f32 %v5167, 0.2548296
        %v5173 = vadd.f32 %v5168, 0.2548296
        %v5174 = vadd.f32 %v5169, 0.2548296
        %v5175 = vmul.f32 %v5170, %v5130
        %v5176 = vmul.f32 %v5171, %v5131
        %v5177 = vmul.f32 %v5172, %v5132
        %v5178 = vmul.f32 %v5173, %v5133
        %v5179 = vmul.f32 %v5174, %v5134
        %v5180 = vsub.f32 0.0, %v5115
        %v5181 = vsub.f32 0.0, %v5116
        %v5182 = vsub.f32 0.0, %v5117
        %v5183 = vsub.f32 0.0, %v5118
        %v5184 = vsub.f32 0.0, %v5119
        %v5185 = vmul.f32 %v5180, %v5115
        %v5186 = vmul.f32 %v5181, %v5116
        %v5187 = vmul.f32 %v5182, %v5117
        %v5188 = vmul.f32 %v5183, %v5118
        %v5189 = vmul.f32 %v5184, %v5119
        %v5190 = vmul.f32 %v5185, 1.442695
        %v5191 = vpow.pop %v5190
        %v5192 = vmul.f32 %v5186, 1.442695
        %v5193 = vpow.pop %v5192
        %v5194 = vmul.f32 %v5187, 1.442695
        %v5195 = vpow.pop %v5194
        %v5196 = vmul.f32 %v5188, 1.442695
        %v5197 = vpow.pop %v5196
        %v5198 = vmul.f32 %v5189, 1.442695
        %v5199 = vpow.pop %v5198
        %v5200 = vmul.f32 %v5175, %v5191
        %v5201 = vmul.f32 %v5176, %v5193
        %v5202 = vmul.f32 %v5177, %v5195
        %v5203 = vmul.f32 %v5178, %v5197
        %v5204 = vmul.f32 %v5179, %v5199
        %v5205 = vsub.f32 1.0, %v5200
        %v5206 = vsub.f32 1.0, %v5201
        %v5207 = vsub.f32 1.0, %v5202
        %v5208 = vsub.f32 1.0, %v5203
        %v5209 = vsub.f32 1.0, %v5204
        %v5210 = vmul.f32 %v5110, %v5205
        %v5211 = vmul.f32 %v5111, %v5206
        %v5212 = vmul.f32 %v5112, %v5207
        %v5213 = vmul.f32 %v5113, %v5208
        %v5214 = vmul.f32 %v5114, %v5209
        %v5215 = vadd.f32 %v5210, 1.0
        %v5216 = vadd.f32 %v5211, 1.0
        %v5217 = vadd.f32 %v5212, 1.0
        %v5218 = vadd.f32 %v5213, 1.0
        %v5219 = vadd.f32 %v5214, 1.0
        %v5220 = vmul.f32 %v5095, %v5215
        %v5221 = vmul.f32 %v5096, %v5216
        %v5222 = vmul.f32 %v5097, %v5217
        %v5223 = vmul.f32 %v5098, %v5218
        %v5224 = vmul.f32 %v5099, %v5219
        %v5225 = vpack.c.bf16 %v5221, %v5220
        %v5226 = vpack.c.bf16 %v5223, %v5222
        %v5227 = vpack.c.bf16 %v5224, %v5224
        %v5229 = vlaneseq
        %v5230 = vshrl.u32 %v5229, 7
        %v5231 = vsub.s32 0, %v5230
        %v5232 = vrot.slane %v791, %v5231
        %v5242 = vunpack.c.l.b16 %v783
        %v5243 = vunpack.c.l.b16 %v784
        %v5244 = vunpack.c.l.b16 %v785
        %v5245 = vunpack.c.l.b16 %v786
        %v5246 = vunpack.c.l.b16 %v787
        %v5247 = vunpack.c.l.b16 %v788
        %v5248 = vunpack.c.l.b16 %v789
        %v5249 = vunpack.c.l.b16 %v790
        %v5250 = vpack.c.b16 %v5243, %v5242
        %v5251 = vpack.c.b16 %v5245, %v5244
        %v5252 = vpack.c.b16 %v5247, %v5246
        %v5253 = vpack.c.b16 %v5249, %v5248
        %vm5258 = vcmask 523264
        %v5260 = vsel %vm5258, %v5225, 0
        %v5263 = vsel %vm5258, %v5226, 0
        %v5266 = vsel %vm5258, %v5227, 0
        %5268 = vmatprep.subr.bf16.mxu0 0
        %5269 = vmatpush1.bf16.msra.mxu0 %v5250
        %5270 = vmatprep.subr.bf16.mxu0 0
        %5271 = vmatpush1.bf16.msra.mxu0 %v5251
        %5272 = vmatprep.subr.bf16.mxu0 0
        %5273 = vmatpush1.bf16.msra.mxu0 %v5252
        %5274 = vmatprep.subr.bf16.mxu0 0
        %5275 = vmatpush1.bf16.msra.mxu0 %v5253
        %5276 = vmatprep.subr.bf16.mxu0 0
        %5277 = vmatpush1.bf16.msra.mxu0 0
        %5278 = vmatprep.subr.bf16.mxu0 0
        %5279 = vmatpush1.bf16.msra.mxu0 0
        %5280 = vmatprep.subr.bf16.mxu0 0
        %5281 = vmatpush1.bf16.msra.mxu0 0
        %5282 = vmatprep.subr.bf16.mxu0 0
        %5283 = vmatpush1.bf16.msra.mxu0 0
        %5284 = vmatprep.subr.bf16.mxu0 0
        %5285 = vmatpush1.bf16.msra.mxu0 0
        %5286 = vmatprep.subr.bf16.mxu0 0
        %5287 = vmatpush1.bf16.msra.mxu0 0
        %5288 = vmatprep.subr.bf16.mxu0 0
        %5289 = vmatpush1.bf16.msra.mxu0 0
        %5290 = vmatprep.subr.bf16.mxu0 0
        %5291 = vmatpush1.bf16.msra.mxu0 0
        %5292 = vmatprep.subr.bf16.mxu0 0
        %5293 = vmatpush1.bf16.msra.mxu0 0
        %5294 = vmatprep.subr.bf16.mxu0 0
        %5295 = vmatpush1.bf16.msra.mxu0 0
        %5296 = vmatprep.subr.bf16.mxu0 0
        %5297 = vmatpush1.bf16.msra.mxu0 0
        %5298 = vmatprep.subr.bf16.mxu0 0
        %5299 = vmatpush1.bf16.msra.mxu0 0
        %5300 = vmatprep.mubr.bf16.mxu0 0
        %5301 = vmatmul.mubr.bf16.gmra.mrb[0].mxu0 %v5260
        %v5302 = vpop.f32.mrb[0].mxu0
        %v5303 = vadd.f32 %v5232, %v5302
        %v5304 = vpop.f32.mrb[0].mxu0
        %v5305 = vpop.f32.mrb[0].mxu0
        %v5306 = vadd.f32 %v5232, %v5305
        %v5307 = vpop.f32.mrb[0].mxu0
        %5308 = vmatprep.mubr.bf16.mxu0 0
        %5309 = vmatmul.mubr.bf16.gmra.mrb[0].mxu0 %v5263
        %v5310 = vpop.f32.mrb[0].mxu0
        %v5311 = vadd.f32 %v5232, %v5310
        %v5312 = vpop.f32.mrb[0].mxu0
        %v5313 = vpop.f32.mrb[0].mxu0
        %v5314 = vadd.f32 %v5232, %v5313
        %v5315 = vpop.f32.mrb[0].mxu0
        %5316 = vmatprep.mubr.bf16.mxu0 0
        %5317 = vmatmul.mubr.bf16.gmra.mrb[0].mxu0 %v5266
        %v5318 = vpop.f32.mrb[0].mxu0
        %v5319 = vadd.f32 %v5232, %v5318
        %v5320 = vpop.f32.mrb[0].mxu0
        %v5321 = vpop.f32.mrb[0].mxu0
        %v5322 = vpop.f32.mrb[0].mxu0
        %5323 = vdwg.mxu0
        %v5324 = vadd.f32 %v4917, %v5303
        %v5325 = vadd.f32 %v4918, %v5306
        %v5326 = vadd.f32 %v4919, %v5311
        %v5327 = vadd.f32 %v4920, %v5314
        %v5328 = vadd.f32 %v4921, %v5319
        %5329 = vst.msk [vmem:[#allocation2] sm:$0xff] %vm797, %v5324
        %5330 = vst.msk [vmem:[#allocation2 + $0x8] sm:$0xff] %vm797, %v5325
        %5331 = vst.msk [vmem:[#allocation2 + $0x10] sm:$0xff] %vm797, %v5326
        %5332 = vst.msk [vmem:[#allocation2 + $0x18] sm:$0xff] %vm797, %v5327
        %5333 = vst.msk [vmem:[#allocation2 + $0x20] sm:$0x3] %vm810, %v5328
        %p5334 = scmp.eq.s32.totalorder %s31, 1
        // Predicated region
        $region93: #{vit_forward.3} parent=87 // pred_check
          %p5335 = pneg %p5334
        $region94: #{vit_forward.3} parent=87 // pred_check_branch
          %5337 = sbr.rel (%p5335) target = $region96
        $region95: #{vit_forward.3} parent=87 // pred_region
          %v5341 = vunpack.c.l.s4 1966171168
          %v5342 = vunpack.c.0.s8 %v5341
          %v5343 = vlaneseq
          %v5344 = vshrl.u32 %v5343, 7
          %v5345 = vsub.s32 %v5342, %v5344
          %v5346 = vrot.slane %v5324, %v5345
          %v5348 = vunpack.c.l.s4 1966171168
          %v5349 = vunpack.c.0.s8 %v5348
          %v5350 = vlaneseq
          %v5351 = vshrl.u32 %v5350, 7
          %v5352 = vsub.s32 %v5349, %v5351
          %v5353 = vrot.slane %v5346, %v5352
          %v5355 = vunpack.c.l.s4 1966171168
          %v5356 = vunpack.c.0.s8 %v5355
          %v5357 = vlaneseq
          %v5358 = vshrl.u32 %v5357, 7
          %v5359 = vsub.s32 %v5356, %v5358
          %v5360 = vrot.slane %v5326, %v5359
          %v5361 = vcombine.high %v5360, %v5360
          %v5363 = vunpack.c.l.s4 1966171168
          %v5364 = vunpack.c.0.s8 %v5363
          %v5365 = vlaneseq
          %v5366 = vshrl.u32 %v5365, 7
          %v5367 = vsub.s32 %v5364, %v5366
          %v5368 = vrot.slane %v5361, %v5367
          %v5371 = vld [vmem:[%s13] sm:$0x1]
          %v5372 = vld [vmem:[%s14] sm:$0x1]
          %v5373 = vcombine.low %v5353, %v5368
          %v5375 = vunpack.c.l.s4 1966171168
          %v5376 = vunpack.c.0.s8 %v5375
          %v5377 = vlaneseq
          %v5378 = vshrl.u32 %v5377, 7
          %v5379 = vsub.s32 %v5376, %v5378
          %v5380 = vrot.slane %v5373, %v5379
          %v5382 = vunpack.c.l.s4 1966171168
          %v5383 = vunpack.c.0.s8 %v5382
          %v5384 = vlaneseq
          %v5385 = vshrl.u32 %v5384, 7
          %v5386 = vsub.s32 %v5383, %v5385
          %v5387 = vrot.slane %v5380, %v5386
          %v5389 = vsel %vm810, %v5387, 0.0
          %5390 = vadd.xlane.f32.xlu0 %v5389
          %v5391 = vpop.xlane.xlu0 %5390
          %v5392 = vmul.f32 %v5391, %v814
          %v5394 = vlaneseq
          %v5395 = vshrl.u32 %v5394, 7
          %v5396 = vsub.s32 0, %v5395
          %v5397 = vrot.slane %v5392, %v5396
          %v5398 = vlaneseq
          %v5399 = vshrl.u32 %v5398, 7
          %v5400 = vsub.s32 1, %v5399
          %v5401 = vrot.slane %v5392, %v5400
          %v5404 = vsub.f32 %v5353, %v5397
          %v5405 = vsub.f32 %v5368, %v5401
          %v5406 = vmul.f32 %v5404, %v5404
          %v5407 = vmul.f32 %v5405, %v5405
          %v5410 = vcombine.low %v5406, %v5407
          %v5412 = vunpack.c.l.s4 1966171168
          %v5413 = vunpack.c.0.s8 %v5412
          %v5414 = vlaneseq
          %v5415 = vshrl.u32 %v5414, 7
          %v5416 = vsub.s32 %v5413, %v5415
          %v5417 = vrot.slane %v5410, %v5416
          %v5419 = vunpack.c.l.s4 1966171168
          %v5420 = vunpack.c.0.s8 %v5419
          %v5421 = vlaneseq
          %v5422 = vshrl.u32 %v5421, 7
          %v5423 = vsub.s32 %v5420, %v5422
          %v5424 = vrot.slane %v5417, %v5423
          %v5426 = vsel %vm810, %v5424, 0.0
          %5427 = vadd.xlane.f32.xlu0 %v5426
          %v5428 = vpop.xlane.xlu0 %5427
          %v5429 = vmul.f32 %v5428, %v814
          %v5430 = vadd.f32 %v5429, 1e-05
          %v5431 = vrsqrt.pop %v5430
          %v5433 = vlaneseq
          %v5434 = vshrl.u32 %v5433, 7
          %v5435 = vsub.s32 0, %v5434
          %v5436 = vrot.slane %v5431, %v5435
          %v5437 = vlaneseq
          %v5438 = vshrl.u32 %v5437, 7
          %v5439 = vsub.s32 1, %v5438
          %v5440 = vrot.slane %v5431, %v5439
          %v5443 = vmul.f32 %v5404, %v5436
          %v5444 = vmul.f32 %v5405, %v5440
          %v5446 = vlaneseq
          %v5447 = vshrl.u32 %v5446, 7
          %v5448 = vsub.s32 0, %v5447
          %v5449 = vrot.slane %v5371, %v5448
          %v5451 = vunpack.c.l.s4 1966171168
          %v5452 = vunpack.c.0.s8 %v5451
          %v5453 = vlaneseq
          %v5454 = vshrl.u32 %v5453, 7
          %v5455 = vsub.s32 %v5452, %v5454
          %v5456 = vrot.slane %v5449, %v5455
          %v5457 = vcombine.high %v5456, %v5456
          %v5459 = vunpack.c.l.s4 1966171168
          %v5460 = vunpack.c.0.s8 %v5459
          %v5461 = vlaneseq
          %v5462 = vshrl.u32 %v5461, 7
          %v5463 = vsub.s32 %v5460, %v5462
          %v5464 = vrot.slane %v5456, %v5463
          %v5466 = vunpack.c.l.s4 1966171168
          %v5467 = vunpack.c.0.s8 %v5466
          %v5468 = vlaneseq
          %v5469 = vshrl.u32 %v5468, 7
          %v5470 = vsub.s32 %v5467, %v5469
          %v5471 = vrot.slane %v5457, %v5470
          %v5474 = vmul.f32 %v5443, %v5464
          %v5475 = vmul.f32 %v5444, %v5471
          %v5477 = vlaneseq
          %v5478 = vshrl.u32 %v5477, 7
          %v5479 = vsub.s32 0, %v5478
          %v5480 = vrot.slane %v5372, %v5479
          %v5482 = vunpack.c.l.s4 1966171168
          %v5483 = vunpack.c.0.s8 %v5482
          %v5484 = vlaneseq
          %v5485 = vshrl.u32 %v5484, 7
          %v5486 = vsub.s32 %v5483, %v5485
          %v5487 = vrot.slane %v5480, %v5486
          %v5488 = vcombine.high %v5487, %v5487
          %v5490 = vunpack.c.l.s4 1966171168
          %v5491 = vunpack.c.0.s8 %v5490
          %v5492 = vlaneseq
          %v5493 = vshrl.u32 %v5492, 7
          %v5494 = vsub.s32 %v5491, %v5493
          %v5495 = vrot.slane %v5487, %v5494
          %v5497 = vunpack.c.l.s4 1966171168
          %v5498 = vunpack.c.0.s8 %v5497
          %v5499 = vlaneseq
          %v5500 = vshrl.u32 %v5499, 7
          %v5501 = vsub.s32 %v5498, %v5500
          %v5502 = vrot.slane %v5488, %v5501
          %v5505 = vadd.f32 %v5474, %v5495
          %v5506 = vadd.f32 %v5475, %v5502
          %v5507 = vpack.c.bf16 %v5505, %v5505
          %v5508 = vpack.c.bf16 %v5506, %v5506
          %v5509 = vld [vmem:[%s15] sm:$0xf]
          %v5510 = vld [vmem:[%s15 + $0x4] sm:$0xf]
          %v5511 = vld [vmem:[%s15 + $0x8] sm:$0xf]
          %v5512 = vld [vmem:[%s15 + $0xc] sm:$0xf]
          %v5513 = vld [vmem:[%s16] sm:$0x1]
          %v5515 = vlaneseq
          %v5516 = vshrl.u32 %v5515, 7
          %v5517 = vsub.s32 0, %v5516
          %v5518 = vrot.slane %v5513, %v5517
          %v5522 = vunpack.c.l.b16 %v5507
          %v5523 = vunpack.c.l.b16 %v5508
          %v5524 = vrot.slane %v5523, 7
          %vm5525 = vcmask 1041409
          %v5526 = vsel %vm5525, %v5524, %v5522
          %v5527 = vpack.c.b16 %v5526, %v5526
          %v5532 = vunpack.c.l.b16 %v5509
          %v5533 = vunpack.c.l.b16 %v5510
          %v5534 = vunpack.c.l.b16 %v5511
          %v5535 = vunpack.c.l.b16 %v5512
          %v5536 = vpack.c.b16 %v5533, %v5532
          %v5537 = vpack.c.b16 %v5535, %v5534
          %v5541 = vsel %vm797, %v5527, 0
          %5543 = vmatprep.subr.bf16.mxu0 0
          %5544 = vmatpush1.bf16.msra.mxu0 %v5536
          %5545 = vmatprep.subr.bf16.mxu0 0
          %5546 = vmatpush1.bf16.msra.mxu0 %v5537
          %5547 = vmatprep.subr.bf16.mxu0 0
          %5548 = vmatpush1.bf16.msra.mxu0 0
          %5549 = vmatprep.subr.bf16.mxu0 0
          %5550 = vmatpush1.bf16.msra.mxu0 0
          %5551 = vmatprep.subr.bf16.mxu0 0
          %5552 = vmatpush1.bf16.msra.mxu0 0
          %5553 = vmatprep.subr.bf16.mxu0 0
          %5554 = vmatpush1.bf16.msra.mxu0 0
          %5555 = vmatprep.subr.bf16.mxu0 0
          %5556 = vmatpush1.bf16.msra.mxu0 0
          %5557 = vmatprep.subr.bf16.mxu0 0
          %5558 = vmatpush1.bf16.msra.mxu0 0
          %5559 = vmatprep.subr.bf16.mxu0 0
          %5560 = vmatpush1.bf16.msra.mxu0 0
          %5561 = vmatprep.subr.bf16.mxu0 0
          %5562 = vmatpush1.bf16.msra.mxu0 0
          %5563 = vmatprep.subr.bf16.mxu0 0
          %5564 = vmatpush1.bf16.msra.mxu0 0
          %5565 = vmatprep.subr.bf16.mxu0 0
          %5566 = vmatpush1.bf16.msra.mxu0 0
          %5567 = vmatprep.subr.bf16.mxu0 0
          %5568 = vmatpush1.bf16.msra.mxu0 0
          %5569 = vmatprep.subr.bf16.mxu0 0
          %5570 = vmatpush1.bf16.msra.mxu0 0
          %5571 = vmatprep.subr.bf16.mxu0 0
          %5572 = vmatpush1.bf16.msra.mxu0 0
          %5573 = vmatprep.subr.bf16.mxu0 0
          %5574 = vmatpush1.bf16.msra.mxu0 0
          %5575 = vmatprep.mubr.bf16.mxu0 0
          %5576 = vmatmul.mubr.bf16.gmra.mrb[0].mxu0 %v5541
          %v5577 = vpop.f32.mrb[0].mxu0
          %v5578 = vadd.f32 %v5518, %v5577
          %v5579 = vpop.f32.mrb[0].mxu0
          %v5580 = vpop.f32.mrb[0].mxu0
          %v5581 = vpop.f32.mrb[0].mxu0
          %5582 = vdwg.mxu0
          %5583 = vst [vmem:[#allocation3] sm:$0x3] %v5578
        $region96: #{vit_forward.3} parent=87 // pred_fallthru
          _
        %p5584 = scmp.lt.s32.totalorder %s31, 1
        %s5585 = scalar_select %p5584, %s31, 1
        %s5586 = smul.addr %s5585, 24
        %s5587 = smul.addr %s5586, 8
        %s5588 = scalar_lea.vmem %s18, %s5587
        // Predicated region
        $region97: #{vit_forward.3} parent=87 // pred_check
          %p5589 = pneg %p461
        $region98: #{vit_forward.3} parent=87 // pred_check_branch
          %5591 = sbr.rel (%p5589) target = $region100
        $region99: #{vit_forward.3} parent=87 // pred_region
          %s5593 = ssub.s32 32, 32
          %5594 = vsyncadd [#allocation4], %s5593
          %s5596 = sshll.u32 [#allocation3], 4
          %s5597 = int_to_ptr.vmem [resolvable:$true] %s5596
          %5599 = dma.vmem_to_hbm [thread:$0]  %s5597, 32, %s17, [#allocation4]
        $region100: #{vit_forward.3} parent=87 // pred_fallthru
          _
        // Predicated region
        $region101: #{vit_forward.3} parent=87 // pred_check
          %p5600 = pneg %p487
        $region102: #{vit_forward.3} parent=87 // pred_check_branch
          %5602 = sbr.rel (%p5600) target = $region104
        $region103: #{vit_forward.3} parent=87 // pred_region
          _
        $region104: #{vit_forward.3} parent=87 // pred_fallthru
          _
        // Predicated region
        $region105: #{vit_forward.3} parent=87 // pred_check
          %p5603 = pneg %p461
        $region106: #{vit_forward.3} parent=87 // pred_check_branch
          %5605 = sbr.rel (%p5603) target = $region108
        $region107: #{vit_forward.3} parent=87 // pred_region
          %5606 = dma.done [#allocation4], 32
        $region108: #{vit_forward.3} parent=87 // pred_fallthru
          _
      $region88: #{vit_forward.3} parent=5 // pred_fallthru
        _
      %p5607 = scmp.le.s32.totalorder 2, %s26
      // Predicated region
      $region109: #{vit_forward.3} parent=5 // pred_check
        %p5608 = pneg %p5607
      $region110: #{vit_forward.3} parent=5 // pred_check_branch
        %5610 = sbr.rel (%p5608) target = $region112
      $region111: #{vit_forward.3} parent=5 // pred_region
        %s5611 = ssub.s32 %s26, 2
        // Predicated region
        $region113: #{vit_forward.3} parent=111 // pred_check
          %p5612 = pneg %p493
        $region114: #{vit_forward.3} parent=111 // pred_check_branch
          %5614 = sbr.rel (%p5612) target = $region116
        $region115: #{vit_forward.3} parent=111 // pred_region
          %p5615 = scmp.lt.s32.totalorder %s32, 1
          %s5616 = scalar_select %p5615, %s32, 1
          %s5617 = smul.addr %s5616, 24
          %s5618 = smul.addr %s5617, 8
          %s5619 = scalar_lea.vmem %s18, %s5618
        $region116: #{vit_forward.3} parent=111 // pred_fallthru
          _
      $region112: #{vit_forward.3} parent=5 // pred_fallthru
        _
    $region6: #{vit_forward.3} parent=1 // loop_footer
      %s30 = sadd.s32 1, %s26
    $region7: #{vit_forward.3} parent=1 // loop_footer_branch
      %25 = sbr.rel target = $region3
    $region8: #{vit_forward.3} parent=1 // loop_exit
      _
    %5620 = vsyncpa [#allocation4], 1
    %s5621 = scalar_lea.sflag [#allocation4], 1
    %5622 = vsyncpa %s5621, 1

</llo_original>
